<compile_context>
chip_gen: v7x
topology: tpu7x:2x2x1
jax: 0.10.0
libtpu: 0.0.40
codegen_flags: <defaults>
</compile_context>

<pallas_src>
import numpy as np
import jax
import jax.numpy as jnp
from jax import lax
from jax.experimental import pallas as pl
from jax.experimental.pallas import tpu as pltpu

# ---- dimensions fixed by the TrackNN architecture (fc1 expects 16*5*5 -> 32x32 input)
C_IN, H_IN, W_IN = 2, 32, 32
K = 5
C1, H1, W1 = 6, 28, 28        # after conv1
HP1, WP1 = 14, 14             # after pool1
C2, H2, W2 = 16, 10, 10       # after conv2
HP2, WP2 = 5, 5               # after pool2
FC_IN, FC_OUT = C2 * HP2 * WP2, 32 * 32


# ----------------------------------------------------------------------------------
# Pallas kernel: full TrackNN forward for BT lane-packed images per grid step
# ----------------------------------------------------------------------------------
def tracknn_kernel(x_ref, b1_ref, bb1_ref, se1_ref, so1_ref,
                   b2_ref, bb2_ref, se2_ref, so2_ref,
                   wk_ref, g_ref, bfc_ref, alpha_ref, out_ref):
    f32 = jnp.float32
    bf16 = jnp.bfloat16
    alpha = alpha_ref[0, 0]

    def prelu(v):
        return jnp.where(v >= 0, v, alpha * v)

    x = x_ref[...]                       # (64, W0) bf16, images packed along lanes
    w0 = x.shape[1]                      # BT * 32
    wc1, wp1 = w0 - 4, w0 - 5
    wc2, wp2 = w0 - 13, w0 - 15
    bt = out_ref.shape[0]

    # ---- conv1 (5x5 valid): 5 banded matmuls over lane-shifted slices, bias, PReLU
    #      valid output at rows co*28+i, lanes b*32+j (j<28)
    acc1 = jnp.dot(b1_ref[0], x[:, 0:wc1], preferred_element_type=f32)
    for kj in range(1, K):
        acc1 = acc1 + jnp.dot(b1_ref[kj], x[:, kj:kj + wc1],
                              preferred_element_type=f32)
    c1 = prelu(acc1 + bb1_ref[...]).astype(bf16)          # (168, wc1)

    # ---- maxpool1: rows via 0/1 selection matmuls, columns via shifted max
    #      valid output at rows co*14+p, lanes b*32+2j (j<14)
    r1 = jnp.maximum(jnp.dot(se1_ref[...], c1, preferred_element_type=f32),
                     jnp.dot(so1_ref[...], c1, preferred_element_type=f32))
    p1 = jnp.maximum(r1[:, 0:wp1], r1[:, 1:1 + wp1]).astype(bf16)      # (84, wp1)

    # ---- conv2: column shifts are 2*kj because columns are dilated by the pool
    #      valid output at rows co*10+i, lanes b*32+2j (j<10)
    acc2 = jnp.dot(b2_ref[0], p1[:, 0:wc2], preferred_element_type=f32)
    for kj in range(1, K):
        acc2 = acc2 + jnp.dot(b2_ref[kj], p1[:, 2 * kj:2 * kj + wc2],
                              preferred_element_type=f32)
    c2 = prelu(acc2 + bb2_ref[...]).astype(bf16)          # (160, wc2)

    # ---- maxpool2: valid output at rows co*5+h, lanes b*32+4w (w<5)
    r2 = jnp.maximum(jnp.dot(se2_ref[...], c2, preferred_element_type=f32),
                     jnp.dot(so2_ref[...], c2, preferred_element_type=f32))
    p2 = jnp.maximum(r2[:, 0:wp2], r2[:, 2:2 + wp2]).astype(bf16)      # (80, wp2)

    # ---- fc1: one 0/1 gather matmul -> (80, 5*BT), then 5 (BT,80)x(80,1024) matmuls
    #      with batch as the M dimension; f32 accumulation, bias, PReLU
    sel = jnp.dot(p2, g_ref[...], preferred_element_type=f32).astype(bf16)
    y = lax.dot_general(sel[:, 0:bt], wk_ref[0],
                        (((0,), (0,)), ((), ())), preferred_element_type=f32)
    for w in range(1, WP2):
        y = y + lax.dot_general(sel[:, w * bt:(w + 1) * bt], wk_ref[w],
                                (((0,), (0,)), ((), ())),
                                preferred_element_type=f32)
    out_ref[...] = prelu(y + bfc_ref[...])                # (BT, 1024)


# ----------------------------------------------------------------------------------
# parameter setup: banded conv weights, pool selection matrices, permuted fc weight
# ----------------------------------------------------------------------------------
def _band_matrix(w, h_in, h_out):
    # w: (co, ci, K, K); B[kj, co*h_out+i, ci*h_in+i+ki] = w[co, ci, ki, kj]
    co_n, ci_n, kk, _ = w.shape
    B = np.zeros((kk, co_n * h_out, ci_n * h_in), np.float32)
    for kj in range(kk):
        for co in range(co_n):
            for ci in range(ci_n):
                for ki in range(kk):
                    for i in range(h_out):
                        B[kj, co * h_out + i, ci * h_in + i + ki] = w[co, ci, ki, kj]
    return B


def _row_pool_select(nch, hin):
    hout = hin // 2
    e = np.zeros((nch * hout, nch * hin), np.float32)
    o = np.zeros((nch * hout, nch * hin), np.float32)
    for c in range(nch):
        for p in range(hout):
            e[c * hout + p, c * hin + 2 * p] = 1.0
            o[c * hout + p, c * hin + 2 * p + 1] = 1.0
    return e, o


def make_kernel_params(w1, b1, w2, b2, wfc, bfc, alpha, batch_tile):
    bt = int(batch_tile)
    bf = jnp.bfloat16

    B1 = _band_matrix(np.asarray(w1, np.float32), H_IN, H1)       # (5, 168, 64)
    B2 = _band_matrix(np.asarray(w2, np.float32), HP1, H2)        # (5, 160, 84)
    bb1 = np.repeat(np.asarray(b1, np.float32), H1).reshape(C1 * H1, 1)
    bb2 = np.repeat(np.asarray(b2, np.float32), H2).reshape(C2 * H2, 1)

    Se1, So1 = _row_pool_select(C1, H1)                           # (84, 168)
    Se2, So2 = _row_pool_select(C2, H2)                           # (80, 160)

    # PyTorch flatten order of the (16,5,5) map is c*25 + h*5 + w.
    wr = np.asarray(wfc, np.float32).reshape(FC_OUT, C2, HP2, WP2)
    Wk = np.transpose(wr, (3, 1, 2, 0)).reshape(WP2, C2 * HP2, FC_OUT)   # (5, 80, 1024)

    # gather matrix: picks pooled column w of image b (lane b*32 + 4w) into
    # column w*bt + b of the compacted (80, 5*bt) FC input.
    w0 = bt * W_IN
    wp2 = w0 - 15
    G = np.zeros((wp2, WP2 * bt), np.float32)
    for b in range(bt):
        for w in range(WP2):
            G[b * W_IN + 4 * w, w * bt + b] = 1.0

    return dict(
        bt=bt,
        B1=jnp.asarray(B1, bf), B2=jnp.asarray(B2, bf),
        bb1=jnp.asarray(bb1), bb2=jnp.asarray(bb2),
        Se1=jnp.asarray(Se1, bf), So1=jnp.asarray(So1, bf),
        Se2=jnp.asarray(Se2, bf), So2=jnp.asarray(So2, bf),
        Wk=jnp.asarray(Wk, bf),
        G=jnp.asarray(G, bf),
        bfc=jnp.asarray(np.asarray(bfc, np.float32).reshape(1, FC_OUT)),
        alpha=jnp.full((1, 1), alpha, jnp.float32),
    )


def _const_spec(shape):
    nd = len(shape)
    return pl.BlockSpec(shape, lambda i, _nd=nd: (0,) * _nd)


def run_tracknn(x_nchw, kp):
    bt = kp["bt"]
    n = x_nchw.shape[0]
    npad = ((n + bt - 1) // bt) * bt
    grid = npad // bt
    w0 = bt * W_IN

    xp = jnp.pad(x_nchw.astype(jnp.float32),
                 ((0, npad - n), (0, 0), (0, 0), (0, 0)))
    # pack batch along lanes: X[c*32+h, b*32+w] = x[b, c, h, w]   (b global)
    xbig = jnp.transpose(xp, (1, 2, 0, 3)).reshape(C_IN * H_IN, npad * W_IN)
    xbig = xbig.astype(jnp.bfloat16)

    out = pl.pallas_call(
        tracknn_kernel,
        out_shape=jax.ShapeDtypeStruct((npad, FC_OUT), jnp.float32),
        grid_spec=pltpu.PrefetchScalarGridSpec(
            num_scalar_prefetch=0,
            grid=(grid,),
            in_specs=[
                pl.BlockSpec((C_IN * H_IN, w0), lambda i: (0, i)),
                _const_spec(kp["B1"].shape), _const_spec(kp["bb1"].shape),
                _const_spec(kp["Se1"].shape), _const_spec(kp["So1"].shape),
                _const_spec(kp["B2"].shape), _const_spec(kp["bb2"].shape),
                _const_spec(kp["Se2"].shape), _const_spec(kp["So2"].shape),
                _const_spec(kp["Wk"].shape), _const_spec(kp["G"].shape),
                _const_spec(kp["bfc"].shape),
                pl.BlockSpec(memory_space=pltpu.MemorySpace.SMEM),
            ],
            out_specs=pl.BlockSpec((bt, FC_OUT), lambda i: (i, 0)),
        ),
        compiler_params=pltpu.CompilerParams(
            dimension_semantics=("parallel",),
            vmem_limit_bytes=48 * 1024 * 1024,
        ),
    )(xbig, kp["B1"], kp["bb1"], kp["Se1"], kp["So1"],
      kp["B2"], kp["bb2"], kp["Se2"], kp["So2"],
      kp["Wk"], kp["G"], kp["bfc"], kp["alpha"])
    return out[:n].reshape(n, 32, 32)


# ----------------------------------------------------------------------------------
# plain-JAX reference (mirrors the PyTorch forward) for the correctness check
# ----------------------------------------------------------------------------------
def reference_forward(x, w1, b1, w2, b2, wfc, bfc, alpha):
    def prelu(v):
        return jnp.where(v >= 0, v, alpha * v)

    def conv(v, w, b):
        o = lax.conv_general_dilated(v, w, (1, 1), "VALID",
                                     dimension_numbers=("NCHW", "OIHW", "NCHW"))
        return o + b[None, :, None, None]

    def pool(v):
        return lax.reduce_window(v, -jnp.inf, lax.max,
                                 (1, 1, 2, 2), (1, 1, 2, 2), "VALID")

    h = pool(prelu(conv(x, w1, b1)))
    h = pool(prelu(conv(h, w2, b2)))
    h = h.reshape(h.shape[0], -1)
    y = prelu(h @ wfc.T + bfc)
    return y.reshape(-1, 32, 32)


if __name__ == "__main__":
    key = jax.random.PRNGKey(0)
    ks = jax.random.split(key, 7)

    def unif(k, shape, fan_in):
        bound = 1.0 / np.sqrt(fan_in)
        return jax.random.uniform(k, shape, jnp.float32, -bound, bound)

    # deterministic synthetic parameters (shapes match TrackNN.__init__)
    w1 = unif(ks[0], (C1, C_IN, K, K), C_IN * K * K)
    b1 = unif(ks[1], (C1,), C_IN * K * K)
    w2 = unif(ks[2], (C2, C1, K, K), C1 * K * K)
    b2 = unif(ks[3], (C2,), C1 * K * K)
    wfc = unif(ks[4], (FC_OUT, FC_IN), FC_IN)
    bfc = unif(ks[5], (FC_OUT,), FC_IN)
    alpha = 0.25  # nn.PReLU() default single-parameter init

    # input: batch=2, NCHW; 32x32 spatial is required by fc1 (16*5*5)
    x = jax.random.normal(ks[6], (2, C_IN, H_IN, W_IN), jnp.float32)

    # small demo batch tile (pads batch 2 -> 8); use 64-128 for production batches
    kp = make_kernel_params(np.asarray(w1), np.asarray(b1), np.asarray(w2),
                            np.asarray(b2), np.asarray(wfc), np.asarray(bfc),
                            alpha, batch_tile=8)

    out = jax.block_until_ready(run_tracknn(x, kp))
    ref = jax.block_until_ready(
        reference_forward(x, w1, b1, w2, b2, wfc, bfc, jnp.float32(alpha)))

    assert out.shape == (2, 32, 32) and out.dtype == jnp.float32
    np.testing.assert_allclose(np.asarray(out), np.asarray(ref), rtol=5e-2, atol=5e-2)
    print("KERNEL_OK")
</pallas_src>

<mosaic_0001>
module attributes {stable_mosaic.version = 11 : i64} {
  func.func @tracknn_kernel(%arg0: i32, %arg1: memref<64x256xbf16, #tpu.memory_space<vmem>>, %arg2: memref<5x168x64xbf16, #tpu.memory_space<vmem>>, %arg3: memref<168x1xf32, #tpu.memory_space<vmem>>, %arg4: memref<84x168xbf16, #tpu.memory_space<vmem>>, %arg5: memref<84x168xbf16, #tpu.memory_space<vmem>>, %arg6: memref<5x160x84xbf16, #tpu.memory_space<vmem>>, %arg7: memref<160x1xf32, #tpu.memory_space<vmem>>, %arg8: memref<80x160xbf16, #tpu.memory_space<vmem>>, %arg9: memref<80x160xbf16, #tpu.memory_space<vmem>>, %arg10: memref<5x80x1024xbf16, #tpu.memory_space<vmem>>, %arg11: memref<241x40xbf16, #tpu.memory_space<vmem>>, %arg12: memref<1x1024xf32, #tpu.memory_space<vmem>>, %arg13: memref<1x1xf32, #tpu.memory_space<smem>>, %arg14: memref<8x1024xf32, #tpu.memory_space<vmem>>) attributes {dimension_semantics = [#tpu.dimension_semantics<parallel>], iteration_bounds = array<i64: 1>, scalar_prefetch = 0 : i64, scratch_operands = 0 : i64, tpu.core_type = #tpu.core_type<tc>, window_params = [{transform_indices = @transform_0, window_bounds = array<i64: 64, 256>}, {pipeline_mode = #tpu.pipeline_mode<synchronous>, transform_indices = @transform_1, window_bounds = array<i64: 5, 168, 64>}, {pipeline_mode = #tpu.pipeline_mode<synchronous>, transform_indices = @transform_2, window_bounds = array<i64: 168, 1>}, {pipeline_mode = #tpu.pipeline_mode<synchronous>, transform_indices = @transform_3, window_bounds = array<i64: 84, 168>}, {pipeline_mode = #tpu.pipeline_mode<synchronous>, transform_indices = @transform_4, window_bounds = array<i64: 84, 168>}, {pipeline_mode = #tpu.pipeline_mode<synchronous>, transform_indices = @transform_5, window_bounds = array<i64: 5, 160, 84>}, {pipeline_mode = #tpu.pipeline_mode<synchronous>, transform_indices = @transform_6, window_bounds = array<i64: 160, 1>}, {pipeline_mode = #tpu.pipeline_mode<synchronous>, transform_indices = @transform_7, window_bounds = array<i64: 80, 160>}, {pipeline_mode = #tpu.pipeline_mode<synchronous>, transform_indices = @transform_8, window_bounds = array<i64: 80, 160>}, {pipeline_mode = #tpu.pipeline_mode<synchronous>, transform_indices = @transform_9, window_bounds = array<i64: 5, 80, 1024>}, {pipeline_mode = #tpu.pipeline_mode<synchronous>, transform_indices = @transform_10, window_bounds = array<i64: 241, 40>}, {pipeline_mode = #tpu.pipeline_mode<synchronous>, transform_indices = @transform_11, window_bounds = array<i64: 1, 1024>}, {transform_indices = @transform_12, window_bounds = array<i64: 1, 1>}, {transform_indices = @transform_13, window_bounds = array<i64: 8, 1024>}]} {
    %c0 = arith.constant 0 : index
    %c0_0 = arith.constant 0 : index
    %0 = memref.load %arg13[%c0, %c0_0] : memref<1x1xf32, #tpu.memory_space<smem>>
    %c0_1 = arith.constant 0 : index
    %c0_2 = arith.constant 0 : index
    %1 = vector.load %arg1[%c0_1, %c0_2] : memref<64x256xbf16, #tpu.memory_space<vmem>>, vector<64x256xbf16>
    %c0_3 = arith.constant 0 : index
    %c0_4 = arith.constant 0 : index
    %c0_5 = arith.constant 0 : index
    %2 = vector.load %arg2[%c0_3, %c0_4, %c0_5] : memref<5x168x64xbf16, #tpu.memory_space<vmem>>, vector<1x168x64xbf16>
    %3 = vector.shape_cast %2 : vector<1x168x64xbf16> to vector<168x64xbf16>
    %4 = vector.extract_strided_slice %1 {offsets = [0, 0], sizes = [64, 252], strides = [1, 1]} : vector<64x256xbf16> to vector<64x252xbf16>
    %cst = arith.constant dense<0.000000e+00> : vector<168x252xf32>
    %5 = tpu.matmul %3, %4, %cst {dimension_numbers = #tpu.dot_dimension_numbers<[1], [0], [0], [1], [0, 0, 1, 1], [], []>} : vector<168x64xbf16>, vector<64x252xbf16>, vector<168x252xf32> -> vector<168x252xf32>
    %c1 = arith.constant 1 : index
    %c0_6 = arith.constant 0 : index
    %c0_7 = arith.constant 0 : index
    %6 = vector.load %arg2[%c1, %c0_6, %c0_7] : memref<5x168x64xbf16, #tpu.memory_space<vmem>>, vector<1x168x64xbf16>
    %7 = vector.shape_cast %6 : vector<1x168x64xbf16> to vector<168x64xbf16>
    %8 = vector.extract_strided_slice %1 {offsets = [0, 1], sizes = [64, 252], strides = [1, 1]} : vector<64x256xbf16> to vector<64x252xbf16>
    %cst_8 = arith.constant dense<0.000000e+00> : vector<168x252xf32>
    %9 = tpu.matmul %7, %8, %cst_8 {dimension_numbers = #tpu.dot_dimension_numbers<[1], [0], [0], [1], [0, 0, 1, 1], [], []>} : vector<168x64xbf16>, vector<64x252xbf16>, vector<168x252xf32> -> vector<168x252xf32>
    %10 = arith.addf %5, %9 : vector<168x252xf32>
    %c2 = arith.constant 2 : index
    %c0_9 = arith.constant 0 : index
    %c0_10 = arith.constant 0 : index
    %11 = vector.load %arg2[%c2, %c0_9, %c0_10] : memref<5x168x64xbf16, #tpu.memory_space<vmem>>, vector<1x168x64xbf16>
    %12 = vector.shape_cast %11 : vector<1x168x64xbf16> to vector<168x64xbf16>
    %13 = vector.extract_strided_slice %1 {offsets = [0, 2], sizes = [64, 252], strides = [1, 1]} : vector<64x256xbf16> to vector<64x252xbf16>
    %cst_11 = arith.constant dense<0.000000e+00> : vector<168x252xf32>
    %14 = tpu.matmul %12, %13, %cst_11 {dimension_numbers = #tpu.dot_dimension_numbers<[1], [0], [0], [1], [0, 0, 1, 1], [], []>} : vector<168x64xbf16>, vector<64x252xbf16>, vector<168x252xf32> -> vector<168x252xf32>
    %15 = arith.addf %10, %14 : vector<168x252xf32>
    %c3 = arith.constant 3 : index
    %c0_12 = arith.constant 0 : index
    %c0_13 = arith.constant 0 : index
    %16 = vector.load %arg2[%c3, %c0_12, %c0_13] : memref<5x168x64xbf16, #tpu.memory_space<vmem>>, vector<1x168x64xbf16>
    %17 = vector.shape_cast %16 : vector<1x168x64xbf16> to vector<168x64xbf16>
    %18 = vector.extract_strided_slice %1 {offsets = [0, 3], sizes = [64, 252], strides = [1, 1]} : vector<64x256xbf16> to vector<64x252xbf16>
    %cst_14 = arith.constant dense<0.000000e+00> : vector<168x252xf32>
    %19 = tpu.matmul %17, %18, %cst_14 {dimension_numbers = #tpu.dot_dimension_numbers<[1], [0], [0], [1], [0, 0, 1, 1], [], []>} : vector<168x64xbf16>, vector<64x252xbf16>, vector<168x252xf32> -> vector<168x252xf32>
    %20 = arith.addf %15, %19 : vector<168x252xf32>
    %c4 = arith.constant 4 : index
    %c0_15 = arith.constant 0 : index
    %c0_16 = arith.constant 0 : index
    %21 = vector.load %arg2[%c4, %c0_15, %c0_16] : memref<5x168x64xbf16, #tpu.memory_space<vmem>>, vector<1x168x64xbf16>
    %22 = vector.shape_cast %21 : vector<1x168x64xbf16> to vector<168x64xbf16>
    %23 = vector.extract_strided_slice %1 {offsets = [0, 4], sizes = [64, 252], strides = [1, 1]} : vector<64x256xbf16> to vector<64x252xbf16>
    %cst_17 = arith.constant dense<0.000000e+00> : vector<168x252xf32>
    %24 = tpu.matmul %22, %23, %cst_17 {dimension_numbers = #tpu.dot_dimension_numbers<[1], [0], [0], [1], [0, 0, 1, 1], [], []>} : vector<168x64xbf16>, vector<64x252xbf16>, vector<168x252xf32> -> vector<168x252xf32>
    %25 = arith.addf %20, %24 : vector<168x252xf32>
    %c0_18 = arith.constant 0 : index
    %c0_19 = arith.constant 0 : index
    %26 = vector.load %arg3[%c0_18, %c0_19] : memref<168x1xf32, #tpu.memory_space<vmem>>, vector<168x1xf32>
    %27 = vector.broadcast %26 : vector<168x1xf32> to vector<168x252xf32>
    %28 = arith.addf %25, %27 : vector<168x252xf32>
    %cst_20 = arith.constant 0.000000e+00 : f32
    %29 = vector.broadcast %cst_20 : f32 to vector<168x252xf32>
    %30 = arith.cmpf oge, %28, %29 : vector<168x252xf32>
    %31 = vector.broadcast %0 : f32 to vector<168x252xf32>
    %32 = arith.mulf %31, %28 : vector<168x252xf32>
    %33 = arith.select %30, %28, %32 : vector<168x252xi1>, vector<168x252xf32>
    %34 = arith.truncf %33 : vector<168x252xf32> to vector<168x252xbf16>
    %c0_21 = arith.constant 0 : index
    %c0_22 = arith.constant 0 : index
    %35 = vector.load %arg4[%c0_21, %c0_22] : memref<84x168xbf16, #tpu.memory_space<vmem>>, vector<84x168xbf16>
    %cst_23 = arith.constant dense<0.000000e+00> : vector<84x252xf32>
    %36 = tpu.matmul %35, %34, %cst_23 {dimension_numbers = #tpu.dot_dimension_numbers<[1], [0], [0], [1], [0, 0, 1, 1], [], []>} : vector<84x168xbf16>, vector<168x252xbf16>, vector<84x252xf32> -> vector<84x252xf32>
    %c0_24 = arith.constant 0 : index
    %c0_25 = arith.constant 0 : index
    %37 = vector.load %arg5[%c0_24, %c0_25] : memref<84x168xbf16, #tpu.memory_space<vmem>>, vector<84x168xbf16>
    %cst_26 = arith.constant dense<0.000000e+00> : vector<84x252xf32>
    %38 = tpu.matmul %37, %34, %cst_26 {dimension_numbers = #tpu.dot_dimension_numbers<[1], [0], [0], [1], [0, 0, 1, 1], [], []>} : vector<84x168xbf16>, vector<168x252xbf16>, vector<84x252xf32> -> vector<84x252xf32>
    %39 = arith.maximumf %36, %38 : vector<84x252xf32>
    %40 = vector.extract_strided_slice %39 {offsets = [0, 0], sizes = [84, 251], strides = [1, 1]} : vector<84x252xf32> to vector<84x251xf32>
    %41 = vector.extract_strided_slice %39 {offsets = [0, 1], sizes = [84, 251], strides = [1, 1]} : vector<84x252xf32> to vector<84x251xf32>
    %42 = arith.maximumf %40, %41 : vector<84x251xf32>
    %43 = arith.truncf %42 : vector<84x251xf32> to vector<84x251xbf16>
    %c0_27 = arith.constant 0 : index
    %c0_28 = arith.constant 0 : index
    %c0_29 = arith.constant 0 : index
    %44 = vector.load %arg6[%c0_27, %c0_28, %c0_29] : memref<5x160x84xbf16, #tpu.memory_space<vmem>>, vector<1x160x84xbf16>
    %45 = vector.shape_cast %44 : vector<1x160x84xbf16> to vector<160x84xbf16>
    %46 = vector.extract_strided_slice %43 {offsets = [0, 0], sizes = [84, 243], strides = [1, 1]} : vector<84x251xbf16> to vector<84x243xbf16>
    %cst_30 = arith.constant dense<0.000000e+00> : vector<160x243xf32>
    %47 = tpu.matmul %45, %46, %cst_30 {dimension_numbers = #tpu.dot_dimension_numbers<[1], [0], [0], [1], [0, 0, 1, 1], [], []>} : vector<160x84xbf16>, vector<84x243xbf16>, vector<160x243xf32> -> vector<160x243xf32>
    %c1_31 = arith.constant 1 : index
    %c0_32 = arith.constant 0 : index
    %c0_33 = arith.constant 0 : index
    %48 = vector.load %arg6[%c1_31, %c0_32, %c0_33] : memref<5x160x84xbf16, #tpu.memory_space<vmem>>, vector<1x160x84xbf16>
    %49 = vector.shape_cast %48 : vector<1x160x84xbf16> to vector<160x84xbf16>
    %50 = vector.extract_strided_slice %43 {offsets = [0, 2], sizes = [84, 243], strides = [1, 1]} : vector<84x251xbf16> to vector<84x243xbf16>
    %cst_34 = arith.constant dense<0.000000e+00> : vector<160x243xf32>
    %51 = tpu.matmul %49, %50, %cst_34 {dimension_numbers = #tpu.dot_dimension_numbers<[1], [0], [0], [1], [0, 0, 1, 1], [], []>} : vector<160x84xbf16>, vector<84x243xbf16>, vector<160x243xf32> -> vector<160x243xf32>
    %52 = arith.addf %47, %51 : vector<160x243xf32>
    %c2_35 = arith.constant 2 : index
    %c0_36 = arith.constant 0 : index
    %c0_37 = arith.constant 0 : index
    %53 = vector.load %arg6[%c2_35, %c0_36, %c0_37] : memref<5x160x84xbf16, #tpu.memory_space<vmem>>, vector<1x160x84xbf16>
    %54 = vector.shape_cast %53 : vector<1x160x84xbf16> to vector<160x84xbf16>
    %55 = vector.extract_strided_slice %43 {offsets = [0, 4], sizes = [84, 243], strides = [1, 1]} : vector<84x251xbf16> to vector<84x243xbf16>
    %cst_38 = arith.constant dense<0.000000e+00> : vector<160x243xf32>
    %56 = tpu.matmul %54, %55, %cst_38 {dimension_numbers = #tpu.dot_dimension_numbers<[1], [0], [0], [1], [0, 0, 1, 1], [], []>} : vector<160x84xbf16>, vector<84x243xbf16>, vector<160x243xf32> -> vector<160x243xf32>
    %57 = arith.addf %52, %56 : vector<160x243xf32>
    %c3_39 = arith.constant 3 : index
    %c0_40 = arith.constant 0 : index
    %c0_41 = arith.constant 0 : index
    %58 = vector.load %arg6[%c3_39, %c0_40, %c0_41] : memref<5x160x84xbf16, #tpu.memory_space<vmem>>, vector<1x160x84xbf16>
    %59 = vector.shape_cast %58 : vector<1x160x84xbf16> to vector<160x84xbf16>
    %60 = vector.extract_strided_slice %43 {offsets = [0, 6], sizes = [84, 243], strides = [1, 1]} : vector<84x251xbf16> to vector<84x243xbf16>
    %cst_42 = arith.constant dense<0.000000e+00> : vector<160x243xf32>
    %61 = tpu.matmul %59, %60, %cst_42 {dimension_numbers = #tpu.dot_dimension_numbers<[1], [0], [0], [1], [0, 0, 1, 1], [], []>} : vector<160x84xbf16>, vector<84x243xbf16>, vector<160x243xf32> -> vector<160x243xf32>
    %62 = arith.addf %57, %61 : vector<160x243xf32>
    %c4_43 = arith.constant 4 : index
    %c0_44 = arith.constant 0 : index
    %c0_45 = arith.constant 0 : index
    %63 = vector.load %arg6[%c4_43, %c0_44, %c0_45] : memref<5x160x84xbf16, #tpu.memory_space<vmem>>, vector<1x160x84xbf16>
    %64 = vector.shape_cast %63 : vector<1x160x84xbf16> to vector<160x84xbf16>
    %65 = vector.extract_strided_slice %43 {offsets = [0, 8], sizes = [84, 243], strides = [1, 1]} : vector<84x251xbf16> to vector<84x243xbf16>
    %cst_46 = arith.constant dense<0.000000e+00> : vector<160x243xf32>
    %66 = tpu.matmul %64, %65, %cst_46 {dimension_numbers = #tpu.dot_dimension_numbers<[1], [0], [0], [1], [0, 0, 1, 1], [], []>} : vector<160x84xbf16>, vector<84x243xbf16>, vector<160x243xf32> -> vector<160x243xf32>
    %67 = arith.addf %62, %66 : vector<160x243xf32>
    %c0_47 = arith.constant 0 : index
    %c0_48 = arith.constant 0 : index
    %68 = vector.load %arg7[%c0_47, %c0_48] : memref<160x1xf32, #tpu.memory_space<vmem>>, vector<160x1xf32>
    %69 = vector.broadcast %68 : vector<160x1xf32> to vector<160x243xf32>
    %70 = arith.addf %67, %69 : vector<160x243xf32>
    %cst_49 = arith.constant 0.000000e+00 : f32
    %71 = vector.broadcast %cst_49 : f32 to vector<160x243xf32>
    %72 = arith.cmpf oge, %70, %71 : vector<160x243xf32>
    %73 = vector.broadcast %0 : f32 to vector<160x243xf32>
    %74 = arith.mulf %73, %70 : vector<160x243xf32>
    %75 = arith.select %72, %70, %74 : vector<160x243xi1>, vector<160x243xf32>
    %76 = arith.truncf %75 : vector<160x243xf32> to vector<160x243xbf16>
    %c0_50 = arith.constant 0 : index
    %c0_51 = arith.constant 0 : index
    %77 = vector.load %arg8[%c0_50, %c0_51] : memref<80x160xbf16, #tpu.memory_space<vmem>>, vector<80x160xbf16>
    %cst_52 = arith.constant dense<0.000000e+00> : vector<80x243xf32>
    %78 = tpu.matmul %77, %76, %cst_52 {dimension_numbers = #tpu.dot_dimension_numbers<[1], [0], [0], [1], [0, 0, 1, 1], [], []>} : vector<80x160xbf16>, vector<160x243xbf16>, vector<80x243xf32> -> vector<80x243xf32>
    %c0_53 = arith.constant 0 : index
    %c0_54 = arith.constant 0 : index
    %79 = vector.load %arg9[%c0_53, %c0_54] : memref<80x160xbf16, #tpu.memory_space<vmem>>, vector<80x160xbf16>
    %cst_55 = arith.constant dense<0.000000e+00> : vector<80x243xf32>
    %80 = tpu.matmul %79, %76, %cst_55 {dimension_numbers = #tpu.dot_dimension_numbers<[1], [0], [0], [1], [0, 0, 1, 1], [], []>} : vector<80x160xbf16>, vector<160x243xbf16>, vector<80x243xf32> -> vector<80x243xf32>
    %81 = arith.maximumf %78, %80 : vector<80x243xf32>
    %82 = vector.extract_strided_slice %81 {offsets = [0, 0], sizes = [80, 241], strides = [1, 1]} : vector<80x243xf32> to vector<80x241xf32>
    %83 = vector.extract_strided_slice %81 {offsets = [0, 2], sizes = [80, 241], strides = [1, 1]} : vector<80x243xf32> to vector<80x241xf32>
    %84 = arith.maximumf %82, %83 : vector<80x241xf32>
    %85 = arith.truncf %84 : vector<80x241xf32> to vector<80x241xbf16>
    %c0_56 = arith.constant 0 : index
    %c0_57 = arith.constant 0 : index
    %86 = vector.load %arg11[%c0_56, %c0_57] : memref<241x40xbf16, #tpu.memory_space<vmem>>, vector<241x40xbf16>
    %cst_58 = arith.constant dense<0.000000e+00> : vector<80x40xf32>
    %87 = tpu.matmul %85, %86, %cst_58 {dimension_numbers = #tpu.dot_dimension_numbers<[1], [0], [0], [1], [0, 0, 1, 1], [], []>} : vector<80x241xbf16>, vector<241x40xbf16>, vector<80x40xf32> -> vector<80x40xf32>
    %88 = arith.truncf %87 : vector<80x40xf32> to vector<80x40xbf16>
    %89 = vector.extract_strided_slice %88 {offsets = [0, 0], sizes = [80, 8], strides = [1, 1]} : vector<80x40xbf16> to vector<80x8xbf16>
    %c0_59 = arith.constant 0 : index
    %c0_60 = arith.constant 0 : index
    %c0_61 = arith.constant 0 : index
    %90 = vector.load %arg10[%c0_59, %c0_60, %c0_61] : memref<5x80x1024xbf16, #tpu.memory_space<vmem>>, vector<1x80x1024xbf16>
    %91 = vector.shape_cast %90 : vector<1x80x1024xbf16> to vector<80x1024xbf16>
    %cst_62 = arith.constant dense<0.000000e+00> : vector<8x1024xf32>
    %92 = tpu.matmul %89, %91, %cst_62 {dimension_numbers = #tpu.dot_dimension_numbers<[0], [0], [1], [1], [0, 1, 1, 1], [], []>} : vector<80x8xbf16>, vector<80x1024xbf16>, vector<8x1024xf32> -> vector<8x1024xf32>
    %93 = vector.extract_strided_slice %88 {offsets = [0, 8], sizes = [80, 8], strides = [1, 1]} : vector<80x40xbf16> to vector<80x8xbf16>
    %c1_63 = arith.constant 1 : index
    %c0_64 = arith.constant 0 : index
    %c0_65 = arith.constant 0 : index
    %94 = vector.load %arg10[%c1_63, %c0_64, %c0_65] : memref<5x80x1024xbf16, #tpu.memory_space<vmem>>, vector<1x80x1024xbf16>
    %95 = vector.shape_cast %94 : vector<1x80x1024xbf16> to vector<80x1024xbf16>
    %cst_66 = arith.constant dense<0.000000e+00> : vector<8x1024xf32>
    %96 = tpu.matmul %93, %95, %cst_66 {dimension_numbers = #tpu.dot_dimension_numbers<[0], [0], [1], [1], [0, 1, 1, 1], [], []>} : vector<80x8xbf16>, vector<80x1024xbf16>, vector<8x1024xf32> -> vector<8x1024xf32>
    %97 = arith.addf %92, %96 : vector<8x1024xf32>
    %98 = vector.extract_strided_slice %88 {offsets = [0, 16], sizes = [80, 8], strides = [1, 1]} : vector<80x40xbf16> to vector<80x8xbf16>
    %c2_67 = arith.constant 2 : index
    %c0_68 = arith.constant 0 : index
    %c0_69 = arith.constant 0 : index
    %99 = vector.load %arg10[%c2_67, %c0_68, %c0_69] : memref<5x80x1024xbf16, #tpu.memory_space<vmem>>, vector<1x80x1024xbf16>
    %100 = vector.shape_cast %99 : vector<1x80x1024xbf16> to vector<80x1024xbf16>
    %cst_70 = arith.constant dense<0.000000e+00> : vector<8x1024xf32>
    %101 = tpu.matmul %98, %100, %cst_70 {dimension_numbers = #tpu.dot_dimension_numbers<[0], [0], [1], [1], [0, 1, 1, 1], [], []>} : vector<80x8xbf16>, vector<80x1024xbf16>, vector<8x1024xf32> -> vector<8x1024xf32>
    %102 = arith.addf %97, %101 : vector<8x1024xf32>
    %103 = vector.extract_strided_slice %88 {offsets = [0, 24], sizes = [80, 8], strides = [1, 1]} : vector<80x40xbf16> to vector<80x8xbf16>
    %c3_71 = arith.constant 3 : index
    %c0_72 = arith.constant 0 : index
    %c0_73 = arith.constant 0 : index
    %104 = vector.load %arg10[%c3_71, %c0_72, %c0_73] : memref<5x80x1024xbf16, #tpu.memory_space<vmem>>, vector<1x80x1024xbf16>
    %105 = vector.shape_cast %104 : vector<1x80x1024xbf16> to vector<80x1024xbf16>
    %cst_74 = arith.constant dense<0.000000e+00> : vector<8x1024xf32>
    %106 = tpu.matmul %103, %105, %cst_74 {dimension_numbers = #tpu.dot_dimension_numbers<[0], [0], [1], [1], [0, 1, 1, 1], [], []>} : vector<80x8xbf16>, vector<80x1024xbf16>, vector<8x1024xf32> -> vector<8x1024xf32>
    %107 = arith.addf %102, %106 : vector<8x1024xf32>
    %108 = vector.extract_strided_slice %88 {offsets = [0, 32], sizes = [80, 8], strides = [1, 1]} : vector<80x40xbf16> to vector<80x8xbf16>
    %c4_75 = arith.constant 4 : index
    %c0_76 = arith.constant 0 : index
    %c0_77 = arith.constant 0 : index
    %109 = vector.load %arg10[%c4_75, %c0_76, %c0_77] : memref<5x80x1024xbf16, #tpu.memory_space<vmem>>, vector<1x80x1024xbf16>
    %110 = vector.shape_cast %109 : vector<1x80x1024xbf16> to vector<80x1024xbf16>
    %cst_78 = arith.constant dense<0.000000e+00> : vector<8x1024xf32>
    %111 = tpu.matmul %108, %110, %cst_78 {dimension_numbers = #tpu.dot_dimension_numbers<[0], [0], [1], [1], [0, 1, 1, 1], [], []>} : vector<80x8xbf16>, vector<80x1024xbf16>, vector<8x1024xf32> -> vector<8x1024xf32>
    %112 = arith.addf %107, %111 : vector<8x1024xf32>
    %c0_79 = arith.constant 0 : index
    %c0_80 = arith.constant 0 : index
    %113 = vector.load %arg12[%c0_79, %c0_80] : memref<1x1024xf32, #tpu.memory_space<vmem>>, vector<1x1024xf32>
    %114 = vector.broadcast %113 : vector<1x1024xf32> to vector<8x1024xf32>
    %115 = arith.addf %112, %114 : vector<8x1024xf32>
    %cst_81 = arith.constant 0.000000e+00 : f32
    %116 = vector.broadcast %cst_81 : f32 to vector<8x1024xf32>
    %117 = arith.cmpf oge, %115, %116 : vector<8x1024xf32>
    %118 = vector.broadcast %0 : f32 to vector<8x1024xf32>
    %119 = arith.mulf %118, %115 : vector<8x1024xf32>
    %120 = arith.select %117, %115, %119 : vector<8x1024xi1>, vector<8x1024xf32>
    %c0_82 = arith.constant 0 : index
    %c0_83 = arith.constant 0 : index
    %121 = vector.load %arg14[%c0_82, %c0_83] : memref<8x1024xf32, #tpu.memory_space<vmem>>, vector<8x1024xf32>
    tpu.vector_store %arg14[%c0_82, %c0_83], %120 {strides = array<i32>} : memref<8x1024xf32, #tpu.memory_space<vmem>>, vector<8x1024xf32>,
    return
  }
  func.func @transform_0(%arg0: i32) -> (i32, i32) {
    %c0_i32 = arith.constant 0 : i32
    %c0_i32_0 = arith.constant 0 : i32
    return %c0_i32, %arg0 : i32, i32
  }
  func.func @transform_1(%arg0: i32) -> (i32, i32, i32) {
    %c0_i32 = arith.constant 0 : i32
    %c0_i32_0 = arith.constant 0 : i32
    %c0_i32_1 = arith.constant 0 : i32
    %c0_i32_2 = arith.constant 0 : i32
    return %c0_i32, %c0_i32_0, %c0_i32_1 : i32, i32, i32
  }
  func.func @transform_2(%arg0: i32) -> (i32, i32) {
    %c0_i32 = arith.constant 0 : i32
    %c0_i32_0 = arith.constant 0 : i32
    %c0_i32_1 = arith.constant 0 : i32
    return %c0_i32, %c0_i32_0 : i32, i32
  }
  func.func @transform_3(%arg0: i32) -> (i32, i32) {
    %c0_i32 = arith.constant 0 : i32
    %c0_i32_0 = arith.constant 0 : i32
    %c0_i32_1 = arith.constant 0 : i32
    return %c0_i32, %c0_i32_0 : i32, i32
  }
  func.func @transform_4(%arg0: i32) -> (i32, i32) {
    %c0_i32 = arith.constant 0 : i32
    %c0_i32_0 = arith.constant 0 : i32
    %c0_i32_1 = arith.constant 0 : i32
    return %c0_i32, %c0_i32_0 : i32, i32
  }
  func.func @transform_5(%arg0: i32) -> (i32, i32, i32) {
    %c0_i32 = arith.constant 0 : i32
    %c0_i32_0 = arith.constant 0 : i32
    %c0_i32_1 = arith.constant 0 : i32
    %c0_i32_2 = arith.constant 0 : i32
    return %c0_i32, %c0_i32_0, %c0_i32_1 : i32, i32, i32
  }
  func.func @transform_6(%arg0: i32) -> (i32, i32) {
    %c0_i32 = arith.constant 0 : i32
    %c0_i32_0 = arith.constant 0 : i32
    %c0_i32_1 = arith.constant 0 : i32
    return %c0_i32, %c0_i32_0 : i32, i32
  }
  func.func @transform_7(%arg0: i32) -> (i32, i32) {
    %c0_i32 = arith.constant 0 : i32
    %c0_i32_0 = arith.constant 0 : i32
    %c0_i32_1 = arith.constant 0 : i32
    return %c0_i32, %c0_i32_0 : i32, i32
  }
  func.func @transform_8(%arg0: i32) -> (i32, i32) {
    %c0_i32 = arith.constant 0 : i32
    %c0_i32_0 = arith.constant 0 : i32
    %c0_i32_1 = arith.constant 0 : i32
    return %c0_i32, %c0_i32_0 : i32, i32
  }
  func.func @transform_9(%arg0: i32) -> (i32, i32, i32) {
    %c0_i32 = arith.constant 0 : i32
    %c0_i32_0 = arith.constant 0 : i32
    %c0_i32_1 = arith.constant 0 : i32
    %c0_i32_2 = arith.constant 0 : i32
    return %c0_i32, %c0_i32_0, %c0_i32_1 : i32, i32, i32
  }
  func.func @transform_10(%arg0: i32) -> (i32, i32) {
    %c0_i32 = arith.constant 0 : i32
    %c0_i32_0 = arith.constant 0 : i32
    %c0_i32_1 = arith.constant 0 : i32
    return %c0_i32, %c0_i32_0 : i32, i32
  }
  func.func @transform_11(%arg0: i32) -> (i32, i32) {
    %c0_i32 = arith.constant 0 : i32
    %c0_i32_0 = arith.constant 0 : i32
    %c0_i32_1 = arith.constant 0 : i32
    return %c0_i32, %c0_i32_0 : i32, i32
  }
  func.func @transform_12(%arg0: i32) -> (i32, i32) {
    %c0_i32 = arith.constant 0 : i32
    %c0_i32_0 = arith.constant 0 : i32
    %c0_i32_1 = arith.constant 0 : i32
    return %c0_i32, %c0_i32_0 : i32, i32
  }
  func.func @transform_13(%arg0: i32) -> (i32, i32) {
    %c0_i32 = arith.constant 0 : i32
    %c0_i32_0 = arith.constant 0 : i32
    return %arg0, %c0_i32 : i32, i32
  }
}

</mosaic_0001>

<llo_original>
// kernel: tpu_custom_call.1
$region0: #{tpu_custom_call.1}
  #allocation0 [shape = 'u32[]', space=smem, size = 0x4, offset = 0x4, fixed_abs, tag = 'smem constant byte address 0x4 - core index']
  #allocation1 [shape = 'u32[144,128]{1,0:T(1,128)}', space=vmem, size = 0x12000, scoped, tag = 'internal scratch']
  #allocation2 [shape = 'f32[1,1]{1,0:T(1,128)S(6)}', space=smem, size = 0x200, scoped, tag = 'scoped memory for tpu_custom_call.1']
  %s0 = inlined_call_operand.hbm [shape: bf16[64,256], index: 0, kind: input, shape index: {}]
  %s1 = inlined_call_operand.vmem [shape: bf16[5,168,64], index: 1, kind: input, shape index: {}]
  %s2 = inlined_call_operand.vmem [shape: f32[168,1], index: 2, kind: input, shape index: {}]
  %s3 = inlined_call_operand.vmem [shape: bf16[84,168], index: 3, kind: input, shape index: {}]
  %s4 = inlined_call_operand.vmem [shape: bf16[84,168], index: 4, kind: input, shape index: {}]
  %s5 = inlined_call_operand.hbm [shape: bf16[5,160,84], index: 5, kind: input, shape index: {}]
  %s6 = inlined_call_operand.vmem [shape: f32[160,1], index: 6, kind: input, shape index: {}]
  %s7 = inlined_call_operand.hbm [shape: bf16[80,160], index: 7, kind: input, shape index: {}]
  %s8 = inlined_call_operand.hbm [shape: bf16[80,160], index: 8, kind: input, shape index: {}]
  %s9 = inlined_call_operand.vmem [shape: bf16[5,80,1024], index: 9, kind: input, shape index: {}]
  %s10 = inlined_call_operand.vmem [shape: bf16[241,40], index: 10, kind: input, shape index: {}]
  %s11 = inlined_call_operand.vmem [shape: f32[1,1024], index: 11, kind: input, shape index: {}]
  %s12 = inlined_call_operand.<no memory space> [shape: f32[1,1], index: 12, kind: input, shape index: {}]
  %s13 = inlined_call_operand.hbm [shape: f32[8,1024], index: 13, kind: output, shape index: {}]
  %s14 = sld [smem:[#allocation0]]
  $region78: #{tpu_custom_call.1} parent=0
    _
  %s16 = ssub.s32 1, %s14
  %s17 = scalar_select 0, %s16, %s14
  %18 = sst [smem:[#allocation2]] %s12
  $region1: #{tpu_custom_call.1} parent=0
    #allocation3 [shape = 'u8[32768]{0}', space=vmem, size = 0x8000, scoped, tag = 'input window, operand 0, single buffered']
    #allocation4 [shape = 's32[1]{0}', space=sflag, size = 0x4, scoped, tag = 'scoped memory for tpu_custom_call.1']
    #allocation5 [shape = 's32[1]{0}', space=sflag, size = 0x4, scoped, tag = 'scoped memory for tpu_custom_call.1']
    #allocation6 [shape = 'u8[204800]{0}', space=vmem, size = 0x32000, scoped, tag = 'input window, operand 5, single buffered']
    #allocation7 [shape = 's32[1]{0}', space=sflag, size = 0x4, scoped, tag = 'scoped memory for tpu_custom_call.1']
    #allocation8 [shape = 'u8[40960]{0}', space=vmem, size = 0xa000, scoped, tag = 'input window, operand 7, single buffered']
    #allocation9 [shape = 'u8[40960]{0}', space=vmem, size = 0xa000, scoped, tag = 'input window, operand 8, single buffered']
    #allocation10 [shape = 's32[1]{0}', space=sflag, size = 0x4, scoped, tag = 'scoped memory for tpu_custom_call.1']
    #allocation11 [shape = 'u8[32768]{0}', space=vmem, size = 0x8000, scoped, tag = 'output window, operand 0, single buffered']
    %19 = vsyncpa [#allocation4], 0
    %20 = vsyncpa [#allocation7], 0
    %21 = vsyncpa [#allocation10], 0
    %22 = vsyncpa [#allocation5], 0
    // Predicated region
    $region2: #{tpu_custom_call.1} parent=1 // pred_check
      _
    $region3: #{tpu_custom_call.1} parent=1 // pred_check_branch
      %24 = sbr.rel (0) target = $region5
    $region4: #{tpu_custom_call.1} parent=1 // pred_region
      %s26 = ssub.s32 1024, 1024
      %27 = vsyncadd [#allocation4], %s26
      %s28 = sshll.u32 [#allocation3], 4
      %s29 = int_to_ptr.vmem [resolvable:$true] %s28
      %34 = dma.hbm_to_vmem [thread:$0]  %s0, 1024, %s29, [#allocation4], 128, 128, 8
    $region5: #{tpu_custom_call.1} parent=1 // pred_fallthru
      _
    // Predicated region
    $region6: #{tpu_custom_call.1} parent=1 // pred_check
      _
    $region7: #{tpu_custom_call.1} parent=1 // pred_check_branch
      %36 = sbr.rel (0) target = $region9
    $region8: #{tpu_custom_call.1} parent=1 // pred_region
      _
    $region9: #{tpu_custom_call.1} parent=1 // pred_fallthru
      _
    // Predicated region
    $region10: #{tpu_custom_call.1} parent=1 // pred_check
      _
    $region11: #{tpu_custom_call.1} parent=1 // pred_check_branch
      %38 = sbr.rel (0) target = $region13
    $region12: #{tpu_custom_call.1} parent=1 // pred_region
      _
    $region13: #{tpu_custom_call.1} parent=1 // pred_fallthru
      _
    // Predicated region
    $region14: #{tpu_custom_call.1} parent=1 // pred_check
      _
    $region15: #{tpu_custom_call.1} parent=1 // pred_check_branch
      %40 = sbr.rel (0) target = $region17
    $region16: #{tpu_custom_call.1} parent=1 // pred_region
      _
    $region17: #{tpu_custom_call.1} parent=1 // pred_fallthru
      _
    // Predicated region
    $region18: #{tpu_custom_call.1} parent=1 // pred_check
      _
    $region19: #{tpu_custom_call.1} parent=1 // pred_check_branch
      %42 = sbr.rel (0) target = $region21
    $region20: #{tpu_custom_call.1} parent=1 // pred_region
      _
    $region21: #{tpu_custom_call.1} parent=1 // pred_fallthru
      _
    // Predicated region
    $region22: #{tpu_custom_call.1} parent=1 // pred_check
      _
    $region23: #{tpu_custom_call.1} parent=1 // pred_check_branch
      %44 = sbr.rel (0) target = $region25
    $region24: #{tpu_custom_call.1} parent=1 // pred_region
      %s46 = ssub.s32 6400, 6400
      %47 = vsyncadd [#allocation7], %s46
      %s48 = sshll.u32 [#allocation6], 4
      %s49 = int_to_ptr.vmem [resolvable:$true] %s48
      %54 = dma.hbm_to_vmem [thread:$0]  %s5, 6400, %s49, [#allocation7], 64, 64, 4
    $region25: #{tpu_custom_call.1} parent=1 // pred_fallthru
      _
    // Predicated region
    $region26: #{tpu_custom_call.1} parent=1 // pred_check
      _
    $region27: #{tpu_custom_call.1} parent=1 // pred_check_branch
      %56 = sbr.rel (0) target = $region29
    $region28: #{tpu_custom_call.1} parent=1 // pred_region
      _
    $region29: #{tpu_custom_call.1} parent=1 // pred_fallthru
      _
    // Predicated region
    $region30: #{tpu_custom_call.1} parent=1 // pred_check
      _
    $region31: #{tpu_custom_call.1} parent=1 // pred_check_branch
      %58 = sbr.rel (0) target = $region33
    $region32: #{tpu_custom_call.1} parent=1 // pred_region
      %s60 = ssub.s32 1280, 1280
      %61 = vsyncadd [#allocation7], %s60
      %s62 = sshll.u32 [#allocation8], 4
      %s63 = int_to_ptr.vmem [resolvable:$true] %s62
      %68 = dma.hbm_to_vmem [thread:$0]  %s7, 1280, %s63, [#allocation7], 128, 128, 8
    $region33: #{tpu_custom_call.1} parent=1 // pred_fallthru
      _
    // Predicated region
    $region34: #{tpu_custom_call.1} parent=1 // pred_check
      _
    $region35: #{tpu_custom_call.1} parent=1 // pred_check_branch
      %70 = sbr.rel (0) target = $region37
    $region36: #{tpu_custom_call.1} parent=1 // pred_region
      %s72 = ssub.s32 1280, 1280
      %73 = vsyncadd [#allocation10], %s72
      %s74 = sshll.u32 [#allocation9], 4
      %s75 = int_to_ptr.vmem [resolvable:$true] %s74
      %80 = dma.hbm_to_vmem [thread:$0]  %s8, 1280, %s75, [#allocation10], 128, 128, 8
    $region37: #{tpu_custom_call.1} parent=1 // pred_fallthru
      _
    // Predicated region
    $region38: #{tpu_custom_call.1} parent=1 // pred_check
      _
    $region39: #{tpu_custom_call.1} parent=1 // pred_check_branch
      %82 = sbr.rel (0) target = $region41
    $region40: #{tpu_custom_call.1} parent=1 // pred_region
      _
    $region41: #{tpu_custom_call.1} parent=1 // pred_fallthru
      _
    // Predicated region
    $region42: #{tpu_custom_call.1} parent=1 // pred_check
      _
    $region43: #{tpu_custom_call.1} parent=1 // pred_check_branch
      %84 = sbr.rel (0) target = $region45
    $region44: #{tpu_custom_call.1} parent=1 // pred_region
      _
    $region45: #{tpu_custom_call.1} parent=1 // pred_fallthru
      _
    // Predicated region
    $region46: #{tpu_custom_call.1} parent=1 // pred_check
      _
    $region47: #{tpu_custom_call.1} parent=1 // pred_check_branch
      %86 = sbr.rel (0) target = $region49
    $region48: #{tpu_custom_call.1} parent=1 // pred_region
      _
    $region49: #{tpu_custom_call.1} parent=1 // pred_fallthru
      _
    // Predicated region
    $region50: #{tpu_custom_call.1} parent=1 // pred_check
      _
    $region51: #{tpu_custom_call.1} parent=1 // pred_check_branch
      %88 = sbr.rel (0) target = $region53
    $region52: #{tpu_custom_call.1} parent=1 // pred_region
      _
    $region53: #{tpu_custom_call.1} parent=1 // pred_fallthru
      _
    // Predicated region
    $region54: #{tpu_custom_call.1} parent=1 // pred_check
      _
    $region55: #{tpu_custom_call.1} parent=1 // pred_check_branch
      %90 = sbr.rel (0) target = $region57
    $region56: #{tpu_custom_call.1} parent=1 // pred_region
      %91 = dma.done [#allocation4], 1024
    $region57: #{tpu_custom_call.1} parent=1 // pred_fallthru
      _
    // Predicated region
    $region58: #{tpu_custom_call.1} parent=1 // pred_check
      _
    $region59: #{tpu_custom_call.1} parent=1 // pred_check_branch
      %93 = sbr.rel (0) target = $region61
    $region60: #{tpu_custom_call.1} parent=1 // pred_region
      %94 = dma.done [#allocation7], 6400
    $region61: #{tpu_custom_call.1} parent=1 // pred_fallthru
      _
    // Predicated region
    $region62: #{tpu_custom_call.1} parent=1 // pred_check
      _
    $region63: #{tpu_custom_call.1} parent=1 // pred_check_branch
      %96 = sbr.rel (0) target = $region65
    $region64: #{tpu_custom_call.1} parent=1 // pred_region
      %97 = dma.done [#allocation7], 1280
    $region65: #{tpu_custom_call.1} parent=1 // pred_fallthru
      _
    // Predicated region
    $region66: #{tpu_custom_call.1} parent=1 // pred_check
      _
    $region67: #{tpu_custom_call.1} parent=1 // pred_check_branch
      %99 = sbr.rel (0) target = $region69
    $region68: #{tpu_custom_call.1} parent=1 // pred_region
      %100 = dma.done [#allocation10], 1280
    $region69: #{tpu_custom_call.1} parent=1 // pred_fallthru
      _
    %s102 = sld [smem:[#allocation2]]
    %v103 = vld [vmem:[#allocation3] sm:$0xff]
    %v104 = vld [vmem:[#allocation3 + $0x8] sm:$0xff]
    %v105 = vld [vmem:[#allocation3 + $0x10] sm:$0xff]
    %v106 = vld [vmem:[#allocation3 + $0x18] sm:$0xff]
    %v107 = vld [vmem:[#allocation3 + $0x20] sm:$0xff]
    %v108 = vld [vmem:[#allocation3 + $0x28] sm:$0xff]
    %v109 = vld [vmem:[#allocation3 + $0x30] sm:$0xff]
    %v110 = vld [vmem:[#allocation3 + $0x38] sm:$0xff]
    %v111 = vld [vmem:[%s1] sm:$0xf]
    %v112 = vld [vmem:[%s1 + $0x4] sm:$0xf]
    %v113 = vld [vmem:[%s1 + $0x8] sm:$0xf]
    %v114 = vld [vmem:[%s1 + $0xc] sm:$0xf]
    %v115 = vld [vmem:[%s1 + $0x10] sm:$0xf]
    %v116 = vld [vmem:[%s1 + $0x14] sm:$0xf]
    %v117 = vld [vmem:[%s1 + $0x18] sm:$0xf]
    %v118 = vld [vmem:[%s1 + $0x1c] sm:$0xf]
    %v119 = vld [vmem:[%s1 + $0x20] sm:$0xf]
    %v120 = vld [vmem:[%s1 + $0x24] sm:$0xf]
    %v121 = vld [vmem:[%s1 + $0x28] sm:$0xf]
    %v122 = vld [vmem:[%s1 + $0x2c] sm:$0xf]
    %v123 = vld [vmem:[%s1 + $0x30] sm:$0xf]
    %v124 = vld [vmem:[%s1 + $0x34] sm:$0xf]
    %v125 = vld [vmem:[%s1 + $0x38] sm:$0xf]
    %v126 = vld [vmem:[%s1 + $0x3c] sm:$0xf]
    %v127 = vld [vmem:[%s1 + $0x40] sm:$0xf]
    %v128 = vld [vmem:[%s1 + $0x44] sm:$0xf]
    %v129 = vld [vmem:[%s1 + $0x48] sm:$0xf]
    %v130 = vld [vmem:[%s1 + $0x4c] sm:$0xf]
    %v131 = vld [vmem:[%s1 + $0x50] sm:$0xf]
    %s132 = scalar_lea.vmem %s1, 84
    %v133 = vld [vmem:[%s132] sm:$0xf]
    %v134 = vld [vmem:[%s132 + $0x4] sm:$0xf]
    %v135 = vld [vmem:[%s132 + $0x8] sm:$0xf]
    %v136 = vld [vmem:[%s132 + $0xc] sm:$0xf]
    %v137 = vld [vmem:[%s132 + $0x10] sm:$0xf]
    %v138 = vld [vmem:[%s132 + $0x14] sm:$0xf]
    %v139 = vld [vmem:[%s132 + $0x18] sm:$0xf]
    %v140 = vld [vmem:[%s132 + $0x1c] sm:$0xf]
    %v141 = vld [vmem:[%s132 + $0x20] sm:$0xf]
    %v142 = vld [vmem:[%s132 + $0x24] sm:$0xf]
    %v143 = vld [vmem:[%s132 + $0x28] sm:$0xf]
    %v144 = vld [vmem:[%s132 + $0x2c] sm:$0xf]
    %v145 = vld [vmem:[%s132 + $0x30] sm:$0xf]
    %v146 = vld [vmem:[%s132 + $0x34] sm:$0xf]
    %v147 = vld [vmem:[%s132 + $0x38] sm:$0xf]
    %v148 = vld [vmem:[%s132 + $0x3c] sm:$0xf]
    %v149 = vld [vmem:[%s132 + $0x40] sm:$0xf]
    %v150 = vld [vmem:[%s132 + $0x44] sm:$0xf]
    %v151 = vld [vmem:[%s132 + $0x48] sm:$0xf]
    %v152 = vld [vmem:[%s132 + $0x4c] sm:$0xf]
    %v153 = vld [vmem:[%s132 + $0x50] sm:$0xf]
    %v175 = vunpack.c.l.b16 %v133
    %v176 = vunpack.c.l.b16 %v134
    %v177 = vunpack.c.l.b16 %v135
    %v178 = vunpack.c.l.b16 %v136
    %v179 = vunpack.c.l.b16 %v137
    %v180 = vunpack.c.l.b16 %v138
    %v181 = vunpack.c.l.b16 %v139
    %v182 = vunpack.c.l.b16 %v140
    %v183 = vunpack.c.l.b16 %v141
    %v184 = vunpack.c.l.b16 %v142
    %v185 = vunpack.c.l.b16 %v143
    %v186 = vunpack.c.l.b16 %v144
    %v187 = vunpack.c.l.b16 %v145
    %v188 = vunpack.c.l.b16 %v146
    %v189 = vunpack.c.l.b16 %v147
    %v190 = vunpack.c.l.b16 %v148
    %v191 = vunpack.c.l.b16 %v149
    %v192 = vunpack.c.l.b16 %v150
    %v193 = vunpack.c.l.b16 %v151
    %v194 = vunpack.c.l.b16 %v152
    %v195 = vunpack.c.l.b16 %v153
    %v196 = vpack.c.b16 %v176, %v175
    %v197 = vpack.c.b16 %v178, %v177
    %v198 = vpack.c.b16 %v180, %v179
    %v199 = vpack.c.b16 %v182, %v181
    %v200 = vpack.c.b16 %v184, %v183
    %v201 = vpack.c.b16 %v186, %v185
    %v202 = vpack.c.b16 %v188, %v187
    %v203 = vpack.c.b16 %v190, %v189
    %v204 = vpack.c.b16 %v192, %v191
    %v205 = vpack.c.b16 %v194, %v193
    %v206 = vpack.c.b16 %v195, %v195
    %v215 = vunpack.c.l.b16 %v103
    %v216 = vunpack.c.h.b16 %v103
    %v217 = vunpack.c.l.b16 %v104
    %v218 = vunpack.c.h.b16 %v104
    %v219 = vunpack.c.l.b16 %v105
    %v220 = vunpack.c.h.b16 %v105
    %v221 = vunpack.c.l.b16 %v106
    %v222 = vunpack.c.h.b16 %v106
    %v223 = vunpack.c.l.b16 %v107
    %v224 = vunpack.c.h.b16 %v107
    %v225 = vunpack.c.l.b16 %v108
    %v226 = vunpack.c.h.b16 %v108
    %v227 = vunpack.c.l.b16 %v109
    %v228 = vunpack.c.h.b16 %v109
    %v229 = vunpack.c.l.b16 %v110
    %v230 = vunpack.c.h.b16 %v110
    %v231 = vpack.c.b16 %v217, %v215
    %v232 = vpack.c.b16 %v218, %v216
    %v233 = vpack.c.b16 %v221, %v219
    %v234 = vpack.c.b16 %v222, %v220
    %v235 = vpack.c.b16 %v225, %v223
    %v236 = vpack.c.b16 %v226, %v224
    %v237 = vpack.c.b16 %v229, %v227
    %v238 = vpack.c.b16 %v230, %v228
    %239 = vrot.lane.b32.xlu0 %v231, 127
    %v240 = vpop.permute.xlu0 %239
    %241 = vrot.lane.b32.xlu0 %v232, 127
    %v242 = vpop.permute.xlu0 %241
    %243 = vrot.lane.b32.xlu0 %v233, 127
    %v244 = vpop.permute.xlu0 %243
    %245 = vrot.lane.b32.xlu0 %v234, 127
    %v246 = vpop.permute.xlu0 %245
    %247 = vrot.lane.b32.xlu0 %v235, 127
    %v248 = vpop.permute.xlu0 %247
    %249 = vrot.lane.b32.xlu0 %v236, 127
    %v250 = vpop.permute.xlu0 %249
    %251 = vrot.lane.b32.xlu0 %v237, 127
    %v252 = vpop.permute.xlu0 %251
    %253 = vrot.lane.b32.xlu0 %v238, 127
    %v254 = vpop.permute.xlu0 %253
    %vm255 = vcmask 1039360
    %v256 = vsel %vm255, %v240, %v242
    %v257 = vsel %vm255, %v244, %v246
    %v258 = vsel %vm255, %v248, %v250
    %v259 = vsel %vm255, %v252, %v254
    %vm268 = vcmask 523264
    %v270 = vsel %vm268, %v196, 0
    %v273 = vsel %vm268, %v197, 0
    %v276 = vsel %vm268, %v198, 0
    %v279 = vsel %vm268, %v199, 0
    %v282 = vsel %vm268, %v200, 0
    %v285 = vsel %vm268, %v201, 0
    %v288 = vsel %vm268, %v202, 0
    %v291 = vsel %vm268, %v203, 0
    %v294 = vsel %vm268, %v204, 0
    %v297 = vsel %vm268, %v205, 0
    %v300 = vsel %vm268, %v206, 0
    %302 = vmatprep.subr.bf16.mxu0 %v242
    %303 = vmatpush1.bf16.msra.mxu0 %v256
    %304 = vmatprep.subr.bf16.mxu0 %v246
    %305 = vmatpush1.bf16.msra.mxu0 %v257
    %306 = vmatprep.subr.bf16.mxu0 %v250
    %307 = vmatpush1.bf16.msra.mxu0 %v258
    %308 = vmatprep.subr.bf16.mxu0 %v254
    %309 = vmatpush1.bf16.msra.mxu0 %v259
    %310 = vmatprep.subr.bf16.mxu0 0
    %311 = vmatpush1.bf16.msra.mxu0 0
    %312 = vmatprep.subr.bf16.mxu0 0
    %313 = vmatpush1.bf16.msra.mxu0 0
    %314 = vmatprep.subr.bf16.mxu0 0
    %315 = vmatpush1.bf16.msra.mxu0 0
    %316 = vmatprep.subr.bf16.mxu0 0
    %317 = vmatpush1.bf16.msra.mxu0 0
    %318 = vmatprep.subr.bf16.mxu0 0
    %319 = vmatpush1.bf16.msra.mxu0 0
    %320 = vmatprep.subr.bf16.mxu0 0
    %321 = vmatpush1.bf16.msra.mxu0 0
    %322 = vmatprep.subr.bf16.mxu0 0
    %323 = vmatpush1.bf16.msra.mxu0 0
    %324 = vmatprep.subr.bf16.mxu0 0
    %325 = vmatpush1.bf16.msra.mxu0 0
    %326 = vmatprep.subr.bf16.mxu0 0
    %327 = vmatpush1.bf16.msra.mxu0 0
    %328 = vmatprep.subr.bf16.mxu0 0
    %329 = vmatpush1.bf16.msra.mxu0 0
    %330 = vmatprep.subr.bf16.mxu0 0
    %331 = vmatpush1.bf16.msra.mxu0 0
    %332 = vmatprep.subr.bf16.mxu0 0
    %333 = vmatpush1.bf16.msra.mxu0 0
    %334 = vmatprep.mubr.bf16.mxu0 0
    %335 = vmatmul.mubr.bf16.gmra.mrb[0].mxu0 %v270
    %v336 = vpop.f32.mrb[0].mxu0
    %v337 = vadd.f32 0.0, %v336
    %v338 = vpop.f32.mrb[0].mxu0
    %v339 = vadd.f32 0.0, %v338
    %v340 = vpop.f32.mrb[0].mxu0
    %v341 = vadd.f32 0.0, %v340
    %v342 = vpop.f32.mrb[0].mxu0
    %v343 = vadd.f32 0.0, %v342
    %344 = vmatprep.mubr.bf16.mxu0 0
    %345 = vmatmul.mubr.bf16.gmra.mrb[0].mxu0 %v273
    %v346 = vpop.f32.mrb[0].mxu0
    %v347 = vadd.f32 0.0, %v346
    %v348 = vpop.f32.mrb[0].mxu0
    %v349 = vadd.f32 0.0, %v348
    %v350 = vpop.f32.mrb[0].mxu0
    %v351 = vadd.f32 0.0, %v350
    %v352 = vpop.f32.mrb[0].mxu0
    %v353 = vadd.f32 0.0, %v352
    %354 = vmatprep.mubr.bf16.mxu0 0
    %355 = vmatmul.mubr.bf16.gmra.mrb[0].mxu0 %v276
    %v356 = vpop.f32.mrb[0].mxu0
    %v357 = vadd.f32 0.0, %v356
    %v358 = vpop.f32.mrb[0].mxu0
    %v359 = vadd.f32 0.0, %v358
    %v360 = vpop.f32.mrb[0].mxu0
    %v361 = vadd.f32 0.0, %v360
    %v362 = vpop.f32.mrb[0].mxu0
    %v363 = vadd.f32 0.0, %v362
    %364 = vmatprep.mubr.bf16.mxu0 0
    %365 = vmatmul.mubr.bf16.gmra.mrb[0].mxu0 %v279
    %v366 = vpop.f32.mrb[0].mxu0
    %v367 = vadd.f32 0.0, %v366
    %v368 = vpop.f32.mrb[0].mxu0
    %v369 = vadd.f32 0.0, %v368
    %v370 = vpop.f32.mrb[0].mxu0
    %v371 = vadd.f32 0.0, %v370
    %v372 = vpop.f32.mrb[0].mxu0
    %v373 = vadd.f32 0.0, %v372
    %374 = vmatprep.mubr.bf16.mxu0 0
    %375 = vmatmul.mubr.bf16.gmra.mrb[0].mxu0 %v282
    %v376 = vpop.f32.mrb[0].mxu0
    %v377 = vadd.f32 0.0, %v376
    %v378 = vpop.f32.mrb[0].mxu0
    %v379 = vadd.f32 0.0, %v378
    %v380 = vpop.f32.mrb[0].mxu0
    %v381 = vadd.f32 0.0, %v380
    %v382 = vpop.f32.mrb[0].mxu0
    %v383 = vadd.f32 0.0, %v382
    %384 = vmatprep.mubr.bf16.mxu0 0
    %385 = vmatmul.mubr.bf16.gmra.mrb[0].mxu0 %v285
    %v386 = vpop.f32.mrb[0].mxu0
    %v387 = vadd.f32 0.0, %v386
    %v388 = vpop.f32.mrb[0].mxu0
    %v389 = vadd.f32 0.0, %v388
    %v390 = vpop.f32.mrb[0].mxu0
    %v391 = vadd.f32 0.0, %v390
    %v392 = vpop.f32.mrb[0].mxu0
    %v393 = vadd.f32 0.0, %v392
    %394 = vmatprep.mubr.bf16.mxu0 0
    %395 = vmatmul.mubr.bf16.gmra.mrb[0].mxu0 %v288
    %v396 = vpop.f32.mrb[0].mxu0
    %v397 = vadd.f32 0.0, %v396
    %v398 = vpop.f32.mrb[0].mxu0
    %v399 = vadd.f32 0.0, %v398
    %v400 = vpop.f32.mrb[0].mxu0
    %v401 = vadd.f32 0.0, %v400
    %v402 = vpop.f32.mrb[0].mxu0
    %v403 = vadd.f32 0.0, %v402
    %404 = vmatprep.mubr.bf16.mxu0 0
    %405 = vmatmul.mubr.bf16.gmra.mrb[0].mxu0 %v291
    %v406 = vpop.f32.mrb[0].mxu0
    %v407 = vadd.f32 0.0, %v406
    %v408 = vpop.f32.mrb[0].mxu0
    %v409 = vadd.f32 0.0, %v408
    %v410 = vpop.f32.mrb[0].mxu0
    %v411 = vadd.f32 0.0, %v410
    %v412 = vpop.f32.mrb[0].mxu0
    %v413 = vadd.f32 0.0, %v412
    %414 = vmatprep.mubr.bf16.mxu0 0
    %415 = vmatmul.mubr.bf16.gmra.mrb[0].mxu0 %v294
    %v416 = vpop.f32.mrb[0].mxu0
    %v417 = vadd.f32 0.0, %v416
    %v418 = vpop.f32.mrb[0].mxu0
    %v419 = vadd.f32 0.0, %v418
    %v420 = vpop.f32.mrb[0].mxu0
    %v421 = vadd.f32 0.0, %v420
    %v422 = vpop.f32.mrb[0].mxu0
    %v423 = vadd.f32 0.0, %v422
    %424 = vmatprep.mubr.bf16.mxu0 0
    %425 = vmatmul.mubr.bf16.gmra.mrb[0].mxu0 %v297
    %v426 = vpop.f32.mrb[0].mxu0
    %v427 = vadd.f32 0.0, %v426
    %v428 = vpop.f32.mrb[0].mxu0
    %v429 = vadd.f32 0.0, %v428
    %v430 = vpop.f32.mrb[0].mxu0
    %v431 = vadd.f32 0.0, %v430
    %v432 = vpop.f32.mrb[0].mxu0
    %v433 = vadd.f32 0.0, %v432
    %434 = vmatprep.mubr.bf16.mxu0 0
    %435 = vmatmul.mubr.bf16.gmra.mrb[0].mxu0 %v300
    %v436 = vpop.f32.mrb[0].mxu0
    %v437 = vadd.f32 0.0, %v436
    %v438 = vpop.f32.mrb[0].mxu0
    %v439 = vadd.f32 0.0, %v438
    %v440 = vpop.f32.mrb[0].mxu0
    %v441 = vpop.f32.mrb[0].mxu0
    %442 = vdwg.mxu0
    %v464 = vunpack.c.l.b16 %v111
    %v465 = vunpack.c.l.b16 %v112
    %v466 = vunpack.c.l.b16 %v113
    %v467 = vunpack.c.l.b16 %v114
    %v468 = vunpack.c.l.b16 %v115
    %v469 = vunpack.c.l.b16 %v116
    %v470 = vunpack.c.l.b16 %v117
    %v471 = vunpack.c.l.b16 %v118
    %v472 = vunpack.c.l.b16 %v119
    %v473 = vunpack.c.l.b16 %v120
    %v474 = vunpack.c.l.b16 %v121
    %v475 = vunpack.c.l.b16 %v122
    %v476 = vunpack.c.l.b16 %v123
    %v477 = vunpack.c.l.b16 %v124
    %v478 = vunpack.c.l.b16 %v125
    %v479 = vunpack.c.l.b16 %v126
    %v480 = vunpack.c.l.b16 %v127
    %v481 = vunpack.c.l.b16 %v128
    %v482 = vunpack.c.l.b16 %v129
    %v483 = vunpack.c.l.b16 %v130
    %v484 = vunpack.c.l.b16 %v131
    %v485 = vpack.c.b16 %v465, %v464
    %v486 = vpack.c.b16 %v467, %v466
    %v487 = vpack.c.b16 %v469, %v468
    %v488 = vpack.c.b16 %v471, %v470
    %v489 = vpack.c.b16 %v473, %v472
    %v490 = vpack.c.b16 %v475, %v474
    %v491 = vpack.c.b16 %v477, %v476
    %v492 = vpack.c.b16 %v479, %v478
    %v493 = vpack.c.b16 %v481, %v480
    %v494 = vpack.c.b16 %v483, %v482
    %v495 = vpack.c.b16 %v484, %v484
    %v505 = vsel %vm268, %v485, 0
    %v508 = vsel %vm268, %v486, 0
    %v511 = vsel %vm268, %v487, 0
    %v514 = vsel %vm268, %v488, 0
    %v517 = vsel %vm268, %v489, 0
    %v520 = vsel %vm268, %v490, 0
    %v523 = vsel %vm268, %v491, 0
    %v526 = vsel %vm268, %v492, 0
    %v529 = vsel %vm268, %v493, 0
    %v532 = vsel %vm268, %v494, 0
    %v535 = vsel %vm268, %v495, 0
    %537 = vmatprep.subr.bf16.mxu0 %v232
    %538 = vmatpush1.bf16.msra.mxu0 %v231
    %539 = vmatprep.subr.bf16.mxu0 %v234
    %540 = vmatpush1.bf16.msra.mxu0 %v233
    %541 = vmatprep.subr.bf16.mxu0 %v236
    %542 = vmatpush1.bf16.msra.mxu0 %v235
    %543 = vmatprep.subr.bf16.mxu0 %v238
    %544 = vmatpush1.bf16.msra.mxu0 %v237
    %545 = vmatprep.subr.bf16.mxu0 0
    %546 = vmatpush1.bf16.msra.mxu0 0
    %547 = vmatprep.subr.bf16.mxu0 0
    %548 = vmatpush1.bf16.msra.mxu0 0
    %549 = vmatprep.subr.bf16.mxu0 0
    %550 = vmatpush1.bf16.msra.mxu0 0
    %551 = vmatprep.subr.bf16.mxu0 0
    %552 = vmatpush1.bf16.msra.mxu0 0
    %553 = vmatprep.subr.bf16.mxu0 0
    %554 = vmatpush1.bf16.msra.mxu0 0
    %555 = vmatprep.subr.bf16.mxu0 0
    %556 = vmatpush1.bf16.msra.mxu0 0
    %557 = vmatprep.subr.bf16.mxu0 0
    %558 = vmatpush1.bf16.msra.mxu0 0
    %559 = vmatprep.subr.bf16.mxu0 0
    %560 = vmatpush1.bf16.msra.mxu0 0
    %561 = vmatprep.subr.bf16.mxu0 0
    %562 = vmatpush1.bf16.msra.mxu0 0
    %563 = vmatprep.subr.bf16.mxu0 0
    %564 = vmatpush1.bf16.msra.mxu0 0
    %565 = vmatprep.subr.bf16.mxu0 0
    %566 = vmatpush1.bf16.msra.mxu0 0
    %567 = vmatprep.subr.bf16.mxu0 0
    %568 = vmatpush1.bf16.msra.mxu0 0
    %569 = vmatprep.mubr.bf16.mxu0 0
    %570 = vmatmul.mubr.bf16.gmra.mrb[0].mxu0 %v505
    %v571 = vpop.f32.mrb[0].mxu0
    %v572 = vadd.f32 %v337, %v571
    %v573 = vpop.f32.mrb[0].mxu0
    %v574 = vadd.f32 %v339, %v573
    %v575 = vpop.f32.mrb[0].mxu0
    %v576 = vadd.f32 %v341, %v575
    %v577 = vpop.f32.mrb[0].mxu0
    %v578 = vadd.f32 %v343, %v577
    %579 = vmatprep.mubr.bf16.mxu0 0
    %580 = vmatmul.mubr.bf16.gmra.mrb[0].mxu0 %v508
    %v581 = vpop.f32.mrb[0].mxu0
    %v582 = vadd.f32 %v347, %v581
    %v583 = vpop.f32.mrb[0].mxu0
    %v584 = vadd.f32 %v349, %v583
    %v585 = vpop.f32.mrb[0].mxu0
    %v586 = vadd.f32 %v351, %v585
    %v587 = vpop.f32.mrb[0].mxu0
    %v588 = vadd.f32 %v353, %v587
    %589 = vmatprep.mubr.bf16.mxu0 0
    %590 = vmatmul.mubr.bf16.gmra.mrb[0].mxu0 %v511
    %v591 = vpop.f32.mrb[0].mxu0
    %v592 = vadd.f32 %v357, %v591
    %v593 = vpop.f32.mrb[0].mxu0
    %v594 = vadd.f32 %v359, %v593
    %v595 = vpop.f32.mrb[0].mxu0
    %v596 = vadd.f32 %v361, %v595
    %v597 = vpop.f32.mrb[0].mxu0
    %v598 = vadd.f32 %v363, %v597
    %599 = vmatprep.mubr.bf16.mxu0 0
    %600 = vmatmul.mubr.bf16.gmra.mrb[0].mxu0 %v514
    %v601 = vpop.f32.mrb[0].mxu0
    %v602 = vadd.f32 %v367, %v601
    %v603 = vpop.f32.mrb[0].mxu0
    %v604 = vadd.f32 %v369, %v603
    %v605 = vpop.f32.mrb[0].mxu0
    %v606 = vadd.f32 %v371, %v605
    %v607 = vpop.f32.mrb[0].mxu0
    %v608 = vadd.f32 %v373, %v607
    %609 = vmatprep.mubr.bf16.mxu0 0
    %610 = vmatmul.mubr.bf16.gmra.mrb[0].mxu0 %v517
    %v611 = vpop.f32.mrb[0].mxu0
    %v612 = vadd.f32 %v377, %v611
    %v613 = vpop.f32.mrb[0].mxu0
    %v614 = vadd.f32 %v379, %v613
    %v615 = vpop.f32.mrb[0].mxu0
    %v616 = vadd.f32 %v381, %v615
    %v617 = vpop.f32.mrb[0].mxu0
    %v618 = vadd.f32 %v383, %v617
    %619 = vmatprep.mubr.bf16.mxu0 0
    %620 = vmatmul.mubr.bf16.gmra.mrb[0].mxu0 %v520
    %v621 = vpop.f32.mrb[0].mxu0
    %v622 = vadd.f32 %v387, %v621
    %v623 = vpop.f32.mrb[0].mxu0
    %v624 = vadd.f32 %v389, %v623
    %v625 = vpop.f32.mrb[0].mxu0
    %v626 = vadd.f32 %v391, %v625
    %v627 = vpop.f32.mrb[0].mxu0
    %v628 = vadd.f32 %v393, %v627
    %629 = vmatprep.mubr.bf16.mxu0 0
    %630 = vmatmul.mubr.bf16.gmra.mrb[0].mxu0 %v523
    %v631 = vpop.f32.mrb[0].mxu0
    %v632 = vadd.f32 %v397, %v631
    %v633 = vpop.f32.mrb[0].mxu0
    %v634 = vadd.f32 %v399, %v633
    %v635 = vpop.f32.mrb[0].mxu0
    %v636 = vadd.f32 %v401, %v635
    %v637 = vpop.f32.mrb[0].mxu0
    %v638 = vadd.f32 %v403, %v637
    %639 = vmatprep.mubr.bf16.mxu0 0
    %640 = vmatmul.mubr.bf16.gmra.mrb[0].mxu0 %v526
    %v641 = vpop.f32.mrb[0].mxu0
    %v642 = vadd.f32 %v407, %v641
    %v643 = vpop.f32.mrb[0].mxu0
    %v644 = vadd.f32 %v409, %v643
    %v645 = vpop.f32.mrb[0].mxu0
    %v646 = vadd.f32 %v411, %v645
    %v647 = vpop.f32.mrb[0].mxu0
    %v648 = vadd.f32 %v413, %v647
    %649 = vmatprep.mubr.bf16.mxu0 0
    %650 = vmatmul.mubr.bf16.gmra.mrb[0].mxu0 %v529
    %v651 = vpop.f32.mrb[0].mxu0
    %v652 = vadd.f32 %v417, %v651
    %v653 = vpop.f32.mrb[0].mxu0
    %v654 = vadd.f32 %v419, %v653
    %v655 = vpop.f32.mrb[0].mxu0
    %v656 = vadd.f32 %v421, %v655
    %v657 = vpop.f32.mrb[0].mxu0
    %v658 = vadd.f32 %v423, %v657
    %659 = vmatprep.mubr.bf16.mxu0 0
    %660 = vmatmul.mubr.bf16.gmra.mrb[0].mxu0 %v532
    %v661 = vpop.f32.mrb[0].mxu0
    %v662 = vadd.f32 %v427, %v661
    %v663 = vpop.f32.mrb[0].mxu0
    %v664 = vadd.f32 %v429, %v663
    %v665 = vpop.f32.mrb[0].mxu0
    %v666 = vadd.f32 %v431, %v665
    %v667 = vpop.f32.mrb[0].mxu0
    %v668 = vadd.f32 %v433, %v667
    %669 = vmatprep.mubr.bf16.mxu0 0
    %670 = vmatmul.mubr.bf16.gmra.mrb[0].mxu0 %v535
    %v671 = vpop.f32.mrb[0].mxu0
    %v672 = vadd.f32 %v437, %v671
    %v673 = vpop.f32.mrb[0].mxu0
    %v674 = vadd.f32 %v439, %v673
    %v675 = vpop.f32.mrb[0].mxu0
    %v676 = vpop.f32.mrb[0].mxu0
    %677 = vdwg.mxu0
    %s678 = scalar_lea.vmem %s1, 168
    %v679 = vld [vmem:[%s678] sm:$0xf]
    %v680 = vld [vmem:[%s678 + $0x4] sm:$0xf]
    %v681 = vld [vmem:[%s678 + $0x8] sm:$0xf]
    %v682 = vld [vmem:[%s678 + $0xc] sm:$0xf]
    %v683 = vld [vmem:[%s678 + $0x10] sm:$0xf]
    %v684 = vld [vmem:[%s678 + $0x14] sm:$0xf]
    %v685 = vld [vmem:[%s678 + $0x18] sm:$0xf]
    %v686 = vld [vmem:[%s678 + $0x1c] sm:$0xf]
    %v687 = vld [vmem:[%s678 + $0x20] sm:$0xf]
    %v688 = vld [vmem:[%s678 + $0x24] sm:$0xf]
    %v689 = vld [vmem:[%s678 + $0x28] sm:$0xf]
    %v690 = vld [vmem:[%s678 + $0x2c] sm:$0xf]
    %v691 = vld [vmem:[%s678 + $0x30] sm:$0xf]
    %v692 = vld [vmem:[%s678 + $0x34] sm:$0xf]
    %v693 = vld [vmem:[%s678 + $0x38] sm:$0xf]
    %v694 = vld [vmem:[%s678 + $0x3c] sm:$0xf]
    %v695 = vld [vmem:[%s678 + $0x40] sm:$0xf]
    %v696 = vld [vmem:[%s678 + $0x44] sm:$0xf]
    %v697 = vld [vmem:[%s678 + $0x48] sm:$0xf]
    %v698 = vld [vmem:[%s678 + $0x4c] sm:$0xf]
    %v699 = vld [vmem:[%s678 + $0x50] sm:$0xf]
    %v721 = vunpack.c.l.b16 %v679
    %v722 = vunpack.c.l.b16 %v680
    %v723 = vunpack.c.l.b16 %v681
    %v724 = vunpack.c.l.b16 %v682
    %v725 = vunpack.c.l.b16 %v683
    %v726 = vunpack.c.l.b16 %v684
    %v727 = vunpack.c.l.b16 %v685
    %v728 = vunpack.c.l.b16 %v686
    %v729 = vunpack.c.l.b16 %v687
    %v730 = vunpack.c.l.b16 %v688
    %v731 = vunpack.c.l.b16 %v689
    %v732 = vunpack.c.l.b16 %v690
    %v733 = vunpack.c.l.b16 %v691
    %v734 = vunpack.c.l.b16 %v692
    %v735 = vunpack.c.l.b16 %v693
    %v736 = vunpack.c.l.b16 %v694
    %v737 = vunpack.c.l.b16 %v695
    %v738 = vunpack.c.l.b16 %v696
    %v739 = vunpack.c.l.b16 %v697
    %v740 = vunpack.c.l.b16 %v698
    %v741 = vunpack.c.l.b16 %v699
    %v742 = vpack.c.b16 %v722, %v721
    %v743 = vpack.c.b16 %v724, %v723
    %v744 = vpack.c.b16 %v726, %v725
    %v745 = vpack.c.b16 %v728, %v727
    %v746 = vpack.c.b16 %v730, %v729
    %v747 = vpack.c.b16 %v732, %v731
    %v748 = vpack.c.b16 %v734, %v733
    %v749 = vpack.c.b16 %v736, %v735
    %v750 = vpack.c.b16 %v738, %v737
    %v751 = vpack.c.b16 %v740, %v739
    %v752 = vpack.c.b16 %v741, %v741
    %753 = vrot.lane.b32.xlu0 %v231, 126
    %v754 = vpop.permute.xlu0 %753
    %755 = vrot.lane.b32.xlu0 %v232, 126
    %v756 = vpop.permute.xlu0 %755
    %757 = vrot.lane.b32.xlu0 %v233, 126
    %v758 = vpop.permute.xlu0 %757
    %759 = vrot.lane.b32.xlu0 %v234, 126
    %v760 = vpop.permute.xlu0 %759
    %761 = vrot.lane.b32.xlu0 %v235, 126
    %v762 = vpop.permute.xlu0 %761
    %763 = vrot.lane.b32.xlu0 %v236, 126
    %v764 = vpop.permute.xlu0 %763
    %765 = vrot.lane.b32.xlu0 %v237, 126
    %v766 = vpop.permute.xlu0 %765
    %767 = vrot.lane.b32.xlu0 %v238, 126
    %v768 = vpop.permute.xlu0 %767
    %vm769 = vcmask 1031168
    %v770 = vsel %vm769, %v754, %v756
    %v771 = vsel %vm769, %v758, %v760
    %v772 = vsel %vm769, %v762, %v764
    %v773 = vsel %vm769, %v766, %v768
    %v783 = vsel %vm268, %v742, 0
    %v786 = vsel %vm268, %v743, 0
    %v789 = vsel %vm268, %v744, 0
    %v792 = vsel %vm268, %v745, 0
    %v795 = vsel %vm268, %v746, 0
    %v798 = vsel %vm268, %v747, 0
    %v801 = vsel %vm268, %v748, 0
    %v804 = vsel %vm268, %v749, 0
    %v807 = vsel %vm268, %v750, 0
    %v810 = vsel %vm268, %v751, 0
    %v813 = vsel %vm268, %v752, 0
    %815 = vmatprep.subr.bf16.mxu0 %v756
    %816 = vmatpush1.bf16.msra.mxu0 %v770
    %817 = vmatprep.subr.bf16.mxu0 %v760
    %818 = vmatpush1.bf16.msra.mxu0 %v771
    %819 = vmatprep.subr.bf16.mxu0 %v764
    %820 = vmatpush1.bf16.msra.mxu0 %v772
    %821 = vmatprep.subr.bf16.mxu0 %v768
    %822 = vmatpush1.bf16.msra.mxu0 %v773
    %823 = vmatprep.subr.bf16.mxu0 0
    %824 = vmatpush1.bf16.msra.mxu0 0
    %825 = vmatprep.subr.bf16.mxu0 0
    %826 = vmatpush1.bf16.msra.mxu0 0
    %827 = vmatprep.subr.bf16.mxu0 0
    %828 = vmatpush1.bf16.msra.mxu0 0
    %829 = vmatprep.subr.bf16.mxu0 0
    %830 = vmatpush1.bf16.msra.mxu0 0
    %831 = vmatprep.subr.bf16.mxu0 0
    %832 = vmatpush1.bf16.msra.mxu0 0
    %833 = vmatprep.subr.bf16.mxu0 0
    %834 = vmatpush1.bf16.msra.mxu0 0
    %835 = vmatprep.subr.bf16.mxu0 0
    %836 = vmatpush1.bf16.msra.mxu0 0
    %837 = vmatprep.subr.bf16.mxu0 0
    %838 = vmatpush1.bf16.msra.mxu0 0
    %839 = vmatprep.subr.bf16.mxu0 0
    %840 = vmatpush1.bf16.msra.mxu0 0
    %841 = vmatprep.subr.bf16.mxu0 0
    %842 = vmatpush1.bf16.msra.mxu0 0
    %843 = vmatprep.subr.bf16.mxu0 0
    %844 = vmatpush1.bf16.msra.mxu0 0
    %845 = vmatprep.subr.bf16.mxu0 0
    %846 = vmatpush1.bf16.msra.mxu0 0
    %847 = vmatprep.mubr.bf16.mxu0 0
    %848 = vmatmul.mubr.bf16.gmra.mrb[0].mxu0 %v783
    %v849 = vpop.f32.mrb[0].mxu0
    %v850 = vadd.f32 0.0, %v849
    %v851 = vpop.f32.mrb[0].mxu0
    %v852 = vadd.f32 0.0, %v851
    %v853 = vpop.f32.mrb[0].mxu0
    %v854 = vadd.f32 0.0, %v853
    %v855 = vpop.f32.mrb[0].mxu0
    %v856 = vadd.f32 0.0, %v855
    %857 = vmatprep.mubr.bf16.mxu0 0
    %858 = vmatmul.mubr.bf16.gmra.mrb[0].mxu0 %v786
    %v859 = vpop.f32.mrb[0].mxu0
    %v860 = vadd.f32 0.0, %v859
    %v861 = vpop.f32.mrb[0].mxu0
    %v862 = vadd.f32 0.0, %v861
    %v863 = vpop.f32.mrb[0].mxu0
    %v864 = vadd.f32 0.0, %v863
    %v865 = vpop.f32.mrb[0].mxu0
    %v866 = vadd.f32 0.0, %v865
    %867 = vmatprep.mubr.bf16.mxu0 0
    %868 = vmatmul.mubr.bf16.gmra.mrb[0].mxu0 %v789
    %v869 = vpop.f32.mrb[0].mxu0
    %v870 = vadd.f32 0.0, %v869
    %v871 = vpop.f32.mrb[0].mxu0
    %v872 = vadd.f32 0.0, %v871
    %v873 = vpop.f32.mrb[0].mxu0
    %v874 = vadd.f32 0.0, %v873
    %v875 = vpop.f32.mrb[0].mxu0
    %v876 = vadd.f32 0.0, %v875
    %877 = vmatprep.mubr.bf16.mxu0 0
    %878 = vmatmul.mubr.bf16.gmra.mrb[0].mxu0 %v792
    %v879 = vpop.f32.mrb[0].mxu0
    %v880 = vadd.f32 0.0, %v879
    %v881 = vpop.f32.mrb[0].mxu0
    %v882 = vadd.f32 0.0, %v881
    %v883 = vpop.f32.mrb[0].mxu0
    %v884 = vadd.f32 0.0, %v883
    %v885 = vpop.f32.mrb[0].mxu0
    %v886 = vadd.f32 0.0, %v885
    %887 = vmatprep.mubr.bf16.mxu0 0
    %888 = vmatmul.mubr.bf16.gmra.mrb[0].mxu0 %v795
    %v889 = vpop.f32.mrb[0].mxu0
    %v890 = vadd.f32 0.0, %v889
    %v891 = vpop.f32.mrb[0].mxu0
    %v892 = vadd.f32 0.0, %v891
    %v893 = vpop.f32.mrb[0].mxu0
    %v894 = vadd.f32 0.0, %v893
    %v895 = vpop.f32.mrb[0].mxu0
    %v896 = vadd.f32 0.0, %v895
    %897 = vmatprep.mubr.bf16.mxu0 0
    %898 = vmatmul.mubr.bf16.gmra.mrb[0].mxu0 %v798
    %v899 = vpop.f32.mrb[0].mxu0
    %v900 = vadd.f32 0.0, %v899
    %v901 = vpop.f32.mrb[0].mxu0
    %v902 = vadd.f32 0.0, %v901
    %v903 = vpop.f32.mrb[0].mxu0
    %v904 = vadd.f32 0.0, %v903
    %v905 = vpop.f32.mrb[0].mxu0
    %v906 = vadd.f32 0.0, %v905
    %907 = vmatprep.mubr.bf16.mxu0 0
    %908 = vmatmul.mubr.bf16.gmra.mrb[0].mxu0 %v801
    %v909 = vpop.f32.mrb[0].mxu0
    %v910 = vadd.f32 0.0, %v909
    %v911 = vpop.f32.mrb[0].mxu0
    %v912 = vadd.f32 0.0, %v911
    %v913 = vpop.f32.mrb[0].mxu0
    %v914 = vadd.f32 0.0, %v913
    %v915 = vpop.f32.mrb[0].mxu0
    %v916 = vadd.f32 0.0, %v915
    %917 = vmatprep.mubr.bf16.mxu0 0
    %918 = vmatmul.mubr.bf16.gmra.mrb[0].mxu0 %v804
    %v919 = vpop.f32.mrb[0].mxu0
    %v920 = vadd.f32 0.0, %v919
    %v921 = vpop.f32.mrb[0].mxu0
    %v922 = vadd.f32 0.0, %v921
    %v923 = vpop.f32.mrb[0].mxu0
    %v924 = vadd.f32 0.0, %v923
    %v925 = vpop.f32.mrb[0].mxu0
    %v926 = vadd.f32 0.0, %v925
    %927 = vmatprep.mubr.bf16.mxu0 0
    %928 = vmatmul.mubr.bf16.gmra.mrb[0].mxu0 %v807
    %v929 = vpop.f32.mrb[0].mxu0
    %v930 = vadd.f32 0.0, %v929
    %v931 = vpop.f32.mrb[0].mxu0
    %v932 = vadd.f32 0.0, %v931
    %v933 = vpop.f32.mrb[0].mxu0
    %v934 = vadd.f32 0.0, %v933
    %v935 = vpop.f32.mrb[0].mxu0
    %v936 = vadd.f32 0.0, %v935
    %937 = vmatprep.mubr.bf16.mxu0 0
    %938 = vmatmul.mubr.bf16.gmra.mrb[0].mxu0 %v810
    %v939 = vpop.f32.mrb[0].mxu0
    %v940 = vadd.f32 0.0, %v939
    %v941 = vpop.f32.mrb[0].mxu0
    %v942 = vadd.f32 0.0, %v941
    %v943 = vpop.f32.mrb[0].mxu0
    %v944 = vadd.f32 0.0, %v943
    %v945 = vpop.f32.mrb[0].mxu0
    %v946 = vadd.f32 0.0, %v945
    %947 = vmatprep.mubr.bf16.mxu0 0
    %948 = vmatmul.mubr.bf16.gmra.mrb[0].mxu0 %v813
    %v949 = vpop.f32.mrb[0].mxu0
    %v950 = vadd.f32 0.0, %v949
    %v951 = vpop.f32.mrb[0].mxu0
    %v952 = vadd.f32 0.0, %v951
    %v953 = vpop.f32.mrb[0].mxu0
    %v954 = vpop.f32.mrb[0].mxu0
    %955 = vdwg.mxu0
    %v956 = vadd.f32 %v572, %v850
    %v957 = vadd.f32 %v574, %v852
    %v958 = vadd.f32 %v576, %v854
    %v959 = vadd.f32 %v578, %v856
    %v960 = vadd.f32 %v582, %v860
    %v961 = vadd.f32 %v584, %v862
    %v962 = vadd.f32 %v586, %v864
    %v963 = vadd.f32 %v588, %v866
    %v964 = vadd.f32 %v592, %v870
    %v965 = vadd.f32 %v594, %v872
    %v966 = vadd.f32 %v596, %v874
    %v967 = vadd.f32 %v598, %v876
    %v968 = vadd.f32 %v602, %v880
    %v969 = vadd.f32 %v604, %v882
    %v970 = vadd.f32 %v606, %v884
    %v971 = vadd.f32 %v608, %v886
    %v972 = vadd.f32 %v612, %v890
    %v973 = vadd.f32 %v614, %v892
    %v974 = vadd.f32 %v616, %v894
    %v975 = vadd.f32 %v618, %v896
    %v976 = vadd.f32 %v622, %v900
    %v977 = vadd.f32 %v624, %v902
    %v978 = vadd.f32 %v626, %v904
    %v979 = vadd.f32 %v628, %v906
    %v980 = vadd.f32 %v632, %v910
    %v981 = vadd.f32 %v634, %v912
    %v982 = vadd.f32 %v636, %v914
    %v983 = vadd.f32 %v638, %v916
    %v984 = vadd.f32 %v642, %v920
    %v985 = vadd.f32 %v644, %v922
    %v986 = vadd.f32 %v646, %v924
    %v987 = vadd.f32 %v648, %v926
    %v988 = vadd.f32 %v652, %v930
    %v989 = vadd.f32 %v654, %v932
    %v990 = vadd.f32 %v656, %v934
    %v991 = vadd.f32 %v658, %v936
    %v992 = vadd.f32 %v662, %v940
    %v993 = vadd.f32 %v664, %v942
    %v994 = vadd.f32 %v666, %v944
    %v995 = vadd.f32 %v668, %v946
    %v996 = vadd.f32 %v672, %v950
    %v997 = vadd.f32 %v674, %v952
    %s998 = scalar_lea.vmem %s1, 252
    %v999 = vld [vmem:[%s998] sm:$0xf]
    %v1000 = vld [vmem:[%s998 + $0x4] sm:$0xf]
    %v1001 = vld [vmem:[%s998 + $0x8] sm:$0xf]
    %v1002 = vld [vmem:[%s998 + $0xc] sm:$0xf]
    %v1003 = vld [vmem:[%s998 + $0x10] sm:$0xf]
    %v1004 = vld [vmem:[%s998 + $0x14] sm:$0xf]
    %v1005 = vld [vmem:[%s998 + $0x18] sm:$0xf]
    %v1006 = vld [vmem:[%s998 + $0x1c] sm:$0xf]
    %v1007 = vld [vmem:[%s998 + $0x20] sm:$0xf]
    %v1008 = vld [vmem:[%s998 + $0x24] sm:$0xf]
    %v1009 = vld [vmem:[%s998 + $0x28] sm:$0xf]
    %v1010 = vld [vmem:[%s998 + $0x2c] sm:$0xf]
    %v1011 = vld [vmem:[%s998 + $0x30] sm:$0xf]
    %v1012 = vld [vmem:[%s998 + $0x34] sm:$0xf]
    %v1013 = vld [vmem:[%s998 + $0x38] sm:$0xf]
    %v1014 = vld [vmem:[%s998 + $0x3c] sm:$0xf]
    %v1015 = vld [vmem:[%s998 + $0x40] sm:$0xf]
    %v1016 = vld [vmem:[%s998 + $0x44] sm:$0xf]
    %v1017 = vld [vmem:[%s998 + $0x48] sm:$0xf]
    %v1018 = vld [vmem:[%s998 + $0x4c] sm:$0xf]
    %v1019 = vld [vmem:[%s998 + $0x50] sm:$0xf]
    %v1041 = vunpack.c.l.b16 %v999
    %v1042 = vunpack.c.l.b16 %v1000
    %v1043 = vunpack.c.l.b16 %v1001
    %v1044 = vunpack.c.l.b16 %v1002
    %v1045 = vunpack.c.l.b16 %v1003
    %v1046 = vunpack.c.l.b16 %v1004
    %v1047 = vunpack.c.l.b16 %v1005
    %v1048 = vunpack.c.l.b16 %v1006
    %v1049 = vunpack.c.l.b16 %v1007
    %v1050 = vunpack.c.l.b16 %v1008
    %v1051 = vunpack.c.l.b16 %v1009
    %v1052 = vunpack.c.l.b16 %v1010
    %v1053 = vunpack.c.l.b16 %v1011
    %v1054 = vunpack.c.l.b16 %v1012
    %v1055 = vunpack.c.l.b16 %v1013
    %v1056 = vunpack.c.l.b16 %v1014
    %v1057 = vunpack.c.l.b16 %v1015
    %v1058 = vunpack.c.l.b16 %v1016
    %v1059 = vunpack.c.l.b16 %v1017
    %v1060 = vunpack.c.l.b16 %v1018
    %v1061 = vunpack.c.l.b16 %v1019
    %v1062 = vpack.c.b16 %v1042, %v1041
    %v1063 = vpack.c.b16 %v1044, %v1043
    %v1064 = vpack.c.b16 %v1046, %v1045
    %v1065 = vpack.c.b16 %v1048, %v1047
    %v1066 = vpack.c.b16 %v1050, %v1049
    %v1067 = vpack.c.b16 %v1052, %v1051
    %v1068 = vpack.c.b16 %v1054, %v1053
    %v1069 = vpack.c.b16 %v1056, %v1055
    %v1070 = vpack.c.b16 %v1058, %v1057
    %v1071 = vpack.c.b16 %v1060, %v1059
    %v1072 = vpack.c.b16 %v1061, %v1061
    %1073 = vrot.lane.b32.xlu0 %v231, 125
    %v1074 = vpop.permute.xlu0 %1073
    %1075 = vrot.lane.b32.xlu0 %v232, 125
    %v1076 = vpop.permute.xlu0 %1075
    %1077 = vrot.lane.b32.xlu0 %v233, 125
    %v1078 = vpop.permute.xlu0 %1077
    %1079 = vrot.lane.b32.xlu0 %v234, 125
    %v1080 = vpop.permute.xlu0 %1079
    %1081 = vrot.lane.b32.xlu0 %v235, 125
    %v1082 = vpop.permute.xlu0 %1081
    %1083 = vrot.lane.b32.xlu0 %v236, 125
    %v1084 = vpop.permute.xlu0 %1083
    %1085 = vrot.lane.b32.xlu0 %v237, 125
    %v1086 = vpop.permute.xlu0 %1085
    %1087 = vrot.lane.b32.xlu0 %v238, 125
    %v1088 = vpop.permute.xlu0 %1087
    %vm1089 = vcmask 1022976
    %v1090 = vsel %vm1089, %v1074, %v1076
    %v1091 = vsel %vm1089, %v1078, %v1080
    %v1092 = vsel %vm1089, %v1082, %v1084
    %v1093 = vsel %vm1089, %v1086, %v1088
    %v1103 = vsel %vm268, %v1062, 0
    %v1106 = vsel %vm268, %v1063, 0
    %v1109 = vsel %vm268, %v1064, 0
    %v1112 = vsel %vm268, %v1065, 0
    %v1115 = vsel %vm268, %v1066, 0
    %v1118 = vsel %vm268, %v1067, 0
    %v1121 = vsel %vm268, %v1068, 0
    %v1124 = vsel %vm268, %v1069, 0
    %v1127 = vsel %vm268, %v1070, 0
    %v1130 = vsel %vm268, %v1071, 0
    %v1133 = vsel %vm268, %v1072, 0
    %1135 = vmatprep.subr.bf16.mxu0 %v1076
    %1136 = vmatpush1.bf16.msra.mxu0 %v1090
    %1137 = vmatprep.subr.bf16.mxu0 %v1080
    %1138 = vmatpush1.bf16.msra.mxu0 %v1091
    %1139 = vmatprep.subr.bf16.mxu0 %v1084
    %1140 = vmatpush1.bf16.msra.mxu0 %v1092
    %1141 = vmatprep.subr.bf16.mxu0 %v1088
    %1142 = vmatpush1.bf16.msra.mxu0 %v1093
    %1143 = vmatprep.subr.bf16.mxu0 0
    %1144 = vmatpush1.bf16.msra.mxu0 0
    %1145 = vmatprep.subr.bf16.mxu0 0
    %1146 = vmatpush1.bf16.msra.mxu0 0
    %1147 = vmatprep.subr.bf16.mxu0 0
    %1148 = vmatpush1.bf16.msra.mxu0 0
    %1149 = vmatprep.subr.bf16.mxu0 0
    %1150 = vmatpush1.bf16.msra.mxu0 0
    %1151 = vmatprep.subr.bf16.mxu0 0
    %1152 = vmatpush1.bf16.msra.mxu0 0
    %1153 = vmatprep.subr.bf16.mxu0 0
    %1154 = vmatpush1.bf16.msra.mxu0 0
    %1155 = vmatprep.subr.bf16.mxu0 0
    %1156 = vmatpush1.bf16.msra.mxu0 0
    %1157 = vmatprep.subr.bf16.mxu0 0
    %1158 = vmatpush1.bf16.msra.mxu0 0
    %1159 = vmatprep.subr.bf16.mxu0 0
    %1160 = vmatpush1.bf16.msra.mxu0 0
    %1161 = vmatprep.subr.bf16.mxu0 0
    %1162 = vmatpush1.bf16.msra.mxu0 0
    %1163 = vmatprep.subr.bf16.mxu0 0
    %1164 = vmatpush1.bf16.msra.mxu0 0
    %1165 = vmatprep.subr.bf16.mxu0 0
    %1166 = vmatpush1.bf16.msra.mxu0 0
    %1167 = vmatprep.mubr.bf16.mxu0 0
    %1168 = vmatmul.mubr.bf16.gmra.mrb[0].mxu0 %v1103
    %v1169 = vpop.f32.mrb[0].mxu0
    %v1170 = vadd.f32 0.0, %v1169
    %v1171 = vpop.f32.mrb[0].mxu0
    %v1172 = vadd.f32 0.0, %v1171
    %v1173 = vpop.f32.mrb[0].mxu0
    %v1174 = vadd.f32 0.0, %v1173
    %v1175 = vpop.f32.mrb[0].mxu0
    %v1176 = vadd.f32 0.0, %v1175
    %1177 = vmatprep.mubr.bf16.mxu0 0
    %1178 = vmatmul.mubr.bf16.gmra.mrb[0].mxu0 %v1106
    %v1179 = vpop.f32.mrb[0].mxu0
    %v1180 = vadd.f32 0.0, %v1179
    %v1181 = vpop.f32.mrb[0].mxu0
    %v1182 = vadd.f32 0.0, %v1181
    %v1183 = vpop.f32.mrb[0].mxu0
    %v1184 = vadd.f32 0.0, %v1183
    %v1185 = vpop.f32.mrb[0].mxu0
    %v1186 = vadd.f32 0.0, %v1185
    %1187 = vmatprep.mubr.bf16.mxu0 0
    %1188 = vmatmul.mubr.bf16.gmra.mrb[0].mxu0 %v1109
    %v1189 = vpop.f32.mrb[0].mxu0
    %v1190 = vadd.f32 0.0, %v1189
    %v1191 = vpop.f32.mrb[0].mxu0
    %v1192 = vadd.f32 0.0, %v1191
    %v1193 = vpop.f32.mrb[0].mxu0
    %v1194 = vadd.f32 0.0, %v1193
    %v1195 = vpop.f32.mrb[0].mxu0
    %v1196 = vadd.f32 0.0, %v1195
    %1197 = vmatprep.mubr.bf16.mxu0 0
    %1198 = vmatmul.mubr.bf16.gmra.mrb[0].mxu0 %v1112
    %v1199 = vpop.f32.mrb[0].mxu0
    %v1200 = vadd.f32 0.0, %v1199
    %v1201 = vpop.f32.mrb[0].mxu0
    %v1202 = vadd.f32 0.0, %v1201
    %v1203 = vpop.f32.mrb[0].mxu0
    %v1204 = vadd.f32 0.0, %v1203
    %v1205 = vpop.f32.mrb[0].mxu0
    %v1206 = vadd.f32 0.0, %v1205
    %1207 = vmatprep.mubr.bf16.mxu0 0
    %1208 = vmatmul.mubr.bf16.gmra.mrb[0].mxu0 %v1115
    %v1209 = vpop.f32.mrb[0].mxu0
    %v1210 = vadd.f32 0.0, %v1209
    %v1211 = vpop.f32.mrb[0].mxu0
    %v1212 = vadd.f32 0.0, %v1211
    %v1213 = vpop.f32.mrb[0].mxu0
    %v1214 = vadd.f32 0.0, %v1213
    %v1215 = vpop.f32.mrb[0].mxu0
    %v1216 = vadd.f32 0.0, %v1215
    %1217 = vmatprep.mubr.bf16.mxu0 0
    %1218 = vmatmul.mubr.bf16.gmra.mrb[0].mxu0 %v1118
    %v1219 = vpop.f32.mrb[0].mxu0
    %v1220 = vadd.f32 0.0, %v1219
    %v1221 = vpop.f32.mrb[0].mxu0
    %v1222 = vadd.f32 0.0, %v1221
    %v1223 = vpop.f32.mrb[0].mxu0
    %v1224 = vadd.f32 0.0, %v1223
    %v1225 = vpop.f32.mrb[0].mxu0
    %v1226 = vadd.f32 0.0, %v1225
    %1227 = vmatprep.mubr.bf16.mxu0 0
    %1228 = vmatmul.mubr.bf16.gmra.mrb[0].mxu0 %v1121
    %v1229 = vpop.f32.mrb[0].mxu0
    %v1230 = vadd.f32 0.0, %v1229
    %v1231 = vpop.f32.mrb[0].mxu0
    %v1232 = vadd.f32 0.0, %v1231
    %v1233 = vpop.f32.mrb[0].mxu0
    %v1234 = vadd.f32 0.0, %v1233
    %v1235 = vpop.f32.mrb[0].mxu0
    %v1236 = vadd.f32 0.0, %v1235
    %1237 = vmatprep.mubr.bf16.mxu0 0
    %1238 = vmatmul.mubr.bf16.gmra.mrb[0].mxu0 %v1124
    %v1239 = vpop.f32.mrb[0].mxu0
    %v1240 = vadd.f32 0.0, %v1239
    %v1241 = vpop.f32.mrb[0].mxu0
    %v1242 = vadd.f32 0.0, %v1241
    %v1243 = vpop.f32.mrb[0].mxu0
    %v1244 = vadd.f32 0.0, %v1243
    %v1245 = vpop.f32.mrb[0].mxu0
    %v1246 = vadd.f32 0.0, %v1245
    %1247 = vmatprep.mubr.bf16.mxu0 0
    %1248 = vmatmul.mubr.bf16.gmra.mrb[0].mxu0 %v1127
    %v1249 = vpop.f32.mrb[0].mxu0
    %v1250 = vadd.f32 0.0, %v1249
    %v1251 = vpop.f32.mrb[0].mxu0
    %v1252 = vadd.f32 0.0, %v1251
    %v1253 = vpop.f32.mrb[0].mxu0
    %v1254 = vadd.f32 0.0, %v1253
    %v1255 = vpop.f32.mrb[0].mxu0
    %v1256 = vadd.f32 0.0, %v1255
    %1257 = vmatprep.mubr.bf16.mxu0 0
    %1258 = vmatmul.mubr.bf16.gmra.mrb[0].mxu0 %v1130
    %v1259 = vpop.f32.mrb[0].mxu0
    %v1260 = vadd.f32 0.0, %v1259
    %v1261 = vpop.f32.mrb[0].mxu0
    %v1262 = vadd.f32 0.0, %v1261
    %v1263 = vpop.f32.mrb[0].mxu0
    %v1264 = vadd.f32 0.0, %v1263
    %v1265 = vpop.f32.mrb[0].mxu0
    %v1266 = vadd.f32 0.0, %v1265
    %1267 = vmatprep.mubr.bf16.mxu0 0
    %1268 = vmatmul.mubr.bf16.gmra.mrb[0].mxu0 %v1133
    %v1269 = vpop.f32.mrb[0].mxu0
    %v1270 = vadd.f32 0.0, %v1269
    %v1271 = vpop.f32.mrb[0].mxu0
    %v1272 = vadd.f32 0.0, %v1271
    %v1273 = vpop.f32.mrb[0].mxu0
    %v1274 = vpop.f32.mrb[0].mxu0
    %1275 = vdwg.mxu0
    %v1276 = vadd.f32 %v956, %v1170
    %v1277 = vadd.f32 %v957, %v1172
    %v1278 = vadd.f32 %v958, %v1174
    %v1279 = vadd.f32 %v959, %v1176
    %v1280 = vadd.f32 %v960, %v1180
    %v1281 = vadd.f32 %v961, %v1182
    %v1282 = vadd.f32 %v962, %v1184
    %v1283 = vadd.f32 %v963, %v1186
    %v1284 = vadd.f32 %v964, %v1190
    %v1285 = vadd.f32 %v965, %v1192
    %v1286 = vadd.f32 %v966, %v1194
    %v1287 = vadd.f32 %v967, %v1196
    %v1288 = vadd.f32 %v968, %v1200
    %v1289 = vadd.f32 %v969, %v1202
    %v1290 = vadd.f32 %v970, %v1204
    %v1291 = vadd.f32 %v971, %v1206
    %v1292 = vadd.f32 %v972, %v1210
    %v1293 = vadd.f32 %v973, %v1212
    %v1294 = vadd.f32 %v974, %v1214
    %v1295 = vadd.f32 %v975, %v1216
    %v1296 = vadd.f32 %v976, %v1220
    %v1297 = vadd.f32 %v977, %v1222
    %v1298 = vadd.f32 %v978, %v1224
    %v1299 = vadd.f32 %v979, %v1226
    %v1300 = vadd.f32 %v980, %v1230
    %v1301 = vadd.f32 %v981, %v1232
    %v1302 = vadd.f32 %v982, %v1234
    %v1303 = vadd.f32 %v983, %v1236
    %v1304 = vadd.f32 %v984, %v1240
    %v1305 = vadd.f32 %v985, %v1242
    %v1306 = vadd.f32 %v986, %v1244
    %v1307 = vadd.f32 %v987, %v1246
    %v1308 = vadd.f32 %v988, %v1250
    %v1309 = vadd.f32 %v989, %v1252
    %v1310 = vadd.f32 %v990, %v1254
    %v1311 = vadd.f32 %v991, %v1256
    %v1312 = vadd.f32 %v992, %v1260
    %v1313 = vadd.f32 %v993, %v1262
    %v1314 = vadd.f32 %v994, %v1264
    %v1315 = vadd.f32 %v995, %v1266
    %v1316 = vadd.f32 %v996, %v1270
    %v1317 = vadd.f32 %v997, %v1272
    %s1318 = scalar_lea.vmem %s1, 336
    %v1319 = vld [vmem:[%s1318] sm:$0xf]
    %v1320 = vld [vmem:[%s1318 + $0x4] sm:$0xf]
    %v1321 = vld [vmem:[%s1318 + $0x8] sm:$0xf]
    %v1322 = vld [vmem:[%s1318 + $0xc] sm:$0xf]
    %v1323 = vld [vmem:[%s1318 + $0x10] sm:$0xf]
    %v1324 = vld [vmem:[%s1318 + $0x14] sm:$0xf]
    %v1325 = vld [vmem:[%s1318 + $0x18] sm:$0xf]
    %v1326 = vld [vmem:[%s1318 + $0x1c] sm:$0xf]
    %v1327 = vld [vmem:[%s1318 + $0x20] sm:$0xf]
    %v1328 = vld [vmem:[%s1318 + $0x24] sm:$0xf]
    %v1329 = vld [vmem:[%s1318 + $0x28] sm:$0xf]
    %v1330 = vld [vmem:[%s1318 + $0x2c] sm:$0xf]
    %v1331 = vld [vmem:[%s1318 + $0x30] sm:$0xf]
    %v1332 = vld [vmem:[%s1318 + $0x34] sm:$0xf]
    %v1333 = vld [vmem:[%s1318 + $0x38] sm:$0xf]
    %v1334 = vld [vmem:[%s1318 + $0x3c] sm:$0xf]
    %v1335 = vld [vmem:[%s1318 + $0x40] sm:$0xf]
    %v1336 = vld [vmem:[%s1318 + $0x44] sm:$0xf]
    %v1337 = vld [vmem:[%s1318 + $0x48] sm:$0xf]
    %v1338 = vld [vmem:[%s1318 + $0x4c] sm:$0xf]
    %v1339 = vld [vmem:[%s1318 + $0x50] sm:$0xf]
    %v1361 = vunpack.c.l.b16 %v1319
    %v1362 = vunpack.c.l.b16 %v1320
    %v1363 = vunpack.c.l.b16 %v1321
    %v1364 = vunpack.c.l.b16 %v1322
    %v1365 = vunpack.c.l.b16 %v1323
    %v1366 = vunpack.c.l.b16 %v1324
    %v1367 = vunpack.c.l.b16 %v1325
    %v1368 = vunpack.c.l.b16 %v1326
    %v1369 = vunpack.c.l.b16 %v1327
    %v1370 = vunpack.c.l.b16 %v1328
    %v1371 = vunpack.c.l.b16 %v1329
    %v1372 = vunpack.c.l.b16 %v1330
    %v1373 = vunpack.c.l.b16 %v1331
    %v1374 = vunpack.c.l.b16 %v1332
    %v1375 = vunpack.c.l.b16 %v1333
    %v1376 = vunpack.c.l.b16 %v1334
    %v1377 = vunpack.c.l.b16 %v1335
    %v1378 = vunpack.c.l.b16 %v1336
    %v1379 = vunpack.c.l.b16 %v1337
    %v1380 = vunpack.c.l.b16 %v1338
    %v1381 = vunpack.c.l.b16 %v1339
    %v1382 = vpack.c.b16 %v1362, %v1361
    %v1383 = vpack.c.b16 %v1364, %v1363
    %v1384 = vpack.c.b16 %v1366, %v1365
    %v1385 = vpack.c.b16 %v1368, %v1367
    %v1386 = vpack.c.b16 %v1370, %v1369
    %v1387 = vpack.c.b16 %v1372, %v1371
    %v1388 = vpack.c.b16 %v1374, %v1373
    %v1389 = vpack.c.b16 %v1376, %v1375
    %v1390 = vpack.c.b16 %v1378, %v1377
    %v1391 = vpack.c.b16 %v1380, %v1379
    %v1392 = vpack.c.b16 %v1381, %v1381
    %1393 = vrot.lane.b32.xlu0 %v231, 124
    %v1394 = vpop.permute.xlu0 %1393
    %1395 = vrot.lane.b32.xlu0 %v232, 124
    %v1396 = vpop.permute.xlu0 %1395
    %1397 = vrot.lane.b32.xlu0 %v233, 124
    %v1398 = vpop.permute.xlu0 %1397
    %1399 = vrot.lane.b32.xlu0 %v234, 124
    %v1400 = vpop.permute.xlu0 %1399
    %1401 = vrot.lane.b32.xlu0 %v235, 124
    %v1402 = vpop.permute.xlu0 %1401
    %1403 = vrot.lane.b32.xlu0 %v236, 124
    %v1404 = vpop.permute.xlu0 %1403
    %1405 = vrot.lane.b32.xlu0 %v237, 124
    %v1406 = vpop.permute.xlu0 %1405
    %1407 = vrot.lane.b32.xlu0 %v238, 124
    %v1408 = vpop.permute.xlu0 %1407
    %vm1409 = vcmask 1014784
    %v1410 = vsel %vm1409, %v1394, %v1396
    %v1411 = vsel %vm1409, %v1398, %v1400
    %v1412 = vsel %vm1409, %v1402, %v1404
    %v1413 = vsel %vm1409, %v1406, %v1408
    %v1423 = vsel %vm268, %v1382, 0
    %v1426 = vsel %vm268, %v1383, 0
    %v1429 = vsel %vm268, %v1384, 0
    %v1432 = vsel %vm268, %v1385, 0
    %v1435 = vsel %vm268, %v1386, 0
    %v1438 = vsel %vm268, %v1387, 0
    %v1441 = vsel %vm268, %v1388, 0
    %v1444 = vsel %vm268, %v1389, 0
    %v1447 = vsel %vm268, %v1390, 0
    %v1450 = vsel %vm268, %v1391, 0
    %v1453 = vsel %vm268, %v1392, 0
    %1455 = vmatprep.subr.bf16.mxu0 %v1396
    %1456 = vmatpush1.bf16.msra.mxu0 %v1410
    %1457 = vmatprep.subr.bf16.mxu0 %v1400
    %1458 = vmatpush1.bf16.msra.mxu0 %v1411
    %1459 = vmatprep.subr.bf16.mxu0 %v1404
    %1460 = vmatpush1.bf16.msra.mxu0 %v1412
    %1461 = vmatprep.subr.bf16.mxu0 %v1408
    %1462 = vmatpush1.bf16.msra.mxu0 %v1413
    %1463 = vmatprep.subr.bf16.mxu0 0
    %1464 = vmatpush1.bf16.msra.mxu0 0
    %1465 = vmatprep.subr.bf16.mxu0 0
    %1466 = vmatpush1.bf16.msra.mxu0 0
    %1467 = vmatprep.subr.bf16.mxu0 0
    %1468 = vmatpush1.bf16.msra.mxu0 0
    %1469 = vmatprep.subr.bf16.mxu0 0
    %1470 = vmatpush1.bf16.msra.mxu0 0
    %1471 = vmatprep.subr.bf16.mxu0 0
    %1472 = vmatpush1.bf16.msra.mxu0 0
    %1473 = vmatprep.subr.bf16.mxu0 0
    %1474 = vmatpush1.bf16.msra.mxu0 0
    %1475 = vmatprep.subr.bf16.mxu0 0
    %1476 = vmatpush1.bf16.msra.mxu0 0
    %1477 = vmatprep.subr.bf16.mxu0 0
    %1478 = vmatpush1.bf16.msra.mxu0 0
    %1479 = vmatprep.subr.bf16.mxu0 0
    %1480 = vmatpush1.bf16.msra.mxu0 0
    %1481 = vmatprep.subr.bf16.mxu0 0
    %1482 = vmatpush1.bf16.msra.mxu0 0
    %1483 = vmatprep.subr.bf16.mxu0 0
    %1484 = vmatpush1.bf16.msra.mxu0 0
    %1485 = vmatprep.subr.bf16.mxu0 0
    %1486 = vmatpush1.bf16.msra.mxu0 0
    %1487 = vmatprep.mubr.bf16.mxu0 0
    %1488 = vmatmul.mubr.bf16.gmra.mrb[0].mxu0 %v1423
    %v1489 = vpop.f32.mrb[0].mxu0
    %v1490 = vadd.f32 0.0, %v1489
    %v1491 = vpop.f32.mrb[0].mxu0
    %v1492 = vadd.f32 0.0, %v1491
    %v1493 = vpop.f32.mrb[0].mxu0
    %v1494 = vadd.f32 0.0, %v1493
    %v1495 = vpop.f32.mrb[0].mxu0
    %v1496 = vadd.f32 0.0, %v1495
    %1497 = vmatprep.mubr.bf16.mxu0 0
    %1498 = vmatmul.mubr.bf16.gmra.mrb[0].mxu0 %v1426
    %v1499 = vpop.f32.mrb[0].mxu0
    %v1500 = vadd.f32 0.0, %v1499
    %v1501 = vpop.f32.mrb[0].mxu0
    %v1502 = vadd.f32 0.0, %v1501
    %v1503 = vpop.f32.mrb[0].mxu0
    %v1504 = vadd.f32 0.0, %v1503
    %v1505 = vpop.f32.mrb[0].mxu0
    %v1506 = vadd.f32 0.0, %v1505
    %1507 = vmatprep.mubr.bf16.mxu0 0
    %1508 = vmatmul.mubr.bf16.gmra.mrb[0].mxu0 %v1429
    %v1509 = vpop.f32.mrb[0].mxu0
    %v1510 = vadd.f32 0.0, %v1509
    %v1511 = vpop.f32.mrb[0].mxu0
    %v1512 = vadd.f32 0.0, %v1511
    %v1513 = vpop.f32.mrb[0].mxu0
    %v1514 = vadd.f32 0.0, %v1513
    %v1515 = vpop.f32.mrb[0].mxu0
    %v1516 = vadd.f32 0.0, %v1515
    %1517 = vmatprep.mubr.bf16.mxu0 0
    %1518 = vmatmul.mubr.bf16.gmra.mrb[0].mxu0 %v1432
    %v1519 = vpop.f32.mrb[0].mxu0
    %v1520 = vadd.f32 0.0, %v1519
    %v1521 = vpop.f32.mrb[0].mxu0
    %v1522 = vadd.f32 0.0, %v1521
    %v1523 = vpop.f32.mrb[0].mxu0
    %v1524 = vadd.f32 0.0, %v1523
    %v1525 = vpop.f32.mrb[0].mxu0
    %v1526 = vadd.f32 0.0, %v1525
    %1527 = vmatprep.mubr.bf16.mxu0 0
    %1528 = vmatmul.mubr.bf16.gmra.mrb[0].mxu0 %v1435
    %v1529 = vpop.f32.mrb[0].mxu0
    %v1530 = vadd.f32 0.0, %v1529
    %v1531 = vpop.f32.mrb[0].mxu0
    %v1532 = vadd.f32 0.0, %v1531
    %v1533 = vpop.f32.mrb[0].mxu0
    %v1534 = vadd.f32 0.0, %v1533
    %v1535 = vpop.f32.mrb[0].mxu0
    %v1536 = vadd.f32 0.0, %v1535
    %1537 = vmatprep.mubr.bf16.mxu0 0
    %1538 = vmatmul.mubr.bf16.gmra.mrb[0].mxu0 %v1438
    %v1539 = vpop.f32.mrb[0].mxu0
    %v1540 = vadd.f32 0.0, %v1539
    %v1541 = vpop.f32.mrb[0].mxu0
    %v1542 = vadd.f32 0.0, %v1541
    %v1543 = vpop.f32.mrb[0].mxu0
    %v1544 = vadd.f32 0.0, %v1543
    %v1545 = vpop.f32.mrb[0].mxu0
    %v1546 = vadd.f32 0.0, %v1545
    %1547 = vmatprep.mubr.bf16.mxu0 0
    %1548 = vmatmul.mubr.bf16.gmra.mrb[0].mxu0 %v1441
    %v1549 = vpop.f32.mrb[0].mxu0
    %v1550 = vadd.f32 0.0, %v1549
    %v1551 = vpop.f32.mrb[0].mxu0
    %v1552 = vadd.f32 0.0, %v1551
    %v1553 = vpop.f32.mrb[0].mxu0
    %v1554 = vadd.f32 0.0, %v1553
    %v1555 = vpop.f32.mrb[0].mxu0
    %v1556 = vadd.f32 0.0, %v1555
    %1557 = vmatprep.mubr.bf16.mxu0 0
    %1558 = vmatmul.mubr.bf16.gmra.mrb[0].mxu0 %v1444
    %v1559 = vpop.f32.mrb[0].mxu0
    %v1560 = vadd.f32 0.0, %v1559
    %v1561 = vpop.f32.mrb[0].mxu0
    %v1562 = vadd.f32 0.0, %v1561
    %v1563 = vpop.f32.mrb[0].mxu0
    %v1564 = vadd.f32 0.0, %v1563
    %v1565 = vpop.f32.mrb[0].mxu0
    %v1566 = vadd.f32 0.0, %v1565
    %1567 = vmatprep.mubr.bf16.mxu0 0
    %1568 = vmatmul.mubr.bf16.gmra.mrb[0].mxu0 %v1447
    %v1569 = vpop.f32.mrb[0].mxu0
    %v1570 = vadd.f32 0.0, %v1569
    %v1571 = vpop.f32.mrb[0].mxu0
    %v1572 = vadd.f32 0.0, %v1571
    %v1573 = vpop.f32.mrb[0].mxu0
    %v1574 = vadd.f32 0.0, %v1573
    %v1575 = vpop.f32.mrb[0].mxu0
    %v1576 = vadd.f32 0.0, %v1575
    %1577 = vmatprep.mubr.bf16.mxu0 0
    %1578 = vmatmul.mubr.bf16.gmra.mrb[0].mxu0 %v1450
    %v1579 = vpop.f32.mrb[0].mxu0
    %v1580 = vadd.f32 0.0, %v1579
    %v1581 = vpop.f32.mrb[0].mxu0
    %v1582 = vadd.f32 0.0, %v1581
    %v1583 = vpop.f32.mrb[0].mxu0
    %v1584 = vadd.f32 0.0, %v1583
    %v1585 = vpop.f32.mrb[0].mxu0
    %v1586 = vadd.f32 0.0, %v1585
    %1587 = vmatprep.mubr.bf16.mxu0 0
    %1588 = vmatmul.mubr.bf16.gmra.mrb[0].mxu0 %v1453
    %v1589 = vpop.f32.mrb[0].mxu0
    %v1590 = vadd.f32 0.0, %v1589
    %v1591 = vpop.f32.mrb[0].mxu0
    %v1592 = vadd.f32 0.0, %v1591
    %v1593 = vpop.f32.mrb[0].mxu0
    %v1594 = vpop.f32.mrb[0].mxu0
    %1595 = vdwg.mxu0
    %v1596 = vadd.f32 %v1276, %v1490
    %v1597 = vadd.f32 %v1277, %v1492
    %v1598 = vadd.f32 %v1278, %v1494
    %v1599 = vadd.f32 %v1279, %v1496
    %v1600 = vadd.f32 %v1280, %v1500
    %v1601 = vadd.f32 %v1281, %v1502
    %v1602 = vadd.f32 %v1282, %v1504
    %v1603 = vadd.f32 %v1283, %v1506
    %v1604 = vadd.f32 %v1284, %v1510
    %v1605 = vadd.f32 %v1285, %v1512
    %v1606 = vadd.f32 %v1286, %v1514
    %v1607 = vadd.f32 %v1287, %v1516
    %v1608 = vadd.f32 %v1288, %v1520
    %v1609 = vadd.f32 %v1289, %v1522
    %v1610 = vadd.f32 %v1290, %v1524
    %v1611 = vadd.f32 %v1291, %v1526
    %v1612 = vadd.f32 %v1292, %v1530
    %v1613 = vadd.f32 %v1293, %v1532
    %v1614 = vadd.f32 %v1294, %v1534
    %v1615 = vadd.f32 %v1295, %v1536
    %v1616 = vadd.f32 %v1296, %v1540
    %v1617 = vadd.f32 %v1297, %v1542
    %v1618 = vadd.f32 %v1298, %v1544
    %v1619 = vadd.f32 %v1299, %v1546
    %v1620 = vadd.f32 %v1300, %v1550
    %v1621 = vadd.f32 %v1301, %v1552
    %v1622 = vadd.f32 %v1302, %v1554
    %v1623 = vadd.f32 %v1303, %v1556
    %v1624 = vadd.f32 %v1304, %v1560
    %v1625 = vadd.f32 %v1305, %v1562
    %v1626 = vadd.f32 %v1306, %v1564
    %v1627 = vadd.f32 %v1307, %v1566
    %v1628 = vadd.f32 %v1308, %v1570
    %v1629 = vadd.f32 %v1309, %v1572
    %v1630 = vadd.f32 %v1310, %v1574
    %v1631 = vadd.f32 %v1311, %v1576
    %v1632 = vadd.f32 %v1312, %v1580
    %v1633 = vadd.f32 %v1313, %v1582
    %v1634 = vadd.f32 %v1314, %v1584
    %v1635 = vadd.f32 %v1315, %v1586
    %v1636 = vadd.f32 %v1316, %v1590
    %v1637 = vadd.f32 %v1317, %v1592
    %v1638 = vld [vmem:[%s2] sm:$0xff]
    %v1639 = vld [vmem:[%s2 + $0x8] sm:$0xff]
    %v1640 = vld [vmem:[%s2 + $0x10] sm:$0xff]
    %v1641 = vld [vmem:[%s2 + $0x18] sm:$0xff]
    %v1642 = vld [vmem:[%s2 + $0x20] sm:$0xff]
    %v1643 = vld [vmem:[%s2 + $0x28] sm:$0xff]
    %v1644 = vld [vmem:[%s2 + $0x30] sm:$0xff]
    %v1645 = vld [vmem:[%s2 + $0x38] sm:$0xff]
    %v1646 = vld [vmem:[%s2 + $0x40] sm:$0xff]
    %v1647 = vld [vmem:[%s2 + $0x48] sm:$0xff]
    %v1648 = vld [vmem:[%s2 + $0x50] sm:$0xff]
    %v1649 = vld [vmem:[%s2 + $0x58] sm:$0xff]
    %v1650 = vld [vmem:[%s2 + $0x60] sm:$0xff]
    %v1651 = vld [vmem:[%s2 + $0x68] sm:$0xff]
    %v1652 = vld [vmem:[%s2 + $0x70] sm:$0xff]
    %v1653 = vld [vmem:[%s2 + $0x78] sm:$0xff]
    %v1654 = vld [vmem:[%s2 + $0x80] sm:$0xff]
    %v1655 = vld [vmem:[%s2 + $0x88] sm:$0xff]
    %v1656 = vld [vmem:[%s2 + $0x90] sm:$0xff]
    %v1657 = vld [vmem:[%s2 + $0x98] sm:$0xff]
    %v1658 = vld [vmem:[%s2 + $0xa0] sm:$0xff]
    %1660 = vset.pattern.permute.xlu0 0
    %1661 = vperm.xlu0 %1660, %v1638
    %v1662 = vpop.permute.xlu0 %1661
    %1665 = vset.pattern.permute.xlu0 0
    %1666 = vperm.xlu0 %1665, %v1639
    %v1667 = vpop.permute.xlu0 %1666
    %1670 = vset.pattern.permute.xlu0 0
    %1671 = vperm.xlu0 %1670, %v1640
    %v1672 = vpop.permute.xlu0 %1671
    %1675 = vset.pattern.permute.xlu0 0
    %1676 = vperm.xlu0 %1675, %v1641
    %v1677 = vpop.permute.xlu0 %1676
    %1680 = vset.pattern.permute.xlu0 0
    %1681 = vperm.xlu0 %1680, %v1642
    %v1682 = vpop.permute.xlu0 %1681
    %1685 = vset.pattern.permute.xlu0 0
    %1686 = vperm.xlu0 %1685, %v1643
    %v1687 = vpop.permute.xlu0 %1686
    %1690 = vset.pattern.permute.xlu0 0
    %1691 = vperm.xlu0 %1690, %v1644
    %v1692 = vpop.permute.xlu0 %1691
    %1695 = vset.pattern.permute.xlu0 0
    %1696 = vperm.xlu0 %1695, %v1645
    %v1697 = vpop.permute.xlu0 %1696
    %1700 = vset.pattern.permute.xlu0 0
    %1701 = vperm.xlu0 %1700, %v1646
    %v1702 = vpop.permute.xlu0 %1701
    %1705 = vset.pattern.permute.xlu0 0
    %1706 = vperm.xlu0 %1705, %v1647
    %v1707 = vpop.permute.xlu0 %1706
    %1710 = vset.pattern.permute.xlu0 0
    %1711 = vperm.xlu0 %1710, %v1648
    %v1712 = vpop.permute.xlu0 %1711
    %1715 = vset.pattern.permute.xlu0 0
    %1716 = vperm.xlu0 %1715, %v1649
    %v1717 = vpop.permute.xlu0 %1716
    %1720 = vset.pattern.permute.xlu0 0
    %1721 = vperm.xlu0 %1720, %v1650
    %v1722 = vpop.permute.xlu0 %1721
    %1725 = vset.pattern.permute.xlu0 0
    %1726 = vperm.xlu0 %1725, %v1651
    %v1727 = vpop.permute.xlu0 %1726
    %1730 = vset.pattern.permute.xlu0 0
    %1731 = vperm.xlu0 %1730, %v1652
    %v1732 = vpop.permute.xlu0 %1731
    %1735 = vset.pattern.permute.xlu0 0
    %1736 = vperm.xlu0 %1735, %v1653
    %v1737 = vpop.permute.xlu0 %1736
    %1740 = vset.pattern.permute.xlu0 0
    %1741 = vperm.xlu0 %1740, %v1654
    %v1742 = vpop.permute.xlu0 %1741
    %1745 = vset.pattern.permute.xlu0 0
    %1746 = vperm.xlu0 %1745, %v1655
    %v1747 = vpop.permute.xlu0 %1746
    %1750 = vset.pattern.permute.xlu0 0
    %1751 = vperm.xlu0 %1750, %v1656
    %v1752 = vpop.permute.xlu0 %1751
    %1755 = vset.pattern.permute.xlu0 0
    %1756 = vperm.xlu0 %1755, %v1657
    %v1757 = vpop.permute.xlu0 %1756
    %1760 = vset.pattern.permute.xlu0 0
    %1761 = vperm.xlu0 %1760, %v1658
    %v1762 = vpop.permute.xlu0 %1761
    %v1764 = vadd.f32 %v1596, %v1662
    %v1765 = vadd.f32 %v1597, %v1662
    %v1766 = vadd.f32 %v1598, %v1667
    %v1767 = vadd.f32 %v1599, %v1667
    %v1768 = vadd.f32 %v1600, %v1672
    %v1769 = vadd.f32 %v1601, %v1672
    %v1770 = vadd.f32 %v1602, %v1677
    %v1771 = vadd.f32 %v1603, %v1677
    %v1772 = vadd.f32 %v1604, %v1682
    %v1773 = vadd.f32 %v1605, %v1682
    %v1774 = vadd.f32 %v1606, %v1687
    %v1775 = vadd.f32 %v1607, %v1687
    %v1776 = vadd.f32 %v1608, %v1692
    %v1777 = vadd.f32 %v1609, %v1692
    %v1778 = vadd.f32 %v1610, %v1697
    %v1779 = vadd.f32 %v1611, %v1697
    %v1780 = vadd.f32 %v1612, %v1702
    %v1781 = vadd.f32 %v1613, %v1702
    %v1782 = vadd.f32 %v1614, %v1707
    %v1783 = vadd.f32 %v1615, %v1707
    %v1784 = vadd.f32 %v1616, %v1712
    %v1785 = vadd.f32 %v1617, %v1712
    %v1786 = vadd.f32 %v1618, %v1717
    %v1787 = vadd.f32 %v1619, %v1717
    %v1788 = vadd.f32 %v1620, %v1722
    %v1789 = vadd.f32 %v1621, %v1722
    %v1790 = vadd.f32 %v1622, %v1727
    %v1791 = vadd.f32 %v1623, %v1727
    %v1792 = vadd.f32 %v1624, %v1732
    %v1793 = vadd.f32 %v1625, %v1732
    %v1794 = vadd.f32 %v1626, %v1737
    %v1795 = vadd.f32 %v1627, %v1737
    %v1796 = vadd.f32 %v1628, %v1742
    %v1797 = vadd.f32 %v1629, %v1742
    %v1798 = vadd.f32 %v1630, %v1747
    %v1799 = vadd.f32 %v1631, %v1747
    %v1800 = vadd.f32 %v1632, %v1752
    %v1801 = vadd.f32 %v1633, %v1752
    %v1802 = vadd.f32 %v1634, %v1757
    %v1803 = vadd.f32 %v1635, %v1757
    %v1804 = vadd.f32 %v1636, %v1762
    %v1805 = vadd.f32 %v1637, %v1762
    %vm1806 = vcmp.ge.f32.partialorder %v1764, 0.0
    %vm1807 = vcmp.ge.f32.partialorder %v1765, 0.0
    %vm1808 = vcmp.ge.f32.partialorder %v1766, 0.0
    %vm1809 = vcmp.ge.f32.partialorder %v1767, 0.0
    %vm1810 = vcmp.ge.f32.partialorder %v1768, 0.0
    %vm1811 = vcmp.ge.f32.partialorder %v1769, 0.0
    %vm1812 = vcmp.ge.f32.partialorder %v1770, 0.0
    %vm1813 = vcmp.ge.f32.partialorder %v1771, 0.0
    %vm1814 = vcmp.ge.f32.partialorder %v1772, 0.0
    %vm1815 = vcmp.ge.f32.partialorder %v1773, 0.0
    %vm1816 = vcmp.ge.f32.partialorder %v1774, 0.0
    %vm1817 = vcmp.ge.f32.partialorder %v1775, 0.0
    %vm1818 = vcmp.ge.f32.partialorder %v1776, 0.0
    %vm1819 = vcmp.ge.f32.partialorder %v1777, 0.0
    %vm1820 = vcmp.ge.f32.partialorder %v1778, 0.0
    %vm1821 = vcmp.ge.f32.partialorder %v1779, 0.0
    %vm1822 = vcmp.ge.f32.partialorder %v1780, 0.0
    %vm1823 = vcmp.ge.f32.partialorder %v1781, 0.0
    %vm1824 = vcmp.ge.f32.partialorder %v1782, 0.0
    %vm1825 = vcmp.ge.f32.partialorder %v1783, 0.0
    %vm1826 = vcmp.ge.f32.partialorder %v1784, 0.0
    %vm1827 = vcmp.ge.f32.partialorder %v1785, 0.0
    %vm1828 = vcmp.ge.f32.partialorder %v1786, 0.0
    %vm1829 = vcmp.ge.f32.partialorder %v1787, 0.0
    %vm1830 = vcmp.ge.f32.partialorder %v1788, 0.0
    %vm1831 = vcmp.ge.f32.partialorder %v1789, 0.0
    %vm1832 = vcmp.ge.f32.partialorder %v1790, 0.0
    %vm1833 = vcmp.ge.f32.partialorder %v1791, 0.0
    %vm1834 = vcmp.ge.f32.partialorder %v1792, 0.0
    %vm1835 = vcmp.ge.f32.partialorder %v1793, 0.0
    %vm1836 = vcmp.ge.f32.partialorder %v1794, 0.0
    %vm1837 = vcmp.ge.f32.partialorder %v1795, 0.0
    %vm1838 = vcmp.ge.f32.partialorder %v1796, 0.0
    %vm1839 = vcmp.ge.f32.partialorder %v1797, 0.0
    %vm1840 = vcmp.ge.f32.partialorder %v1798, 0.0
    %vm1841 = vcmp.ge.f32.partialorder %v1799, 0.0
    %vm1842 = vcmp.ge.f32.partialorder %v1800, 0.0
    %vm1843 = vcmp.ge.f32.partialorder %v1801, 0.0
    %vm1844 = vcmp.ge.f32.partialorder %v1802, 0.0
    %vm1845 = vcmp.ge.f32.partialorder %v1803, 0.0
    %vm1846 = vcmp.ge.f32.partialorder %v1804, 0.0
    %vm1847 = vcmp.ge.f32.partialorder %v1805, 0.0
    %v1848 = vstv %s102
    %v1849 = vmul.f32 %v1848, %v1764
    %v1850 = vmul.f32 %v1848, %v1765
    %v1851 = vmul.f32 %v1848, %v1766
    %v1852 = vmul.f32 %v1848, %v1767
    %v1853 = vmul.f32 %v1848, %v1768
    %v1854 = vmul.f32 %v1848, %v1769
    %v1855 = vmul.f32 %v1848, %v1770
    %v1856 = vmul.f32 %v1848, %v1771
    %v1857 = vmul.f32 %v1848, %v1772
    %v1858 = vmul.f32 %v1848, %v1773
    %v1859 = vmul.f32 %v1848, %v1774
    %v1860 = vmul.f32 %v1848, %v1775
    %v1861 = vmul.f32 %v1848, %v1776
    %v1862 = vmul.f32 %v1848, %v1777
    %v1863 = vmul.f32 %v1848, %v1778
    %v1864 = vmul.f32 %v1848, %v1779
    %v1865 = vmul.f32 %v1848, %v1780
    %v1866 = vmul.f32 %v1848, %v1781
    %v1867 = vmul.f32 %v1848, %v1782
    %v1868 = vmul.f32 %v1848, %v1783
    %v1869 = vmul.f32 %v1848, %v1784
    %v1870 = vmul.f32 %v1848, %v1785
    %v1871 = vmul.f32 %v1848, %v1786
    %v1872 = vmul.f32 %v1848, %v1787
    %v1873 = vmul.f32 %v1848, %v1788
    %v1874 = vmul.f32 %v1848, %v1789
    %v1875 = vmul.f32 %v1848, %v1790
    %v1876 = vmul.f32 %v1848, %v1791
    %v1877 = vmul.f32 %v1848, %v1792
    %v1878 = vmul.f32 %v1848, %v1793
    %v1879 = vmul.f32 %v1848, %v1794
    %v1880 = vmul.f32 %v1848, %v1795
    %v1881 = vmul.f32 %v1848, %v1796
    %v1882 = vmul.f32 %v1848, %v1797
    %v1883 = vmul.f32 %v1848, %v1798
    %v1884 = vmul.f32 %v1848, %v1799
    %v1885 = vmul.f32 %v1848, %v1800
    %v1886 = vmul.f32 %v1848, %v1801
    %v1887 = vmul.f32 %v1848, %v1802
    %v1888 = vmul.f32 %v1848, %v1803
    %v1889 = vmul.f32 %v1848, %v1804
    %v1890 = vmul.f32 %v1848, %v1805
    %v1891 = vsel %vm1806, %v1764, %v1849
    %v1892 = vsel %vm1807, %v1765, %v1850
    %v1893 = vsel %vm1808, %v1766, %v1851
    %v1894 = vsel %vm1809, %v1767, %v1852
    %v1895 = vsel %vm1810, %v1768, %v1853
    %v1896 = vsel %vm1811, %v1769, %v1854
    %v1897 = vsel %vm1812, %v1770, %v1855
    %v1898 = vsel %vm1813, %v1771, %v1856
    %v1899 = vsel %vm1814, %v1772, %v1857
    %v1900 = vsel %vm1815, %v1773, %v1858
    %v1901 = vsel %vm1816, %v1774, %v1859
    %v1902 = vsel %vm1817, %v1775, %v1860
    %v1903 = vsel %vm1818, %v1776, %v1861
    %v1904 = vsel %vm1819, %v1777, %v1862
    %v1905 = vsel %vm1820, %v1778, %v1863
    %v1906 = vsel %vm1821, %v1779, %v1864
    %v1907 = vsel %vm1822, %v1780, %v1865
    %v1908 = vsel %vm1823, %v1781, %v1866
    %v1909 = vsel %vm1824, %v1782, %v1867
    %v1910 = vsel %vm1825, %v1783, %v1868
    %v1911 = vsel %vm1826, %v1784, %v1869
    %v1912 = vsel %vm1827, %v1785, %v1870
    %v1913 = vsel %vm1828, %v1786, %v1871
    %v1914 = vsel %vm1829, %v1787, %v1872
    %v1915 = vsel %vm1830, %v1788, %v1873
    %v1916 = vsel %vm1831, %v1789, %v1874
    %v1917 = vsel %vm1832, %v1790, %v1875
    %v1918 = vsel %vm1833, %v1791, %v1876
    %v1919 = vsel %vm1834, %v1792, %v1877
    %v1920 = vsel %vm1835, %v1793, %v1878
    %v1921 = vsel %vm1836, %v1794, %v1879
    %v1922 = vsel %vm1837, %v1795, %v1880
    %v1923 = vsel %vm1838, %v1796, %v1881
    %v1924 = vsel %vm1839, %v1797, %v1882
    %v1925 = vsel %vm1840, %v1798, %v1883
    %v1926 = vsel %vm1841, %v1799, %v1884
    %v1927 = vsel %vm1842, %v1800, %v1885
    %v1928 = vsel %vm1843, %v1801, %v1886
    %v1929 = vsel %vm1844, %v1802, %v1887
    %v1930 = vsel %vm1845, %v1803, %v1888
    %v1931 = vsel %vm1846, %v1804, %v1889
    %v1932 = vsel %vm1847, %v1805, %v1890
    %v1933 = vpack.c.bf16 %v1893, %v1891
    %v1934 = vpack.c.bf16 %v1894, %v1892
    %v1935 = vpack.c.bf16 %v1897, %v1895
    %v1936 = vpack.c.bf16 %v1898, %v1896
    %v1937 = vpack.c.bf16 %v1901, %v1899
    %v1938 = vpack.c.bf16 %v1902, %v1900
    %v1939 = vpack.c.bf16 %v1905, %v1903
    %v1940 = vpack.c.bf16 %v1906, %v1904
    %v1941 = vpack.c.bf16 %v1909, %v1907
    %v1942 = vpack.c.bf16 %v1910, %v1908
    %v1943 = vpack.c.bf16 %v1913, %v1911
    %v1944 = vpack.c.bf16 %v1914, %v1912
    %v1945 = vpack.c.bf16 %v1917, %v1915
    %v1946 = vpack.c.bf16 %v1918, %v1916
    %v1947 = vpack.c.bf16 %v1921, %v1919
    %v1948 = vpack.c.bf16 %v1922, %v1920
    %v1949 = vpack.c.bf16 %v1925, %v1923
    %v1950 = vpack.c.bf16 %v1926, %v1924
    %v1951 = vpack.c.bf16 %v1929, %v1927
    %v1952 = vpack.c.bf16 %v1930, %v1928
    %v1953 = vpack.c.bf16 %v1931, %v1931
    %v1954 = vpack.c.bf16 %v1932, %v1932
    %v1955 = vld [vmem:[%s3] sm:$0xff]
    %v1956 = vld [vmem:[%s3 + $0x8] sm:$0xff]
    %v1957 = vld [vmem:[%s3 + $0x10] sm:$0xff]
    %v1958 = vld [vmem:[%s3 + $0x18] sm:$0xff]
    %v1959 = vld [vmem:[%s3 + $0x20] sm:$0xff]
    %v1960 = vld [vmem:[%s3 + $0x28] sm:$0xff]
    %v1961 = vld [vmem:[%s3 + $0x30] sm:$0xff]
    %v1962 = vld [vmem:[%s3 + $0x38] sm:$0xff]
    %v1963 = vld [vmem:[%s3 + $0x40] sm:$0xff]
    %v1964 = vld [vmem:[%s3 + $0x48] sm:$0xff]
    %v1965 = vld [vmem:[%s3 + $0x50] sm:$0x33]
    %v1977 = vunpack.c.l.b16 %v1955
    %v1978 = vunpack.c.h.b16 %v1955
    %v1979 = vunpack.c.l.b16 %v1956
    %v1980 = vunpack.c.h.b16 %v1956
    %v1981 = vunpack.c.l.b16 %v1957
    %v1982 = vunpack.c.h.b16 %v1957
    %v1983 = vunpack.c.l.b16 %v1958
    %v1984 = vunpack.c.h.b16 %v1958
    %v1985 = vunpack.c.l.b16 %v1959
    %v1986 = vunpack.c.h.b16 %v1959
    %v1987 = vunpack.c.l.b16 %v1960
    %v1988 = vunpack.c.h.b16 %v1960
    %v1989 = vunpack.c.l.b16 %v1961
    %v1990 = vunpack.c.h.b16 %v1961
    %v1991 = vunpack.c.l.b16 %v1962
    %v1992 = vunpack.c.h.b16 %v1962
    %v1993 = vunpack.c.l.b16 %v1963
    %v1994 = vunpack.c.h.b16 %v1963
    %v1995 = vunpack.c.l.b16 %v1964
    %v1996 = vunpack.c.h.b16 %v1964
    %v1997 = vunpack.c.l.b16 %v1965
    %v1998 = vunpack.c.h.b16 %v1965
    %v1999 = vpack.c.b16 %v1979, %v1977
    %v2000 = vpack.c.b16 %v1980, %v1978
    %v2001 = vpack.c.b16 %v1983, %v1981
    %v2002 = vpack.c.b16 %v1984, %v1982
    %v2003 = vpack.c.b16 %v1987, %v1985
    %v2004 = vpack.c.b16 %v1988, %v1986
    %v2005 = vpack.c.b16 %v1991, %v1989
    %v2006 = vpack.c.b16 %v1992, %v1990
    %v2007 = vpack.c.b16 %v1995, %v1993
    %v2008 = vpack.c.b16 %v1996, %v1994
    %v2009 = vpack.c.b16 %v1997, %v1997
    %v2010 = vpack.c.b16 %v1998, %v1998
    %vm2017 = vcmask 326656
    %v2019 = vsel %vm2017, %v2000, 0
    %v2022 = vsel %vm2017, %v2002, 0
    %v2025 = vsel %vm2017, %v2004, 0
    %v2028 = vsel %vm2017, %v2006, 0
    %v2031 = vsel %vm2017, %v2008, 0
    %v2034 = vsel %vm2017, %v2010, 0
    %vm2036 = vcmask 1043456
    %v2038 = vsel %vm2036, %v1953, 0
    %v2041 = vsel %vm2036, %v1954, 0
    %2043 = vmatprep.subr.bf16.mxu0 %v1934
    %2044 = vmatpush1.bf16.msra.mxu0 %v1933
    %2045 = vmatprep.subr.bf16.mxu0 %v1936
    %2046 = vmatpush1.bf16.msra.mxu0 %v1935
    %2047 = vmatprep.subr.bf16.mxu0 %v1938
    %2048 = vmatpush1.bf16.msra.mxu0 %v1937
    %2049 = vmatprep.subr.bf16.mxu0 %v1940
    %2050 = vmatpush1.bf16.msra.mxu0 %v1939
    %2051 = vmatprep.subr.bf16.mxu0 %v1942
    %2052 = vmatpush1.bf16.msra.mxu0 %v1941
    %2053 = vmatprep.subr.bf16.mxu0 %v1944
    %2054 = vmatpush1.bf16.msra.mxu0 %v1943
    %2055 = vmatprep.subr.bf16.mxu0 %v1946
    %2056 = vmatpush1.bf16.msra.mxu0 %v1945
    %2057 = vmatprep.subr.bf16.mxu0 %v1948
    %2058 = vmatpush1.bf16.msra.mxu0 %v1947
    %2059 = vmatprep.subr.bf16.mxu0 %v1950
    %2060 = vmatpush1.bf16.msra.mxu0 %v1949
    %2061 = vmatprep.subr.bf16.mxu0 %v1952
    %2062 = vmatpush1.bf16.msra.mxu0 %v1951
    %2063 = vmatprep.subr.bf16.mxu0 %v2041
    %2064 = vmatpush1.bf16.msra.mxu0 %v2038
    %2065 = vmatprep.subr.bf16.mxu0 0
    %2066 = vmatpush1.bf16.msra.mxu0 0
    %2067 = vmatprep.subr.bf16.mxu0 0
    %2068 = vmatpush1.bf16.msra.mxu0 0
    %2069 = vmatprep.subr.bf16.mxu0 0
    %2070 = vmatpush1.bf16.msra.mxu0 0
    %2071 = vmatprep.subr.bf16.mxu0 0
    %2072 = vmatpush1.bf16.msra.mxu0 0
    %2073 = vmatprep.subr.bf16.mxu0 0
    %2074 = vmatpush1.bf16.msra.mxu0 0
    %2075 = vmatprep.mubr.bf16.mxu0 %v2019
    %2076 = vmatmul.mubr.bf16.gmra.mrb[0].mxu0 %v1999
    %v2077 = vpop.f32.mrb[0].mxu0
    %v2078 = vadd.f32 0.0, %v2077
    %v2079 = vpop.f32.mrb[0].mxu0
    %v2080 = vadd.f32 0.0, %v2079
    %v2081 = vpop.f32.mrb[0].mxu0
    %v2082 = vadd.f32 0.0, %v2081
    %v2083 = vpop.f32.mrb[0].mxu0
    %v2084 = vadd.f32 0.0, %v2083
    %2085 = vmatprep.mubr.bf16.mxu0 %v2022
    %2086 = vmatmul.mubr.bf16.gmra.mrb[0].mxu0 %v2001
    %v2087 = vpop.f32.mrb[0].mxu0
    %v2088 = vadd.f32 0.0, %v2087
    %v2089 = vpop.f32.mrb[0].mxu0
    %v2090 = vadd.f32 0.0, %v2089
    %v2091 = vpop.f32.mrb[0].mxu0
    %v2092 = vadd.f32 0.0, %v2091
    %v2093 = vpop.f32.mrb[0].mxu0
    %v2094 = vadd.f32 0.0, %v2093
    %2095 = vmatprep.mubr.bf16.mxu0 %v2025
    %2096 = vmatmul.mubr.bf16.gmra.mrb[0].mxu0 %v2003
    %v2097 = vpop.f32.mrb[0].mxu0
    %v2098 = vadd.f32 0.0, %v2097
    %v2099 = vpop.f32.mrb[0].mxu0
    %v2100 = vadd.f32 0.0, %v2099
    %v2101 = vpop.f32.mrb[0].mxu0
    %v2102 = vadd.f32 0.0, %v2101
    %v2103 = vpop.f32.mrb[0].mxu0
    %v2104 = vadd.f32 0.0, %v2103
    %2105 = vmatprep.mubr.bf16.mxu0 %v2028
    %2106 = vmatmul.mubr.bf16.gmra.mrb[0].mxu0 %v2005
    %v2107 = vpop.f32.mrb[0].mxu0
    %v2108 = vadd.f32 0.0, %v2107
    %v2109 = vpop.f32.mrb[0].mxu0
    %v2110 = vadd.f32 0.0, %v2109
    %v2111 = vpop.f32.mrb[0].mxu0
    %v2112 = vadd.f32 0.0, %v2111
    %v2113 = vpop.f32.mrb[0].mxu0
    %v2114 = vadd.f32 0.0, %v2113
    %2115 = vmatprep.mubr.bf16.mxu0 %v2031
    %2116 = vmatmul.mubr.bf16.gmra.mrb[0].mxu0 %v2007
    %v2117 = vpop.f32.mrb[0].mxu0
    %v2118 = vadd.f32 0.0, %v2117
    %v2119 = vpop.f32.mrb[0].mxu0
    %v2120 = vadd.f32 0.0, %v2119
    %v2121 = vpop.f32.mrb[0].mxu0
    %v2122 = vadd.f32 0.0, %v2121
    %v2123 = vpop.f32.mrb[0].mxu0
    %v2124 = vadd.f32 0.0, %v2123
    %2125 = vmatprep.mubr.bf16.mxu0 %v2034
    %2126 = vmatmul.mubr.bf16.gmra.mrb[0].mxu0 %v2009
    %v2127 = vpop.f32.mrb[0].mxu0
    %v2128 = vadd.f32 0.0, %v2127
    %v2129 = vpop.f32.mrb[0].mxu0
    %v2130 = vadd.f32 0.0, %v2129
    %v2131 = vpop.f32.mrb[0].mxu0
    %v2132 = vpop.f32.mrb[0].mxu0
    %2133 = vdwg.mxu0
    %v2134 = vld [vmem:[%s4] sm:$0xff]
    %v2135 = vld [vmem:[%s4 + $0x8] sm:$0xff]
    %v2136 = vld [vmem:[%s4 + $0x10] sm:$0xff]
    %v2137 = vld [vmem:[%s4 + $0x18] sm:$0xff]
    %v2138 = vld [vmem:[%s4 + $0x20] sm:$0xff]
    %v2139 = vld [vmem:[%s4 + $0x28] sm:$0xff]
    %v2140 = vld [vmem:[%s4 + $0x30] sm:$0xff]
    %v2141 = vld [vmem:[%s4 + $0x38] sm:$0xff]
    %v2142 = vld [vmem:[%s4 + $0x40] sm:$0xff]
    %v2143 = vld [vmem:[%s4 + $0x48] sm:$0xff]
    %v2144 = vld [vmem:[%s4 + $0x50] sm:$0x33]
    %v2156 = vunpack.c.l.b16 %v2134
    %v2157 = vunpack.c.h.b16 %v2134
    %v2158 = vunpack.c.l.b16 %v2135
    %v2159 = vunpack.c.h.b16 %v2135
    %v2160 = vunpack.c.l.b16 %v2136
    %v2161 = vunpack.c.h.b16 %v2136
    %v2162 = vunpack.c.l.b16 %v2137
    %v2163 = vunpack.c.h.b16 %v2137
    %v2164 = vunpack.c.l.b16 %v2138
    %v2165 = vunpack.c.h.b16 %v2138
    %v2166 = vunpack.c.l.b16 %v2139
    %v2167 = vunpack.c.h.b16 %v2139
    %v2168 = vunpack.c.l.b16 %v2140
    %v2169 = vunpack.c.h.b16 %v2140
    %v2170 = vunpack.c.l.b16 %v2141
    %v2171 = vunpack.c.h.b16 %v2141
    %v2172 = vunpack.c.l.b16 %v2142
    %v2173 = vunpack.c.h.b16 %v2142
    %v2174 = vunpack.c.l.b16 %v2143
    %v2175 = vunpack.c.h.b16 %v2143
    %v2176 = vunpack.c.l.b16 %v2144
    %v2177 = vunpack.c.h.b16 %v2144
    %v2178 = vpack.c.b16 %v2158, %v2156
    %v2179 = vpack.c.b16 %v2159, %v2157
    %v2180 = vpack.c.b16 %v2162, %v2160
    %v2181 = vpack.c.b16 %v2163, %v2161
    %v2182 = vpack.c.b16 %v2166, %v2164
    %v2183 = vpack.c.b16 %v2167, %v2165
    %v2184 = vpack.c.b16 %v2170, %v2168
    %v2185 = vpack.c.b16 %v2171, %v2169
    %v2186 = vpack.c.b16 %v2174, %v2172
    %v2187 = vpack.c.b16 %v2175, %v2173
    %v2188 = vpack.c.b16 %v2176, %v2176
    %v2189 = vpack.c.b16 %v2177, %v2177
    %v2197 = vsel %vm2017, %v2179, 0
    %v2200 = vsel %vm2017, %v2181, 0
    %v2203 = vsel %vm2017, %v2183, 0
    %v2206 = vsel %vm2017, %v2185, 0
    %v2209 = vsel %vm2017, %v2187, 0
    %v2212 = vsel %vm2017, %v2189, 0
    %2214 = vmatprep.subr.bf16.mxu0 %v1934
    %2215 = vmatpush1.bf16.msra.mxu0 %v1933
    %2216 = vmatprep.subr.bf16.mxu0 %v1936
    %2217 = vmatpush1.bf16.msra.mxu0 %v1935
    %2218 = vmatprep.subr.bf16.mxu0 %v1938
    %2219 = vmatpush1.bf16.msra.mxu0 %v1937
    %2220 = vmatprep.subr.bf16.mxu0 %v1940
    %2221 = vmatpush1.bf16.msra.mxu0 %v1939
    %2222 = vmatprep.subr.bf16.mxu0 %v1942
    %2223 = vmatpush1.bf16.msra.mxu0 %v1941
    %2224 = vmatprep.subr.bf16.mxu0 %v1944
    %2225 = vmatpush1.bf16.msra.mxu0 %v1943
    %2226 = vmatprep.subr.bf16.mxu0 %v1946
    %2227 = vmatpush1.bf16.msra.mxu0 %v1945
    %2228 = vmatprep.subr.bf16.mxu0 %v1948
    %2229 = vmatpush1.bf16.msra.mxu0 %v1947
    %2230 = vmatprep.subr.bf16.mxu0 %v1950
    %2231 = vmatpush1.bf16.msra.mxu0 %v1949
    %2232 = vmatprep.subr.bf16.mxu0 %v1952
    %2233 = vmatpush1.bf16.msra.mxu0 %v1951
    %2234 = vmatprep.subr.bf16.mxu0 %v2041
    %2235 = vmatpush1.bf16.msra.mxu0 %v2038
    %2236 = vmatprep.subr.bf16.mxu0 0
    %2237 = vmatpush1.bf16.msra.mxu0 0
    %2238 = vmatprep.subr.bf16.mxu0 0
    %2239 = vmatpush1.bf16.msra.mxu0 0
    %2240 = vmatprep.subr.bf16.mxu0 0
    %2241 = vmatpush1.bf16.msra.mxu0 0
    %2242 = vmatprep.subr.bf16.mxu0 0
    %2243 = vmatpush1.bf16.msra.mxu0 0
    %2244 = vmatprep.subr.bf16.mxu0 0
    %2245 = vmatpush1.bf16.msra.mxu0 0
    %2246 = vmatprep.mubr.bf16.mxu0 %v2197
    %2247 = vmatmul.mubr.bf16.gmra.mrb[0].mxu0 %v2178
    %v2248 = vpop.f32.mrb[0].mxu0
    %v2249 = vadd.f32 0.0, %v2248
    %v2250 = vpop.f32.mrb[0].mxu0
    %v2251 = vadd.f32 0.0, %v2250
    %v2252 = vpop.f32.mrb[0].mxu0
    %v2253 = vadd.f32 0.0, %v2252
    %v2254 = vpop.f32.mrb[0].mxu0
    %v2255 = vadd.f32 0.0, %v2254
    %2256 = vmatprep.mubr.bf16.mxu0 %v2200
    %2257 = vmatmul.mubr.bf16.gmra.mrb[0].mxu0 %v2180
    %v2258 = vpop.f32.mrb[0].mxu0
    %v2259 = vadd.f32 0.0, %v2258
    %v2260 = vpop.f32.mrb[0].mxu0
    %v2261 = vadd.f32 0.0, %v2260
    %v2262 = vpop.f32.mrb[0].mxu0
    %v2263 = vadd.f32 0.0, %v2262
    %v2264 = vpop.f32.mrb[0].mxu0
    %v2265 = vadd.f32 0.0, %v2264
    %2266 = vmatprep.mubr.bf16.mxu0 %v2203
    %2267 = vmatmul.mubr.bf16.gmra.mrb[0].mxu0 %v2182
    %v2268 = vpop.f32.mrb[0].mxu0
    %v2269 = vadd.f32 0.0, %v2268
    %v2270 = vpop.f32.mrb[0].mxu0
    %v2271 = vadd.f32 0.0, %v2270
    %v2272 = vpop.f32.mrb[0].mxu0
    %v2273 = vadd.f32 0.0, %v2272
    %v2274 = vpop.f32.mrb[0].mxu0
    %v2275 = vadd.f32 0.0, %v2274
    %2276 = vmatprep.mubr.bf16.mxu0 %v2206
    %2277 = vmatmul.mubr.bf16.gmra.mrb[0].mxu0 %v2184
    %v2278 = vpop.f32.mrb[0].mxu0
    %v2279 = vadd.f32 0.0, %v2278
    %v2280 = vpop.f32.mrb[0].mxu0
    %v2281 = vadd.f32 0.0, %v2280
    %v2282 = vpop.f32.mrb[0].mxu0
    %v2283 = vadd.f32 0.0, %v2282
    %v2284 = vpop.f32.mrb[0].mxu0
    %v2285 = vadd.f32 0.0, %v2284
    %2286 = vmatprep.mubr.bf16.mxu0 %v2209
    %2287 = vmatmul.mubr.bf16.gmra.mrb[0].mxu0 %v2186
    %v2288 = vpop.f32.mrb[0].mxu0
    %v2289 = vadd.f32 0.0, %v2288
    %v2290 = vpop.f32.mrb[0].mxu0
    %v2291 = vadd.f32 0.0, %v2290
    %v2292 = vpop.f32.mrb[0].mxu0
    %v2293 = vadd.f32 0.0, %v2292
    %v2294 = vpop.f32.mrb[0].mxu0
    %v2295 = vadd.f32 0.0, %v2294
    %2296 = vmatprep.mubr.bf16.mxu0 %v2212
    %2297 = vmatmul.mubr.bf16.gmra.mrb[0].mxu0 %v2188
    %v2298 = vpop.f32.mrb[0].mxu0
    %v2299 = vadd.f32 0.0, %v2298
    %v2300 = vpop.f32.mrb[0].mxu0
    %v2301 = vadd.f32 0.0, %v2300
    %v2302 = vpop.f32.mrb[0].mxu0
    %v2303 = vpop.f32.mrb[0].mxu0
    %2304 = vdwg.mxu0
    %v2305 = vmax.f32 %v2078, %v2249
    %v2306 = vmax.f32 %v2080, %v2251
    %v2307 = vmax.f32 %v2082, %v2253
    %v2308 = vmax.f32 %v2084, %v2255
    %v2309 = vmax.f32 %v2088, %v2259
    %v2310 = vmax.f32 %v2090, %v2261
    %v2311 = vmax.f32 %v2092, %v2263
    %v2312 = vmax.f32 %v2094, %v2265
    %v2313 = vmax.f32 %v2098, %v2269
    %v2314 = vmax.f32 %v2100, %v2271
    %v2315 = vmax.f32 %v2102, %v2273
    %v2316 = vmax.f32 %v2104, %v2275
    %v2317 = vmax.f32 %v2108, %v2279
    %v2318 = vmax.f32 %v2110, %v2281
    %v2319 = vmax.f32 %v2112, %v2283
    %v2320 = vmax.f32 %v2114, %v2285
    %v2321 = vmax.f32 %v2118, %v2289
    %v2322 = vmax.f32 %v2120, %v2291
    %v2323 = vmax.f32 %v2122, %v2293
    %v2324 = vmax.f32 %v2124, %v2295
    %v2325 = vmax.f32 %v2128, %v2299
    %v2326 = vmax.f32 %v2130, %v2301
    %2349 = vrot.lane.b32.xlu0 %v2305, 127
    %v2350 = vpop.permute.xlu0 %2349
    %2351 = vrot.lane.b32.xlu0 %v2306, 127
    %v2352 = vpop.permute.xlu0 %2351
    %2353 = vrot.lane.b32.xlu0 %v2307, 127
    %v2354 = vpop.permute.xlu0 %2353
    %2355 = vrot.lane.b32.xlu0 %v2308, 127
    %v2356 = vpop.permute.xlu0 %2355
    %2357 = vrot.lane.b32.xlu0 %v2309, 127
    %v2358 = vpop.permute.xlu0 %2357
    %2359 = vrot.lane.b32.xlu0 %v2310, 127
    %v2360 = vpop.permute.xlu0 %2359
    %2361 = vrot.lane.b32.xlu0 %v2311, 127
    %v2362 = vpop.permute.xlu0 %2361
    %2363 = vrot.lane.b32.xlu0 %v2312, 127
    %v2364 = vpop.permute.xlu0 %2363
    %2365 = vrot.lane.b32.xlu0 %v2313, 127
    %v2366 = vpop.permute.xlu0 %2365
    %2367 = vrot.lane.b32.xlu0 %v2314, 127
    %v2368 = vpop.permute.xlu0 %2367
    %2369 = vrot.lane.b32.xlu0 %v2315, 127
    %v2370 = vpop.permute.xlu0 %2369
    %2371 = vrot.lane.b32.xlu0 %v2316, 127
    %v2372 = vpop.permute.xlu0 %2371
    %2373 = vrot.lane.b32.xlu0 %v2317, 127
    %v2374 = vpop.permute.xlu0 %2373
    %2375 = vrot.lane.b32.xlu0 %v2318, 127
    %v2376 = vpop.permute.xlu0 %2375
    %2377 = vrot.lane.b32.xlu0 %v2319, 127
    %v2378 = vpop.permute.xlu0 %2377
    %2379 = vrot.lane.b32.xlu0 %v2320, 127
    %v2380 = vpop.permute.xlu0 %2379
    %2381 = vrot.lane.b32.xlu0 %v2321, 127
    %v2382 = vpop.permute.xlu0 %2381
    %2383 = vrot.lane.b32.xlu0 %v2322, 127
    %v2384 = vpop.permute.xlu0 %2383
    %2385 = vrot.lane.b32.xlu0 %v2323, 127
    %v2386 = vpop.permute.xlu0 %2385
    %2387 = vrot.lane.b32.xlu0 %v2324, 127
    %v2388 = vpop.permute.xlu0 %2387
    %2389 = vrot.lane.b32.xlu0 %v2325, 127
    %v2390 = vpop.permute.xlu0 %2389
    %2391 = vrot.lane.b32.xlu0 %v2326, 127
    %v2392 = vpop.permute.xlu0 %2391
    %vm2393 = vcmask 1039360
    %v2394 = vsel %vm2393, %v2350, %v2352
    %v2395 = vsel %vm2393, %v2354, %v2356
    %v2396 = vsel %vm2393, %v2358, %v2360
    %v2397 = vsel %vm2393, %v2362, %v2364
    %v2398 = vsel %vm2393, %v2366, %v2368
    %v2399 = vsel %vm2393, %v2370, %v2372
    %v2400 = vsel %vm2393, %v2374, %v2376
    %v2401 = vsel %vm2393, %v2378, %v2380
    %v2402 = vsel %vm2393, %v2382, %v2384
    %v2403 = vsel %vm2393, %v2386, %v2388
    %v2404 = vsel %vm2393, %v2390, %v2392
    %v2427 = vmax.f32 %v2305, %v2394
    %v2428 = vmax.f32 %v2306, %v2352
    %v2429 = vmax.f32 %v2307, %v2395
    %v2430 = vmax.f32 %v2308, %v2356
    %v2431 = vmax.f32 %v2309, %v2396
    %v2432 = vmax.f32 %v2310, %v2360
    %v2433 = vmax.f32 %v2311, %v2397
    %v2434 = vmax.f32 %v2312, %v2364
    %v2435 = vmax.f32 %v2313, %v2398
    %v2436 = vmax.f32 %v2314, %v2368
    %v2437 = vmax.f32 %v2315, %v2399
    %v2438 = vmax.f32 %v2316, %v2372
    %v2439 = vmax.f32 %v2317, %v2400
    %v2440 = vmax.f32 %v2318, %v2376
    %v2441 = vmax.f32 %v2319, %v2401
    %v2442 = vmax.f32 %v2320, %v2380
    %v2443 = vmax.f32 %v2321, %v2402
    %v2444 = vmax.f32 %v2322, %v2384
    %v2445 = vmax.f32 %v2323, %v2403
    %v2446 = vmax.f32 %v2324, %v2388
    %v2447 = vmax.f32 %v2325, %v2404
    %v2448 = vmax.f32 %v2326, %v2392
    %v2449 = vpack.c.bf16 %v2429, %v2427
    %v2450 = vpack.c.bf16 %v2430, %v2428
    %v2451 = vpack.c.bf16 %v2433, %v2431
    %v2452 = vpack.c.bf16 %v2434, %v2432
    %v2453 = vpack.c.bf16 %v2437, %v2435
    %v2454 = vpack.c.bf16 %v2438, %v2436
    %v2455 = vpack.c.bf16 %v2441, %v2439
    %v2456 = vpack.c.bf16 %v2442, %v2440
    %v2457 = vpack.c.bf16 %v2445, %v2443
    %v2458 = vpack.c.bf16 %v2446, %v2444
    %v2459 = vpack.c.bf16 %v2447, %v2447
    %v2460 = vpack.c.bf16 %v2448, %v2448
    %v2461 = vld [vmem:[#allocation6] sm:$0xf]
    %v2462 = vld [vmem:[#allocation6 + $0x4] sm:$0xf]
    %v2463 = vld [vmem:[#allocation6 + $0x8] sm:$0xf]
    %v2464 = vld [vmem:[#allocation6 + $0xc] sm:$0xf]
    %v2465 = vld [vmem:[#allocation6 + $0x10] sm:$0xf]
    %v2466 = vld [vmem:[#allocation6 + $0x14] sm:$0xf]
    %v2467 = vld [vmem:[#allocation6 + $0x18] sm:$0xf]
    %v2468 = vld [vmem:[#allocation6 + $0x1c] sm:$0xf]
    %v2469 = vld [vmem:[#allocation6 + $0x20] sm:$0xf]
    %v2470 = vld [vmem:[#allocation6 + $0x24] sm:$0xf]
    %v2471 = vld [vmem:[#allocation6 + $0x28] sm:$0xf]
    %v2472 = vld [vmem:[#allocation6 + $0x2c] sm:$0xf]
    %v2473 = vld [vmem:[#allocation6 + $0x30] sm:$0xf]
    %v2474 = vld [vmem:[#allocation6 + $0x34] sm:$0xf]
    %v2475 = vld [vmem:[#allocation6 + $0x38] sm:$0xf]
    %v2476 = vld [vmem:[#allocation6 + $0x3c] sm:$0xf]
    %v2477 = vld [vmem:[#allocation6 + $0x40] sm:$0xf]
    %v2478 = vld [vmem:[#allocation6 + $0x44] sm:$0xf]
    %v2479 = vld [vmem:[#allocation6 + $0x48] sm:$0xf]
    %v2480 = vld [vmem:[#allocation6 + $0x4c] sm:$0xf]
    %s2481 = scalar_lea.vmem [#allocation6], 80
    %v2482 = vld [vmem:[%s2481] sm:$0xf]
    %v2483 = vld [vmem:[%s2481 + $0x4] sm:$0xf]
    %v2484 = vld [vmem:[%s2481 + $0x8] sm:$0xf]
    %v2485 = vld [vmem:[%s2481 + $0xc] sm:$0xf]
    %v2486 = vld [vmem:[%s2481 + $0x10] sm:$0xf]
    %v2487 = vld [vmem:[%s2481 + $0x14] sm:$0xf]
    %v2488 = vld [vmem:[%s2481 + $0x18] sm:$0xf]
    %v2489 = vld [vmem:[%s2481 + $0x1c] sm:$0xf]
    %v2490 = vld [vmem:[%s2481 + $0x20] sm:$0xf]
    %v2491 = vld [vmem:[%s2481 + $0x24] sm:$0xf]
    %v2492 = vld [vmem:[%s2481 + $0x28] sm:$0xf]
    %v2493 = vld [vmem:[%s2481 + $0x2c] sm:$0xf]
    %v2494 = vld [vmem:[%s2481 + $0x30] sm:$0xf]
    %v2495 = vld [vmem:[%s2481 + $0x34] sm:$0xf]
    %v2496 = vld [vmem:[%s2481 + $0x38] sm:$0xf]
    %v2497 = vld [vmem:[%s2481 + $0x3c] sm:$0xf]
    %v2498 = vld [vmem:[%s2481 + $0x40] sm:$0xf]
    %v2499 = vld [vmem:[%s2481 + $0x44] sm:$0xf]
    %v2500 = vld [vmem:[%s2481 + $0x48] sm:$0xf]
    %v2501 = vld [vmem:[%s2481 + $0x4c] sm:$0xf]
    %v2522 = vunpack.c.l.b16 %v2482
    %v2523 = vunpack.c.l.b16 %v2483
    %v2524 = vunpack.c.l.b16 %v2484
    %v2525 = vunpack.c.l.b16 %v2485
    %v2526 = vunpack.c.l.b16 %v2486
    %v2527 = vunpack.c.l.b16 %v2487
    %v2528 = vunpack.c.l.b16 %v2488
    %v2529 = vunpack.c.l.b16 %v2489
    %v2530 = vunpack.c.l.b16 %v2490
    %v2531 = vunpack.c.l.b16 %v2491
    %v2532 = vunpack.c.l.b16 %v2492
    %v2533 = vunpack.c.l.b16 %v2493
    %v2534 = vunpack.c.l.b16 %v2494
    %v2535 = vunpack.c.l.b16 %v2495
    %v2536 = vunpack.c.l.b16 %v2496
    %v2537 = vunpack.c.l.b16 %v2497
    %v2538 = vunpack.c.l.b16 %v2498
    %v2539 = vunpack.c.l.b16 %v2499
    %v2540 = vunpack.c.l.b16 %v2500
    %v2541 = vunpack.c.l.b16 %v2501
    %v2542 = vpack.c.b16 %v2523, %v2522
    %v2543 = vpack.c.b16 %v2525, %v2524
    %v2544 = vpack.c.b16 %v2527, %v2526
    %v2545 = vpack.c.b16 %v2529, %v2528
    %v2546 = vpack.c.b16 %v2531, %v2530
    %v2547 = vpack.c.b16 %v2533, %v2532
    %v2548 = vpack.c.b16 %v2535, %v2534
    %v2549 = vpack.c.b16 %v2537, %v2536
    %v2550 = vpack.c.b16 %v2539, %v2538
    %v2551 = vpack.c.b16 %v2541, %v2540
    %2564 = vrot.lane.b32.xlu0 %v2449, 126
    %v2565 = vpop.permute.xlu0 %2564
    %2566 = vrot.lane.b32.xlu0 %v2450, 126
    %v2567 = vpop.permute.xlu0 %2566
    %2568 = vrot.lane.b32.xlu0 %v2451, 126
    %v2569 = vpop.permute.xlu0 %2568
    %2570 = vrot.lane.b32.xlu0 %v2452, 126
    %v2571 = vpop.permute.xlu0 %2570
    %2572 = vrot.lane.b32.xlu0 %v2453, 126
    %v2573 = vpop.permute.xlu0 %2572
    %2574 = vrot.lane.b32.xlu0 %v2454, 126
    %v2575 = vpop.permute.xlu0 %2574
    %2576 = vrot.lane.b32.xlu0 %v2455, 126
    %v2577 = vpop.permute.xlu0 %2576
    %2578 = vrot.lane.b32.xlu0 %v2456, 126
    %v2579 = vpop.permute.xlu0 %2578
    %2580 = vrot.lane.b32.xlu0 %v2457, 126
    %v2581 = vpop.permute.xlu0 %2580
    %2582 = vrot.lane.b32.xlu0 %v2458, 126
    %v2583 = vpop.permute.xlu0 %2582
    %2584 = vrot.lane.b32.xlu0 %v2459, 126
    %v2585 = vpop.permute.xlu0 %2584
    %2586 = vrot.lane.b32.xlu0 %v2460, 126
    %v2587 = vpop.permute.xlu0 %2586
    %v2588 = vsel %vm769, %v2565, %v2567
    %v2589 = vsel %vm769, %v2569, %v2571
    %v2590 = vsel %vm769, %v2573, %v2575
    %v2591 = vsel %vm769, %v2577, %v2579
    %v2592 = vsel %vm769, %v2581, %v2583
    %v2593 = vsel %vm769, %v2585, %v2587
    %vm2604 = vcmask 687104
    %v2606 = vsel %vm2604, %v2542, 0
    %v2609 = vsel %vm2604, %v2543, 0
    %v2612 = vsel %vm2604, %v2544, 0
    %v2615 = vsel %vm2604, %v2545, 0
    %v2618 = vsel %vm2604, %v2546, 0
    %v2621 = vsel %vm2604, %v2547, 0
    %v2624 = vsel %vm2604, %v2548, 0
    %v2627 = vsel %vm2604, %v2549, 0
    %v2630 = vsel %vm2604, %v2550, 0
    %v2633 = vsel %vm2604, %v2551, 0
    %vm2635 = vcmask 1041408
    %v2637 = vsel %vm2635, %v2593, 0
    %v2640 = vsel %vm2635, %v2587, 0
    %2642 = vmatprep.subr.bf16.mxu0 %v2567
    %2643 = vmatpush1.bf16.msra.mxu0 %v2588
    %2644 = vmatprep.subr.bf16.mxu0 %v2571
    %2645 = vmatpush1.bf16.msra.mxu0 %v2589
    %2646 = vmatprep.subr.bf16.mxu0 %v2575
    %2647 = vmatpush1.bf16.msra.mxu0 %v2590
    %2648 = vmatprep.subr.bf16.mxu0 %v2579
    %2649 = vmatpush1.bf16.msra.mxu0 %v2591
    %2650 = vmatprep.subr.bf16.mxu0 %v2583
    %2651 = vmatpush1.bf16.msra.mxu0 %v2592
    %2652 = vmatprep.subr.bf16.mxu0 %v2640
    %2653 = vmatpush1.bf16.msra.mxu0 %v2637
    %2654 = vmatprep.subr.bf16.mxu0 0
    %2655 = vmatpush1.bf16.msra.mxu0 0
    %2656 = vmatprep.subr.bf16.mxu0 0
    %2657 = vmatpush1.bf16.msra.mxu0 0
    %2658 = vmatprep.subr.bf16.mxu0 0
    %2659 = vmatpush1.bf16.msra.mxu0 0
    %2660 = vmatprep.subr.bf16.mxu0 0
    %2661 = vmatpush1.bf16.msra.mxu0 0
    %2662 = vmatprep.subr.bf16.mxu0 0
    %2663 = vmatpush1.bf16.msra.mxu0 0
    %2664 = vmatprep.subr.bf16.mxu0 0
    %2665 = vmatpush1.bf16.msra.mxu0 0
    %2666 = vmatprep.subr.bf16.mxu0 0
    %2667 = vmatpush1.bf16.msra.mxu0 0
    %2668 = vmatprep.subr.bf16.mxu0 0
    %2669 = vmatpush1.bf16.msra.mxu0 0
    %2670 = vmatprep.subr.bf16.mxu0 0
    %2671 = vmatpush1.bf16.msra.mxu0 0
    %2672 = vmatprep.subr.bf16.mxu0 0
    %2673 = vmatpush1.bf16.msra.mxu0 0
    %2674 = vmatprep.mubr.bf16.mxu0 0
    %2675 = vmatmul.mubr.bf16.gmra.mrb[0].mxu0 %v2606
    %v2676 = vpop.f32.mrb[0].mxu0
    %v2677 = vadd.f32 0.0, %v2676
    %v2678 = vpop.f32.mrb[0].mxu0
    %v2679 = vadd.f32 0.0, %v2678
    %v2680 = vpop.f32.mrb[0].mxu0
    %v2681 = vadd.f32 0.0, %v2680
    %v2682 = vpop.f32.mrb[0].mxu0
    %v2683 = vadd.f32 0.0, %v2682
    %2684 = vmatprep.mubr.bf16.mxu0 0
    %2685 = vmatmul.mubr.bf16.gmra.mrb[0].mxu0 %v2609
    %v2686 = vpop.f32.mrb[0].mxu0
    %v2687 = vadd.f32 0.0, %v2686
    %v2688 = vpop.f32.mrb[0].mxu0
    %v2689 = vadd.f32 0.0, %v2688
    %v2690 = vpop.f32.mrb[0].mxu0
    %v2691 = vadd.f32 0.0, %v2690
    %v2692 = vpop.f32.mrb[0].mxu0
    %v2693 = vadd.f32 0.0, %v2692
    %2694 = vmatprep.mubr.bf16.mxu0 0
    %2695 = vmatmul.mubr.bf16.gmra.mrb[0].mxu0 %v2612
    %v2696 = vpop.f32.mrb[0].mxu0
    %v2697 = vadd.f32 0.0, %v2696
    %v2698 = vpop.f32.mrb[0].mxu0
    %v2699 = vadd.f32 0.0, %v2698
    %v2700 = vpop.f32.mrb[0].mxu0
    %v2701 = vadd.f32 0.0, %v2700
    %v2702 = vpop.f32.mrb[0].mxu0
    %v2703 = vadd.f32 0.0, %v2702
    %2704 = vmatprep.mubr.bf16.mxu0 0
    %2705 = vmatmul.mubr.bf16.gmra.mrb[0].mxu0 %v2615
    %v2706 = vpop.f32.mrb[0].mxu0
    %v2707 = vadd.f32 0.0, %v2706
    %v2708 = vpop.f32.mrb[0].mxu0
    %v2709 = vadd.f32 0.0, %v2708
    %v2710 = vpop.f32.mrb[0].mxu0
    %v2711 = vadd.f32 0.0, %v2710
    %v2712 = vpop.f32.mrb[0].mxu0
    %v2713 = vadd.f32 0.0, %v2712
    %2714 = vmatprep.mubr.bf16.mxu0 0
    %2715 = vmatmul.mubr.bf16.gmra.mrb[0].mxu0 %v2618
    %v2716 = vpop.f32.mrb[0].mxu0
    %v2717 = vadd.f32 0.0, %v2716
    %v2718 = vpop.f32.mrb[0].mxu0
    %v2719 = vadd.f32 0.0, %v2718
    %v2720 = vpop.f32.mrb[0].mxu0
    %v2721 = vadd.f32 0.0, %v2720
    %v2722 = vpop.f32.mrb[0].mxu0
    %v2723 = vadd.f32 0.0, %v2722
    %2724 = vmatprep.mubr.bf16.mxu0 0
    %2725 = vmatmul.mubr.bf16.gmra.mrb[0].mxu0 %v2621
    %v2726 = vpop.f32.mrb[0].mxu0
    %v2727 = vadd.f32 0.0, %v2726
    %v2728 = vpop.f32.mrb[0].mxu0
    %v2729 = vadd.f32 0.0, %v2728
    %v2730 = vpop.f32.mrb[0].mxu0
    %v2731 = vadd.f32 0.0, %v2730
    %v2732 = vpop.f32.mrb[0].mxu0
    %v2733 = vadd.f32 0.0, %v2732
    %2734 = vmatprep.mubr.bf16.mxu0 0
    %2735 = vmatmul.mubr.bf16.gmra.mrb[0].mxu0 %v2624
    %v2736 = vpop.f32.mrb[0].mxu0
    %v2737 = vadd.f32 0.0, %v2736
    %v2738 = vpop.f32.mrb[0].mxu0
    %v2739 = vadd.f32 0.0, %v2738
    %v2740 = vpop.f32.mrb[0].mxu0
    %v2741 = vadd.f32 0.0, %v2740
    %v2742 = vpop.f32.mrb[0].mxu0
    %v2743 = vadd.f32 0.0, %v2742
    %2744 = vmatprep.mubr.bf16.mxu0 0
    %2745 = vmatmul.mubr.bf16.gmra.mrb[0].mxu0 %v2627
    %v2746 = vpop.f32.mrb[0].mxu0
    %v2747 = vadd.f32 0.0, %v2746
    %v2748 = vpop.f32.mrb[0].mxu0
    %v2749 = vadd.f32 0.0, %v2748
    %v2750 = vpop.f32.mrb[0].mxu0
    %v2751 = vadd.f32 0.0, %v2750
    %v2752 = vpop.f32.mrb[0].mxu0
    %v2753 = vadd.f32 0.0, %v2752
    %2754 = vmatprep.mubr.bf16.mxu0 0
    %2755 = vmatmul.mubr.bf16.gmra.mrb[0].mxu0 %v2630
    %v2756 = vpop.f32.mrb[0].mxu0
    %v2757 = vadd.f32 0.0, %v2756
    %v2758 = vpop.f32.mrb[0].mxu0
    %v2759 = vadd.f32 0.0, %v2758
    %v2760 = vpop.f32.mrb[0].mxu0
    %v2761 = vadd.f32 0.0, %v2760
    %v2762 = vpop.f32.mrb[0].mxu0
    %v2763 = vadd.f32 0.0, %v2762
    %2764 = vmatprep.mubr.bf16.mxu0 0
    %2765 = vmatmul.mubr.bf16.gmra.mrb[0].mxu0 %v2633
    %v2766 = vpop.f32.mrb[0].mxu0
    %v2767 = vadd.f32 0.0, %v2766
    %v2768 = vpop.f32.mrb[0].mxu0
    %v2769 = vadd.f32 0.0, %v2768
    %v2770 = vpop.f32.mrb[0].mxu0
    %v2771 = vadd.f32 0.0, %v2770
    %v2772 = vpop.f32.mrb[0].mxu0
    %v2773 = vadd.f32 0.0, %v2772
    %2774 = vdwg.mxu0
    %v2795 = vunpack.c.l.b16 %v2461
    %v2796 = vunpack.c.l.b16 %v2462
    %v2797 = vunpack.c.l.b16 %v2463
    %v2798 = vunpack.c.l.b16 %v2464
    %v2799 = vunpack.c.l.b16 %v2465
    %v2800 = vunpack.c.l.b16 %v2466
    %v2801 = vunpack.c.l.b16 %v2467
    %v2802 = vunpack.c.l.b16 %v2468
    %v2803 = vunpack.c.l.b16 %v2469
    %v2804 = vunpack.c.l.b16 %v2470
    %v2805 = vunpack.c.l.b16 %v2471
    %v2806 = vunpack.c.l.b16 %v2472
    %v2807 = vunpack.c.l.b16 %v2473
    %v2808 = vunpack.c.l.b16 %v2474
    %v2809 = vunpack.c.l.b16 %v2475
    %v2810 = vunpack.c.l.b16 %v2476
    %v2811 = vunpack.c.l.b16 %v2477
    %v2812 = vunpack.c.l.b16 %v2478
    %v2813 = vunpack.c.l.b16 %v2479
    %v2814 = vunpack.c.l.b16 %v2480
    %v2815 = vpack.c.b16 %v2796, %v2795
    %v2816 = vpack.c.b16 %v2798, %v2797
    %v2817 = vpack.c.b16 %v2800, %v2799
    %v2818 = vpack.c.b16 %v2802, %v2801
    %v2819 = vpack.c.b16 %v2804, %v2803
    %v2820 = vpack.c.b16 %v2806, %v2805
    %v2821 = vpack.c.b16 %v2808, %v2807
    %v2822 = vpack.c.b16 %v2810, %v2809
    %v2823 = vpack.c.b16 %v2812, %v2811
    %v2824 = vpack.c.b16 %v2814, %v2813
    %v2826 = vsel %vm2604, %v2815, 0
    %v2829 = vsel %vm2604, %v2816, 0
    %v2832 = vsel %vm2604, %v2817, 0
    %v2835 = vsel %vm2604, %v2818, 0
    %v2838 = vsel %vm2604, %v2819, 0
    %v2841 = vsel %vm2604, %v2820, 0
    %v2844 = vsel %vm2604, %v2821, 0
    %v2847 = vsel %vm2604, %v2822, 0
    %v2850 = vsel %vm2604, %v2823, 0
    %v2853 = vsel %vm2604, %v2824, 0
    %v2856 = vsel %vm2635, %v2459, 0
    %v2859 = vsel %vm2635, %v2460, 0
    %2861 = vmatprep.subr.bf16.mxu0 %v2450
    %2862 = vmatpush1.bf16.msra.mxu0 %v2449
    %2863 = vmatprep.subr.bf16.mxu0 %v2452
    %2864 = vmatpush1.bf16.msra.mxu0 %v2451
    %2865 = vmatprep.subr.bf16.mxu0 %v2454
    %2866 = vmatpush1.bf16.msra.mxu0 %v2453
    %2867 = vmatprep.subr.bf16.mxu0 %v2456
    %2868 = vmatpush1.bf16.msra.mxu0 %v2455
    %2869 = vmatprep.subr.bf16.mxu0 %v2458
    %2870 = vmatpush1.bf16.msra.mxu0 %v2457
    %2871 = vmatprep.subr.bf16.mxu0 %v2859
    %2872 = vmatpush1.bf16.msra.mxu0 %v2856
    %2873 = vmatprep.subr.bf16.mxu0 0
    %2874 = vmatpush1.bf16.msra.mxu0 0
    %2875 = vmatprep.subr.bf16.mxu0 0
    %2876 = vmatpush1.bf16.msra.mxu0 0
    %2877 = vmatprep.subr.bf16.mxu0 0
    %2878 = vmatpush1.bf16.msra.mxu0 0
    %2879 = vmatprep.subr.bf16.mxu0 0
    %2880 = vmatpush1.bf16.msra.mxu0 0
    %2881 = vmatprep.subr.bf16.mxu0 0
    %2882 = vmatpush1.bf16.msra.mxu0 0
    %2883 = vmatprep.subr.bf16.mxu0 0
    %2884 = vmatpush1.bf16.msra.mxu0 0
    %2885 = vmatprep.subr.bf16.mxu0 0
    %2886 = vmatpush1.bf16.msra.mxu0 0
    %2887 = vmatprep.subr.bf16.mxu0 0
    %2888 = vmatpush1.bf16.msra.mxu0 0
    %2889 = vmatprep.subr.bf16.mxu0 0
    %2890 = vmatpush1.bf16.msra.mxu0 0
    %2891 = vmatprep.subr.bf16.mxu0 0
    %2892 = vmatpush1.bf16.msra.mxu0 0
    %2893 = vmatprep.mubr.bf16.mxu0 0
    %2894 = vmatmul.mubr.bf16.gmra.mrb[0].mxu0 %v2826
    %v2895 = vpop.f32.mrb[0].mxu0
    %v2896 = vadd.f32 %v2677, %v2895
    %v2897 = vpop.f32.mrb[0].mxu0
    %v2898 = vadd.f32 %v2679, %v2897
    %v2899 = vpop.f32.mrb[0].mxu0
    %v2900 = vadd.f32 %v2681, %v2899
    %v2901 = vpop.f32.mrb[0].mxu0
    %v2902 = vadd.f32 %v2683, %v2901
    %2903 = vmatprep.mubr.bf16.mxu0 0
    %2904 = vmatmul.mubr.bf16.gmra.mrb[0].mxu0 %v2829
    %v2905 = vpop.f32.mrb[0].mxu0
    %v2906 = vadd.f32 %v2687, %v2905
    %v2907 = vpop.f32.mrb[0].mxu0
    %v2908 = vadd.f32 %v2689, %v2907
    %v2909 = vpop.f32.mrb[0].mxu0
    %v2910 = vadd.f32 %v2691, %v2909
    %v2911 = vpop.f32.mrb[0].mxu0
    %v2912 = vadd.f32 %v2693, %v2911
    %2913 = vmatprep.mubr.bf16.mxu0 0
    %2914 = vmatmul.mubr.bf16.gmra.mrb[0].mxu0 %v2832
    %v2915 = vpop.f32.mrb[0].mxu0
    %v2916 = vadd.f32 %v2697, %v2915
    %v2917 = vpop.f32.mrb[0].mxu0
    %v2918 = vadd.f32 %v2699, %v2917
    %v2919 = vpop.f32.mrb[0].mxu0
    %v2920 = vadd.f32 %v2701, %v2919
    %v2921 = vpop.f32.mrb[0].mxu0
    %v2922 = vadd.f32 %v2703, %v2921
    %2923 = vmatprep.mubr.bf16.mxu0 0
    %2924 = vmatmul.mubr.bf16.gmra.mrb[0].mxu0 %v2835
    %v2925 = vpop.f32.mrb[0].mxu0
    %v2926 = vadd.f32 %v2707, %v2925
    %v2927 = vpop.f32.mrb[0].mxu0
    %v2928 = vadd.f32 %v2709, %v2927
    %v2929 = vpop.f32.mrb[0].mxu0
    %v2930 = vadd.f32 %v2711, %v2929
    %v2931 = vpop.f32.mrb[0].mxu0
    %v2932 = vadd.f32 %v2713, %v2931
    %2933 = vmatprep.mubr.bf16.mxu0 0
    %2934 = vmatmul.mubr.bf16.gmra.mrb[0].mxu0 %v2838
    %v2935 = vpop.f32.mrb[0].mxu0
    %v2936 = vadd.f32 %v2717, %v2935
    %v2937 = vpop.f32.mrb[0].mxu0
    %v2938 = vadd.f32 %v2719, %v2937
    %v2939 = vpop.f32.mrb[0].mxu0
    %v2940 = vadd.f32 %v2721, %v2939
    %v2941 = vpop.f32.mrb[0].mxu0
    %v2942 = vadd.f32 %v2723, %v2941
    %2943 = vmatprep.mubr.bf16.mxu0 0
    %2944 = vmatmul.mubr.bf16.gmra.mrb[0].mxu0 %v2841
    %v2945 = vpop.f32.mrb[0].mxu0
    %v2946 = vadd.f32 %v2727, %v2945
    %v2947 = vpop.f32.mrb[0].mxu0
    %v2948 = vadd.f32 %v2729, %v2947
    %v2949 = vpop.f32.mrb[0].mxu0
    %v2950 = vadd.f32 %v2731, %v2949
    %v2951 = vpop.f32.mrb[0].mxu0
    %v2952 = vadd.f32 %v2733, %v2951
    %2953 = vmatprep.mubr.bf16.mxu0 0
    %2954 = vmatmul.mubr.bf16.gmra.mrb[0].mxu0 %v2844
    %v2955 = vpop.f32.mrb[0].mxu0
    %v2956 = vadd.f32 %v2737, %v2955
    %v2957 = vpop.f32.mrb[0].mxu0
    %v2958 = vadd.f32 %v2739, %v2957
    %v2959 = vpop.f32.mrb[0].mxu0
    %v2960 = vadd.f32 %v2741, %v2959
    %v2961 = vpop.f32.mrb[0].mxu0
    %v2962 = vadd.f32 %v2743, %v2961
    %2963 = vmatprep.mubr.bf16.mxu0 0
    %2964 = vmatmul.mubr.bf16.gmra.mrb[0].mxu0 %v2847
    %v2965 = vpop.f32.mrb[0].mxu0
    %v2966 = vadd.f32 %v2747, %v2965
    %v2967 = vpop.f32.mrb[0].mxu0
    %v2968 = vadd.f32 %v2749, %v2967
    %v2969 = vpop.f32.mrb[0].mxu0
    %v2970 = vadd.f32 %v2751, %v2969
    %v2971 = vpop.f32.mrb[0].mxu0
    %v2972 = vadd.f32 %v2753, %v2971
    %2973 = vmatprep.mubr.bf16.mxu0 0
    %2974 = vmatmul.mubr.bf16.gmra.mrb[0].mxu0 %v2850
    %v2975 = vpop.f32.mrb[0].mxu0
    %v2976 = vadd.f32 %v2757, %v2975
    %v2977 = vpop.f32.mrb[0].mxu0
    %v2978 = vadd.f32 %v2759, %v2977
    %v2979 = vpop.f32.mrb[0].mxu0
    %v2980 = vadd.f32 %v2761, %v2979
    %v2981 = vpop.f32.mrb[0].mxu0
    %v2982 = vadd.f32 %v2763, %v2981
    %2983 = vmatprep.mubr.bf16.mxu0 0
    %2984 = vmatmul.mubr.bf16.gmra.mrb[0].mxu0 %v2853
    %v2985 = vpop.f32.mrb[0].mxu0
    %v2986 = vadd.f32 %v2767, %v2985
    %v2987 = vpop.f32.mrb[0].mxu0
    %v2988 = vadd.f32 %v2769, %v2987
    %v2989 = vpop.f32.mrb[0].mxu0
    %v2990 = vadd.f32 %v2771, %v2989
    %v2991 = vpop.f32.mrb[0].mxu0
    %v2992 = vadd.f32 %v2773, %v2991
    %2993 = vdwg.mxu0
    %s2994 = scalar_lea.vmem [#allocation6], 160
    %v2995 = vld [vmem:[%s2994] sm:$0xf]
    %v2996 = vld [vmem:[%s2994 + $0x4] sm:$0xf]
    %v2997 = vld [vmem:[%s2994 + $0x8] sm:$0xf]
    %v2998 = vld [vmem:[%s2994 + $0xc] sm:$0xf]
    %v2999 = vld [vmem:[%s2994 + $0x10] sm:$0xf]
    %v3000 = vld [vmem:[%s2994 + $0x14] sm:$0xf]
    %v3001 = vld [vmem:[%s2994 + $0x18] sm:$0xf]
    %v3002 = vld [vmem:[%s2994 + $0x1c] sm:$0xf]
    %v3003 = vld [vmem:[%s2994 + $0x20] sm:$0xf]
    %v3004 = vld [vmem:[%s2994 + $0x24] sm:$0xf]
    %v3005 = vld [vmem:[%s2994 + $0x28] sm:$0xf]
    %v3006 = vld [vmem:[%s2994 + $0x2c] sm:$0xf]
    %v3007 = vld [vmem:[%s2994 + $0x30] sm:$0xf]
    %v3008 = vld [vmem:[%s2994 + $0x34] sm:$0xf]
    %v3009 = vld [vmem:[%s2994 + $0x38] sm:$0xf]
    %v3010 = vld [vmem:[%s2994 + $0x3c] sm:$0xf]
    %v3011 = vld [vmem:[%s2994 + $0x40] sm:$0xf]
    %v3012 = vld [vmem:[%s2994 + $0x44] sm:$0xf]
    %v3013 = vld [vmem:[%s2994 + $0x48] sm:$0xf]
    %v3014 = vld [vmem:[%s2994 + $0x4c] sm:$0xf]
    %v3035 = vunpack.c.l.b16 %v2995
    %v3036 = vunpack.c.l.b16 %v2996
    %v3037 = vunpack.c.l.b16 %v2997
    %v3038 = vunpack.c.l.b16 %v2998
    %v3039 = vunpack.c.l.b16 %v2999
    %v3040 = vunpack.c.l.b16 %v3000
    %v3041 = vunpack.c.l.b16 %v3001
    %v3042 = vunpack.c.l.b16 %v3002
    %v3043 = vunpack.c.l.b16 %v3003
    %v3044 = vunpack.c.l.b16 %v3004
    %v3045 = vunpack.c.l.b16 %v3005
    %v3046 = vunpack.c.l.b16 %v3006
    %v3047 = vunpack.c.l.b16 %v3007
    %v3048 = vunpack.c.l.b16 %v3008
    %v3049 = vunpack.c.l.b16 %v3009
    %v3050 = vunpack.c.l.b16 %v3010
    %v3051 = vunpack.c.l.b16 %v3011
    %v3052 = vunpack.c.l.b16 %v3012
    %v3053 = vunpack.c.l.b16 %v3013
    %v3054 = vunpack.c.l.b16 %v3014
    %v3055 = vpack.c.b16 %v3036, %v3035
    %v3056 = vpack.c.b16 %v3038, %v3037
    %v3057 = vpack.c.b16 %v3040, %v3039
    %v3058 = vpack.c.b16 %v3042, %v3041
    %v3059 = vpack.c.b16 %v3044, %v3043
    %v3060 = vpack.c.b16 %v3046, %v3045
    %v3061 = vpack.c.b16 %v3048, %v3047
    %v3062 = vpack.c.b16 %v3050, %v3049
    %v3063 = vpack.c.b16 %v3052, %v3051
    %v3064 = vpack.c.b16 %v3054, %v3053
    %3065 = vrot.lane.b32.xlu0 %v2449, 124
    %v3066 = vpop.permute.xlu0 %3065
    %3067 = vrot.lane.b32.xlu0 %v2450, 124
    %v3068 = vpop.permute.xlu0 %3067
    %3069 = vrot.lane.b32.xlu0 %v2451, 124
    %v3070 = vpop.permute.xlu0 %3069
    %3071 = vrot.lane.b32.xlu0 %v2452, 124
    %v3072 = vpop.permute.xlu0 %3071
    %3073 = vrot.lane.b32.xlu0 %v2453, 124
    %v3074 = vpop.permute.xlu0 %3073
    %3075 = vrot.lane.b32.xlu0 %v2454, 124
    %v3076 = vpop.permute.xlu0 %3075
    %3077 = vrot.lane.b32.xlu0 %v2455, 124
    %v3078 = vpop.permute.xlu0 %3077
    %3079 = vrot.lane.b32.xlu0 %v2456, 124
    %v3080 = vpop.permute.xlu0 %3079
    %3081 = vrot.lane.b32.xlu0 %v2457, 124
    %v3082 = vpop.permute.xlu0 %3081
    %3083 = vrot.lane.b32.xlu0 %v2458, 124
    %v3084 = vpop.permute.xlu0 %3083
    %3085 = vrot.lane.b32.xlu0 %v2459, 124
    %v3086 = vpop.permute.xlu0 %3085
    %3087 = vrot.lane.b32.xlu0 %v2460, 124
    %v3088 = vpop.permute.xlu0 %3087
    %v3089 = vsel %vm1409, %v3066, %v3068
    %v3090 = vsel %vm1409, %v3070, %v3072
    %v3091 = vsel %vm1409, %v3074, %v3076
    %v3092 = vsel %vm1409, %v3078, %v3080
    %v3093 = vsel %vm1409, %v3082, %v3084
    %v3094 = vsel %vm1409, %v3086, %v3088
    %v3106 = vsel %vm2604, %v3055, 0
    %v3109 = vsel %vm2604, %v3056, 0
    %v3112 = vsel %vm2604, %v3057, 0
    %v3115 = vsel %vm2604, %v3058, 0
    %v3118 = vsel %vm2604, %v3059, 0
    %v3121 = vsel %vm2604, %v3060, 0
    %v3124 = vsel %vm2604, %v3061, 0
    %v3127 = vsel %vm2604, %v3062, 0
    %v3130 = vsel %vm2604, %v3063, 0
    %v3133 = vsel %vm2604, %v3064, 0
    %v3136 = vsel %vm2635, %v3094, 0
    %v3139 = vsel %vm2635, %v3088, 0
    %3141 = vmatprep.subr.bf16.mxu0 %v3068
    %3142 = vmatpush1.bf16.msra.mxu0 %v3089
    %3143 = vmatprep.subr.bf16.mxu0 %v3072
    %3144 = vmatpush1.bf16.msra.mxu0 %v3090
    %3145 = vmatprep.subr.bf16.mxu0 %v3076
    %3146 = vmatpush1.bf16.msra.mxu0 %v3091
    %3147 = vmatprep.subr.bf16.mxu0 %v3080
    %3148 = vmatpush1.bf16.msra.mxu0 %v3092
    %3149 = vmatprep.subr.bf16.mxu0 %v3084
    %3150 = vmatpush1.bf16.msra.mxu0 %v3093
    %3151 = vmatprep.subr.bf16.mxu0 %v3139
    %3152 = vmatpush1.bf16.msra.mxu0 %v3136
    %3153 = vmatprep.subr.bf16.mxu0 0
    %3154 = vmatpush1.bf16.msra.mxu0 0
    %3155 = vmatprep.subr.bf16.mxu0 0
    %3156 = vmatpush1.bf16.msra.mxu0 0
    %3157 = vmatprep.subr.bf16.mxu0 0
    %3158 = vmatpush1.bf16.msra.mxu0 0
    %3159 = vmatprep.subr.bf16.mxu0 0
    %3160 = vmatpush1.bf16.msra.mxu0 0
    %3161 = vmatprep.subr.bf16.mxu0 0
    %3162 = vmatpush1.bf16.msra.mxu0 0
    %3163 = vmatprep.subr.bf16.mxu0 0
    %3164 = vmatpush1.bf16.msra.mxu0 0
    %3165 = vmatprep.subr.bf16.mxu0 0
    %3166 = vmatpush1.bf16.msra.mxu0 0
    %3167 = vmatprep.subr.bf16.mxu0 0
    %3168 = vmatpush1.bf16.msra.mxu0 0
    %3169 = vmatprep.subr.bf16.mxu0 0
    %3170 = vmatpush1.bf16.msra.mxu0 0
    %3171 = vmatprep.subr.bf16.mxu0 0
    %3172 = vmatpush1.bf16.msra.mxu0 0
    %3173 = vmatprep.mubr.bf16.mxu0 0
    %3174 = vmatmul.mubr.bf16.gmra.mrb[0].mxu0 %v3106
    %v3175 = vpop.f32.mrb[0].mxu0
    %v3176 = vadd.f32 0.0, %v3175
    %v3177 = vpop.f32.mrb[0].mxu0
    %v3178 = vadd.f32 0.0, %v3177
    %v3179 = vpop.f32.mrb[0].mxu0
    %v3180 = vadd.f32 0.0, %v3179
    %v3181 = vpop.f32.mrb[0].mxu0
    %v3182 = vadd.f32 0.0, %v3181
    %3183 = vmatprep.mubr.bf16.mxu0 0
    %3184 = vmatmul.mubr.bf16.gmra.mrb[0].mxu0 %v3109
    %v3185 = vpop.f32.mrb[0].mxu0
    %v3186 = vadd.f32 0.0, %v3185
    %v3187 = vpop.f32.mrb[0].mxu0
    %v3188 = vadd.f32 0.0, %v3187
    %v3189 = vpop.f32.mrb[0].mxu0
    %v3190 = vadd.f32 0.0, %v3189
    %v3191 = vpop.f32.mrb[0].mxu0
    %v3192 = vadd.f32 0.0, %v3191
    %3193 = vmatprep.mubr.bf16.mxu0 0
    %3194 = vmatmul.mubr.bf16.gmra.mrb[0].mxu0 %v3112
    %v3195 = vpop.f32.mrb[0].mxu0
    %v3196 = vadd.f32 0.0, %v3195
    %v3197 = vpop.f32.mrb[0].mxu0
    %v3198 = vadd.f32 0.0, %v3197
    %v3199 = vpop.f32.mrb[0].mxu0
    %v3200 = vadd.f32 0.0, %v3199
    %v3201 = vpop.f32.mrb[0].mxu0
    %v3202 = vadd.f32 0.0, %v3201
    %3203 = vmatprep.mubr.bf16.mxu0 0
    %3204 = vmatmul.mubr.bf16.gmra.mrb[0].mxu0 %v3115
    %v3205 = vpop.f32.mrb[0].mxu0
    %v3206 = vadd.f32 0.0, %v3205
    %v3207 = vpop.f32.mrb[0].mxu0
    %v3208 = vadd.f32 0.0, %v3207
    %v3209 = vpop.f32.mrb[0].mxu0
    %v3210 = vadd.f32 0.0, %v3209
    %v3211 = vpop.f32.mrb[0].mxu0
    %v3212 = vadd.f32 0.0, %v3211
    %3213 = vmatprep.mubr.bf16.mxu0 0
    %3214 = vmatmul.mubr.bf16.gmra.mrb[0].mxu0 %v3118
    %v3215 = vpop.f32.mrb[0].mxu0
    %v3216 = vadd.f32 0.0, %v3215
    %v3217 = vpop.f32.mrb[0].mxu0
    %v3218 = vadd.f32 0.0, %v3217
    %v3219 = vpop.f32.mrb[0].mxu0
    %v3220 = vadd.f32 0.0, %v3219
    %v3221 = vpop.f32.mrb[0].mxu0
    %v3222 = vadd.f32 0.0, %v3221
    %3223 = vmatprep.mubr.bf16.mxu0 0
    %3224 = vmatmul.mubr.bf16.gmra.mrb[0].mxu0 %v3121
    %v3225 = vpop.f32.mrb[0].mxu0
    %v3226 = vadd.f32 0.0, %v3225
    %v3227 = vpop.f32.mrb[0].mxu0
    %v3228 = vadd.f32 0.0, %v3227
    %v3229 = vpop.f32.mrb[0].mxu0
    %v3230 = vadd.f32 0.0, %v3229
    %v3231 = vpop.f32.mrb[0].mxu0
    %v3232 = vadd.f32 0.0, %v3231
    %3233 = vmatprep.mubr.bf16.mxu0 0
    %3234 = vmatmul.mubr.bf16.gmra.mrb[0].mxu0 %v3124
    %v3235 = vpop.f32.mrb[0].mxu0
    %v3236 = vadd.f32 0.0, %v3235
    %v3237 = vpop.f32.mrb[0].mxu0
    %v3238 = vadd.f32 0.0, %v3237
    %v3239 = vpop.f32.mrb[0].mxu0
    %v3240 = vadd.f32 0.0, %v3239
    %v3241 = vpop.f32.mrb[0].mxu0
    %v3242 = vadd.f32 0.0, %v3241
    %3243 = vmatprep.mubr.bf16.mxu0 0
    %3244 = vmatmul.mubr.bf16.gmra.mrb[0].mxu0 %v3127
    %v3245 = vpop.f32.mrb[0].mxu0
    %v3246 = vadd.f32 0.0, %v3245
    %v3247 = vpop.f32.mrb[0].mxu0
    %v3248 = vadd.f32 0.0, %v3247
    %v3249 = vpop.f32.mrb[0].mxu0
    %v3250 = vadd.f32 0.0, %v3249
    %v3251 = vpop.f32.mrb[0].mxu0
    %v3252 = vadd.f32 0.0, %v3251
    %3253 = vmatprep.mubr.bf16.mxu0 0
    %3254 = vmatmul.mubr.bf16.gmra.mrb[0].mxu0 %v3130
    %v3255 = vpop.f32.mrb[0].mxu0
    %v3256 = vadd.f32 0.0, %v3255
    %v3257 = vpop.f32.mrb[0].mxu0
    %v3258 = vadd.f32 0.0, %v3257
    %v3259 = vpop.f32.mrb[0].mxu0
    %v3260 = vadd.f32 0.0, %v3259
    %v3261 = vpop.f32.mrb[0].mxu0
    %v3262 = vadd.f32 0.0, %v3261
    %3263 = vmatprep.mubr.bf16.mxu0 0
    %3264 = vmatmul.mubr.bf16.gmra.mrb[0].mxu0 %v3133
    %v3265 = vpop.f32.mrb[0].mxu0
    %v3266 = vadd.f32 0.0, %v3265
    %v3267 = vpop.f32.mrb[0].mxu0
    %v3268 = vadd.f32 0.0, %v3267
    %v3269 = vpop.f32.mrb[0].mxu0
    %v3270 = vadd.f32 0.0, %v3269
    %v3271 = vpop.f32.mrb[0].mxu0
    %v3272 = vadd.f32 0.0, %v3271
    %3273 = vdwg.mxu0
    %v3274 = vadd.f32 %v2896, %v3176
    %v3275 = vadd.f32 %v2898, %v3178
    %v3276 = vadd.f32 %v2900, %v3180
    %v3277 = vadd.f32 %v2902, %v3182
    %v3278 = vadd.f32 %v2906, %v3186
    %v3279 = vadd.f32 %v2908, %v3188
    %v3280 = vadd.f32 %v2910, %v3190
    %v3281 = vadd.f32 %v2912, %v3192
    %v3282 = vadd.f32 %v2916, %v3196
    %v3283 = vadd.f32 %v2918, %v3198
    %v3284 = vadd.f32 %v2920, %v3200
    %v3285 = vadd.f32 %v2922, %v3202
    %v3286 = vadd.f32 %v2926, %v3206
    %v3287 = vadd.f32 %v2928, %v3208
    %v3288 = vadd.f32 %v2930, %v3210
    %v3289 = vadd.f32 %v2932, %v3212
    %v3290 = vadd.f32 %v2936, %v3216
    %v3291 = vadd.f32 %v2938, %v3218
    %v3292 = vadd.f32 %v2940, %v3220
    %v3293 = vadd.f32 %v2942, %v3222
    %v3294 = vadd.f32 %v2946, %v3226
    %v3295 = vadd.f32 %v2948, %v3228
    %v3296 = vadd.f32 %v2950, %v3230
    %v3297 = vadd.f32 %v2952, %v3232
    %v3298 = vadd.f32 %v2956, %v3236
    %v3299 = vadd.f32 %v2958, %v3238
    %v3300 = vadd.f32 %v2960, %v3240
    %v3301 = vadd.f32 %v2962, %v3242
    %v3302 = vadd.f32 %v2966, %v3246
    %v3303 = vadd.f32 %v2968, %v3248
    %v3304 = vadd.f32 %v2970, %v3250
    %v3305 = vadd.f32 %v2972, %v3252
    %v3306 = vadd.f32 %v2976, %v3256
    %v3307 = vadd.f32 %v2978, %v3258
    %v3308 = vadd.f32 %v2980, %v3260
    %v3309 = vadd.f32 %v2982, %v3262
    %v3310 = vadd.f32 %v2986, %v3266
    %v3311 = vadd.f32 %v2988, %v3268
    %v3312 = vadd.f32 %v2990, %v3270
    %v3313 = vadd.f32 %v2992, %v3272
    %s3314 = scalar_lea.vmem [#allocation6], 240
    %v3315 = vld [vmem:[%s3314] sm:$0xf]
    %v3316 = vld [vmem:[%s3314 + $0x4] sm:$0xf]
    %v3317 = vld [vmem:[%s3314 + $0x8] sm:$0xf]
    %v3318 = vld [vmem:[%s3314 + $0xc] sm:$0xf]
    %v3319 = vld [vmem:[%s3314 + $0x10] sm:$0xf]
    %v3320 = vld [vmem:[%s3314 + $0x14] sm:$0xf]
    %v3321 = vld [vmem:[%s3314 + $0x18] sm:$0xf]
    %v3322 = vld [vmem:[%s3314 + $0x1c] sm:$0xf]
    %v3323 = vld [vmem:[%s3314 + $0x20] sm:$0xf]
    %v3324 = vld [vmem:[%s3314 + $0x24] sm:$0xf]
    %v3325 = vld [vmem:[%s3314 + $0x28] sm:$0xf]
    %v3326 = vld [vmem:[%s3314 + $0x2c] sm:$0xf]
    %v3327 = vld [vmem:[%s3314 + $0x30] sm:$0xf]
    %v3328 = vld [vmem:[%s3314 + $0x34] sm:$0xf]
    %v3329 = vld [vmem:[%s3314 + $0x38] sm:$0xf]
    %v3330 = vld [vmem:[%s3314 + $0x3c] sm:$0xf]
    %v3331 = vld [vmem:[%s3314 + $0x40] sm:$0xf]
    %v3332 = vld [vmem:[%s3314 + $0x44] sm:$0xf]
    %v3333 = vld [vmem:[%s3314 + $0x48] sm:$0xf]
    %v3334 = vld [vmem:[%s3314 + $0x4c] sm:$0xf]
    %v3355 = vunpack.c.l.b16 %v3315
    %v3356 = vunpack.c.l.b16 %v3316
    %v3357 = vunpack.c.l.b16 %v3317
    %v3358 = vunpack.c.l.b16 %v3318
    %v3359 = vunpack.c.l.b16 %v3319
    %v3360 = vunpack.c.l.b16 %v3320
    %v3361 = vunpack.c.l.b16 %v3321
    %v3362 = vunpack.c.l.b16 %v3322
    %v3363 = vunpack.c.l.b16 %v3323
    %v3364 = vunpack.c.l.b16 %v3324
    %v3365 = vunpack.c.l.b16 %v3325
    %v3366 = vunpack.c.l.b16 %v3326
    %v3367 = vunpack.c.l.b16 %v3327
    %v3368 = vunpack.c.l.b16 %v3328
    %v3369 = vunpack.c.l.b16 %v3329
    %v3370 = vunpack.c.l.b16 %v3330
    %v3371 = vunpack.c.l.b16 %v3331
    %v3372 = vunpack.c.l.b16 %v3332
    %v3373 = vunpack.c.l.b16 %v3333
    %v3374 = vunpack.c.l.b16 %v3334
    %v3375 = vpack.c.b16 %v3356, %v3355
    %v3376 = vpack.c.b16 %v3358, %v3357
    %v3377 = vpack.c.b16 %v3360, %v3359
    %v3378 = vpack.c.b16 %v3362, %v3361
    %v3379 = vpack.c.b16 %v3364, %v3363
    %v3380 = vpack.c.b16 %v3366, %v3365
    %v3381 = vpack.c.b16 %v3368, %v3367
    %v3382 = vpack.c.b16 %v3370, %v3369
    %v3383 = vpack.c.b16 %v3372, %v3371
    %v3384 = vpack.c.b16 %v3374, %v3373
    %3385 = vrot.lane.b32.xlu0 %v2449, 122
    %v3386 = vpop.permute.xlu0 %3385
    %3387 = vrot.lane.b32.xlu0 %v2450, 122
    %v3388 = vpop.permute.xlu0 %3387
    %3389 = vrot.lane.b32.xlu0 %v2451, 122
    %v3390 = vpop.permute.xlu0 %3389
    %3391 = vrot.lane.b32.xlu0 %v2452, 122
    %v3392 = vpop.permute.xlu0 %3391
    %3393 = vrot.lane.b32.xlu0 %v2453, 122
    %v3394 = vpop.permute.xlu0 %3393
    %3395 = vrot.lane.b32.xlu0 %v2454, 122
    %v3396 = vpop.permute.xlu0 %3395
    %3397 = vrot.lane.b32.xlu0 %v2455, 122
    %v3398 = vpop.permute.xlu0 %3397
    %3399 = vrot.lane.b32.xlu0 %v2456, 122
    %v3400 = vpop.permute.xlu0 %3399
    %3401 = vrot.lane.b32.xlu0 %v2457, 122
    %v3402 = vpop.permute.xlu0 %3401
    %3403 = vrot.lane.b32.xlu0 %v2458, 122
    %v3404 = vpop.permute.xlu0 %3403
    %3405 = vrot.lane.b32.xlu0 %v2459, 122
    %v3406 = vpop.permute.xlu0 %3405
    %3407 = vrot.lane.b32.xlu0 %v2460, 122
    %v3408 = vpop.permute.xlu0 %3407
    %vm3409 = vcmask 998400
    %v3410 = vsel %vm3409, %v3386, %v3388
    %v3411 = vsel %vm3409, %v3390, %v3392
    %v3412 = vsel %vm3409, %v3394, %v3396
    %v3413 = vsel %vm3409, %v3398, %v3400
    %v3414 = vsel %vm3409, %v3402, %v3404
    %v3415 = vsel %vm3409, %v3406, %v3408
    %v3427 = vsel %vm2604, %v3375, 0
    %v3430 = vsel %vm2604, %v3376, 0
    %v3433 = vsel %vm2604, %v3377, 0
    %v3436 = vsel %vm2604, %v3378, 0
    %v3439 = vsel %vm2604, %v3379, 0
    %v3442 = vsel %vm2604, %v3380, 0
    %v3445 = vsel %vm2604, %v3381, 0
    %v3448 = vsel %vm2604, %v3382, 0
    %v3451 = vsel %vm2604, %v3383, 0
    %v3454 = vsel %vm2604, %v3384, 0
    %v3457 = vsel %vm2635, %v3415, 0
    %v3460 = vsel %vm2635, %v3408, 0
    %3462 = vmatprep.subr.bf16.mxu0 %v3388
    %3463 = vmatpush1.bf16.msra.mxu0 %v3410
    %3464 = vmatprep.subr.bf16.mxu0 %v3392
    %3465 = vmatpush1.bf16.msra.mxu0 %v3411
    %3466 = vmatprep.subr.bf16.mxu0 %v3396
    %3467 = vmatpush1.bf16.msra.mxu0 %v3412
    %3468 = vmatprep.subr.bf16.mxu0 %v3400
    %3469 = vmatpush1.bf16.msra.mxu0 %v3413
    %3470 = vmatprep.subr.bf16.mxu0 %v3404
    %3471 = vmatpush1.bf16.msra.mxu0 %v3414
    %3472 = vmatprep.subr.bf16.mxu0 %v3460
    %3473 = vmatpush1.bf16.msra.mxu0 %v3457
    %3474 = vmatprep.subr.bf16.mxu0 0
    %3475 = vmatpush1.bf16.msra.mxu0 0
    %3476 = vmatprep.subr.bf16.mxu0 0
    %3477 = vmatpush1.bf16.msra.mxu0 0
    %3478 = vmatprep.subr.bf16.mxu0 0
    %3479 = vmatpush1.bf16.msra.mxu0 0
    %3480 = vmatprep.subr.bf16.mxu0 0
    %3481 = vmatpush1.bf16.msra.mxu0 0
    %3482 = vmatprep.subr.bf16.mxu0 0
    %3483 = vmatpush1.bf16.msra.mxu0 0
    %3484 = vmatprep.subr.bf16.mxu0 0
    %3485 = vmatpush1.bf16.msra.mxu0 0
    %3486 = vmatprep.subr.bf16.mxu0 0
    %3487 = vmatpush1.bf16.msra.mxu0 0
    %3488 = vmatprep.subr.bf16.mxu0 0
    %3489 = vmatpush1.bf16.msra.mxu0 0
    %3490 = vmatprep.subr.bf16.mxu0 0
    %3491 = vmatpush1.bf16.msra.mxu0 0
    %3492 = vmatprep.subr.bf16.mxu0 0
    %3493 = vmatpush1.bf16.msra.mxu0 0
    %3494 = vmatprep.mubr.bf16.mxu0 0
    %3495 = vmatmul.mubr.bf16.gmra.mrb[0].mxu0 %v3427
    %v3496 = vpop.f32.mrb[0].mxu0
    %v3497 = vadd.f32 0.0, %v3496
    %v3498 = vpop.f32.mrb[0].mxu0
    %v3499 = vadd.f32 0.0, %v3498
    %v3500 = vpop.f32.mrb[0].mxu0
    %v3501 = vadd.f32 0.0, %v3500
    %v3502 = vpop.f32.mrb[0].mxu0
    %v3503 = vadd.f32 0.0, %v3502
    %3504 = vmatprep.mubr.bf16.mxu0 0
    %3505 = vmatmul.mubr.bf16.gmra.mrb[0].mxu0 %v3430
    %v3506 = vpop.f32.mrb[0].mxu0
    %v3507 = vadd.f32 0.0, %v3506
    %v3508 = vpop.f32.mrb[0].mxu0
    %v3509 = vadd.f32 0.0, %v3508
    %v3510 = vpop.f32.mrb[0].mxu0
    %v3511 = vadd.f32 0.0, %v3510
    %v3512 = vpop.f32.mrb[0].mxu0
    %v3513 = vadd.f32 0.0, %v3512
    %3514 = vmatprep.mubr.bf16.mxu0 0
    %3515 = vmatmul.mubr.bf16.gmra.mrb[0].mxu0 %v3433
    %v3516 = vpop.f32.mrb[0].mxu0
    %v3517 = vadd.f32 0.0, %v3516
    %v3518 = vpop.f32.mrb[0].mxu0
    %v3519 = vadd.f32 0.0, %v3518
    %v3520 = vpop.f32.mrb[0].mxu0
    %v3521 = vadd.f32 0.0, %v3520
    %v3522 = vpop.f32.mrb[0].mxu0
    %v3523 = vadd.f32 0.0, %v3522
    %3524 = vmatprep.mubr.bf16.mxu0 0
    %3525 = vmatmul.mubr.bf16.gmra.mrb[0].mxu0 %v3436
    %v3526 = vpop.f32.mrb[0].mxu0
    %v3527 = vadd.f32 0.0, %v3526
    %v3528 = vpop.f32.mrb[0].mxu0
    %v3529 = vadd.f32 0.0, %v3528
    %v3530 = vpop.f32.mrb[0].mxu0
    %v3531 = vadd.f32 0.0, %v3530
    %v3532 = vpop.f32.mrb[0].mxu0
    %v3533 = vadd.f32 0.0, %v3532
    %3534 = vmatprep.mubr.bf16.mxu0 0
    %3535 = vmatmul.mubr.bf16.gmra.mrb[0].mxu0 %v3439
    %v3536 = vpop.f32.mrb[0].mxu0
    %v3537 = vadd.f32 0.0, %v3536
    %v3538 = vpop.f32.mrb[0].mxu0
    %v3539 = vadd.f32 0.0, %v3538
    %v3540 = vpop.f32.mrb[0].mxu0
    %v3541 = vadd.f32 0.0, %v3540
    %v3542 = vpop.f32.mrb[0].mxu0
    %v3543 = vadd.f32 0.0, %v3542
    %3544 = vmatprep.mubr.bf16.mxu0 0
    %3545 = vmatmul.mubr.bf16.gmra.mrb[0].mxu0 %v3442
    %v3546 = vpop.f32.mrb[0].mxu0
    %v3547 = vadd.f32 0.0, %v3546
    %v3548 = vpop.f32.mrb[0].mxu0
    %v3549 = vadd.f32 0.0, %v3548
    %v3550 = vpop.f32.mrb[0].mxu0
    %v3551 = vadd.f32 0.0, %v3550
    %v3552 = vpop.f32.mrb[0].mxu0
    %v3553 = vadd.f32 0.0, %v3552
    %3554 = vmatprep.mubr.bf16.mxu0 0
    %3555 = vmatmul.mubr.bf16.gmra.mrb[0].mxu0 %v3445
    %v3556 = vpop.f32.mrb[0].mxu0
    %v3557 = vadd.f32 0.0, %v3556
    %v3558 = vpop.f32.mrb[0].mxu0
    %v3559 = vadd.f32 0.0, %v3558
    %v3560 = vpop.f32.mrb[0].mxu0
    %v3561 = vadd.f32 0.0, %v3560
    %v3562 = vpop.f32.mrb[0].mxu0
    %v3563 = vadd.f32 0.0, %v3562
    %3564 = vmatprep.mubr.bf16.mxu0 0
    %3565 = vmatmul.mubr.bf16.gmra.mrb[0].mxu0 %v3448
    %v3566 = vpop.f32.mrb[0].mxu0
    %v3567 = vadd.f32 0.0, %v3566
    %v3568 = vpop.f32.mrb[0].mxu0
    %v3569 = vadd.f32 0.0, %v3568
    %v3570 = vpop.f32.mrb[0].mxu0
    %v3571 = vadd.f32 0.0, %v3570
    %v3572 = vpop.f32.mrb[0].mxu0
    %v3573 = vadd.f32 0.0, %v3572
    %3574 = vmatprep.mubr.bf16.mxu0 0
    %3575 = vmatmul.mubr.bf16.gmra.mrb[0].mxu0 %v3451
    %v3576 = vpop.f32.mrb[0].mxu0
    %v3577 = vadd.f32 0.0, %v3576
    %v3578 = vpop.f32.mrb[0].mxu0
    %v3579 = vadd.f32 0.0, %v3578
    %v3580 = vpop.f32.mrb[0].mxu0
    %v3581 = vadd.f32 0.0, %v3580
    %v3582 = vpop.f32.mrb[0].mxu0
    %v3583 = vadd.f32 0.0, %v3582
    %3584 = vmatprep.mubr.bf16.mxu0 0
    %3585 = vmatmul.mubr.bf16.gmra.mrb[0].mxu0 %v3454
    %v3586 = vpop.f32.mrb[0].mxu0
    %v3587 = vadd.f32 0.0, %v3586
    %v3588 = vpop.f32.mrb[0].mxu0
    %v3589 = vadd.f32 0.0, %v3588
    %v3590 = vpop.f32.mrb[0].mxu0
    %v3591 = vadd.f32 0.0, %v3590
    %v3592 = vpop.f32.mrb[0].mxu0
    %v3593 = vadd.f32 0.0, %v3592
    %3594 = vdwg.mxu0
    %v3595 = vadd.f32 %v3274, %v3497
    %v3596 = vadd.f32 %v3275, %v3499
    %v3597 = vadd.f32 %v3276, %v3501
    %v3598 = vadd.f32 %v3277, %v3503
    %v3599 = vadd.f32 %v3278, %v3507
    %v3600 = vadd.f32 %v3279, %v3509
    %v3601 = vadd.f32 %v3280, %v3511
    %v3602 = vadd.f32 %v3281, %v3513
    %v3603 = vadd.f32 %v3282, %v3517
    %v3604 = vadd.f32 %v3283, %v3519
    %v3605 = vadd.f32 %v3284, %v3521
    %v3606 = vadd.f32 %v3285, %v3523
    %v3607 = vadd.f32 %v3286, %v3527
    %v3608 = vadd.f32 %v3287, %v3529
    %v3609 = vadd.f32 %v3288, %v3531
    %v3610 = vadd.f32 %v3289, %v3533
    %v3611 = vadd.f32 %v3290, %v3537
    %v3612 = vadd.f32 %v3291, %v3539
    %v3613 = vadd.f32 %v3292, %v3541
    %v3614 = vadd.f32 %v3293, %v3543
    %v3615 = vadd.f32 %v3294, %v3547
    %v3616 = vadd.f32 %v3295, %v3549
    %v3617 = vadd.f32 %v3296, %v3551
    %v3618 = vadd.f32 %v3297, %v3553
    %v3619 = vadd.f32 %v3298, %v3557
    %v3620 = vadd.f32 %v3299, %v3559
    %v3621 = vadd.f32 %v3300, %v3561
    %v3622 = vadd.f32 %v3301, %v3563
    %v3623 = vadd.f32 %v3302, %v3567
    %v3624 = vadd.f32 %v3303, %v3569
    %v3625 = vadd.f32 %v3304, %v3571
    %v3626 = vadd.f32 %v3305, %v3573
    %v3627 = vadd.f32 %v3306, %v3577
    %v3628 = vadd.f32 %v3307, %v3579
    %v3629 = vadd.f32 %v3308, %v3581
    %v3630 = vadd.f32 %v3309, %v3583
    %v3631 = vadd.f32 %v3310, %v3587
    %v3632 = vadd.f32 %v3311, %v3589
    %v3633 = vadd.f32 %v3312, %v3591
    %v3634 = vadd.f32 %v3313, %v3593
    %s3635 = scalar_lea.vmem [#allocation6], 320
    %v3636 = vld [vmem:[%s3635] sm:$0xf]
    %v3637 = vld [vmem:[%s3635 + $0x4] sm:$0xf]
    %v3638 = vld [vmem:[%s3635 + $0x8] sm:$0xf]
    %v3639 = vld [vmem:[%s3635 + $0xc] sm:$0xf]
    %v3640 = vld [vmem:[%s3635 + $0x10] sm:$0xf]
    %v3641 = vld [vmem:[%s3635 + $0x14] sm:$0xf]
    %v3642 = vld [vmem:[%s3635 + $0x18] sm:$0xf]
    %v3643 = vld [vmem:[%s3635 + $0x1c] sm:$0xf]
    %v3644 = vld [vmem:[%s3635 + $0x20] sm:$0xf]
    %v3645 = vld [vmem:[%s3635 + $0x24] sm:$0xf]
    %v3646 = vld [vmem:[%s3635 + $0x28] sm:$0xf]
    %v3647 = vld [vmem:[%s3635 + $0x2c] sm:$0xf]
    %v3648 = vld [vmem:[%s3635 + $0x30] sm:$0xf]
    %v3649 = vld [vmem:[%s3635 + $0x34] sm:$0xf]
    %v3650 = vld [vmem:[%s3635 + $0x38] sm:$0xf]
    %v3651 = vld [vmem:[%s3635 + $0x3c] sm:$0xf]
    %v3652 = vld [vmem:[%s3635 + $0x40] sm:$0xf]
    %v3653 = vld [vmem:[%s3635 + $0x44] sm:$0xf]
    %v3654 = vld [vmem:[%s3635 + $0x48] sm:$0xf]
    %v3655 = vld [vmem:[%s3635 + $0x4c] sm:$0xf]
    %v3676 = vunpack.c.l.b16 %v3636
    %v3677 = vunpack.c.l.b16 %v3637
    %v3678 = vunpack.c.l.b16 %v3638
    %v3679 = vunpack.c.l.b16 %v3639
    %v3680 = vunpack.c.l.b16 %v3640
    %v3681 = vunpack.c.l.b16 %v3641
    %v3682 = vunpack.c.l.b16 %v3642
    %v3683 = vunpack.c.l.b16 %v3643
    %v3684 = vunpack.c.l.b16 %v3644
    %v3685 = vunpack.c.l.b16 %v3645
    %v3686 = vunpack.c.l.b16 %v3646
    %v3687 = vunpack.c.l.b16 %v3647
    %v3688 = vunpack.c.l.b16 %v3648
    %v3689 = vunpack.c.l.b16 %v3649
    %v3690 = vunpack.c.l.b16 %v3650
    %v3691 = vunpack.c.l.b16 %v3651
    %v3692 = vunpack.c.l.b16 %v3652
    %v3693 = vunpack.c.l.b16 %v3653
    %v3694 = vunpack.c.l.b16 %v3654
    %v3695 = vunpack.c.l.b16 %v3655
    %v3696 = vpack.c.b16 %v3677, %v3676
    %v3697 = vpack.c.b16 %v3679, %v3678
    %v3698 = vpack.c.b16 %v3681, %v3680
    %v3699 = vpack.c.b16 %v3683, %v3682
    %v3700 = vpack.c.b16 %v3685, %v3684
    %v3701 = vpack.c.b16 %v3687, %v3686
    %v3702 = vpack.c.b16 %v3689, %v3688
    %v3703 = vpack.c.b16 %v3691, %v3690
    %v3704 = vpack.c.b16 %v3693, %v3692
    %v3705 = vpack.c.b16 %v3695, %v3694
    %3706 = vrot.lane.b32.xlu0 %v2449, 120
    %v3707 = vpop.permute.xlu0 %3706
    %3708 = vrot.lane.b32.xlu0 %v2450, 120
    %v3709 = vpop.permute.xlu0 %3708
    %3710 = vrot.lane.b32.xlu0 %v2451, 120
    %v3711 = vpop.permute.xlu0 %3710
    %3712 = vrot.lane.b32.xlu0 %v2452, 120
    %v3713 = vpop.permute.xlu0 %3712
    %3714 = vrot.lane.b32.xlu0 %v2453, 120
    %v3715 = vpop.permute.xlu0 %3714
    %3716 = vrot.lane.b32.xlu0 %v2454, 120
    %v3717 = vpop.permute.xlu0 %3716
    %3718 = vrot.lane.b32.xlu0 %v2455, 120
    %v3719 = vpop.permute.xlu0 %3718
    %3720 = vrot.lane.b32.xlu0 %v2456, 120
    %v3721 = vpop.permute.xlu0 %3720
    %3722 = vrot.lane.b32.xlu0 %v2457, 120
    %v3723 = vpop.permute.xlu0 %3722
    %3724 = vrot.lane.b32.xlu0 %v2458, 120
    %v3725 = vpop.permute.xlu0 %3724
    %3726 = vrot.lane.b32.xlu0 %v2459, 120
    %v3727 = vpop.permute.xlu0 %3726
    %3728 = vrot.lane.b32.xlu0 %v2460, 120
    %v3729 = vpop.permute.xlu0 %3728
    %vm3730 = vcmask 982016
    %v3731 = vsel %vm3730, %v3707, %v3709
    %v3732 = vsel %vm3730, %v3711, %v3713
    %v3733 = vsel %vm3730, %v3715, %v3717
    %v3734 = vsel %vm3730, %v3719, %v3721
    %v3735 = vsel %vm3730, %v3723, %v3725
    %v3736 = vsel %vm3730, %v3727, %v3729
    %v3748 = vsel %vm2604, %v3696, 0
    %v3751 = vsel %vm2604, %v3697, 0
    %v3754 = vsel %vm2604, %v3698, 0
    %v3757 = vsel %vm2604, %v3699, 0
    %v3760 = vsel %vm2604, %v3700, 0
    %v3763 = vsel %vm2604, %v3701, 0
    %v3766 = vsel %vm2604, %v3702, 0
    %v3769 = vsel %vm2604, %v3703, 0
    %v3772 = vsel %vm2604, %v3704, 0
    %v3775 = vsel %vm2604, %v3705, 0
    %v3778 = vsel %vm2635, %v3736, 0
    %v3781 = vsel %vm2635, %v3729, 0
    %3783 = vmatprep.subr.bf16.mxu0 %v3709
    %3784 = vmatpush1.bf16.msra.mxu0 %v3731
    %3785 = vmatprep.subr.bf16.mxu0 %v3713
    %3786 = vmatpush1.bf16.msra.mxu0 %v3732
    %3787 = vmatprep.subr.bf16.mxu0 %v3717
    %3788 = vmatpush1.bf16.msra.mxu0 %v3733
    %3789 = vmatprep.subr.bf16.mxu0 %v3721
    %3790 = vmatpush1.bf16.msra.mxu0 %v3734
    %3791 = vmatprep.subr.bf16.mxu0 %v3725
    %3792 = vmatpush1.bf16.msra.mxu0 %v3735
    %3793 = vmatprep.subr.bf16.mxu0 %v3781
    %3794 = vmatpush1.bf16.msra.mxu0 %v3778
    %3795 = vmatprep.subr.bf16.mxu0 0
    %3796 = vmatpush1.bf16.msra.mxu0 0
    %3797 = vmatprep.subr.bf16.mxu0 0
    %3798 = vmatpush1.bf16.msra.mxu0 0
    %3799 = vmatprep.subr.bf16.mxu0 0
    %3800 = vmatpush1.bf16.msra.mxu0 0
    %3801 = vmatprep.subr.bf16.mxu0 0
    %3802 = vmatpush1.bf16.msra.mxu0 0
    %3803 = vmatprep.subr.bf16.mxu0 0
    %3804 = vmatpush1.bf16.msra.mxu0 0
    %3805 = vmatprep.subr.bf16.mxu0 0
    %3806 = vmatpush1.bf16.msra.mxu0 0
    %3807 = vmatprep.subr.bf16.mxu0 0
    %3808 = vmatpush1.bf16.msra.mxu0 0
    %3809 = vmatprep.subr.bf16.mxu0 0
    %3810 = vmatpush1.bf16.msra.mxu0 0
    %3811 = vmatprep.subr.bf16.mxu0 0
    %3812 = vmatpush1.bf16.msra.mxu0 0
    %3813 = vmatprep.subr.bf16.mxu0 0
    %3814 = vmatpush1.bf16.msra.mxu0 0
    %3815 = vmatprep.mubr.bf16.mxu0 0
    %3816 = vmatmul.mubr.bf16.gmra.mrb[0].mxu0 %v3748
    %v3817 = vpop.f32.mrb[0].mxu0
    %v3818 = vadd.f32 0.0, %v3817
    %v3819 = vpop.f32.mrb[0].mxu0
    %v3820 = vadd.f32 0.0, %v3819
    %v3821 = vpop.f32.mrb[0].mxu0
    %v3822 = vadd.f32 0.0, %v3821
    %v3823 = vpop.f32.mrb[0].mxu0
    %v3824 = vadd.f32 0.0, %v3823
    %3825 = vmatprep.mubr.bf16.mxu0 0
    %3826 = vmatmul.mubr.bf16.gmra.mrb[0].mxu0 %v3751
    %v3827 = vpop.f32.mrb[0].mxu0
    %v3828 = vadd.f32 0.0, %v3827
    %v3829 = vpop.f32.mrb[0].mxu0
    %v3830 = vadd.f32 0.0, %v3829
    %v3831 = vpop.f32.mrb[0].mxu0
    %v3832 = vadd.f32 0.0, %v3831
    %v3833 = vpop.f32.mrb[0].mxu0
    %v3834 = vadd.f32 0.0, %v3833
    %3835 = vmatprep.mubr.bf16.mxu0 0
    %3836 = vmatmul.mubr.bf16.gmra.mrb[0].mxu0 %v3754
    %v3837 = vpop.f32.mrb[0].mxu0
    %v3838 = vadd.f32 0.0, %v3837
    %v3839 = vpop.f32.mrb[0].mxu0
    %v3840 = vadd.f32 0.0, %v3839
    %v3841 = vpop.f32.mrb[0].mxu0
    %v3842 = vadd.f32 0.0, %v3841
    %v3843 = vpop.f32.mrb[0].mxu0
    %v3844 = vadd.f32 0.0, %v3843
    %3845 = vmatprep.mubr.bf16.mxu0 0
    %3846 = vmatmul.mubr.bf16.gmra.mrb[0].mxu0 %v3757
    %v3847 = vpop.f32.mrb[0].mxu0
    %v3848 = vadd.f32 0.0, %v3847
    %v3849 = vpop.f32.mrb[0].mxu0
    %v3850 = vadd.f32 0.0, %v3849
    %v3851 = vpop.f32.mrb[0].mxu0
    %v3852 = vadd.f32 0.0, %v3851
    %v3853 = vpop.f32.mrb[0].mxu0
    %v3854 = vadd.f32 0.0, %v3853
    %3855 = vmatprep.mubr.bf16.mxu0 0
    %3856 = vmatmul.mubr.bf16.gmra.mrb[0].mxu0 %v3760
    %v3857 = vpop.f32.mrb[0].mxu0
    %v3858 = vadd.f32 0.0, %v3857
    %v3859 = vpop.f32.mrb[0].mxu0
    %v3860 = vadd.f32 0.0, %v3859
    %v3861 = vpop.f32.mrb[0].mxu0
    %v3862 = vadd.f32 0.0, %v3861
    %v3863 = vpop.f32.mrb[0].mxu0
    %v3864 = vadd.f32 0.0, %v3863
    %3865 = vmatprep.mubr.bf16.mxu0 0
    %3866 = vmatmul.mubr.bf16.gmra.mrb[0].mxu0 %v3763
    %v3867 = vpop.f32.mrb[0].mxu0
    %v3868 = vadd.f32 0.0, %v3867
    %v3869 = vpop.f32.mrb[0].mxu0
    %v3870 = vadd.f32 0.0, %v3869
    %v3871 = vpop.f32.mrb[0].mxu0
    %v3872 = vadd.f32 0.0, %v3871
    %v3873 = vpop.f32.mrb[0].mxu0
    %v3874 = vadd.f32 0.0, %v3873
    %3875 = vmatprep.mubr.bf16.mxu0 0
    %3876 = vmatmul.mubr.bf16.gmra.mrb[0].mxu0 %v3766
    %v3877 = vpop.f32.mrb[0].mxu0
    %v3878 = vadd.f32 0.0, %v3877
    %v3879 = vpop.f32.mrb[0].mxu0
    %v3880 = vadd.f32 0.0, %v3879
    %v3881 = vpop.f32.mrb[0].mxu0
    %v3882 = vadd.f32 0.0, %v3881
    %v3883 = vpop.f32.mrb[0].mxu0
    %v3884 = vadd.f32 0.0, %v3883
    %3885 = vmatprep.mubr.bf16.mxu0 0
    %3886 = vmatmul.mubr.bf16.gmra.mrb[0].mxu0 %v3769
    %v3887 = vpop.f32.mrb[0].mxu0
    %v3888 = vadd.f32 0.0, %v3887
    %v3889 = vpop.f32.mrb[0].mxu0
    %v3890 = vadd.f32 0.0, %v3889
    %v3891 = vpop.f32.mrb[0].mxu0
    %v3892 = vadd.f32 0.0, %v3891
    %v3893 = vpop.f32.mrb[0].mxu0
    %v3894 = vadd.f32 0.0, %v3893
    %3895 = vmatprep.mubr.bf16.mxu0 0
    %3896 = vmatmul.mubr.bf16.gmra.mrb[0].mxu0 %v3772
    %v3897 = vpop.f32.mrb[0].mxu0
    %v3898 = vadd.f32 0.0, %v3897
    %v3899 = vpop.f32.mrb[0].mxu0
    %v3900 = vadd.f32 0.0, %v3899
    %v3901 = vpop.f32.mrb[0].mxu0
    %v3902 = vadd.f32 0.0, %v3901
    %v3903 = vpop.f32.mrb[0].mxu0
    %v3904 = vadd.f32 0.0, %v3903
    %3905 = vmatprep.mubr.bf16.mxu0 0
    %3906 = vmatmul.mubr.bf16.gmra.mrb[0].mxu0 %v3775
    %v3907 = vpop.f32.mrb[0].mxu0
    %v3908 = vadd.f32 0.0, %v3907
    %v3909 = vpop.f32.mrb[0].mxu0
    %v3910 = vadd.f32 0.0, %v3909
    %v3911 = vpop.f32.mrb[0].mxu0
    %v3912 = vadd.f32 0.0, %v3911
    %v3913 = vpop.f32.mrb[0].mxu0
    %v3914 = vadd.f32 0.0, %v3913
    %3915 = vdwg.mxu0
    %v3916 = vadd.f32 %v3595, %v3818
    %v3917 = vadd.f32 %v3596, %v3820
    %v3918 = vadd.f32 %v3597, %v3822
    %v3919 = vadd.f32 %v3598, %v3824
    %v3920 = vadd.f32 %v3599, %v3828
    %v3921 = vadd.f32 %v3600, %v3830
    %v3922 = vadd.f32 %v3601, %v3832
    %v3923 = vadd.f32 %v3602, %v3834
    %v3924 = vadd.f32 %v3603, %v3838
    %v3925 = vadd.f32 %v3604, %v3840
    %v3926 = vadd.f32 %v3605, %v3842
    %v3927 = vadd.f32 %v3606, %v3844
    %v3928 = vadd.f32 %v3607, %v3848
    %v3929 = vadd.f32 %v3608, %v3850
    %v3930 = vadd.f32 %v3609, %v3852
    %v3931 = vadd.f32 %v3610, %v3854
    %v3932 = vadd.f32 %v3611, %v3858
    %v3933 = vadd.f32 %v3612, %v3860
    %v3934 = vadd.f32 %v3613, %v3862
    %v3935 = vadd.f32 %v3614, %v3864
    %v3936 = vadd.f32 %v3615, %v3868
    %v3937 = vadd.f32 %v3616, %v3870
    %v3938 = vadd.f32 %v3617, %v3872
    %v3939 = vadd.f32 %v3618, %v3874
    %v3940 = vadd.f32 %v3619, %v3878
    %v3941 = vadd.f32 %v3620, %v3880
    %v3942 = vadd.f32 %v3621, %v3882
    %v3943 = vadd.f32 %v3622, %v3884
    %v3944 = vadd.f32 %v3623, %v3888
    %v3945 = vadd.f32 %v3624, %v3890
    %v3946 = vadd.f32 %v3625, %v3892
    %v3947 = vadd.f32 %v3626, %v3894
    %v3948 = vadd.f32 %v3627, %v3898
    %v3949 = vadd.f32 %v3628, %v3900
    %v3950 = vadd.f32 %v3629, %v3902
    %v3951 = vadd.f32 %v3630, %v3904
    %v3952 = vadd.f32 %v3631, %v3908
    %v3953 = vadd.f32 %v3632, %v3910
    %v3954 = vadd.f32 %v3633, %v3912
    %v3955 = vadd.f32 %v3634, %v3914
    %v3956 = vld [vmem:[%s6] sm:$0xff]
    %v3957 = vld [vmem:[%s6 + $0x8] sm:$0xff]
    %v3958 = vld [vmem:[%s6 + $0x10] sm:$0xff]
    %v3959 = vld [vmem:[%s6 + $0x18] sm:$0xff]
    %v3960 = vld [vmem:[%s6 + $0x20] sm:$0xff]
    %v3961 = vld [vmem:[%s6 + $0x28] sm:$0xff]
    %v3962 = vld [vmem:[%s6 + $0x30] sm:$0xff]
    %v3963 = vld [vmem:[%s6 + $0x38] sm:$0xff]
    %v3964 = vld [vmem:[%s6 + $0x40] sm:$0xff]
    %v3965 = vld [vmem:[%s6 + $0x48] sm:$0xff]
    %v3966 = vld [vmem:[%s6 + $0x50] sm:$0xff]
    %v3967 = vld [vmem:[%s6 + $0x58] sm:$0xff]
    %v3968 = vld [vmem:[%s6 + $0x60] sm:$0xff]
    %v3969 = vld [vmem:[%s6 + $0x68] sm:$0xff]
    %v3970 = vld [vmem:[%s6 + $0x70] sm:$0xff]
    %v3971 = vld [vmem:[%s6 + $0x78] sm:$0xff]
    %v3972 = vld [vmem:[%s6 + $0x80] sm:$0xff]
    %v3973 = vld [vmem:[%s6 + $0x88] sm:$0xff]
    %v3974 = vld [vmem:[%s6 + $0x90] sm:$0xff]
    %v3975 = vld [vmem:[%s6 + $0x98] sm:$0xff]
    %3977 = vset.pattern.permute.xlu0 0
    %3978 = vperm.xlu0 %3977, %v3956
    %v3979 = vpop.permute.xlu0 %3978
    %3982 = vset.pattern.permute.xlu0 0
    %3983 = vperm.xlu0 %3982, %v3957
    %v3984 = vpop.permute.xlu0 %3983
    %3987 = vset.pattern.permute.xlu0 0
    %3988 = vperm.xlu0 %3987, %v3958
    %v3989 = vpop.permute.xlu0 %3988
    %3992 = vset.pattern.permute.xlu0 0
    %3993 = vperm.xlu0 %3992, %v3959
    %v3994 = vpop.permute.xlu0 %3993
    %3997 = vset.pattern.permute.xlu0 0
    %3998 = vperm.xlu0 %3997, %v3960
    %v3999 = vpop.permute.xlu0 %3998
    %4002 = vset.pattern.permute.xlu0 0
    %4003 = vperm.xlu0 %4002, %v3961
    %v4004 = vpop.permute.xlu0 %4003
    %4007 = vset.pattern.permute.xlu0 0
    %4008 = vperm.xlu0 %4007, %v3962
    %v4009 = vpop.permute.xlu0 %4008
    %4012 = vset.pattern.permute.xlu0 0
    %4013 = vperm.xlu0 %4012, %v3963
    %v4014 = vpop.permute.xlu0 %4013
    %4017 = vset.pattern.permute.xlu0 0
    %4018 = vperm.xlu0 %4017, %v3964
    %v4019 = vpop.permute.xlu0 %4018
    %4022 = vset.pattern.permute.xlu0 0
    %4023 = vperm.xlu0 %4022, %v3965
    %v4024 = vpop.permute.xlu0 %4023
    %4027 = vset.pattern.permute.xlu0 0
    %4028 = vperm.xlu0 %4027, %v3966
    %v4029 = vpop.permute.xlu0 %4028
    %4032 = vset.pattern.permute.xlu0 0
    %4033 = vperm.xlu0 %4032, %v3967
    %v4034 = vpop.permute.xlu0 %4033
    %4037 = vset.pattern.permute.xlu0 0
    %4038 = vperm.xlu0 %4037, %v3968
    %v4039 = vpop.permute.xlu0 %4038
    %4042 = vset.pattern.permute.xlu0 0
    %4043 = vperm.xlu0 %4042, %v3969
    %v4044 = vpop.permute.xlu0 %4043
    %4047 = vset.pattern.permute.xlu0 0
    %4048 = vperm.xlu0 %4047, %v3970
    %v4049 = vpop.permute.xlu0 %4048
    %4052 = vset.pattern.permute.xlu0 0
    %4053 = vperm.xlu0 %4052, %v3971
    %v4054 = vpop.permute.xlu0 %4053
    %4057 = vset.pattern.permute.xlu0 0
    %4058 = vperm.xlu0 %4057, %v3972
    %v4059 = vpop.permute.xlu0 %4058
    %4062 = vset.pattern.permute.xlu0 0
    %4063 = vperm.xlu0 %4062, %v3973
    %v4064 = vpop.permute.xlu0 %4063
    %4067 = vset.pattern.permute.xlu0 0
    %4068 = vperm.xlu0 %4067, %v3974
    %v4069 = vpop.permute.xlu0 %4068
    %4072 = vset.pattern.permute.xlu0 0
    %4073 = vperm.xlu0 %4072, %v3975
    %v4074 = vpop.permute.xlu0 %4073
    %v4076 = vadd.f32 %v3916, %v3979
    %v4077 = vadd.f32 %v3917, %v3979
    %v4078 = vadd.f32 %v3918, %v3984
    %v4079 = vadd.f32 %v3919, %v3984
    %v4080 = vadd.f32 %v3920, %v3989
    %v4081 = vadd.f32 %v3921, %v3989
    %v4082 = vadd.f32 %v3922, %v3994
    %v4083 = vadd.f32 %v3923, %v3994
    %v4084 = vadd.f32 %v3924, %v3999
    %v4085 = vadd.f32 %v3925, %v3999
    %v4086 = vadd.f32 %v3926, %v4004
    %v4087 = vadd.f32 %v3927, %v4004
    %v4088 = vadd.f32 %v3928, %v4009
    %v4089 = vadd.f32 %v3929, %v4009
    %v4090 = vadd.f32 %v3930, %v4014
    %v4091 = vadd.f32 %v3931, %v4014
    %v4092 = vadd.f32 %v3932, %v4019
    %v4093 = vadd.f32 %v3933, %v4019
    %v4094 = vadd.f32 %v3934, %v4024
    %v4095 = vadd.f32 %v3935, %v4024
    %v4096 = vadd.f32 %v3936, %v4029
    %v4097 = vadd.f32 %v3937, %v4029
    %v4098 = vadd.f32 %v3938, %v4034
    %v4099 = vadd.f32 %v3939, %v4034
    %v4100 = vadd.f32 %v3940, %v4039
    %v4101 = vadd.f32 %v3941, %v4039
    %v4102 = vadd.f32 %v3942, %v4044
    %v4103 = vadd.f32 %v3943, %v4044
    %v4104 = vadd.f32 %v3944, %v4049
    %v4105 = vadd.f32 %v3945, %v4049
    %v4106 = vadd.f32 %v3946, %v4054
    %v4107 = vadd.f32 %v3947, %v4054
    %v4108 = vadd.f32 %v3948, %v4059
    %v4109 = vadd.f32 %v3949, %v4059
    %v4110 = vadd.f32 %v3950, %v4064
    %v4111 = vadd.f32 %v3951, %v4064
    %v4112 = vadd.f32 %v3952, %v4069
    %v4113 = vadd.f32 %v3953, %v4069
    %v4114 = vadd.f32 %v3954, %v4074
    %v4115 = vadd.f32 %v3955, %v4074
    %vm4116 = vcmp.ge.f32.partialorder %v4076, 0.0
    %vm4117 = vcmp.ge.f32.partialorder %v4077, 0.0
    %vm4118 = vcmp.ge.f32.partialorder %v4078, 0.0
    %vm4119 = vcmp.ge.f32.partialorder %v4079, 0.0
    %vm4120 = vcmp.ge.f32.partialorder %v4080, 0.0
    %vm4121 = vcmp.ge.f32.partialorder %v4081, 0.0
    %vm4122 = vcmp.ge.f32.partialorder %v4082, 0.0
    %vm4123 = vcmp.ge.f32.partialorder %v4083, 0.0
    %vm4124 = vcmp.ge.f32.partialorder %v4084, 0.0
    %vm4125 = vcmp.ge.f32.partialorder %v4085, 0.0
    %vm4126 = vcmp.ge.f32.partialorder %v4086, 0.0
    %vm4127 = vcmp.ge.f32.partialorder %v4087, 0.0
    %vm4128 = vcmp.ge.f32.partialorder %v4088, 0.0
    %vm4129 = vcmp.ge.f32.partialorder %v4089, 0.0
    %vm4130 = vcmp.ge.f32.partialorder %v4090, 0.0
    %vm4131 = vcmp.ge.f32.partialorder %v4091, 0.0
    %vm4132 = vcmp.ge.f32.partialorder %v4092, 0.0
    %vm4133 = vcmp.ge.f32.partialorder %v4093, 0.0
    %vm4134 = vcmp.ge.f32.partialorder %v4094, 0.0
    %vm4135 = vcmp.ge.f32.partialorder %v4095, 0.0
    %vm4136 = vcmp.ge.f32.partialorder %v4096, 0.0
    %vm4137 = vcmp.ge.f32.partialorder %v4097, 0.0
    %vm4138 = vcmp.ge.f32.partialorder %v4098, 0.0
    %vm4139 = vcmp.ge.f32.partialorder %v4099, 0.0
    %vm4140 = vcmp.ge.f32.partialorder %v4100, 0.0
    %vm4141 = vcmp.ge.f32.partialorder %v4101, 0.0
    %vm4142 = vcmp.ge.f32.partialorder %v4102, 0.0
    %vm4143 = vcmp.ge.f32.partialorder %v4103, 0.0
    %vm4144 = vcmp.ge.f32.partialorder %v4104, 0.0
    %vm4145 = vcmp.ge.f32.partialorder %v4105, 0.0
    %vm4146 = vcmp.ge.f32.partialorder %v4106, 0.0
    %vm4147 = vcmp.ge.f32.partialorder %v4107, 0.0
    %vm4148 = vcmp.ge.f32.partialorder %v4108, 0.0
    %vm4149 = vcmp.ge.f32.partialorder %v4109, 0.0
    %vm4150 = vcmp.ge.f32.partialorder %v4110, 0.0
    %vm4151 = vcmp.ge.f32.partialorder %v4111, 0.0
    %vm4152 = vcmp.ge.f32.partialorder %v4112, 0.0
    %vm4153 = vcmp.ge.f32.partialorder %v4113, 0.0
    %vm4154 = vcmp.ge.f32.partialorder %v4114, 0.0
    %vm4155 = vcmp.ge.f32.partialorder %v4115, 0.0
    %v4156 = vmul.f32 %v1848, %v4076
    %v4157 = vmul.f32 %v1848, %v4077
    %v4158 = vmul.f32 %v1848, %v4078
    %v4159 = vmul.f32 %v1848, %v4079
    %v4160 = vmul.f32 %v1848, %v4080
    %v4161 = vmul.f32 %v1848, %v4081
    %v4162 = vmul.f32 %v1848, %v4082
    %v4163 = vmul.f32 %v1848, %v4083
    %v4164 = vmul.f32 %v1848, %v4084
    %v4165 = vmul.f32 %v1848, %v4085
    %v4166 = vmul.f32 %v1848, %v4086
    %v4167 = vmul.f32 %v1848, %v4087
    %v4168 = vmul.f32 %v1848, %v4088
    %v4169 = vmul.f32 %v1848, %v4089
    %v4170 = vmul.f32 %v1848, %v4090
    %v4171 = vmul.f32 %v1848, %v4091
    %v4172 = vmul.f32 %v1848, %v4092
    %v4173 = vmul.f32 %v1848, %v4093
    %v4174 = vmul.f32 %v1848, %v4094
    %v4175 = vmul.f32 %v1848, %v4095
    %v4176 = vmul.f32 %v1848, %v4096
    %v4177 = vmul.f32 %v1848, %v4097
    %v4178 = vmul.f32 %v1848, %v4098
    %v4179 = vmul.f32 %v1848, %v4099
    %v4180 = vmul.f32 %v1848, %v4100
    %v4181 = vmul.f32 %v1848, %v4101
    %v4182 = vmul.f32 %v1848, %v4102
    %v4183 = vmul.f32 %v1848, %v4103
    %v4184 = vmul.f32 %v1848, %v4104
    %v4185 = vmul.f32 %v1848, %v4105
    %v4186 = vmul.f32 %v1848, %v4106
    %v4187 = vmul.f32 %v1848, %v4107
    %v4188 = vmul.f32 %v1848, %v4108
    %v4189 = vmul.f32 %v1848, %v4109
    %v4190 = vmul.f32 %v1848, %v4110
    %v4191 = vmul.f32 %v1848, %v4111
    %v4192 = vmul.f32 %v1848, %v4112
    %v4193 = vmul.f32 %v1848, %v4113
    %v4194 = vmul.f32 %v1848, %v4114
    %v4195 = vmul.f32 %v1848, %v4115
    %v4196 = vsel %vm4116, %v4076, %v4156
    %v4197 = vsel %vm4117, %v4077, %v4157
    %v4198 = vsel %vm4118, %v4078, %v4158
    %v4199 = vsel %vm4119, %v4079, %v4159
    %v4200 = vsel %vm4120, %v4080, %v4160
    %v4201 = vsel %vm4121, %v4081, %v4161
    %v4202 = vsel %vm4122, %v4082, %v4162
    %v4203 = vsel %vm4123, %v4083, %v4163
    %v4204 = vsel %vm4124, %v4084, %v4164
    %v4205 = vsel %vm4125, %v4085, %v4165
    %v4206 = vsel %vm4126, %v4086, %v4166
    %v4207 = vsel %vm4127, %v4087, %v4167
    %v4208 = vsel %vm4128, %v4088, %v4168
    %v4209 = vsel %vm4129, %v4089, %v4169
    %v4210 = vsel %vm4130, %v4090, %v4170
    %v4211 = vsel %vm4131, %v4091, %v4171
    %v4212 = vsel %vm4132, %v4092, %v4172
    %v4213 = vsel %vm4133, %v4093, %v4173
    %v4214 = vsel %vm4134, %v4094, %v4174
    %v4215 = vsel %vm4135, %v4095, %v4175
    %v4216 = vsel %vm4136, %v4096, %v4176
    %v4217 = vsel %vm4137, %v4097, %v4177
    %v4218 = vsel %vm4138, %v4098, %v4178
    %v4219 = vsel %vm4139, %v4099, %v4179
    %v4220 = vsel %vm4140, %v4100, %v4180
    %v4221 = vsel %vm4141, %v4101, %v4181
    %v4222 = vsel %vm4142, %v4102, %v4182
    %v4223 = vsel %vm4143, %v4103, %v4183
    %v4224 = vsel %vm4144, %v4104, %v4184
    %v4225 = vsel %vm4145, %v4105, %v4185
    %v4226 = vsel %vm4146, %v4106, %v4186
    %v4227 = vsel %vm4147, %v4107, %v4187
    %v4228 = vsel %vm4148, %v4108, %v4188
    %v4229 = vsel %vm4149, %v4109, %v4189
    %v4230 = vsel %vm4150, %v4110, %v4190
    %v4231 = vsel %vm4151, %v4111, %v4191
    %v4232 = vsel %vm4152, %v4112, %v4192
    %v4233 = vsel %vm4153, %v4113, %v4193
    %v4234 = vsel %vm4154, %v4114, %v4194
    %v4235 = vsel %vm4155, %v4115, %v4195
    %v4236 = vpack.c.bf16 %v4198, %v4196
    %v4237 = vpack.c.bf16 %v4199, %v4197
    %v4238 = vpack.c.bf16 %v4202, %v4200
    %v4239 = vpack.c.bf16 %v4203, %v4201
    %v4240 = vpack.c.bf16 %v4206, %v4204
    %v4241 = vpack.c.bf16 %v4207, %v4205
    %v4242 = vpack.c.bf16 %v4210, %v4208
    %v4243 = vpack.c.bf16 %v4211, %v4209
    %v4244 = vpack.c.bf16 %v4214, %v4212
    %v4245 = vpack.c.bf16 %v4215, %v4213
    %v4246 = vpack.c.bf16 %v4218, %v4216
    %v4247 = vpack.c.bf16 %v4219, %v4217
    %v4248 = vpack.c.bf16 %v4222, %v4220
    %v4249 = vpack.c.bf16 %v4223, %v4221
    %v4250 = vpack.c.bf16 %v4226, %v4224
    %v4251 = vpack.c.bf16 %v4227, %v4225
    %v4252 = vpack.c.bf16 %v4230, %v4228
    %v4253 = vpack.c.bf16 %v4231, %v4229
    %v4254 = vpack.c.bf16 %v4234, %v4232
    %v4255 = vpack.c.bf16 %v4235, %v4233
    %v4256 = vld [vmem:[#allocation8] sm:$0xff]
    %v4257 = vld [vmem:[#allocation8 + $0x8] sm:$0xff]
    %v4258 = vld [vmem:[#allocation8 + $0x10] sm:$0xff]
    %v4259 = vld [vmem:[#allocation8 + $0x18] sm:$0xff]
    %v4260 = vld [vmem:[#allocation8 + $0x20] sm:$0xff]
    %v4261 = vld [vmem:[#allocation8 + $0x28] sm:$0xff]
    %v4262 = vld [vmem:[#allocation8 + $0x30] sm:$0xff]
    %v4263 = vld [vmem:[#allocation8 + $0x38] sm:$0xff]
    %v4264 = vld [vmem:[#allocation8 + $0x40] sm:$0xff]
    %v4265 = vld [vmem:[#allocation8 + $0x48] sm:$0xff]
    %v4276 = vunpack.c.l.b16 %v4256
    %v4277 = vunpack.c.h.b16 %v4256
    %v4278 = vunpack.c.l.b16 %v4257
    %v4279 = vunpack.c.h.b16 %v4257
    %v4280 = vunpack.c.l.b16 %v4258
    %v4281 = vunpack.c.h.b16 %v4258
    %v4282 = vunpack.c.l.b16 %v4259
    %v4283 = vunpack.c.h.b16 %v4259
    %v4284 = vunpack.c.l.b16 %v4260
    %v4285 = vunpack.c.h.b16 %v4260
    %v4286 = vunpack.c.l.b16 %v4261
    %v4287 = vunpack.c.h.b16 %v4261
    %v4288 = vunpack.c.l.b16 %v4262
    %v4289 = vunpack.c.h.b16 %v4262
    %v4290 = vunpack.c.l.b16 %v4263
    %v4291 = vunpack.c.h.b16 %v4263
    %v4292 = vunpack.c.l.b16 %v4264
    %v4293 = vunpack.c.h.b16 %v4264
    %v4294 = vunpack.c.l.b16 %v4265
    %v4295 = vunpack.c.h.b16 %v4265
    %v4296 = vpack.c.b16 %v4278, %v4276
    %v4297 = vpack.c.b16 %v4279, %v4277
    %v4298 = vpack.c.b16 %v4282, %v4280
    %v4299 = vpack.c.b16 %v4283, %v4281
    %v4300 = vpack.c.b16 %v4286, %v4284
    %v4301 = vpack.c.b16 %v4287, %v4285
    %v4302 = vpack.c.b16 %v4290, %v4288
    %v4303 = vpack.c.b16 %v4291, %v4289
    %v4304 = vpack.c.b16 %v4294, %v4292
    %v4305 = vpack.c.b16 %v4295, %v4293
    %vm4311 = vcmask 261120
    %v4313 = vsel %vm4311, %v4297, 0
    %v4316 = vsel %vm4311, %v4299, 0
    %v4319 = vsel %vm4311, %v4301, 0
    %v4322 = vsel %vm4311, %v4303, 0
    %v4325 = vsel %vm4311, %v4305, 0
    %4327 = vmatprep.subr.bf16.mxu0 %v4237
    %4328 = vmatpush1.bf16.msra.mxu0 %v4236
    %4329 = vmatprep.subr.bf16.mxu0 %v4239
    %4330 = vmatpush1.bf16.msra.mxu0 %v4238
    %4331 = vmatprep.subr.bf16.mxu0 %v4241
    %4332 = vmatpush1.bf16.msra.mxu0 %v4240
    %4333 = vmatprep.subr.bf16.mxu0 %v4243
    %4334 = vmatpush1.bf16.msra.mxu0 %v4242
    %4335 = vmatprep.subr.bf16.mxu0 %v4245
    %4336 = vmatpush1.bf16.msra.mxu0 %v4244
    %4337 = vmatprep.subr.bf16.mxu0 %v4247
    %4338 = vmatpush1.bf16.msra.mxu0 %v4246
    %4339 = vmatprep.subr.bf16.mxu0 %v4249
    %4340 = vmatpush1.bf16.msra.mxu0 %v4248
    %4341 = vmatprep.subr.bf16.mxu0 %v4251
    %4342 = vmatpush1.bf16.msra.mxu0 %v4250
    %4343 = vmatprep.subr.bf16.mxu0 %v4253
    %4344 = vmatpush1.bf16.msra.mxu0 %v4252
    %4345 = vmatprep.subr.bf16.mxu0 %v4255
    %4346 = vmatpush1.bf16.msra.mxu0 %v4254
    %4347 = vmatprep.subr.bf16.mxu0 0
    %4348 = vmatpush1.bf16.msra.mxu0 0
    %4349 = vmatprep.subr.bf16.mxu0 0
    %4350 = vmatpush1.bf16.msra.mxu0 0
    %4351 = vmatprep.subr.bf16.mxu0 0
    %4352 = vmatpush1.bf16.msra.mxu0 0
    %4353 = vmatprep.subr.bf16.mxu0 0
    %4354 = vmatpush1.bf16.msra.mxu0 0
    %4355 = vmatprep.subr.bf16.mxu0 0
    %4356 = vmatpush1.bf16.msra.mxu0 0
    %4357 = vmatprep.subr.bf16.mxu0 0
    %4358 = vmatpush1.bf16.msra.mxu0 0
    %4359 = vmatprep.mubr.bf16.mxu0 %v4313
    %4360 = vmatmul.mubr.bf16.gmra.mrb[0].mxu0 %v4296
    %v4361 = vpop.f32.mrb[0].mxu0
    %v4362 = vadd.f32 0.0, %v4361
    %v4363 = vpop.f32.mrb[0].mxu0
    %v4364 = vadd.f32 0.0, %v4363
    %v4365 = vpop.f32.mrb[0].mxu0
    %v4366 = vadd.f32 0.0, %v4365
    %v4367 = vpop.f32.mrb[0].mxu0
    %v4368 = vadd.f32 0.0, %v4367
    %4369 = vmatprep.mubr.bf16.mxu0 %v4316
    %4370 = vmatmul.mubr.bf16.gmra.mrb[0].mxu0 %v4298
    %v4371 = vpop.f32.mrb[0].mxu0
    %v4372 = vadd.f32 0.0, %v4371
    %v4373 = vpop.f32.mrb[0].mxu0
    %v4374 = vadd.f32 0.0, %v4373
    %v4375 = vpop.f32.mrb[0].mxu0
    %v4376 = vadd.f32 0.0, %v4375
    %v4377 = vpop.f32.mrb[0].mxu0
    %v4378 = vadd.f32 0.0, %v4377
    %4379 = vmatprep.mubr.bf16.mxu0 %v4319
    %4380 = vmatmul.mubr.bf16.gmra.mrb[0].mxu0 %v4300
    %v4381 = vpop.f32.mrb[0].mxu0
    %v4382 = vadd.f32 0.0, %v4381
    %v4383 = vpop.f32.mrb[0].mxu0
    %v4384 = vadd.f32 0.0, %v4383
    %v4385 = vpop.f32.mrb[0].mxu0
    %v4386 = vadd.f32 0.0, %v4385
    %v4387 = vpop.f32.mrb[0].mxu0
    %v4388 = vadd.f32 0.0, %v4387
    %4389 = vmatprep.mubr.bf16.mxu0 %v4322
    %4390 = vmatmul.mubr.bf16.gmra.mrb[0].mxu0 %v4302
    %v4391 = vpop.f32.mrb[0].mxu0
    %v4392 = vadd.f32 0.0, %v4391
    %v4393 = vpop.f32.mrb[0].mxu0
    %v4394 = vadd.f32 0.0, %v4393
    %v4395 = vpop.f32.mrb[0].mxu0
    %v4396 = vadd.f32 0.0, %v4395
    %v4397 = vpop.f32.mrb[0].mxu0
    %v4398 = vadd.f32 0.0, %v4397
    %4399 = vmatprep.mubr.bf16.mxu0 %v4325
    %4400 = vmatmul.mubr.bf16.gmra.mrb[0].mxu0 %v4304
    %v4401 = vpop.f32.mrb[0].mxu0
    %v4402 = vadd.f32 0.0, %v4401
    %v4403 = vpop.f32.mrb[0].mxu0
    %v4404 = vadd.f32 0.0, %v4403
    %v4405 = vpop.f32.mrb[0].mxu0
    %v4406 = vadd.f32 0.0, %v4405
    %v4407 = vpop.f32.mrb[0].mxu0
    %v4408 = vadd.f32 0.0, %v4407
    %4409 = vdwg.mxu0
    %v4410 = vld [vmem:[#allocation9] sm:$0xff]
    %v4411 = vld [vmem:[#allocation9 + $0x8] sm:$0xff]
    %v4412 = vld [vmem:[#allocation9 + $0x10] sm:$0xff]
    %v4413 = vld [vmem:[#allocation9 + $0x18] sm:$0xff]
    %v4414 = vld [vmem:[#allocation9 + $0x20] sm:$0xff]
    %v4415 = vld [vmem:[#allocation9 + $0x28] sm:$0xff]
    %v4416 = vld [vmem:[#allocation9 + $0x30] sm:$0xff]
    %v4417 = vld [vmem:[#allocation9 + $0x38] sm:$0xff]
    %v4418 = vld [vmem:[#allocation9 + $0x40] sm:$0xff]
    %v4419 = vld [vmem:[#allocation9 + $0x48] sm:$0xff]
    %v4430 = vunpack.c.l.b16 %v4410
    %v4431 = vunpack.c.h.b16 %v4410
    %v4432 = vunpack.c.l.b16 %v4411
    %v4433 = vunpack.c.h.b16 %v4411
    %v4434 = vunpack.c.l.b16 %v4412
    %v4435 = vunpack.c.h.b16 %v4412
    %v4436 = vunpack.c.l.b16 %v4413
    %v4437 = vunpack.c.h.b16 %v4413
    %v4438 = vunpack.c.l.b16 %v4414
    %v4439 = vunpack.c.h.b16 %v4414
    %v4440 = vunpack.c.l.b16 %v4415
    %v4441 = vunpack.c.h.b16 %v4415
    %v4442 = vunpack.c.l.b16 %v4416
    %v4443 = vunpack.c.h.b16 %v4416
    %v4444 = vunpack.c.l.b16 %v4417
    %v4445 = vunpack.c.h.b16 %v4417
    %v4446 = vunpack.c.l.b16 %v4418
    %v4447 = vunpack.c.h.b16 %v4418
    %v4448 = vunpack.c.l.b16 %v4419
    %v4449 = vunpack.c.h.b16 %v4419
    %v4450 = vpack.c.b16 %v4432, %v4430
    %v4451 = vpack.c.b16 %v4433, %v4431
    %v4452 = vpack.c.b16 %v4436, %v4434
    %v4453 = vpack.c.b16 %v4437, %v4435
    %v4454 = vpack.c.b16 %v4440, %v4438
    %v4455 = vpack.c.b16 %v4441, %v4439
    %v4456 = vpack.c.b16 %v4444, %v4442
    %v4457 = vpack.c.b16 %v4445, %v4443
    %v4458 = vpack.c.b16 %v4448, %v4446
    %v4459 = vpack.c.b16 %v4449, %v4447
    %v4466 = vsel %vm4311, %v4451, 0
    %v4469 = vsel %vm4311, %v4453, 0
    %v4472 = vsel %vm4311, %v4455, 0
    %v4475 = vsel %vm4311, %v4457, 0
    %v4478 = vsel %vm4311, %v4459, 0
    %4480 = vmatprep.subr.bf16.mxu0 %v4237
    %4481 = vmatpush1.bf16.msra.mxu0 %v4236
    %4482 = vmatprep.subr.bf16.mxu0 %v4239
    %4483 = vmatpush1.bf16.msra.mxu0 %v4238
    %4484 = vmatprep.subr.bf16.mxu0 %v4241
    %4485 = vmatpush1.bf16.msra.mxu0 %v4240
    %4486 = vmatprep.subr.bf16.mxu0 %v4243
    %4487 = vmatpush1.bf16.msra.mxu0 %v4242
    %4488 = vmatprep.subr.bf16.mxu0 %v4245
    %4489 = vmatpush1.bf16.msra.mxu0 %v4244
    %4490 = vmatprep.subr.bf16.mxu0 %v4247
    %4491 = vmatpush1.bf16.msra.mxu0 %v4246
    %4492 = vmatprep.subr.bf16.mxu0 %v4249
    %4493 = vmatpush1.bf16.msra.mxu0 %v4248
    %4494 = vmatprep.subr.bf16.mxu0 %v4251
    %4495 = vmatpush1.bf16.msra.mxu0 %v4250
    %4496 = vmatprep.subr.bf16.mxu0 %v4253
    %4497 = vmatpush1.bf16.msra.mxu0 %v4252
    %4498 = vmatprep.subr.bf16.mxu0 %v4255
    %4499 = vmatpush1.bf16.msra.mxu0 %v4254
    %4500 = vmatprep.subr.bf16.mxu0 0
    %4501 = vmatpush1.bf16.msra.mxu0 0
    %4502 = vmatprep.subr.bf16.mxu0 0
    %4503 = vmatpush1.bf16.msra.mxu0 0
    %4504 = vmatprep.subr.bf16.mxu0 0
    %4505 = vmatpush1.bf16.msra.mxu0 0
    %4506 = vmatprep.subr.bf16.mxu0 0
    %4507 = vmatpush1.bf16.msra.mxu0 0
    %4508 = vmatprep.subr.bf16.mxu0 0
    %4509 = vmatpush1.bf16.msra.mxu0 0
    %4510 = vmatprep.subr.bf16.mxu0 0
    %4511 = vmatpush1.bf16.msra.mxu0 0
    %4512 = vmatprep.mubr.bf16.mxu0 %v4466
    %4513 = vmatmul.mubr.bf16.gmra.mrb[0].mxu0 %v4450
    %v4514 = vpop.f32.mrb[0].mxu0
    %v4515 = vadd.f32 0.0, %v4514
    %v4516 = vpop.f32.mrb[0].mxu0
    %v4517 = vadd.f32 0.0, %v4516
    %v4518 = vpop.f32.mrb[0].mxu0
    %v4519 = vadd.f32 0.0, %v4518
    %v4520 = vpop.f32.mrb[0].mxu0
    %v4521 = vadd.f32 0.0, %v4520
    %4522 = vmatprep.mubr.bf16.mxu0 %v4469
    %4523 = vmatmul.mubr.bf16.gmra.mrb[0].mxu0 %v4452
    %v4524 = vpop.f32.mrb[0].mxu0
    %v4525 = vadd.f32 0.0, %v4524
    %v4526 = vpop.f32.mrb[0].mxu0
    %v4527 = vadd.f32 0.0, %v4526
    %v4528 = vpop.f32.mrb[0].mxu0
    %v4529 = vadd.f32 0.0, %v4528
    %v4530 = vpop.f32.mrb[0].mxu0
    %v4531 = vadd.f32 0.0, %v4530
    %4532 = vmatprep.mubr.bf16.mxu0 %v4472
    %4533 = vmatmul.mubr.bf16.gmra.mrb[0].mxu0 %v4454
    %v4534 = vpop.f32.mrb[0].mxu0
    %v4535 = vadd.f32 0.0, %v4534
    %v4536 = vpop.f32.mrb[0].mxu0
    %v4537 = vadd.f32 0.0, %v4536
    %v4538 = vpop.f32.mrb[0].mxu0
    %v4539 = vadd.f32 0.0, %v4538
    %v4540 = vpop.f32.mrb[0].mxu0
    %v4541 = vadd.f32 0.0, %v4540
    %4542 = vmatprep.mubr.bf16.mxu0 %v4475
    %4543 = vmatmul.mubr.bf16.gmra.mrb[0].mxu0 %v4456
    %v4544 = vpop.f32.mrb[0].mxu0
    %v4545 = vadd.f32 0.0, %v4544
    %v4546 = vpop.f32.mrb[0].mxu0
    %v4547 = vadd.f32 0.0, %v4546
    %v4548 = vpop.f32.mrb[0].mxu0
    %v4549 = vadd.f32 0.0, %v4548
    %v4550 = vpop.f32.mrb[0].mxu0
    %v4551 = vadd.f32 0.0, %v4550
    %4552 = vmatprep.mubr.bf16.mxu0 %v4478
    %4553 = vmatmul.mubr.bf16.gmra.mrb[0].mxu0 %v4458
    %v4554 = vpop.f32.mrb[0].mxu0
    %v4555 = vadd.f32 0.0, %v4554
    %v4556 = vpop.f32.mrb[0].mxu0
    %v4557 = vadd.f32 0.0, %v4556
    %v4558 = vpop.f32.mrb[0].mxu0
    %v4559 = vadd.f32 0.0, %v4558
    %v4560 = vpop.f32.mrb[0].mxu0
    %v4561 = vadd.f32 0.0, %v4560
    %4562 = vdwg.mxu0
    %v4563 = vmax.f32 %v4362, %v4515
    %v4564 = vmax.f32 %v4364, %v4517
    %v4565 = vmax.f32 %v4366, %v4519
    %v4566 = vmax.f32 %v4368, %v4521
    %v4567 = vmax.f32 %v4372, %v4525
    %v4568 = vmax.f32 %v4374, %v4527
    %v4569 = vmax.f32 %v4376, %v4529
    %v4570 = vmax.f32 %v4378, %v4531
    %v4571 = vmax.f32 %v4382, %v4535
    %v4572 = vmax.f32 %v4384, %v4537
    %v4573 = vmax.f32 %v4386, %v4539
    %v4574 = vmax.f32 %v4388, %v4541
    %v4575 = vmax.f32 %v4392, %v4545
    %v4576 = vmax.f32 %v4394, %v4547
    %v4577 = vmax.f32 %v4396, %v4549
    %v4578 = vmax.f32 %v4398, %v4551
    %v4579 = vmax.f32 %v4402, %v4555
    %v4580 = vmax.f32 %v4404, %v4557
    %v4581 = vmax.f32 %v4406, %v4559
    %v4582 = vmax.f32 %v4408, %v4561
    %4603 = vrot.lane.b32.xlu0 %v4563, 126
    %v4604 = vpop.permute.xlu0 %4603
    %4605 = vrot.lane.b32.xlu0 %v4564, 126
    %v4606 = vpop.permute.xlu0 %4605
    %4607 = vrot.lane.b32.xlu0 %v4565, 126
    %v4608 = vpop.permute.xlu0 %4607
    %4609 = vrot.lane.b32.xlu0 %v4566, 126
    %v4610 = vpop.permute.xlu0 %4609
    %4611 = vrot.lane.b32.xlu0 %v4567, 126
    %v4612 = vpop.permute.xlu0 %4611
    %4613 = vrot.lane.b32.xlu0 %v4568, 126
    %v4614 = vpop.permute.xlu0 %4613
    %4615 = vrot.lane.b32.xlu0 %v4569, 126
    %v4616 = vpop.permute.xlu0 %4615
    %4617 = vrot.lane.b32.xlu0 %v4570, 126
    %v4618 = vpop.permute.xlu0 %4617
    %4619 = vrot.lane.b32.xlu0 %v4571, 126
    %v4620 = vpop.permute.xlu0 %4619
    %4621 = vrot.lane.b32.xlu0 %v4572, 126
    %v4622 = vpop.permute.xlu0 %4621
    %4623 = vrot.lane.b32.xlu0 %v4573, 126
    %v4624 = vpop.permute.xlu0 %4623
    %4625 = vrot.lane.b32.xlu0 %v4574, 126
    %v4626 = vpop.permute.xlu0 %4625
    %4627 = vrot.lane.b32.xlu0 %v4575, 126
    %v4628 = vpop.permute.xlu0 %4627
    %4629 = vrot.lane.b32.xlu0 %v4576, 126
    %v4630 = vpop.permute.xlu0 %4629
    %4631 = vrot.lane.b32.xlu0 %v4577, 126
    %v4632 = vpop.permute.xlu0 %4631
    %4633 = vrot.lane.b32.xlu0 %v4578, 126
    %v4634 = vpop.permute.xlu0 %4633
    %4635 = vrot.lane.b32.xlu0 %v4579, 126
    %v4636 = vpop.permute.xlu0 %4635
    %4637 = vrot.lane.b32.xlu0 %v4580, 126
    %v4638 = vpop.permute.xlu0 %4637
    %4639 = vrot.lane.b32.xlu0 %v4581, 126
    %v4640 = vpop.permute.xlu0 %4639
    %4641 = vrot.lane.b32.xlu0 %v4582, 126
    %v4642 = vpop.permute.xlu0 %4641
    %vm4643 = vcmask 1031168
    %v4644 = vsel %vm4643, %v4604, %v4606
    %v4645 = vsel %vm4643, %v4608, %v4610
    %v4646 = vsel %vm4643, %v4612, %v4614
    %v4647 = vsel %vm4643, %v4616, %v4618
    %v4648 = vsel %vm4643, %v4620, %v4622
    %v4649 = vsel %vm4643, %v4624, %v4626
    %v4650 = vsel %vm4643, %v4628, %v4630
    %v4651 = vsel %vm4643, %v4632, %v4634
    %v4652 = vsel %vm4643, %v4636, %v4638
    %v4653 = vsel %vm4643, %v4640, %v4642
    %v4674 = vmax.f32 %v4563, %v4644
    %v4675 = vmax.f32 %v4564, %v4606
    %v4676 = vmax.f32 %v4565, %v4645
    %v4677 = vmax.f32 %v4566, %v4610
    %v4678 = vmax.f32 %v4567, %v4646
    %v4679 = vmax.f32 %v4568, %v4614
    %v4680 = vmax.f32 %v4569, %v4647
    %v4681 = vmax.f32 %v4570, %v4618
    %v4682 = vmax.f32 %v4571, %v4648
    %v4683 = vmax.f32 %v4572, %v4622
    %v4684 = vmax.f32 %v4573, %v4649
    %v4685 = vmax.f32 %v4574, %v4626
    %v4686 = vmax.f32 %v4575, %v4650
    %v4687 = vmax.f32 %v4576, %v4630
    %v4688 = vmax.f32 %v4577, %v4651
    %v4689 = vmax.f32 %v4578, %v4634
    %v4690 = vmax.f32 %v4579, %v4652
    %v4691 = vmax.f32 %v4580, %v4638
    %v4692 = vmax.f32 %v4581, %v4653
    %v4693 = vmax.f32 %v4582, %v4642
    %v4694 = vpack.c.bf16 %v4676, %v4674
    %v4695 = vpack.c.bf16 %v4677, %v4675
    %v4696 = vpack.c.bf16 %v4680, %v4678
    %v4697 = vpack.c.bf16 %v4681, %v4679
    %v4698 = vpack.c.bf16 %v4684, %v4682
    %v4699 = vpack.c.bf16 %v4685, %v4683
    %v4700 = vpack.c.bf16 %v4688, %v4686
    %v4701 = vpack.c.bf16 %v4689, %v4687
    %v4702 = vpack.c.bf16 %v4692, %v4690
    %v4703 = vpack.c.bf16 %v4693, %v4691
    %v4704 = vld [vmem:[%s10] sm:$0xf]
    %v4705 = vld [vmem:[%s10 + $0x4] sm:$0xf]
    %v4706 = vld [vmem:[%s10 + $0x8] sm:$0xf]
    %v4707 = vld [vmem:[%s10 + $0xc] sm:$0xf]
    %v4708 = vld [vmem:[%s10 + $0x10] sm:$0xf]
    %v4709 = vld [vmem:[%s10 + $0x14] sm:$0xf]
    %v4710 = vld [vmem:[%s10 + $0x18] sm:$0xf]
    %v4711 = vld [vmem:[%s10 + $0x1c] sm:$0xf]
    %v4712 = vld [vmem:[%s10 + $0x20] sm:$0xf]
    %v4713 = vld [vmem:[%s10 + $0x24] sm:$0xf]
    %v4714 = vld [vmem:[%s10 + $0x28] sm:$0xf]
    %v4715 = vld [vmem:[%s10 + $0x2c] sm:$0xf]
    %v4716 = vld [vmem:[%s10 + $0x30] sm:$0xf]
    %v4717 = vld [vmem:[%s10 + $0x34] sm:$0xf]
    %v4718 = vld [vmem:[%s10 + $0x38] sm:$0xf]
    %v4719 = vld [vmem:[%s10 + $0x3c] sm:$0xf]
    %v4720 = vld [vmem:[%s10 + $0x40] sm:$0xf]
    %v4721 = vld [vmem:[%s10 + $0x44] sm:$0xf]
    %v4722 = vld [vmem:[%s10 + $0x48] sm:$0xf]
    %v4723 = vld [vmem:[%s10 + $0x4c] sm:$0xf]
    %v4724 = vld [vmem:[%s10 + $0x50] sm:$0xf]
    %v4725 = vld [vmem:[%s10 + $0x54] sm:$0xf]
    %v4726 = vld [vmem:[%s10 + $0x58] sm:$0xf]
    %v4727 = vld [vmem:[%s10 + $0x5c] sm:$0xf]
    %v4728 = vld [vmem:[%s10 + $0x60] sm:$0xf]
    %v4729 = vld [vmem:[%s10 + $0x64] sm:$0xf]
    %v4730 = vld [vmem:[%s10 + $0x68] sm:$0xf]
    %v4731 = vld [vmem:[%s10 + $0x6c] sm:$0xf]
    %v4732 = vld [vmem:[%s10 + $0x70] sm:$0xf]
    %v4733 = vld [vmem:[%s10 + $0x74] sm:$0xf]
    %v4734 = vld [vmem:[%s10 + $0x78] sm:$0x1]
    %v4766 = vunpack.c.l.b16 %v4704
    %v4767 = vunpack.c.l.b16 %v4705
    %v4768 = vunpack.c.l.b16 %v4706
    %v4769 = vunpack.c.l.b16 %v4707
    %v4770 = vunpack.c.l.b16 %v4708
    %v4771 = vunpack.c.l.b16 %v4709
    %v4772 = vunpack.c.l.b16 %v4710
    %v4773 = vunpack.c.l.b16 %v4711
    %v4774 = vunpack.c.l.b16 %v4712
    %v4775 = vunpack.c.l.b16 %v4713
    %v4776 = vunpack.c.l.b16 %v4714
    %v4777 = vunpack.c.l.b16 %v4715
    %v4778 = vunpack.c.l.b16 %v4716
    %v4779 = vunpack.c.l.b16 %v4717
    %v4780 = vunpack.c.l.b16 %v4718
    %v4781 = vunpack.c.l.b16 %v4719
    %v4782 = vunpack.c.l.b16 %v4720
    %v4783 = vunpack.c.l.b16 %v4721
    %v4784 = vunpack.c.l.b16 %v4722
    %v4785 = vunpack.c.l.b16 %v4723
    %v4786 = vunpack.c.l.b16 %v4724
    %v4787 = vunpack.c.l.b16 %v4725
    %v4788 = vunpack.c.l.b16 %v4726
    %v4789 = vunpack.c.l.b16 %v4727
    %v4790 = vunpack.c.l.b16 %v4728
    %v4791 = vunpack.c.l.b16 %v4729
    %v4792 = vunpack.c.l.b16 %v4730
    %v4793 = vunpack.c.l.b16 %v4731
    %v4794 = vunpack.c.l.b16 %v4732
    %v4795 = vunpack.c.l.b16 %v4733
    %v4796 = vunpack.c.l.b16 %v4734
    %v4797 = vpack.c.b16 %v4767, %v4766
    %v4798 = vpack.c.b16 %v4769, %v4768
    %v4799 = vpack.c.b16 %v4771, %v4770
    %v4800 = vpack.c.b16 %v4773, %v4772
    %v4801 = vpack.c.b16 %v4775, %v4774
    %v4802 = vpack.c.b16 %v4777, %v4776
    %v4803 = vpack.c.b16 %v4779, %v4778
    %v4804 = vpack.c.b16 %v4781, %v4780
    %v4805 = vpack.c.b16 %v4783, %v4782
    %v4806 = vpack.c.b16 %v4785, %v4784
    %v4807 = vpack.c.b16 %v4787, %v4786
    %v4808 = vpack.c.b16 %v4789, %v4788
    %v4809 = vpack.c.b16 %v4791, %v4790
    %v4810 = vpack.c.b16 %v4793, %v4792
    %v4811 = vpack.c.b16 %v4795, %v4794
    %v4812 = vpack.c.b16 %v4796, %v4796
    %vm4828 = vcmask 924672
    %v4830 = vsel %vm4828, %v4695, 0
    %v4833 = vsel %vm4828, %v4697, 0
    %v4836 = vsel %vm4828, %v4699, 0
    %v4839 = vsel %vm4828, %v4701, 0
    %v4842 = vsel %vm4828, %v4703, 0
    %vm4844 = vcmask 1040384
    %v4845 = vsel 0, 4294967295, 65535
    %v4846 = vsel %vm4844, %v4845, 0
    %v4848 = vand.u32 %v4812, %v4846
    %4850 = vmatprep.subr.bf16.mxu0 0
    %4851 = vmatpush1.bf16.msra.mxu0 %v4797
    %4852 = vmatprep.subr.bf16.mxu0 0
    %4853 = vmatpush1.bf16.msra.mxu0 %v4798
    %4854 = vmatprep.subr.bf16.mxu0 0
    %4855 = vmatpush1.bf16.msra.mxu0 %v4799
    %4856 = vmatprep.subr.bf16.mxu0 0
    %4857 = vmatpush1.bf16.msra.mxu0 %v4800
    %4858 = vmatprep.subr.bf16.mxu0 0
    %4859 = vmatpush1.bf16.msra.mxu0 %v4801
    %4860 = vmatprep.subr.bf16.mxu0 0
    %4861 = vmatpush1.bf16.msra.mxu0 %v4802
    %4862 = vmatprep.subr.bf16.mxu0 0
    %4863 = vmatpush1.bf16.msra.mxu0 %v4803
    %4864 = vmatprep.subr.bf16.mxu0 0
    %4865 = vmatpush1.bf16.msra.mxu0 %v4804
    %4866 = vmatprep.subr.bf16.mxu0 0
    %4867 = vmatpush1.bf16.msra.mxu0 %v4805
    %4868 = vmatprep.subr.bf16.mxu0 0
    %4869 = vmatpush1.bf16.msra.mxu0 %v4806
    %4870 = vmatprep.subr.bf16.mxu0 0
    %4871 = vmatpush1.bf16.msra.mxu0 %v4807
    %4872 = vmatprep.subr.bf16.mxu0 0
    %4873 = vmatpush1.bf16.msra.mxu0 %v4808
    %4874 = vmatprep.subr.bf16.mxu0 0
    %4875 = vmatpush1.bf16.msra.mxu0 %v4809
    %4876 = vmatprep.subr.bf16.mxu0 0
    %4877 = vmatpush1.bf16.msra.mxu0 %v4810
    %4878 = vmatprep.subr.bf16.mxu0 0
    %4879 = vmatpush1.bf16.msra.mxu0 %v4811
    %4880 = vmatprep.subr.bf16.mxu0 0
    %4881 = vmatpush1.bf16.msra.mxu0 %v4848
    %4882 = vmatprep.mubr.bf16.mxu0 %v4830
    %4883 = vmatmul.mubr.bf16.gmra.mrb[0].mxu0 %v4694
    %v4884 = vpop.f32.mrb[0].mxu0
    %v4885 = vadd.f32 0.0, %v4884
    %v4886 = vpop.f32.mrb[0].mxu0
    %v4887 = vpop.f32.mrb[0].mxu0
    %v4888 = vadd.f32 0.0, %v4887
    %v4889 = vpop.f32.mrb[0].mxu0
    %4890 = vmatprep.mubr.bf16.mxu0 %v4833
    %4891 = vmatmul.mubr.bf16.gmra.mrb[0].mxu0 %v4696
    %v4892 = vpop.f32.mrb[0].mxu0
    %v4893 = vadd.f32 0.0, %v4892
    %v4894 = vpop.f32.mrb[0].mxu0
    %v4895 = vpop.f32.mrb[0].mxu0
    %v4896 = vadd.f32 0.0, %v4895
    %v4897 = vpop.f32.mrb[0].mxu0
    %4898 = vmatprep.mubr.bf16.mxu0 %v4836
    %4899 = vmatmul.mubr.bf16.gmra.mrb[0].mxu0 %v4698
    %v4900 = vpop.f32.mrb[0].mxu0
    %v4901 = vadd.f32 0.0, %v4900
    %v4902 = vpop.f32.mrb[0].mxu0
    %v4903 = vpop.f32.mrb[0].mxu0
    %v4904 = vadd.f32 0.0, %v4903
    %v4905 = vpop.f32.mrb[0].mxu0
    %4906 = vmatprep.mubr.bf16.mxu0 %v4839
    %4907 = vmatmul.mubr.bf16.gmra.mrb[0].mxu0 %v4700
    %v4908 = vpop.f32.mrb[0].mxu0
    %v4909 = vadd.f32 0.0, %v4908
    %v4910 = vpop.f32.mrb[0].mxu0
    %v4911 = vpop.f32.mrb[0].mxu0
    %v4912 = vadd.f32 0.0, %v4911
    %v4913 = vpop.f32.mrb[0].mxu0
    %4914 = vmatprep.mubr.bf16.mxu0 %v4842
    %4915 = vmatmul.mubr.bf16.gmra.mrb[0].mxu0 %v4702
    %v4916 = vpop.f32.mrb[0].mxu0
    %v4917 = vadd.f32 0.0, %v4916
    %v4918 = vpop.f32.mrb[0].mxu0
    %v4919 = vpop.f32.mrb[0].mxu0
    %v4920 = vadd.f32 0.0, %v4919
    %v4921 = vpop.f32.mrb[0].mxu0
    %4922 = vdwg.mxu0
    %v4923 = vpack.c.bf16 %v4888, %v4885
    %v4924 = vpack.c.bf16 %v4896, %v4893
    %v4925 = vpack.c.bf16 %v4904, %v4901
    %v4926 = vpack.c.bf16 %v4912, %v4909
    %v4927 = vpack.c.bf16 %v4920, %v4917
    %v4928 = vld [vmem:[%s9] sm:$0xff]
    %v4929 = vld [vmem:[%s9 + $0x8] sm:$0xff]
    %v4930 = vld [vmem:[%s9 + $0x10] sm:$0xff]
    %v4931 = vld [vmem:[%s9 + $0x18] sm:$0xff]
    %v4932 = vld [vmem:[%s9 + $0x20] sm:$0xff]
    %v4933 = vld [vmem:[%s9 + $0x28] sm:$0xff]
    %v4934 = vld [vmem:[%s9 + $0x30] sm:$0xff]
    %v4935 = vld [vmem:[%s9 + $0x38] sm:$0xff]
    %v4936 = vld [vmem:[%s9 + $0x40] sm:$0xff]
    %v4937 = vld [vmem:[%s9 + $0x48] sm:$0xff]
    %v4938 = vld [vmem:[%s9 + $0x50] sm:$0xff]
    %v4939 = vld [vmem:[%s9 + $0x58] sm:$0xff]
    %v4940 = vld [vmem:[%s9 + $0x60] sm:$0xff]
    %v4941 = vld [vmem:[%s9 + $0x68] sm:$0xff]
    %v4942 = vld [vmem:[%s9 + $0x70] sm:$0xff]
    %v4943 = vld [vmem:[%s9 + $0x78] sm:$0xff]
    %v4944 = vld [vmem:[%s9 + $0x80] sm:$0xff]
    %v4945 = vld [vmem:[%s9 + $0x88] sm:$0xff]
    %v4946 = vld [vmem:[%s9 + $0x90] sm:$0xff]
    %v4947 = vld [vmem:[%s9 + $0x98] sm:$0xff]
    %v4948 = vld [vmem:[%s9 + $0xa0] sm:$0xff]
    %v4949 = vld [vmem:[%s9 + $0xa8] sm:$0xff]
    %v4950 = vld [vmem:[%s9 + $0xb0] sm:$0xff]
    %v4951 = vld [vmem:[%s9 + $0xb8] sm:$0xff]
    %v4952 = vld [vmem:[%s9 + $0xc0] sm:$0xff]
    %v4953 = vld [vmem:[%s9 + $0xc8] sm:$0xff]
    %v4954 = vld [vmem:[%s9 + $0xd0] sm:$0xff]
    %v4955 = vld [vmem:[%s9 + $0xd8] sm:$0xff]
    %v4956 = vld [vmem:[%s9 + $0xe0] sm:$0xff]
    %v4957 = vld [vmem:[%s9 + $0xe8] sm:$0xff]
    %v4958 = vld [vmem:[%s9 + $0xf0] sm:$0xff]
    %v4959 = vld [vmem:[%s9 + $0xf8] sm:$0xff]
    %v4960 = vld [vmem:[%s9 + $0x100] sm:$0xff]
    %v4961 = vld [vmem:[%s9 + $0x108] sm:$0xff]
    %v4962 = vld [vmem:[%s9 + $0x110] sm:$0xff]
    %v4963 = vld [vmem:[%s9 + $0x118] sm:$0xff]
    %v4964 = vld [vmem:[%s9 + $0x120] sm:$0xff]
    %v4965 = vld [vmem:[%s9 + $0x128] sm:$0xff]
    %v4966 = vld [vmem:[%s9 + $0x130] sm:$0xff]
    %v4967 = vld [vmem:[%s9 + $0x138] sm:$0xff]
    %s4968 = scalar_lea.vmem %s9, 320
    %v4969 = vld [vmem:[%s4968] sm:$0xff]
    %v4970 = vld [vmem:[%s4968 + $0x8] sm:$0xff]
    %v4971 = vld [vmem:[%s4968 + $0x10] sm:$0xff]
    %v4972 = vld [vmem:[%s4968 + $0x18] sm:$0xff]
    %v4973 = vld [vmem:[%s4968 + $0x20] sm:$0xff]
    %v4974 = vld [vmem:[%s4968 + $0x28] sm:$0xff]
    %v4975 = vld [vmem:[%s4968 + $0x30] sm:$0xff]
    %v4976 = vld [vmem:[%s4968 + $0x38] sm:$0xff]
    %v4977 = vld [vmem:[%s4968 + $0x40] sm:$0xff]
    %v4978 = vld [vmem:[%s4968 + $0x48] sm:$0xff]
    %v4979 = vld [vmem:[%s4968 + $0x50] sm:$0xff]
    %v4980 = vld [vmem:[%s4968 + $0x58] sm:$0xff]
    %v4981 = vld [vmem:[%s4968 + $0x60] sm:$0xff]
    %v4982 = vld [vmem:[%s4968 + $0x68] sm:$0xff]
    %v4983 = vld [vmem:[%s4968 + $0x70] sm:$0xff]
    %v4984 = vld [vmem:[%s4968 + $0x78] sm:$0xff]
    %v4985 = vld [vmem:[%s4968 + $0x80] sm:$0xff]
    %v4986 = vld [vmem:[%s4968 + $0x88] sm:$0xff]
    %v4987 = vld [vmem:[%s4968 + $0x90] sm:$0xff]
    %v4988 = vld [vmem:[%s4968 + $0x98] sm:$0xff]
    %v4989 = vld [vmem:[%s4968 + $0xa0] sm:$0xff]
    %v4990 = vld [vmem:[%s4968 + $0xa8] sm:$0xff]
    %v4991 = vld [vmem:[%s4968 + $0xb0] sm:$0xff]
    %v4992 = vld [vmem:[%s4968 + $0xb8] sm:$0xff]
    %v4993 = vld [vmem:[%s4968 + $0xc0] sm:$0xff]
    %v4994 = vld [vmem:[%s4968 + $0xc8] sm:$0xff]
    %v4995 = vld [vmem:[%s4968 + $0xd0] sm:$0xff]
    %v4996 = vld [vmem:[%s4968 + $0xd8] sm:$0xff]
    %v4997 = vld [vmem:[%s4968 + $0xe0] sm:$0xff]
    %v4998 = vld [vmem:[%s4968 + $0xe8] sm:$0xff]
    %v4999 = vld [vmem:[%s4968 + $0xf0] sm:$0xff]
    %v5000 = vld [vmem:[%s4968 + $0xf8] sm:$0xff]
    %v5001 = vld [vmem:[%s4968 + $0x100] sm:$0xff]
    %v5002 = vld [vmem:[%s4968 + $0x108] sm:$0xff]
    %v5003 = vld [vmem:[%s4968 + $0x110] sm:$0xff]
    %v5004 = vld [vmem:[%s4968 + $0x118] sm:$0xff]
    %v5005 = vld [vmem:[%s4968 + $0x120] sm:$0xff]
    %v5006 = vld [vmem:[%s4968 + $0x128] sm:$0xff]
    %v5007 = vld [vmem:[%s4968 + $0x130] sm:$0xff]
    %v5008 = vld [vmem:[%s4968 + $0x138] sm:$0xff]
    %5014 = vrot.lane.b32.xlu0 %v4923, 120
    %v5015 = vpop.permute.xlu0 %5014
    %5016 = vrot.lane.b32.xlu0 %v4924, 120
    %v5017 = vpop.permute.xlu0 %5016
    %5018 = vrot.lane.b32.xlu0 %v4925, 120
    %v5019 = vpop.permute.xlu0 %5018
    %5020 = vrot.lane.b32.xlu0 %v4926, 120
    %v5021 = vpop.permute.xlu0 %5020
    %5022 = vrot.lane.b32.xlu0 %v4927, 120
    %v5023 = vpop.permute.xlu0 %5022
    %5029 = vxpose.xlu0.c.b16.start [1/8] %v5015, 128
    %5030 = vxpose.xlu0.c.b16.cont [2/8] %v5017, 128
    %5031 = vxpose.xlu0.c.b16.cont [3/8] %v5019, 128
    %5032 = vxpose.xlu0.c.b16.cont [4/8] %v5021, 128
    %5033 = vxpose.xlu0.c.b16.cont [5/8] %v5023, 128
    %5034 = vxpose.xlu0.c.b16.cont [6/8] 0, 128
    %5035 = vxpose.xlu0.c.b16.cont [7/8] 0, 128
    %5036 = vxpose.xlu0.c.b16.end [8/8] 0, 128
    %v5037 = vpop.trf.xlu0
    %v5038 = vpop.trf.xlu0
    %v5039 = vpop.trf.xlu0
    %v5040 = vpop.trf.xlu0
    %v5041 = vpop.trf.xlu0
    %v5042 = vpop.trf.xlu0
    %v5043 = vpop.trf.xlu0
    %v5044 = vpop.trf.xlu0
    %v5085 = vunpack.c.l.b16 %v4969
    %v5086 = vunpack.c.h.b16 %v4969
    %v5087 = vunpack.c.l.b16 %v4970
    %v5088 = vunpack.c.h.b16 %v4970
    %v5089 = vunpack.c.l.b16 %v4971
    %v5090 = vunpack.c.h.b16 %v4971
    %v5091 = vunpack.c.l.b16 %v4972
    %v5092 = vunpack.c.h.b16 %v4972
    %v5093 = vunpack.c.l.b16 %v4973
    %v5094 = vunpack.c.h.b16 %v4973
    %v5095 = vunpack.c.l.b16 %v4974
    %v5096 = vunpack.c.h.b16 %v4974
    %v5097 = vunpack.c.l.b16 %v4975
    %v5098 = vunpack.c.h.b16 %v4975
    %v5099 = vunpack.c.l.b16 %v4976
    %v5100 = vunpack.c.h.b16 %v4976
    %v5101 = vunpack.c.l.b16 %v4977
    %v5102 = vunpack.c.h.b16 %v4977
    %v5103 = vunpack.c.l.b16 %v4978
    %v5104 = vunpack.c.h.b16 %v4978
    %v5105 = vunpack.c.l.b16 %v4979
    %v5106 = vunpack.c.h.b16 %v4979
    %v5107 = vunpack.c.l.b16 %v4980
    %v5108 = vunpack.c.h.b16 %v4980
    %v5109 = vunpack.c.l.b16 %v4981
    %v5110 = vunpack.c.h.b16 %v4981
    %v5111 = vunpack.c.l.b16 %v4982
    %v5112 = vunpack.c.h.b16 %v4982
    %v5113 = vunpack.c.l.b16 %v4983
    %v5114 = vunpack.c.h.b16 %v4983
    %v5115 = vunpack.c.l.b16 %v4984
    %v5116 = vunpack.c.h.b16 %v4984
    %v5117 = vunpack.c.l.b16 %v4985
    %v5118 = vunpack.c.h.b16 %v4985
    %v5119 = vunpack.c.l.b16 %v4986
    %v5120 = vunpack.c.h.b16 %v4986
    %v5121 = vunpack.c.l.b16 %v4987
    %v5122 = vunpack.c.h.b16 %v4987
    %v5123 = vunpack.c.l.b16 %v4988
    %v5124 = vunpack.c.h.b16 %v4988
    %v5125 = vunpack.c.l.b16 %v4989
    %v5126 = vunpack.c.h.b16 %v4989
    %v5127 = vunpack.c.l.b16 %v4990
    %v5128 = vunpack.c.h.b16 %v4990
    %v5129 = vunpack.c.l.b16 %v4991
    %v5130 = vunpack.c.h.b16 %v4991
    %v5131 = vunpack.c.l.b16 %v4992
    %v5132 = vunpack.c.h.b16 %v4992
    %v5133 = vunpack.c.l.b16 %v4993
    %v5134 = vunpack.c.h.b16 %v4993
    %v5135 = vunpack.c.l.b16 %v4994
    %v5136 = vunpack.c.h.b16 %v4994
    %v5137 = vunpack.c.l.b16 %v4995
    %v5138 = vunpack.c.h.b16 %v4995
    %v5139 = vunpack.c.l.b16 %v4996
    %v5140 = vunpack.c.h.b16 %v4996
    %v5141 = vunpack.c.l.b16 %v4997
    %v5142 = vunpack.c.h.b16 %v4997
    %v5143 = vunpack.c.l.b16 %v4998
    %v5144 = vunpack.c.h.b16 %v4998
    %v5145 = vunpack.c.l.b16 %v4999
    %v5146 = vunpack.c.h.b16 %v4999
    %v5147 = vunpack.c.l.b16 %v5000
    %v5148 = vunpack.c.h.b16 %v5000
    %v5149 = vunpack.c.l.b16 %v5001
    %v5150 = vunpack.c.h.b16 %v5001
    %v5151 = vunpack.c.l.b16 %v5002
    %v5152 = vunpack.c.h.b16 %v5002
    %v5153 = vunpack.c.l.b16 %v5003
    %v5154 = vunpack.c.h.b16 %v5003
    %v5155 = vunpack.c.l.b16 %v5004
    %v5156 = vunpack.c.h.b16 %v5004
    %v5157 = vunpack.c.l.b16 %v5005
    %v5158 = vunpack.c.h.b16 %v5005
    %v5159 = vunpack.c.l.b16 %v5006
    %v5160 = vunpack.c.h.b16 %v5006
    %v5161 = vunpack.c.l.b16 %v5007
    %v5162 = vunpack.c.h.b16 %v5007
    %v5163 = vunpack.c.l.b16 %v5008
    %v5164 = vunpack.c.h.b16 %v5008
    %v5165 = vpack.c.b16 %v5093, %v5085
    %v5166 = vpack.c.b16 %v5094, %v5086
    %v5167 = vpack.c.b16 %v5095, %v5087
    %v5168 = vpack.c.b16 %v5096, %v5088
    %v5169 = vpack.c.b16 %v5097, %v5089
    %v5170 = vpack.c.b16 %v5098, %v5090
    %v5171 = vpack.c.b16 %v5099, %v5091
    %v5172 = vpack.c.b16 %v5100, %v5092
    %v5173 = vpack.c.b16 %v5109, %v5101
    %v5174 = vpack.c.b16 %v5110, %v5102
    %v5175 = vpack.c.b16 %v5111, %v5103
    %v5176 = vpack.c.b16 %v5112, %v5104
    %v5177 = vpack.c.b16 %v5113, %v5105
    %v5178 = vpack.c.b16 %v5114, %v5106
    %v5179 = vpack.c.b16 %v5115, %v5107
    %v5180 = vpack.c.b16 %v5116, %v5108
    %v5181 = vpack.c.b16 %v5125, %v5117
    %v5182 = vpack.c.b16 %v5126, %v5118
    %v5183 = vpack.c.b16 %v5127, %v5119
    %v5184 = vpack.c.b16 %v5128, %v5120
    %v5185 = vpack.c.b16 %v5129, %v5121
    %v5186 = vpack.c.b16 %v5130, %v5122
    %v5187 = vpack.c.b16 %v5131, %v5123
    %v5188 = vpack.c.b16 %v5132, %v5124
    %v5189 = vpack.c.b16 %v5141, %v5133
    %v5190 = vpack.c.b16 %v5142, %v5134
    %v5191 = vpack.c.b16 %v5143, %v5135
    %v5192 = vpack.c.b16 %v5144, %v5136
    %v5193 = vpack.c.b16 %v5145, %v5137
    %v5194 = vpack.c.b16 %v5146, %v5138
    %v5195 = vpack.c.b16 %v5147, %v5139
    %v5196 = vpack.c.b16 %v5148, %v5140
    %v5197 = vpack.c.b16 %v5157, %v5149
    %v5198 = vpack.c.b16 %v5158, %v5150
    %v5199 = vpack.c.b16 %v5159, %v5151
    %v5200 = vpack.c.b16 %v5160, %v5152
    %v5201 = vpack.c.b16 %v5161, %v5153
    %v5202 = vpack.c.b16 %v5162, %v5154
    %v5203 = vpack.c.b16 %v5163, %v5155
    %v5204 = vpack.c.b16 %v5164, %v5156
    %vm5245 = vcmask 654336
    %v5247 = vsel %vm5245, %v5037, 0
    %5249 = vmatprep.subr.bf16.mxu0 %v5166
    %5250 = vmatpush1.bf16.msra.mxu0 %v5165
    %5251 = vmatprep.subr.bf16.mxu0 %v5174
    %5252 = vmatpush1.bf16.msra.mxu0 %v5173
    %5253 = vmatprep.subr.bf16.mxu0 %v5182
    %5254 = vmatpush1.bf16.msra.mxu0 %v5181
    %5255 = vmatprep.subr.bf16.mxu0 %v5190
    %5256 = vmatpush1.bf16.msra.mxu0 %v5189
    %5257 = vmatprep.subr.bf16.mxu0 %v5198
    %5258 = vmatpush1.bf16.msra.mxu0 %v5197
    %5259 = vmatprep.subr.bf16.mxu0 0
    %5260 = vmatpush1.bf16.msra.mxu0 0
    %5261 = vmatprep.subr.bf16.mxu0 0
    %5262 = vmatpush1.bf16.msra.mxu0 0
    %5263 = vmatprep.subr.bf16.mxu0 0
    %5264 = vmatpush1.bf16.msra.mxu0 0
    %5265 = vmatprep.subr.bf16.mxu0 0
    %5266 = vmatpush1.bf16.msra.mxu0 0
    %5267 = vmatprep.subr.bf16.mxu0 0
    %5268 = vmatpush1.bf16.msra.mxu0 0
    %5269 = vmatprep.subr.bf16.mxu0 0
    %5270 = vmatpush1.bf16.msra.mxu0 0
    %5271 = vmatprep.subr.bf16.mxu0 0
    %5272 = vmatpush1.bf16.msra.mxu0 0
    %5273 = vmatprep.subr.bf16.mxu0 0
    %5274 = vmatpush1.bf16.msra.mxu0 0
    %5275 = vmatprep.subr.bf16.mxu0 0
    %5276 = vmatpush1.bf16.msra.mxu0 0
    %5277 = vmatprep.subr.bf16.mxu0 0
    %5278 = vmatpush1.bf16.msra.mxu0 0
    %5279 = vmatprep.subr.bf16.mxu0 0
    %5280 = vmatpush1.bf16.msra.mxu0 0
    %5281 = vmatprep.mubr.bf16.mxu0 0
    %5282 = vmatmul.mubr.bf16.gmra.mrb[0].mxu0 %v5247
    %v5283 = vpop.f32.mrb[0].mxu0
    %v5284 = vadd.f32 0.0, %v5283
    %v5285 = vpop.f32.mrb[0].mxu0
    %v5286 = vadd.f32 0.0, %v5285
    %v5287 = vpop.f32.mrb[0].mxu0
    %v5288 = vpop.f32.mrb[0].mxu0
    %5289 = vdwg.mxu0
    %5290 = vmatprep.subr.bf16.mxu0 %v5168
    %5291 = vmatpush1.bf16.msra.mxu0 %v5167
    %5292 = vmatprep.subr.bf16.mxu0 %v5176
    %5293 = vmatpush1.bf16.msra.mxu0 %v5175
    %5294 = vmatprep.subr.bf16.mxu0 %v5184
    %5295 = vmatpush1.bf16.msra.mxu0 %v5183
    %5296 = vmatprep.subr.bf16.mxu0 %v5192
    %5297 = vmatpush1.bf16.msra.mxu0 %v5191
    %5298 = vmatprep.subr.bf16.mxu0 %v5200
    %5299 = vmatpush1.bf16.msra.mxu0 %v5199
    %5300 = vmatprep.subr.bf16.mxu0 0
    %5301 = vmatpush1.bf16.msra.mxu0 0
    %5302 = vmatprep.subr.bf16.mxu0 0
    %5303 = vmatpush1.bf16.msra.mxu0 0
    %5304 = vmatprep.subr.bf16.mxu0 0
    %5305 = vmatpush1.bf16.msra.mxu0 0
    %5306 = vmatprep.subr.bf16.mxu0 0
    %5307 = vmatpush1.bf16.msra.mxu0 0
    %5308 = vmatprep.subr.bf16.mxu0 0
    %5309 = vmatpush1.bf16.msra.mxu0 0
    %5310 = vmatprep.subr.bf16.mxu0 0
    %5311 = vmatpush1.bf16.msra.mxu0 0
    %5312 = vmatprep.subr.bf16.mxu0 0
    %5313 = vmatpush1.bf16.msra.mxu0 0
    %5314 = vmatprep.subr.bf16.mxu0 0
    %5315 = vmatpush1.bf16.msra.mxu0 0
    %5316 = vmatprep.subr.bf16.mxu0 0
    %5317 = vmatpush1.bf16.msra.mxu0 0
    %5318 = vmatprep.subr.bf16.mxu0 0
    %5319 = vmatpush1.bf16.msra.mxu0 0
    %5320 = vmatprep.subr.bf16.mxu0 0
    %5321 = vmatpush1.bf16.msra.mxu0 0
    %5322 = vmatprep.mubr.bf16.mxu0 0
    %5323 = vmatmul.mubr.bf16.gmra.mrb[0].mxu0 %v5247
    %v5324 = vpop.f32.mrb[0].mxu0
    %v5325 = vadd.f32 0.0, %v5324
    %v5326 = vpop.f32.mrb[0].mxu0
    %v5327 = vadd.f32 0.0, %v5326
    %v5328 = vpop.f32.mrb[0].mxu0
    %v5329 = vpop.f32.mrb[0].mxu0
    %5330 = vdwg.mxu0
    %5331 = vmatprep.subr.bf16.mxu0 %v5170
    %5332 = vmatpush1.bf16.msra.mxu0 %v5169
    %5333 = vmatprep.subr.bf16.mxu0 %v5178
    %5334 = vmatpush1.bf16.msra.mxu0 %v5177
    %5335 = vmatprep.subr.bf16.mxu0 %v5186
    %5336 = vmatpush1.bf16.msra.mxu0 %v5185
    %5337 = vmatprep.subr.bf16.mxu0 %v5194
    %5338 = vmatpush1.bf16.msra.mxu0 %v5193
    %5339 = vmatprep.subr.bf16.mxu0 %v5202
    %5340 = vmatpush1.bf16.msra.mxu0 %v5201
    %5341 = vmatprep.subr.bf16.mxu0 0
    %5342 = vmatpush1.bf16.msra.mxu0 0
    %5343 = vmatprep.subr.bf16.mxu0 0
    %5344 = vmatpush1.bf16.msra.mxu0 0
    %5345 = vmatprep.subr.bf16.mxu0 0
    %5346 = vmatpush1.bf16.msra.mxu0 0
    %5347 = vmatprep.subr.bf16.mxu0 0
    %5348 = vmatpush1.bf16.msra.mxu0 0
    %5349 = vmatprep.subr.bf16.mxu0 0
    %5350 = vmatpush1.bf16.msra.mxu0 0
    %5351 = vmatprep.subr.bf16.mxu0 0
    %5352 = vmatpush1.bf16.msra.mxu0 0
    %5353 = vmatprep.subr.bf16.mxu0 0
    %5354 = vmatpush1.bf16.msra.mxu0 0
    %5355 = vmatprep.subr.bf16.mxu0 0
    %5356 = vmatpush1.bf16.msra.mxu0 0
    %5357 = vmatprep.subr.bf16.mxu0 0
    %5358 = vmatpush1.bf16.msra.mxu0 0
    %5359 = vmatprep.subr.bf16.mxu0 0
    %5360 = vmatpush1.bf16.msra.mxu0 0
    %5361 = vmatprep.subr.bf16.mxu0 0
    %5362 = vmatpush1.bf16.msra.mxu0 0
    %5363 = vmatprep.mubr.bf16.mxu0 0
    %5364 = vmatmul.mubr.bf16.gmra.mrb[0].mxu0 %v5247
    %v5365 = vpop.f32.mrb[0].mxu0
    %v5366 = vadd.f32 0.0, %v5365
    %v5367 = vpop.f32.mrb[0].mxu0
    %v5368 = vadd.f32 0.0, %v5367
    %v5369 = vpop.f32.mrb[0].mxu0
    %v5370 = vpop.f32.mrb[0].mxu0
    %5371 = vdwg.mxu0
    %5372 = vmatprep.subr.bf16.mxu0 %v5172
    %5373 = vmatpush1.bf16.msra.mxu0 %v5171
    %5374 = vmatprep.subr.bf16.mxu0 %v5180
    %5375 = vmatpush1.bf16.msra.mxu0 %v5179
    %5376 = vmatprep.subr.bf16.mxu0 %v5188
    %5377 = vmatpush1.bf16.msra.mxu0 %v5187
    %5378 = vmatprep.subr.bf16.mxu0 %v5196
    %5379 = vmatpush1.bf16.msra.mxu0 %v5195
    %5380 = vmatprep.subr.bf16.mxu0 %v5204
    %5381 = vmatpush1.bf16.msra.mxu0 %v5203
    %5382 = vmatprep.subr.bf16.mxu0 0
    %5383 = vmatpush1.bf16.msra.mxu0 0
    %5384 = vmatprep.subr.bf16.mxu0 0
    %5385 = vmatpush1.bf16.msra.mxu0 0
    %5386 = vmatprep.subr.bf16.mxu0 0
    %5387 = vmatpush1.bf16.msra.mxu0 0
    %5388 = vmatprep.subr.bf16.mxu0 0
    %5389 = vmatpush1.bf16.msra.mxu0 0
    %5390 = vmatprep.subr.bf16.mxu0 0
    %5391 = vmatpush1.bf16.msra.mxu0 0
    %5392 = vmatprep.subr.bf16.mxu0 0
    %5393 = vmatpush1.bf16.msra.mxu0 0
    %5394 = vmatprep.subr.bf16.mxu0 0
    %5395 = vmatpush1.bf16.msra.mxu0 0
    %5396 = vmatprep.subr.bf16.mxu0 0
    %5397 = vmatpush1.bf16.msra.mxu0 0
    %5398 = vmatprep.subr.bf16.mxu0 0
    %5399 = vmatpush1.bf16.msra.mxu0 0
    %5400 = vmatprep.subr.bf16.mxu0 0
    %5401 = vmatpush1.bf16.msra.mxu0 0
    %5402 = vmatprep.subr.bf16.mxu0 0
    %5403 = vmatpush1.bf16.msra.mxu0 0
    %5404 = vmatprep.mubr.bf16.mxu0 0
    %5405 = vmatmul.mubr.bf16.gmra.mrb[0].mxu0 %v5247
    %v5406 = vpop.f32.mrb[0].mxu0
    %v5407 = vadd.f32 0.0, %v5406
    %v5408 = vpop.f32.mrb[0].mxu0
    %v5409 = vadd.f32 0.0, %v5408
    %v5410 = vpop.f32.mrb[0].mxu0
    %v5411 = vpop.f32.mrb[0].mxu0
    %5412 = vdwg.mxu0
    %5413 = vxpose.xlu0.c.b16.start [1/8] %v4923, 128
    %5414 = vxpose.xlu0.c.b16.cont [2/8] %v4924, 128
    %5415 = vxpose.xlu0.c.b16.cont [3/8] %v4925, 128
    %5416 = vxpose.xlu0.c.b16.cont [4/8] %v4926, 128
    %5417 = vxpose.xlu0.c.b16.cont [5/8] %v4927, 128
    %5418 = vxpose.xlu0.c.b16.cont [6/8] 0, 128
    %5419 = vxpose.xlu0.c.b16.cont [7/8] 0, 128
    %5420 = vxpose.xlu0.c.b16.end [8/8] 0, 128
    %v5421 = vpop.trf.xlu0
    %v5422 = vpop.trf.xlu0
    %v5423 = vpop.trf.xlu0
    %v5424 = vpop.trf.xlu0
    %v5425 = vpop.trf.xlu0
    %v5426 = vpop.trf.xlu0
    %v5427 = vpop.trf.xlu0
    %v5428 = vpop.trf.xlu0
    %v5469 = vunpack.c.l.b16 %v4928
    %v5470 = vunpack.c.h.b16 %v4928
    %v5471 = vunpack.c.l.b16 %v4929
    %v5472 = vunpack.c.h.b16 %v4929
    %v5473 = vunpack.c.l.b16 %v4930
    %v5474 = vunpack.c.h.b16 %v4930
    %v5475 = vunpack.c.l.b16 %v4931
    %v5476 = vunpack.c.h.b16 %v4931
    %v5477 = vunpack.c.l.b16 %v4932
    %v5478 = vunpack.c.h.b16 %v4932
    %v5479 = vunpack.c.l.b16 %v4933
    %v5480 = vunpack.c.h.b16 %v4933
    %v5481 = vunpack.c.l.b16 %v4934
    %v5482 = vunpack.c.h.b16 %v4934
    %v5483 = vunpack.c.l.b16 %v4935
    %v5484 = vunpack.c.h.b16 %v4935
    %v5485 = vunpack.c.l.b16 %v4936
    %v5486 = vunpack.c.h.b16 %v4936
    %v5487 = vunpack.c.l.b16 %v4937
    %v5488 = vunpack.c.h.b16 %v4937
    %v5489 = vunpack.c.l.b16 %v4938
    %v5490 = vunpack.c.h.b16 %v4938
    %v5491 = vunpack.c.l.b16 %v4939
    %v5492 = vunpack.c.h.b16 %v4939
    %v5493 = vunpack.c.l.b16 %v4940
    %v5494 = vunpack.c.h.b16 %v4940
    %v5495 = vunpack.c.l.b16 %v4941
    %v5496 = vunpack.c.h.b16 %v4941
    %v5497 = vunpack.c.l.b16 %v4942
    %v5498 = vunpack.c.h.b16 %v4942
    %v5499 = vunpack.c.l.b16 %v4943
    %v5500 = vunpack.c.h.b16 %v4943
    %v5501 = vunpack.c.l.b16 %v4944
    %v5502 = vunpack.c.h.b16 %v4944
    %v5503 = vunpack.c.l.b16 %v4945
    %v5504 = vunpack.c.h.b16 %v4945
    %v5505 = vunpack.c.l.b16 %v4946
    %v5506 = vunpack.c.h.b16 %v4946
    %v5507 = vunpack.c.l.b16 %v4947
    %v5508 = vunpack.c.h.b16 %v4947
    %v5509 = vunpack.c.l.b16 %v4948
    %v5510 = vunpack.c.h.b16 %v4948
    %v5511 = vunpack.c.l.b16 %v4949
    %v5512 = vunpack.c.h.b16 %v4949
    %v5513 = vunpack.c.l.b16 %v4950
    %v5514 = vunpack.c.h.b16 %v4950
    %v5515 = vunpack.c.l.b16 %v4951
    %v5516 = vunpack.c.h.b16 %v4951
    %v5517 = vunpack.c.l.b16 %v4952
    %v5518 = vunpack.c.h.b16 %v4952
    %v5519 = vunpack.c.l.b16 %v4953
    %v5520 = vunpack.c.h.b16 %v4953
    %v5521 = vunpack.c.l.b16 %v4954
    %v5522 = vunpack.c.h.b16 %v4954
    %v5523 = vunpack.c.l.b16 %v4955
    %v5524 = vunpack.c.h.b16 %v4955
    %v5525 = vunpack.c.l.b16 %v4956
    %v5526 = vunpack.c.h.b16 %v4956
    %v5527 = vunpack.c.l.b16 %v4957
    %v5528 = vunpack.c.h.b16 %v4957
    %v5529 = vunpack.c.l.b16 %v4958
    %v5530 = vunpack.c.h.b16 %v4958
    %v5531 = vunpack.c.l.b16 %v4959
    %v5532 = vunpack.c.h.b16 %v4959
    %v5533 = vunpack.c.l.b16 %v4960
    %v5534 = vunpack.c.h.b16 %v4960
    %v5535 = vunpack.c.l.b16 %v4961
    %v5536 = vunpack.c.h.b16 %v4961
    %v5537 = vunpack.c.l.b16 %v4962
    %v5538 = vunpack.c.h.b16 %v4962
    %v5539 = vunpack.c.l.b16 %v4963
    %v5540 = vunpack.c.h.b16 %v4963
    %v5541 = vunpack.c.l.b16 %v4964
    %v5542 = vunpack.c.h.b16 %v4964
    %v5543 = vunpack.c.l.b16 %v4965
    %v5544 = vunpack.c.h.b16 %v4965
    %v5545 = vunpack.c.l.b16 %v4966
    %v5546 = vunpack.c.h.b16 %v4966
    %v5547 = vunpack.c.l.b16 %v4967
    %v5548 = vunpack.c.h.b16 %v4967
    %v5549 = vpack.c.b16 %v5477, %v5469
    %v5550 = vpack.c.b16 %v5478, %v5470
    %v5551 = vpack.c.b16 %v5479, %v5471
    %v5552 = vpack.c.b16 %v5480, %v5472
    %v5553 = vpack.c.b16 %v5481, %v5473
    %v5554 = vpack.c.b16 %v5482, %v5474
    %v5555 = vpack.c.b16 %v5483, %v5475
    %v5556 = vpack.c.b16 %v5484, %v5476
    %v5557 = vpack.c.b16 %v5493, %v5485
    %v5558 = vpack.c.b16 %v5494, %v5486
    %v5559 = vpack.c.b16 %v5495, %v5487
    %v5560 = vpack.c.b16 %v5496, %v5488
    %v5561 = vpack.c.b16 %v5497, %v5489
    %v5562 = vpack.c.b16 %v5498, %v5490
    %v5563 = vpack.c.b16 %v5499, %v5491
    %v5564 = vpack.c.b16 %v5500, %v5492
    %v5565 = vpack.c.b16 %v5509, %v5501
    %v5566 = vpack.c.b16 %v5510, %v5502
    %v5567 = vpack.c.b16 %v5511, %v5503
    %v5568 = vpack.c.b16 %v5512, %v5504
    %v5569 = vpack.c.b16 %v5513, %v5505
    %v5570 = vpack.c.b16 %v5514, %v5506
    %v5571 = vpack.c.b16 %v5515, %v5507
    %v5572 = vpack.c.b16 %v5516, %v5508
    %v5573 = vpack.c.b16 %v5525, %v5517
    %v5574 = vpack.c.b16 %v5526, %v5518
    %v5575 = vpack.c.b16 %v5527, %v5519
    %v5576 = vpack.c.b16 %v5528, %v5520
    %v5577 = vpack.c.b16 %v5529, %v5521
    %v5578 = vpack.c.b16 %v5530, %v5522
    %v5579 = vpack.c.b16 %v5531, %v5523
    %v5580 = vpack.c.b16 %v5532, %v5524
    %v5581 = vpack.c.b16 %v5541, %v5533
    %v5582 = vpack.c.b16 %v5542, %v5534
    %v5583 = vpack.c.b16 %v5543, %v5535
    %v5584 = vpack.c.b16 %v5544, %v5536
    %v5585 = vpack.c.b16 %v5545, %v5537
    %v5586 = vpack.c.b16 %v5546, %v5538
    %v5587 = vpack.c.b16 %v5547, %v5539
    %v5588 = vpack.c.b16 %v5548, %v5540
    %v5630 = vsel %vm5245, %v5421, 0
    %5632 = vmatprep.subr.bf16.mxu0 %v5550
    %5633 = vmatpush1.bf16.msra.mxu0 %v5549
    %5634 = vmatprep.subr.bf16.mxu0 %v5558
    %5635 = vmatpush1.bf16.msra.mxu0 %v5557
    %5636 = vmatprep.subr.bf16.mxu0 %v5566
    %5637 = vmatpush1.bf16.msra.mxu0 %v5565
    %5638 = vmatprep.subr.bf16.mxu0 %v5574
    %5639 = vmatpush1.bf16.msra.mxu0 %v5573
    %5640 = vmatprep.subr.bf16.mxu0 %v5582
    %5641 = vmatpush1.bf16.msra.mxu0 %v5581
    %5642 = vmatprep.subr.bf16.mxu0 0
    %5643 = vmatpush1.bf16.msra.mxu0 0
    %5644 = vmatprep.subr.bf16.mxu0 0
    %5645 = vmatpush1.bf16.msra.mxu0 0
    %5646 = vmatprep.subr.bf16.mxu0 0
    %5647 = vmatpush1.bf16.msra.mxu0 0
    %5648 = vmatprep.subr.bf16.mxu0 0
    %5649 = vmatpush1.bf16.msra.mxu0 0
    %5650 = vmatprep.subr.bf16.mxu0 0
    %5651 = vmatpush1.bf16.msra.mxu0 0
    %5652 = vmatprep.subr.bf16.mxu0 0
    %5653 = vmatpush1.bf16.msra.mxu0 0
    %5654 = vmatprep.subr.bf16.mxu0 0
    %5655 = vmatpush1.bf16.msra.mxu0 0
    %5656 = vmatprep.subr.bf16.mxu0 0
    %5657 = vmatpush1.bf16.msra.mxu0 0
    %5658 = vmatprep.subr.bf16.mxu0 0
    %5659 = vmatpush1.bf16.msra.mxu0 0
    %5660 = vmatprep.subr.bf16.mxu0 0
    %5661 = vmatpush1.bf16.msra.mxu0 0
    %5662 = vmatprep.subr.bf16.mxu0 0
    %5663 = vmatpush1.bf16.msra.mxu0 0
    %5664 = vmatprep.mubr.bf16.mxu0 0
    %5665 = vmatmul.mubr.bf16.gmra.mrb[0].mxu0 %v5630
    %v5666 = vpop.f32.mrb[0].mxu0
    %v5667 = vadd.f32 %v5284, %v5666
    %v5668 = vpop.f32.mrb[0].mxu0
    %v5669 = vadd.f32 %v5286, %v5668
    %v5670 = vpop.f32.mrb[0].mxu0
    %v5671 = vpop.f32.mrb[0].mxu0
    %5672 = vdwg.mxu0
    %5673 = vmatprep.subr.bf16.mxu0 %v5552
    %5674 = vmatpush1.bf16.msra.mxu0 %v5551
    %5675 = vmatprep.subr.bf16.mxu0 %v5560
    %5676 = vmatpush1.bf16.msra.mxu0 %v5559
    %5677 = vmatprep.subr.bf16.mxu0 %v5568
    %5678 = vmatpush1.bf16.msra.mxu0 %v5567
    %5679 = vmatprep.subr.bf16.mxu0 %v5576
    %5680 = vmatpush1.bf16.msra.mxu0 %v5575
    %5681 = vmatprep.subr.bf16.mxu0 %v5584
    %5682 = vmatpush1.bf16.msra.mxu0 %v5583
    %5683 = vmatprep.subr.bf16.mxu0 0
    %5684 = vmatpush1.bf16.msra.mxu0 0
    %5685 = vmatprep.subr.bf16.mxu0 0
    %5686 = vmatpush1.bf16.msra.mxu0 0
    %5687 = vmatprep.subr.bf16.mxu0 0
    %5688 = vmatpush1.bf16.msra.mxu0 0
    %5689 = vmatprep.subr.bf16.mxu0 0
    %5690 = vmatpush1.bf16.msra.mxu0 0
    %5691 = vmatprep.subr.bf16.mxu0 0
    %5692 = vmatpush1.bf16.msra.mxu0 0
    %5693 = vmatprep.subr.bf16.mxu0 0
    %5694 = vmatpush1.bf16.msra.mxu0 0
    %5695 = vmatprep.subr.bf16.mxu0 0
    %5696 = vmatpush1.bf16.msra.mxu0 0
    %5697 = vmatprep.subr.bf16.mxu0 0
    %5698 = vmatpush1.bf16.msra.mxu0 0
    %5699 = vmatprep.subr.bf16.mxu0 0
    %5700 = vmatpush1.bf16.msra.mxu0 0
    %5701 = vmatprep.subr.bf16.mxu0 0
    %5702 = vmatpush1.bf16.msra.mxu0 0
    %5703 = vmatprep.subr.bf16.mxu0 0
    %5704 = vmatpush1.bf16.msra.mxu0 0
    %5705 = vmatprep.mubr.bf16.mxu0 0
    %5706 = vmatmul.mubr.bf16.gmra.mrb[0].mxu0 %v5630
    %v5707 = vpop.f32.mrb[0].mxu0
    %v5708 = vadd.f32 %v5325, %v5707
    %v5709 = vpop.f32.mrb[0].mxu0
    %v5710 = vadd.f32 %v5327, %v5709
    %v5711 = vpop.f32.mrb[0].mxu0
    %v5712 = vpop.f32.mrb[0].mxu0
    %5713 = vdwg.mxu0
    %5714 = vmatprep.subr.bf16.mxu0 %v5554
    %5715 = vmatpush1.bf16.msra.mxu0 %v5553
    %5716 = vmatprep.subr.bf16.mxu0 %v5562
    %5717 = vmatpush1.bf16.msra.mxu0 %v5561
    %5718 = vmatprep.subr.bf16.mxu0 %v5570
    %5719 = vmatpush1.bf16.msra.mxu0 %v5569
    %5720 = vmatprep.subr.bf16.mxu0 %v5578
    %5721 = vmatpush1.bf16.msra.mxu0 %v5577
    %5722 = vmatprep.subr.bf16.mxu0 %v5586
    %5723 = vmatpush1.bf16.msra.mxu0 %v5585
    %5724 = vmatprep.subr.bf16.mxu0 0
    %5725 = vmatpush1.bf16.msra.mxu0 0
    %5726 = vmatprep.subr.bf16.mxu0 0
    %5727 = vmatpush1.bf16.msra.mxu0 0
    %5728 = vmatprep.subr.bf16.mxu0 0
    %5729 = vmatpush1.bf16.msra.mxu0 0
    %5730 = vmatprep.subr.bf16.mxu0 0
    %5731 = vmatpush1.bf16.msra.mxu0 0
    %5732 = vmatprep.subr.bf16.mxu0 0
    %5733 = vmatpush1.bf16.msra.mxu0 0
    %5734 = vmatprep.subr.bf16.mxu0 0
    %5735 = vmatpush1.bf16.msra.mxu0 0
    %5736 = vmatprep.subr.bf16.mxu0 0
    %5737 = vmatpush1.bf16.msra.mxu0 0
    %5738 = vmatprep.subr.bf16.mxu0 0
    %5739 = vmatpush1.bf16.msra.mxu0 0
    %5740 = vmatprep.subr.bf16.mxu0 0
    %5741 = vmatpush1.bf16.msra.mxu0 0
    %5742 = vmatprep.subr.bf16.mxu0 0
    %5743 = vmatpush1.bf16.msra.mxu0 0
    %5744 = vmatprep.subr.bf16.mxu0 0
    %5745 = vmatpush1.bf16.msra.mxu0 0
    %5746 = vmatprep.mubr.bf16.mxu0 0
    %5747 = vmatmul.mubr.bf16.gmra.mrb[0].mxu0 %v5630
    %v5748 = vpop.f32.mrb[0].mxu0
    %v5749 = vadd.f32 %v5366, %v5748
    %v5750 = vpop.f32.mrb[0].mxu0
    %v5751 = vadd.f32 %v5368, %v5750
    %v5752 = vpop.f32.mrb[0].mxu0
    %v5753 = vpop.f32.mrb[0].mxu0
    %5754 = vdwg.mxu0
    %5755 = vmatprep.subr.bf16.mxu0 %v5556
    %5756 = vmatpush1.bf16.msra.mxu0 %v5555
    %5757 = vmatprep.subr.bf16.mxu0 %v5564
    %5758 = vmatpush1.bf16.msra.mxu0 %v5563
    %5759 = vmatprep.subr.bf16.mxu0 %v5572
    %5760 = vmatpush1.bf16.msra.mxu0 %v5571
    %5761 = vmatprep.subr.bf16.mxu0 %v5580
    %5762 = vmatpush1.bf16.msra.mxu0 %v5579
    %5763 = vmatprep.subr.bf16.mxu0 %v5588
    %5764 = vmatpush1.bf16.msra.mxu0 %v5587
    %5765 = vmatprep.subr.bf16.mxu0 0
    %5766 = vmatpush1.bf16.msra.mxu0 0
    %5767 = vmatprep.subr.bf16.mxu0 0
    %5768 = vmatpush1.bf16.msra.mxu0 0
    %5769 = vmatprep.subr.bf16.mxu0 0
    %5770 = vmatpush1.bf16.msra.mxu0 0
    %5771 = vmatprep.subr.bf16.mxu0 0
    %5772 = vmatpush1.bf16.msra.mxu0 0
    %5773 = vmatprep.subr.bf16.mxu0 0
    %5774 = vmatpush1.bf16.msra.mxu0 0
    %5775 = vmatprep.subr.bf16.mxu0 0
    %5776 = vmatpush1.bf16.msra.mxu0 0
    %5777 = vmatprep.subr.bf16.mxu0 0
    %5778 = vmatpush1.bf16.msra.mxu0 0
    %5779 = vmatprep.subr.bf16.mxu0 0
    %5780 = vmatpush1.bf16.msra.mxu0 0
    %5781 = vmatprep.subr.bf16.mxu0 0
    %5782 = vmatpush1.bf16.msra.mxu0 0
    %5783 = vmatprep.subr.bf16.mxu0 0
    %5784 = vmatpush1.bf16.msra.mxu0 0
    %5785 = vmatprep.subr.bf16.mxu0 0
    %5786 = vmatpush1.bf16.msra.mxu0 0
    %5787 = vmatprep.mubr.bf16.mxu0 0
    %5788 = vmatmul.mubr.bf16.gmra.mrb[0].mxu0 %v5630
    %v5789 = vpop.f32.mrb[0].mxu0
    %v5790 = vadd.f32 %v5407, %v5789
    %v5791 = vpop.f32.mrb[0].mxu0
    %v5792 = vadd.f32 %v5409, %v5791
    %v5793 = vpop.f32.mrb[0].mxu0
    %v5794 = vpop.f32.mrb[0].mxu0
    %5795 = vdwg.mxu0
    %s5796 = scalar_lea.vmem %s9, 640
    %v5797 = vld [vmem:[%s5796] sm:$0xff]
    %v5798 = vld [vmem:[%s5796 + $0x8] sm:$0xff]
    %v5799 = vld [vmem:[%s5796 + $0x10] sm:$0xff]
    %v5800 = vld [vmem:[%s5796 + $0x18] sm:$0xff]
    %v5801 = vld [vmem:[%s5796 + $0x20] sm:$0xff]
    %v5802 = vld [vmem:[%s5796 + $0x28] sm:$0xff]
    %v5803 = vld [vmem:[%s5796 + $0x30] sm:$0xff]
    %v5804 = vld [vmem:[%s5796 + $0x38] sm:$0xff]
    %v5805 = vld [vmem:[%s5796 + $0x40] sm:$0xff]
    %v5806 = vld [vmem:[%s5796 + $0x48] sm:$0xff]
    %v5807 = vld [vmem:[%s5796 + $0x50] sm:$0xff]
    %v5808 = vld [vmem:[%s5796 + $0x58] sm:$0xff]
    %v5809 = vld [vmem:[%s5796 + $0x60] sm:$0xff]
    %v5810 = vld [vmem:[%s5796 + $0x68] sm:$0xff]
    %v5811 = vld [vmem:[%s5796 + $0x70] sm:$0xff]
    %v5812 = vld [vmem:[%s5796 + $0x78] sm:$0xff]
    %v5813 = vld [vmem:[%s5796 + $0x80] sm:$0xff]
    %v5814 = vld [vmem:[%s5796 + $0x88] sm:$0xff]
    %v5815 = vld [vmem:[%s5796 + $0x90] sm:$0xff]
    %v5816 = vld [vmem:[%s5796 + $0x98] sm:$0xff]
    %v5817 = vld [vmem:[%s5796 + $0xa0] sm:$0xff]
    %v5818 = vld [vmem:[%s5796 + $0xa8] sm:$0xff]
    %v5819 = vld [vmem:[%s5796 + $0xb0] sm:$0xff]
    %v5820 = vld [vmem:[%s5796 + $0xb8] sm:$0xff]
    %v5821 = vld [vmem:[%s5796 + $0xc0] sm:$0xff]
    %v5822 = vld [vmem:[%s5796 + $0xc8] sm:$0xff]
    %v5823 = vld [vmem:[%s5796 + $0xd0] sm:$0xff]
    %v5824 = vld [vmem:[%s5796 + $0xd8] sm:$0xff]
    %v5825 = vld [vmem:[%s5796 + $0xe0] sm:$0xff]
    %v5826 = vld [vmem:[%s5796 + $0xe8] sm:$0xff]
    %v5827 = vld [vmem:[%s5796 + $0xf0] sm:$0xff]
    %v5828 = vld [vmem:[%s5796 + $0xf8] sm:$0xff]
    %v5829 = vld [vmem:[%s5796 + $0x100] sm:$0xff]
    %v5830 = vld [vmem:[%s5796 + $0x108] sm:$0xff]
    %v5831 = vld [vmem:[%s5796 + $0x110] sm:$0xff]
    %v5832 = vld [vmem:[%s5796 + $0x118] sm:$0xff]
    %v5833 = vld [vmem:[%s5796 + $0x120] sm:$0xff]
    %v5834 = vld [vmem:[%s5796 + $0x128] sm:$0xff]
    %v5835 = vld [vmem:[%s5796 + $0x130] sm:$0xff]
    %v5836 = vld [vmem:[%s5796 + $0x138] sm:$0xff]
    %5837 = vrot.lane.b32.xlu0 %v4923, 112
    %v5838 = vpop.permute.xlu0 %5837
    %5839 = vrot.lane.b32.xlu0 %v4924, 112
    %v5840 = vpop.permute.xlu0 %5839
    %5841 = vrot.lane.b32.xlu0 %v4925, 112
    %v5842 = vpop.permute.xlu0 %5841
    %5843 = vrot.lane.b32.xlu0 %v4926, 112
    %v5844 = vpop.permute.xlu0 %5843
    %5845 = vrot.lane.b32.xlu0 %v4927, 112
    %v5846 = vpop.permute.xlu0 %5845
    %5852 = vxpose.xlu0.c.b16.start [1/8] %v5838, 128
    %5853 = vxpose.xlu0.c.b16.cont [2/8] %v5840, 128
    %5854 = vxpose.xlu0.c.b16.cont [3/8] %v5842, 128
    %5855 = vxpose.xlu0.c.b16.cont [4/8] %v5844, 128
    %5856 = vxpose.xlu0.c.b16.cont [5/8] %v5846, 128
    %5857 = vxpose.xlu0.c.b16.cont [6/8] 0, 128
    %5858 = vxpose.xlu0.c.b16.cont [7/8] 0, 128
    %5859 = vxpose.xlu0.c.b16.end [8/8] 0, 128
    %v5860 = vpop.trf.xlu0
    %v5861 = vpop.trf.xlu0
    %v5862 = vpop.trf.xlu0
    %v5863 = vpop.trf.xlu0
    %v5864 = vpop.trf.xlu0
    %v5865 = vpop.trf.xlu0
    %v5866 = vpop.trf.xlu0
    %v5867 = vpop.trf.xlu0
    %v5908 = vunpack.c.l.b16 %v5797
    %v5909 = vunpack.c.h.b16 %v5797
    %v5910 = vunpack.c.l.b16 %v5798
    %v5911 = vunpack.c.h.b16 %v5798
    %v5912 = vunpack.c.l.b16 %v5799
    %v5913 = vunpack.c.h.b16 %v5799
    %v5914 = vunpack.c.l.b16 %v5800
    %v5915 = vunpack.c.h.b16 %v5800
    %v5916 = vunpack.c.l.b16 %v5801
    %v5917 = vunpack.c.h.b16 %v5801
    %v5918 = vunpack.c.l.b16 %v5802
    %v5919 = vunpack.c.h.b16 %v5802
    %v5920 = vunpack.c.l.b16 %v5803
    %v5921 = vunpack.c.h.b16 %v5803
    %v5922 = vunpack.c.l.b16 %v5804
    %v5923 = vunpack.c.h.b16 %v5804
    %v5924 = vunpack.c.l.b16 %v5805
    %v5925 = vunpack.c.h.b16 %v5805
    %v5926 = vunpack.c.l.b16 %v5806
    %v5927 = vunpack.c.h.b16 %v5806
    %v5928 = vunpack.c.l.b16 %v5807
    %v5929 = vunpack.c.h.b16 %v5807
    %v5930 = vunpack.c.l.b16 %v5808
    %v5931 = vunpack.c.h.b16 %v5808
    %v5932 = vunpack.c.l.b16 %v5809
    %v5933 = vunpack.c.h.b16 %v5809
    %v5934 = vunpack.c.l.b16 %v5810
    %v5935 = vunpack.c.h.b16 %v5810
    %v5936 = vunpack.c.l.b16 %v5811
    %v5937 = vunpack.c.h.b16 %v5811
    %v5938 = vunpack.c.l.b16 %v5812
    %v5939 = vunpack.c.h.b16 %v5812
    %v5940 = vunpack.c.l.b16 %v5813
    %v5941 = vunpack.c.h.b16 %v5813
    %v5942 = vunpack.c.l.b16 %v5814
    %v5943 = vunpack.c.h.b16 %v5814
    %v5944 = vunpack.c.l.b16 %v5815
    %v5945 = vunpack.c.h.b16 %v5815
    %v5946 = vunpack.c.l.b16 %v5816
    %v5947 = vunpack.c.h.b16 %v5816
    %v5948 = vunpack.c.l.b16 %v5817
    %v5949 = vunpack.c.h.b16 %v5817
    %v5950 = vunpack.c.l.b16 %v5818
    %v5951 = vunpack.c.h.b16 %v5818
    %v5952 = vunpack.c.l.b16 %v5819
    %v5953 = vunpack.c.h.b16 %v5819
    %v5954 = vunpack.c.l.b16 %v5820
    %v5955 = vunpack.c.h.b16 %v5820
    %v5956 = vunpack.c.l.b16 %v5821
    %v5957 = vunpack.c.h.b16 %v5821
    %v5958 = vunpack.c.l.b16 %v5822
    %v5959 = vunpack.c.h.b16 %v5822
    %v5960 = vunpack.c.l.b16 %v5823
    %v5961 = vunpack.c.h.b16 %v5823
    %v5962 = vunpack.c.l.b16 %v5824
    %v5963 = vunpack.c.h.b16 %v5824
    %v5964 = vunpack.c.l.b16 %v5825
    %v5965 = vunpack.c.h.b16 %v5825
    %v5966 = vunpack.c.l.b16 %v5826
    %v5967 = vunpack.c.h.b16 %v5826
    %v5968 = vunpack.c.l.b16 %v5827
    %v5969 = vunpack.c.h.b16 %v5827
    %v5970 = vunpack.c.l.b16 %v5828
    %v5971 = vunpack.c.h.b16 %v5828
    %v5972 = vunpack.c.l.b16 %v5829
    %v5973 = vunpack.c.h.b16 %v5829
    %v5974 = vunpack.c.l.b16 %v5830
    %v5975 = vunpack.c.h.b16 %v5830
    %v5976 = vunpack.c.l.b16 %v5831
    %v5977 = vunpack.c.h.b16 %v5831
    %v5978 = vunpack.c.l.b16 %v5832
    %v5979 = vunpack.c.h.b16 %v5832
    %v5980 = vunpack.c.l.b16 %v5833
    %v5981 = vunpack.c.h.b16 %v5833
    %v5982 = vunpack.c.l.b16 %v5834
    %v5983 = vunpack.c.h.b16 %v5834
    %v5984 = vunpack.c.l.b16 %v5835
    %v5985 = vunpack.c.h.b16 %v5835
    %v5986 = vunpack.c.l.b16 %v5836
    %v5987 = vunpack.c.h.b16 %v5836
    %v5988 = vpack.c.b16 %v5916, %v5908
    %v5989 = vpack.c.b16 %v5917, %v5909
    %v5990 = vpack.c.b16 %v5918, %v5910
    %v5991 = vpack.c.b16 %v5919, %v5911
    %v5992 = vpack.c.b16 %v5920, %v5912
    %v5993 = vpack.c.b16 %v5921, %v5913
    %v5994 = vpack.c.b16 %v5922, %v5914
    %v5995 = vpack.c.b16 %v5923, %v5915
    %v5996 = vpack.c.b16 %v5932, %v5924
    %v5997 = vpack.c.b16 %v5933, %v5925
    %v5998 = vpack.c.b16 %v5934, %v5926
    %v5999 = vpack.c.b16 %v5935, %v5927
    %v6000 = vpack.c.b16 %v5936, %v5928
    %v6001 = vpack.c.b16 %v5937, %v5929
    %v6002 = vpack.c.b16 %v5938, %v5930
    %v6003 = vpack.c.b16 %v5939, %v5931
    %v6004 = vpack.c.b16 %v5948, %v5940
    %v6005 = vpack.c.b16 %v5949, %v5941
    %v6006 = vpack.c.b16 %v5950, %v5942
    %v6007 = vpack.c.b16 %v5951, %v5943
    %v6008 = vpack.c.b16 %v5952, %v5944
    %v6009 = vpack.c.b16 %v5953, %v5945
    %v6010 = vpack.c.b16 %v5954, %v5946
    %v6011 = vpack.c.b16 %v5955, %v5947
    %v6012 = vpack.c.b16 %v5964, %v5956
    %v6013 = vpack.c.b16 %v5965, %v5957
    %v6014 = vpack.c.b16 %v5966, %v5958
    %v6015 = vpack.c.b16 %v5967, %v5959
    %v6016 = vpack.c.b16 %v5968, %v5960
    %v6017 = vpack.c.b16 %v5969, %v5961
    %v6018 = vpack.c.b16 %v5970, %v5962
    %v6019 = vpack.c.b16 %v5971, %v5963
    %v6020 = vpack.c.b16 %v5980, %v5972
    %v6021 = vpack.c.b16 %v5981, %v5973
    %v6022 = vpack.c.b16 %v5982, %v5974
    %v6023 = vpack.c.b16 %v5983, %v5975
    %v6024 = vpack.c.b16 %v5984, %v5976
    %v6025 = vpack.c.b16 %v5985, %v5977
    %v6026 = vpack.c.b16 %v5986, %v5978
    %v6027 = vpack.c.b16 %v5987, %v5979
    %v6069 = vsel %vm5245, %v5860, 0
    %6071 = vmatprep.subr.bf16.mxu0 %v5989
    %6072 = vmatpush1.bf16.msra.mxu0 %v5988
    %6073 = vmatprep.subr.bf16.mxu0 %v5997
    %6074 = vmatpush1.bf16.msra.mxu0 %v5996
    %6075 = vmatprep.subr.bf16.mxu0 %v6005
    %6076 = vmatpush1.bf16.msra.mxu0 %v6004
    %6077 = vmatprep.subr.bf16.mxu0 %v6013
    %6078 = vmatpush1.bf16.msra.mxu0 %v6012
    %6079 = vmatprep.subr.bf16.mxu0 %v6021
    %6080 = vmatpush1.bf16.msra.mxu0 %v6020
    %6081 = vmatprep.subr.bf16.mxu0 0
    %6082 = vmatpush1.bf16.msra.mxu0 0
    %6083 = vmatprep.subr.bf16.mxu0 0
    %6084 = vmatpush1.bf16.msra.mxu0 0
    %6085 = vmatprep.subr.bf16.mxu0 0
    %6086 = vmatpush1.bf16.msra.mxu0 0
    %6087 = vmatprep.subr.bf16.mxu0 0
    %6088 = vmatpush1.bf16.msra.mxu0 0
    %6089 = vmatprep.subr.bf16.mxu0 0
    %6090 = vmatpush1.bf16.msra.mxu0 0
    %6091 = vmatprep.subr.bf16.mxu0 0
    %6092 = vmatpush1.bf16.msra.mxu0 0
    %6093 = vmatprep.subr.bf16.mxu0 0
    %6094 = vmatpush1.bf16.msra.mxu0 0
    %6095 = vmatprep.subr.bf16.mxu0 0
    %6096 = vmatpush1.bf16.msra.mxu0 0
    %6097 = vmatprep.subr.bf16.mxu0 0
    %6098 = vmatpush1.bf16.msra.mxu0 0
    %6099 = vmatprep.subr.bf16.mxu0 0
    %6100 = vmatpush1.bf16.msra.mxu0 0
    %6101 = vmatprep.subr.bf16.mxu0 0
    %6102 = vmatpush1.bf16.msra.mxu0 0
    %6103 = vmatprep.mubr.bf16.mxu0 0
    %6104 = vmatmul.mubr.bf16.gmra.mrb[0].mxu0 %v6069
    %v6105 = vpop.f32.mrb[0].mxu0
    %v6106 = vadd.f32 0.0, %v6105
    %v6107 = vpop.f32.mrb[0].mxu0
    %v6108 = vadd.f32 0.0, %v6107
    %v6109 = vpop.f32.mrb[0].mxu0
    %v6110 = vpop.f32.mrb[0].mxu0
    %6111 = vdwg.mxu0
    %6112 = vmatprep.subr.bf16.mxu0 %v5991
    %6113 = vmatpush1.bf16.msra.mxu0 %v5990
    %6114 = vmatprep.subr.bf16.mxu0 %v5999
    %6115 = vmatpush1.bf16.msra.mxu0 %v5998
    %6116 = vmatprep.subr.bf16.mxu0 %v6007
    %6117 = vmatpush1.bf16.msra.mxu0 %v6006
    %6118 = vmatprep.subr.bf16.mxu0 %v6015
    %6119 = vmatpush1.bf16.msra.mxu0 %v6014
    %6120 = vmatprep.subr.bf16.mxu0 %v6023
    %6121 = vmatpush1.bf16.msra.mxu0 %v6022
    %6122 = vmatprep.subr.bf16.mxu0 0
    %6123 = vmatpush1.bf16.msra.mxu0 0
    %6124 = vmatprep.subr.bf16.mxu0 0
    %6125 = vmatpush1.bf16.msra.mxu0 0
    %6126 = vmatprep.subr.bf16.mxu0 0
    %6127 = vmatpush1.bf16.msra.mxu0 0
    %6128 = vmatprep.subr.bf16.mxu0 0
    %6129 = vmatpush1.bf16.msra.mxu0 0
    %6130 = vmatprep.subr.bf16.mxu0 0
    %6131 = vmatpush1.bf16.msra.mxu0 0
    %6132 = vmatprep.subr.bf16.mxu0 0
    %6133 = vmatpush1.bf16.msra.mxu0 0
    %6134 = vmatprep.subr.bf16.mxu0 0
    %6135 = vmatpush1.bf16.msra.mxu0 0
    %6136 = vmatprep.subr.bf16.mxu0 0
    %6137 = vmatpush1.bf16.msra.mxu0 0
    %6138 = vmatprep.subr.bf16.mxu0 0
    %6139 = vmatpush1.bf16.msra.mxu0 0
    %6140 = vmatprep.subr.bf16.mxu0 0
    %6141 = vmatpush1.bf16.msra.mxu0 0
    %6142 = vmatprep.subr.bf16.mxu0 0
    %6143 = vmatpush1.bf16.msra.mxu0 0
    %6144 = vmatprep.mubr.bf16.mxu0 0
    %6145 = vmatmul.mubr.bf16.gmra.mrb[0].mxu0 %v6069
    %v6146 = vpop.f32.mrb[0].mxu0
    %v6147 = vadd.f32 0.0, %v6146
    %v6148 = vpop.f32.mrb[0].mxu0
    %v6149 = vadd.f32 0.0, %v6148
    %v6150 = vpop.f32.mrb[0].mxu0
    %v6151 = vpop.f32.mrb[0].mxu0
    %6152 = vdwg.mxu0
    %6153 = vmatprep.subr.bf16.mxu0 %v5993
    %6154 = vmatpush1.bf16.msra.mxu0 %v5992
    %6155 = vmatprep.subr.bf16.mxu0 %v6001
    %6156 = vmatpush1.bf16.msra.mxu0 %v6000
    %6157 = vmatprep.subr.bf16.mxu0 %v6009
    %6158 = vmatpush1.bf16.msra.mxu0 %v6008
    %6159 = vmatprep.subr.bf16.mxu0 %v6017
    %6160 = vmatpush1.bf16.msra.mxu0 %v6016
    %6161 = vmatprep.subr.bf16.mxu0 %v6025
    %6162 = vmatpush1.bf16.msra.mxu0 %v6024
    %6163 = vmatprep.subr.bf16.mxu0 0
    %6164 = vmatpush1.bf16.msra.mxu0 0
    %6165 = vmatprep.subr.bf16.mxu0 0
    %6166 = vmatpush1.bf16.msra.mxu0 0
    %6167 = vmatprep.subr.bf16.mxu0 0
    %6168 = vmatpush1.bf16.msra.mxu0 0
    %6169 = vmatprep.subr.bf16.mxu0 0
    %6170 = vmatpush1.bf16.msra.mxu0 0
    %6171 = vmatprep.subr.bf16.mxu0 0
    %6172 = vmatpush1.bf16.msra.mxu0 0
    %6173 = vmatprep.subr.bf16.mxu0 0
    %6174 = vmatpush1.bf16.msra.mxu0 0
    %6175 = vmatprep.subr.bf16.mxu0 0
    %6176 = vmatpush1.bf16.msra.mxu0 0
    %6177 = vmatprep.subr.bf16.mxu0 0
    %6178 = vmatpush1.bf16.msra.mxu0 0
    %6179 = vmatprep.subr.bf16.mxu0 0
    %6180 = vmatpush1.bf16.msra.mxu0 0
    %6181 = vmatprep.subr.bf16.mxu0 0
    %6182 = vmatpush1.bf16.msra.mxu0 0
    %6183 = vmatprep.subr.bf16.mxu0 0
    %6184 = vmatpush1.bf16.msra.mxu0 0
    %6185 = vmatprep.mubr.bf16.mxu0 0
    %6186 = vmatmul.mubr.bf16.gmra.mrb[0].mxu0 %v6069
    %v6187 = vpop.f32.mrb[0].mxu0
    %v6188 = vadd.f32 0.0, %v6187
    %v6189 = vpop.f32.mrb[0].mxu0
    %v6190 = vadd.f32 0.0, %v6189
    %v6191 = vpop.f32.mrb[0].mxu0
    %v6192 = vpop.f32.mrb[0].mxu0
    %6193 = vdwg.mxu0
    %6194 = vmatprep.subr.bf16.mxu0 %v5995
    %6195 = vmatpush1.bf16.msra.mxu0 %v5994
    %6196 = vmatprep.subr.bf16.mxu0 %v6003
    %6197 = vmatpush1.bf16.msra.mxu0 %v6002
    %6198 = vmatprep.subr.bf16.mxu0 %v6011
    %6199 = vmatpush1.bf16.msra.mxu0 %v6010
    %6200 = vmatprep.subr.bf16.mxu0 %v6019
    %6201 = vmatpush1.bf16.msra.mxu0 %v6018
    %6202 = vmatprep.subr.bf16.mxu0 %v6027
    %6203 = vmatpush1.bf16.msra.mxu0 %v6026
    %6204 = vmatprep.subr.bf16.mxu0 0
    %6205 = vmatpush1.bf16.msra.mxu0 0
    %6206 = vmatprep.subr.bf16.mxu0 0
    %6207 = vmatpush1.bf16.msra.mxu0 0
    %6208 = vmatprep.subr.bf16.mxu0 0
    %6209 = vmatpush1.bf16.msra.mxu0 0
    %6210 = vmatprep.subr.bf16.mxu0 0
    %6211 = vmatpush1.bf16.msra.mxu0 0
    %6212 = vmatprep.subr.bf16.mxu0 0
    %6213 = vmatpush1.bf16.msra.mxu0 0
    %6214 = vmatprep.subr.bf16.mxu0 0
    %6215 = vmatpush1.bf16.msra.mxu0 0
    %6216 = vmatprep.subr.bf16.mxu0 0
    %6217 = vmatpush1.bf16.msra.mxu0 0
    %6218 = vmatprep.subr.bf16.mxu0 0
    %6219 = vmatpush1.bf16.msra.mxu0 0
    %6220 = vmatprep.subr.bf16.mxu0 0
    %6221 = vmatpush1.bf16.msra.mxu0 0
    %6222 = vmatprep.subr.bf16.mxu0 0
    %6223 = vmatpush1.bf16.msra.mxu0 0
    %6224 = vmatprep.subr.bf16.mxu0 0
    %6225 = vmatpush1.bf16.msra.mxu0 0
    %6226 = vmatprep.mubr.bf16.mxu0 0
    %6227 = vmatmul.mubr.bf16.gmra.mrb[0].mxu0 %v6069
    %v6228 = vpop.f32.mrb[0].mxu0
    %v6229 = vadd.f32 0.0, %v6228
    %v6230 = vpop.f32.mrb[0].mxu0
    %v6231 = vadd.f32 0.0, %v6230
    %v6232 = vpop.f32.mrb[0].mxu0
    %v6233 = vpop.f32.mrb[0].mxu0
    %6234 = vdwg.mxu0
    %v6235 = vadd.f32 %v5667, %v6106
    %v6236 = vadd.f32 %v5669, %v6108
    %v6237 = vadd.f32 %v5708, %v6147
    %v6238 = vadd.f32 %v5710, %v6149
    %v6239 = vadd.f32 %v5749, %v6188
    %v6240 = vadd.f32 %v5751, %v6190
    %v6241 = vadd.f32 %v5790, %v6229
    %v6242 = vadd.f32 %v5792, %v6231
    %s6243 = scalar_lea.vmem %s9, 960
    %v6244 = vld [vmem:[%s6243] sm:$0xff]
    %v6245 = vld [vmem:[%s6243 + $0x8] sm:$0xff]
    %v6246 = vld [vmem:[%s6243 + $0x10] sm:$0xff]
    %v6247 = vld [vmem:[%s6243 + $0x18] sm:$0xff]
    %v6248 = vld [vmem:[%s6243 + $0x20] sm:$0xff]
    %v6249 = vld [vmem:[%s6243 + $0x28] sm:$0xff]
    %v6250 = vld [vmem:[%s6243 + $0x30] sm:$0xff]
    %v6251 = vld [vmem:[%s6243 + $0x38] sm:$0xff]
    %v6252 = vld [vmem:[%s6243 + $0x40] sm:$0xff]
    %v6253 = vld [vmem:[%s6243 + $0x48] sm:$0xff]
    %v6254 = vld [vmem:[%s6243 + $0x50] sm:$0xff]
    %v6255 = vld [vmem:[%s6243 + $0x58] sm:$0xff]
    %v6256 = vld [vmem:[%s6243 + $0x60] sm:$0xff]
    %v6257 = vld [vmem:[%s6243 + $0x68] sm:$0xff]
    %v6258 = vld [vmem:[%s6243 + $0x70] sm:$0xff]
    %v6259 = vld [vmem:[%s6243 + $0x78] sm:$0xff]
    %v6260 = vld [vmem:[%s6243 + $0x80] sm:$0xff]
    %v6261 = vld [vmem:[%s6243 + $0x88] sm:$0xff]
    %v6262 = vld [vmem:[%s6243 + $0x90] sm:$0xff]
    %v6263 = vld [vmem:[%s6243 + $0x98] sm:$0xff]
    %v6264 = vld [vmem:[%s6243 + $0xa0] sm:$0xff]
    %v6265 = vld [vmem:[%s6243 + $0xa8] sm:$0xff]
    %v6266 = vld [vmem:[%s6243 + $0xb0] sm:$0xff]
    %v6267 = vld [vmem:[%s6243 + $0xb8] sm:$0xff]
    %v6268 = vld [vmem:[%s6243 + $0xc0] sm:$0xff]
    %v6269 = vld [vmem:[%s6243 + $0xc8] sm:$0xff]
    %v6270 = vld [vmem:[%s6243 + $0xd0] sm:$0xff]
    %v6271 = vld [vmem:[%s6243 + $0xd8] sm:$0xff]
    %v6272 = vld [vmem:[%s6243 + $0xe0] sm:$0xff]
    %v6273 = vld [vmem:[%s6243 + $0xe8] sm:$0xff]
    %v6274 = vld [vmem:[%s6243 + $0xf0] sm:$0xff]
    %v6275 = vld [vmem:[%s6243 + $0xf8] sm:$0xff]
    %v6276 = vld [vmem:[%s6243 + $0x100] sm:$0xff]
    %v6277 = vld [vmem:[%s6243 + $0x108] sm:$0xff]
    %v6278 = vld [vmem:[%s6243 + $0x110] sm:$0xff]
    %v6279 = vld [vmem:[%s6243 + $0x118] sm:$0xff]
    %v6280 = vld [vmem:[%s6243 + $0x120] sm:$0xff]
    %v6281 = vld [vmem:[%s6243 + $0x128] sm:$0xff]
    %v6282 = vld [vmem:[%s6243 + $0x130] sm:$0xff]
    %v6283 = vld [vmem:[%s6243 + $0x138] sm:$0xff]
    %6284 = vrot.lane.b32.xlu0 %v4923, 104
    %v6285 = vpop.permute.xlu0 %6284
    %6286 = vrot.lane.b32.xlu0 %v4924, 104
    %v6287 = vpop.permute.xlu0 %6286
    %6288 = vrot.lane.b32.xlu0 %v4925, 104
    %v6289 = vpop.permute.xlu0 %6288
    %6290 = vrot.lane.b32.xlu0 %v4926, 104
    %v6291 = vpop.permute.xlu0 %6290
    %6292 = vrot.lane.b32.xlu0 %v4927, 104
    %v6293 = vpop.permute.xlu0 %6292
    %6299 = vxpose.xlu0.c.b16.start [1/8] %v6285, 128
    %6300 = vxpose.xlu0.c.b16.cont [2/8] %v6287, 128
    %6301 = vxpose.xlu0.c.b16.cont [3/8] %v6289, 128
    %6302 = vxpose.xlu0.c.b16.cont [4/8] %v6291, 128
    %6303 = vxpose.xlu0.c.b16.cont [5/8] %v6293, 128
    %6304 = vxpose.xlu0.c.b16.cont [6/8] 0, 128
    %6305 = vxpose.xlu0.c.b16.cont [7/8] 0, 128
    %6306 = vxpose.xlu0.c.b16.end [8/8] 0, 128
    %v6307 = vpop.trf.xlu0
    %v6308 = vpop.trf.xlu0
    %v6309 = vpop.trf.xlu0
    %v6310 = vpop.trf.xlu0
    %v6311 = vpop.trf.xlu0
    %v6312 = vpop.trf.xlu0
    %v6313 = vpop.trf.xlu0
    %v6314 = vpop.trf.xlu0
    %v6355 = vunpack.c.l.b16 %v6244
    %v6356 = vunpack.c.h.b16 %v6244
    %v6357 = vunpack.c.l.b16 %v6245
    %v6358 = vunpack.c.h.b16 %v6245
    %v6359 = vunpack.c.l.b16 %v6246
    %v6360 = vunpack.c.h.b16 %v6246
    %v6361 = vunpack.c.l.b16 %v6247
    %v6362 = vunpack.c.h.b16 %v6247
    %v6363 = vunpack.c.l.b16 %v6248
    %v6364 = vunpack.c.h.b16 %v6248
    %v6365 = vunpack.c.l.b16 %v6249
    %v6366 = vunpack.c.h.b16 %v6249
    %v6367 = vunpack.c.l.b16 %v6250
    %v6368 = vunpack.c.h.b16 %v6250
    %v6369 = vunpack.c.l.b16 %v6251
    %v6370 = vunpack.c.h.b16 %v6251
    %v6371 = vunpack.c.l.b16 %v6252
    %v6372 = vunpack.c.h.b16 %v6252
    %v6373 = vunpack.c.l.b16 %v6253
    %v6374 = vunpack.c.h.b16 %v6253
    %v6375 = vunpack.c.l.b16 %v6254
    %v6376 = vunpack.c.h.b16 %v6254
    %v6377 = vunpack.c.l.b16 %v6255
    %v6378 = vunpack.c.h.b16 %v6255
    %v6379 = vunpack.c.l.b16 %v6256
    %v6380 = vunpack.c.h.b16 %v6256
    %v6381 = vunpack.c.l.b16 %v6257
    %v6382 = vunpack.c.h.b16 %v6257
    %v6383 = vunpack.c.l.b16 %v6258
    %v6384 = vunpack.c.h.b16 %v6258
    %v6385 = vunpack.c.l.b16 %v6259
    %v6386 = vunpack.c.h.b16 %v6259
    %v6387 = vunpack.c.l.b16 %v6260
    %v6388 = vunpack.c.h.b16 %v6260
    %v6389 = vunpack.c.l.b16 %v6261
    %v6390 = vunpack.c.h.b16 %v6261
    %v6391 = vunpack.c.l.b16 %v6262
    %v6392 = vunpack.c.h.b16 %v6262
    %v6393 = vunpack.c.l.b16 %v6263
    %v6394 = vunpack.c.h.b16 %v6263
    %v6395 = vunpack.c.l.b16 %v6264
    %v6396 = vunpack.c.h.b16 %v6264
    %v6397 = vunpack.c.l.b16 %v6265
    %v6398 = vunpack.c.h.b16 %v6265
    %v6399 = vunpack.c.l.b16 %v6266
    %v6400 = vunpack.c.h.b16 %v6266
    %v6401 = vunpack.c.l.b16 %v6267
    %v6402 = vunpack.c.h.b16 %v6267
    %v6403 = vunpack.c.l.b16 %v6268
    %v6404 = vunpack.c.h.b16 %v6268
    %v6405 = vunpack.c.l.b16 %v6269
    %v6406 = vunpack.c.h.b16 %v6269
    %v6407 = vunpack.c.l.b16 %v6270
    %v6408 = vunpack.c.h.b16 %v6270
    %v6409 = vunpack.c.l.b16 %v6271
    %v6410 = vunpack.c.h.b16 %v6271
    %v6411 = vunpack.c.l.b16 %v6272
    %v6412 = vunpack.c.h.b16 %v6272
    %v6413 = vunpack.c.l.b16 %v6273
    %v6414 = vunpack.c.h.b16 %v6273
    %v6415 = vunpack.c.l.b16 %v6274
    %v6416 = vunpack.c.h.b16 %v6274
    %v6417 = vunpack.c.l.b16 %v6275
    %v6418 = vunpack.c.h.b16 %v6275
    %v6419 = vunpack.c.l.b16 %v6276
    %v6420 = vunpack.c.h.b16 %v6276
    %v6421 = vunpack.c.l.b16 %v6277
    %v6422 = vunpack.c.h.b16 %v6277
    %v6423 = vunpack.c.l.b16 %v6278
    %v6424 = vunpack.c.h.b16 %v6278
    %v6425 = vunpack.c.l.b16 %v6279
    %v6426 = vunpack.c.h.b16 %v6279
    %v6427 = vunpack.c.l.b16 %v6280
    %v6428 = vunpack.c.h.b16 %v6280
    %v6429 = vunpack.c.l.b16 %v6281
    %v6430 = vunpack.c.h.b16 %v6281
    %v6431 = vunpack.c.l.b16 %v6282
    %v6432 = vunpack.c.h.b16 %v6282
    %v6433 = vunpack.c.l.b16 %v6283
    %v6434 = vunpack.c.h.b16 %v6283
    %v6435 = vpack.c.b16 %v6363, %v6355
    %v6436 = vpack.c.b16 %v6364, %v6356
    %v6437 = vpack.c.b16 %v6365, %v6357
    %v6438 = vpack.c.b16 %v6366, %v6358
    %v6439 = vpack.c.b16 %v6367, %v6359
    %v6440 = vpack.c.b16 %v6368, %v6360
    %v6441 = vpack.c.b16 %v6369, %v6361
    %v6442 = vpack.c.b16 %v6370, %v6362
    %v6443 = vpack.c.b16 %v6379, %v6371
    %v6444 = vpack.c.b16 %v6380, %v6372
    %v6445 = vpack.c.b16 %v6381, %v6373
    %v6446 = vpack.c.b16 %v6382, %v6374
    %v6447 = vpack.c.b16 %v6383, %v6375
    %v6448 = vpack.c.b16 %v6384, %v6376
    %v6449 = vpack.c.b16 %v6385, %v6377
    %v6450 = vpack.c.b16 %v6386, %v6378
    %v6451 = vpack.c.b16 %v6395, %v6387
    %v6452 = vpack.c.b16 %v6396, %v6388
    %v6453 = vpack.c.b16 %v6397, %v6389
    %v6454 = vpack.c.b16 %v6398, %v6390
    %v6455 = vpack.c.b16 %v6399, %v6391
    %v6456 = vpack.c.b16 %v6400, %v6392
    %v6457 = vpack.c.b16 %v6401, %v6393
    %v6458 = vpack.c.b16 %v6402, %v6394
    %v6459 = vpack.c.b16 %v6411, %v6403
    %v6460 = vpack.c.b16 %v6412, %v6404
    %v6461 = vpack.c.b16 %v6413, %v6405
    %v6462 = vpack.c.b16 %v6414, %v6406
    %v6463 = vpack.c.b16 %v6415, %v6407
    %v6464 = vpack.c.b16 %v6416, %v6408
    %v6465 = vpack.c.b16 %v6417, %v6409
    %v6466 = vpack.c.b16 %v6418, %v6410
    %v6467 = vpack.c.b16 %v6427, %v6419
    %v6468 = vpack.c.b16 %v6428, %v6420
    %v6469 = vpack.c.b16 %v6429, %v6421
    %v6470 = vpack.c.b16 %v6430, %v6422
    %v6471 = vpack.c.b16 %v6431, %v6423
    %v6472 = vpack.c.b16 %v6432, %v6424
    %v6473 = vpack.c.b16 %v6433, %v6425
    %v6474 = vpack.c.b16 %v6434, %v6426
    %v6516 = vsel %vm5245, %v6307, 0
    %6518 = vmatprep.subr.bf16.mxu0 %v6436
    %6519 = vmatpush1.bf16.msra.mxu0 %v6435
    %6520 = vmatprep.subr.bf16.mxu0 %v6444
    %6521 = vmatpush1.bf16.msra.mxu0 %v6443
    %6522 = vmatprep.subr.bf16.mxu0 %v6452
    %6523 = vmatpush1.bf16.msra.mxu0 %v6451
    %6524 = vmatprep.subr.bf16.mxu0 %v6460
    %6525 = vmatpush1.bf16.msra.mxu0 %v6459
    %6526 = vmatprep.subr.bf16.mxu0 %v6468
    %6527 = vmatpush1.bf16.msra.mxu0 %v6467
    %6528 = vmatprep.subr.bf16.mxu0 0
    %6529 = vmatpush1.bf16.msra.mxu0 0
    %6530 = vmatprep.subr.bf16.mxu0 0
    %6531 = vmatpush1.bf16.msra.mxu0 0
    %6532 = vmatprep.subr.bf16.mxu0 0
    %6533 = vmatpush1.bf16.msra.mxu0 0
    %6534 = vmatprep.subr.bf16.mxu0 0
    %6535 = vmatpush1.bf16.msra.mxu0 0
    %6536 = vmatprep.subr.bf16.mxu0 0
    %6537 = vmatpush1.bf16.msra.mxu0 0
    %6538 = vmatprep.subr.bf16.mxu0 0
    %6539 = vmatpush1.bf16.msra.mxu0 0
    %6540 = vmatprep.subr.bf16.mxu0 0
    %6541 = vmatpush1.bf16.msra.mxu0 0
    %6542 = vmatprep.subr.bf16.mxu0 0
    %6543 = vmatpush1.bf16.msra.mxu0 0
    %6544 = vmatprep.subr.bf16.mxu0 0
    %6545 = vmatpush1.bf16.msra.mxu0 0
    %6546 = vmatprep.subr.bf16.mxu0 0
    %6547 = vmatpush1.bf16.msra.mxu0 0
    %6548 = vmatprep.subr.bf16.mxu0 0
    %6549 = vmatpush1.bf16.msra.mxu0 0
    %6550 = vmatprep.mubr.bf16.mxu0 0
    %6551 = vmatmul.mubr.bf16.gmra.mrb[0].mxu0 %v6516
    %v6552 = vpop.f32.mrb[0].mxu0
    %v6553 = vadd.f32 0.0, %v6552
    %v6554 = vpop.f32.mrb[0].mxu0
    %v6555 = vadd.f32 0.0, %v6554
    %v6556 = vpop.f32.mrb[0].mxu0
    %v6557 = vpop.f32.mrb[0].mxu0
    %6558 = vdwg.mxu0
    %6559 = vmatprep.subr.bf16.mxu0 %v6438
    %6560 = vmatpush1.bf16.msra.mxu0 %v6437
    %6561 = vmatprep.subr.bf16.mxu0 %v6446
    %6562 = vmatpush1.bf16.msra.mxu0 %v6445
    %6563 = vmatprep.subr.bf16.mxu0 %v6454
    %6564 = vmatpush1.bf16.msra.mxu0 %v6453
    %6565 = vmatprep.subr.bf16.mxu0 %v6462
    %6566 = vmatpush1.bf16.msra.mxu0 %v6461
    %6567 = vmatprep.subr.bf16.mxu0 %v6470
    %6568 = vmatpush1.bf16.msra.mxu0 %v6469
    %6569 = vmatprep.subr.bf16.mxu0 0
    %6570 = vmatpush1.bf16.msra.mxu0 0
    %6571 = vmatprep.subr.bf16.mxu0 0
    %6572 = vmatpush1.bf16.msra.mxu0 0
    %6573 = vmatprep.subr.bf16.mxu0 0
    %6574 = vmatpush1.bf16.msra.mxu0 0
    %6575 = vmatprep.subr.bf16.mxu0 0
    %6576 = vmatpush1.bf16.msra.mxu0 0
    %6577 = vmatprep.subr.bf16.mxu0 0
    %6578 = vmatpush1.bf16.msra.mxu0 0
    %6579 = vmatprep.subr.bf16.mxu0 0
    %6580 = vmatpush1.bf16.msra.mxu0 0
    %6581 = vmatprep.subr.bf16.mxu0 0
    %6582 = vmatpush1.bf16.msra.mxu0 0
    %6583 = vmatprep.subr.bf16.mxu0 0
    %6584 = vmatpush1.bf16.msra.mxu0 0
    %6585 = vmatprep.subr.bf16.mxu0 0
    %6586 = vmatpush1.bf16.msra.mxu0 0
    %6587 = vmatprep.subr.bf16.mxu0 0
    %6588 = vmatpush1.bf16.msra.mxu0 0
    %6589 = vmatprep.subr.bf16.mxu0 0
    %6590 = vmatpush1.bf16.msra.mxu0 0
    %6591 = vmatprep.mubr.bf16.mxu0 0
    %6592 = vmatmul.mubr.bf16.gmra.mrb[0].mxu0 %v6516
    %v6593 = vpop.f32.mrb[0].mxu0
    %v6594 = vadd.f32 0.0, %v6593
    %v6595 = vpop.f32.mrb[0].mxu0
    %v6596 = vadd.f32 0.0, %v6595
    %v6597 = vpop.f32.mrb[0].mxu0
    %v6598 = vpop.f32.mrb[0].mxu0
    %6599 = vdwg.mxu0
    %6600 = vmatprep.subr.bf16.mxu0 %v6440
    %6601 = vmatpush1.bf16.msra.mxu0 %v6439
    %6602 = vmatprep.subr.bf16.mxu0 %v6448
    %6603 = vmatpush1.bf16.msra.mxu0 %v6447
    %6604 = vmatprep.subr.bf16.mxu0 %v6456
    %6605 = vmatpush1.bf16.msra.mxu0 %v6455
    %6606 = vmatprep.subr.bf16.mxu0 %v6464
    %6607 = vmatpush1.bf16.msra.mxu0 %v6463
    %6608 = vmatprep.subr.bf16.mxu0 %v6472
    %6609 = vmatpush1.bf16.msra.mxu0 %v6471
    %6610 = vmatprep.subr.bf16.mxu0 0
    %6611 = vmatpush1.bf16.msra.mxu0 0
    %6612 = vmatprep.subr.bf16.mxu0 0
    %6613 = vmatpush1.bf16.msra.mxu0 0
    %6614 = vmatprep.subr.bf16.mxu0 0
    %6615 = vmatpush1.bf16.msra.mxu0 0
    %6616 = vmatprep.subr.bf16.mxu0 0
    %6617 = vmatpush1.bf16.msra.mxu0 0
    %6618 = vmatprep.subr.bf16.mxu0 0
    %6619 = vmatpush1.bf16.msra.mxu0 0
    %6620 = vmatprep.subr.bf16.mxu0 0
    %6621 = vmatpush1.bf16.msra.mxu0 0
    %6622 = vmatprep.subr.bf16.mxu0 0
    %6623 = vmatpush1.bf16.msra.mxu0 0
    %6624 = vmatprep.subr.bf16.mxu0 0
    %6625 = vmatpush1.bf16.msra.mxu0 0
    %6626 = vmatprep.subr.bf16.mxu0 0
    %6627 = vmatpush1.bf16.msra.mxu0 0
    %6628 = vmatprep.subr.bf16.mxu0 0
    %6629 = vmatpush1.bf16.msra.mxu0 0
    %6630 = vmatprep.subr.bf16.mxu0 0
    %6631 = vmatpush1.bf16.msra.mxu0 0
    %6632 = vmatprep.mubr.bf16.mxu0 0
    %6633 = vmatmul.mubr.bf16.gmra.mrb[0].mxu0 %v6516
    %v6634 = vpop.f32.mrb[0].mxu0
    %v6635 = vadd.f32 0.0, %v6634
    %v6636 = vpop.f32.mrb[0].mxu0
    %v6637 = vadd.f32 0.0, %v6636
    %v6638 = vpop.f32.mrb[0].mxu0
    %v6639 = vpop.f32.mrb[0].mxu0
    %6640 = vdwg.mxu0
    %6641 = vmatprep.subr.bf16.mxu0 %v6442
    %6642 = vmatpush1.bf16.msra.mxu0 %v6441
    %6643 = vmatprep.subr.bf16.mxu0 %v6450
    %6644 = vmatpush1.bf16.msra.mxu0 %v6449
    %6645 = vmatprep.subr.bf16.mxu0 %v6458
    %6646 = vmatpush1.bf16.msra.mxu0 %v6457
    %6647 = vmatprep.subr.bf16.mxu0 %v6466
    %6648 = vmatpush1.bf16.msra.mxu0 %v6465
    %6649 = vmatprep.subr.bf16.mxu0 %v6474
    %6650 = vmatpush1.bf16.msra.mxu0 %v6473
    %6651 = vmatprep.subr.bf16.mxu0 0
    %6652 = vmatpush1.bf16.msra.mxu0 0
    %6653 = vmatprep.subr.bf16.mxu0 0
    %6654 = vmatpush1.bf16.msra.mxu0 0
    %6655 = vmatprep.subr.bf16.mxu0 0
    %6656 = vmatpush1.bf16.msra.mxu0 0
    %6657 = vmatprep.subr.bf16.mxu0 0
    %6658 = vmatpush1.bf16.msra.mxu0 0
    %6659 = vmatprep.subr.bf16.mxu0 0
    %6660 = vmatpush1.bf16.msra.mxu0 0
    %6661 = vmatprep.subr.bf16.mxu0 0
    %6662 = vmatpush1.bf16.msra.mxu0 0
    %6663 = vmatprep.subr.bf16.mxu0 0
    %6664 = vmatpush1.bf16.msra.mxu0 0
    %6665 = vmatprep.subr.bf16.mxu0 0
    %6666 = vmatpush1.bf16.msra.mxu0 0
    %6667 = vmatprep.subr.bf16.mxu0 0
    %6668 = vmatpush1.bf16.msra.mxu0 0
    %6669 = vmatprep.subr.bf16.mxu0 0
    %6670 = vmatpush1.bf16.msra.mxu0 0
    %6671 = vmatprep.subr.bf16.mxu0 0
    %6672 = vmatpush1.bf16.msra.mxu0 0
    %6673 = vmatprep.mubr.bf16.mxu0 0
    %6674 = vmatmul.mubr.bf16.gmra.mrb[0].mxu0 %v6516
    %v6675 = vpop.f32.mrb[0].mxu0
    %v6676 = vadd.f32 0.0, %v6675
    %v6677 = vpop.f32.mrb[0].mxu0
    %v6678 = vadd.f32 0.0, %v6677
    %v6679 = vpop.f32.mrb[0].mxu0
    %v6680 = vpop.f32.mrb[0].mxu0
    %6681 = vdwg.mxu0
    %v6682 = vadd.f32 %v6235, %v6553
    %v6683 = vadd.f32 %v6236, %v6555
    %v6684 = vadd.f32 %v6237, %v6594
    %v6685 = vadd.f32 %v6238, %v6596
    %v6686 = vadd.f32 %v6239, %v6635
    %v6687 = vadd.f32 %v6240, %v6637
    %v6688 = vadd.f32 %v6241, %v6676
    %v6689 = vadd.f32 %v6242, %v6678
    %s6690 = scalar_lea.vmem %s9, 1280
    %v6691 = vld [vmem:[%s6690] sm:$0xff]
    %v6692 = vld [vmem:[%s6690 + $0x8] sm:$0xff]
    %v6693 = vld [vmem:[%s6690 + $0x10] sm:$0xff]
    %v6694 = vld [vmem:[%s6690 + $0x18] sm:$0xff]
    %v6695 = vld [vmem:[%s6690 + $0x20] sm:$0xff]
    %v6696 = vld [vmem:[%s6690 + $0x28] sm:$0xff]
    %v6697 = vld [vmem:[%s6690 + $0x30] sm:$0xff]
    %v6698 = vld [vmem:[%s6690 + $0x38] sm:$0xff]
    %v6699 = vld [vmem:[%s6690 + $0x40] sm:$0xff]
    %v6700 = vld [vmem:[%s6690 + $0x48] sm:$0xff]
    %v6701 = vld [vmem:[%s6690 + $0x50] sm:$0xff]
    %v6702 = vld [vmem:[%s6690 + $0x58] sm:$0xff]
    %v6703 = vld [vmem:[%s6690 + $0x60] sm:$0xff]
    %v6704 = vld [vmem:[%s6690 + $0x68] sm:$0xff]
    %v6705 = vld [vmem:[%s6690 + $0x70] sm:$0xff]
    %v6706 = vld [vmem:[%s6690 + $0x78] sm:$0xff]
    %v6707 = vld [vmem:[%s6690 + $0x80] sm:$0xff]
    %v6708 = vld [vmem:[%s6690 + $0x88] sm:$0xff]
    %v6709 = vld [vmem:[%s6690 + $0x90] sm:$0xff]
    %v6710 = vld [vmem:[%s6690 + $0x98] sm:$0xff]
    %v6711 = vld [vmem:[%s6690 + $0xa0] sm:$0xff]
    %v6712 = vld [vmem:[%s6690 + $0xa8] sm:$0xff]
    %v6713 = vld [vmem:[%s6690 + $0xb0] sm:$0xff]
    %v6714 = vld [vmem:[%s6690 + $0xb8] sm:$0xff]
    %v6715 = vld [vmem:[%s6690 + $0xc0] sm:$0xff]
    %v6716 = vld [vmem:[%s6690 + $0xc8] sm:$0xff]
    %v6717 = vld [vmem:[%s6690 + $0xd0] sm:$0xff]
    %v6718 = vld [vmem:[%s6690 + $0xd8] sm:$0xff]
    %v6719 = vld [vmem:[%s6690 + $0xe0] sm:$0xff]
    %v6720 = vld [vmem:[%s6690 + $0xe8] sm:$0xff]
    %v6721 = vld [vmem:[%s6690 + $0xf0] sm:$0xff]
    %v6722 = vld [vmem:[%s6690 + $0xf8] sm:$0xff]
    %v6723 = vld [vmem:[%s6690 + $0x100] sm:$0xff]
    %v6724 = vld [vmem:[%s6690 + $0x108] sm:$0xff]
    %v6725 = vld [vmem:[%s6690 + $0x110] sm:$0xff]
    %v6726 = vld [vmem:[%s6690 + $0x118] sm:$0xff]
    %v6727 = vld [vmem:[%s6690 + $0x120] sm:$0xff]
    %v6728 = vld [vmem:[%s6690 + $0x128] sm:$0xff]
    %v6729 = vld [vmem:[%s6690 + $0x130] sm:$0xff]
    %v6730 = vld [vmem:[%s6690 + $0x138] sm:$0xff]
    %6731 = vrot.lane.b32.xlu0 %v4923, 96
    %v6732 = vpop.permute.xlu0 %6731
    %6733 = vrot.lane.b32.xlu0 %v4924, 96
    %v6734 = vpop.permute.xlu0 %6733
    %6735 = vrot.lane.b32.xlu0 %v4925, 96
    %v6736 = vpop.permute.xlu0 %6735
    %6737 = vrot.lane.b32.xlu0 %v4926, 96
    %v6738 = vpop.permute.xlu0 %6737
    %6739 = vrot.lane.b32.xlu0 %v4927, 96
    %v6740 = vpop.permute.xlu0 %6739
    %6746 = vxpose.xlu0.c.b16.start [1/8] %v6732, 128
    %6747 = vxpose.xlu0.c.b16.cont [2/8] %v6734, 128
    %6748 = vxpose.xlu0.c.b16.cont [3/8] %v6736, 128
    %6749 = vxpose.xlu0.c.b16.cont [4/8] %v6738, 128
    %6750 = vxpose.xlu0.c.b16.cont [5/8] %v6740, 128
    %6751 = vxpose.xlu0.c.b16.cont [6/8] 0, 128
    %6752 = vxpose.xlu0.c.b16.cont [7/8] 0, 128
    %6753 = vxpose.xlu0.c.b16.end [8/8] 0, 128
    %v6754 = vpop.trf.xlu0
    %v6755 = vpop.trf.xlu0
    %v6756 = vpop.trf.xlu0
    %v6757 = vpop.trf.xlu0
    %v6758 = vpop.trf.xlu0
    %v6759 = vpop.trf.xlu0
    %v6760 = vpop.trf.xlu0
    %v6761 = vpop.trf.xlu0
    %v6802 = vunpack.c.l.b16 %v6691
    %v6803 = vunpack.c.h.b16 %v6691
    %v6804 = vunpack.c.l.b16 %v6692
    %v6805 = vunpack.c.h.b16 %v6692
    %v6806 = vunpack.c.l.b16 %v6693
    %v6807 = vunpack.c.h.b16 %v6693
    %v6808 = vunpack.c.l.b16 %v6694
    %v6809 = vunpack.c.h.b16 %v6694
    %v6810 = vunpack.c.l.b16 %v6695
    %v6811 = vunpack.c.h.b16 %v6695
    %v6812 = vunpack.c.l.b16 %v6696
    %v6813 = vunpack.c.h.b16 %v6696
    %v6814 = vunpack.c.l.b16 %v6697
    %v6815 = vunpack.c.h.b16 %v6697
    %v6816 = vunpack.c.l.b16 %v6698
    %v6817 = vunpack.c.h.b16 %v6698
    %v6818 = vunpack.c.l.b16 %v6699
    %v6819 = vunpack.c.h.b16 %v6699
    %v6820 = vunpack.c.l.b16 %v6700
    %v6821 = vunpack.c.h.b16 %v6700
    %v6822 = vunpack.c.l.b16 %v6701
    %v6823 = vunpack.c.h.b16 %v6701
    %v6824 = vunpack.c.l.b16 %v6702
    %v6825 = vunpack.c.h.b16 %v6702
    %v6826 = vunpack.c.l.b16 %v6703
    %v6827 = vunpack.c.h.b16 %v6703
    %v6828 = vunpack.c.l.b16 %v6704
    %v6829 = vunpack.c.h.b16 %v6704
    %v6830 = vunpack.c.l.b16 %v6705
    %v6831 = vunpack.c.h.b16 %v6705
    %v6832 = vunpack.c.l.b16 %v6706
    %v6833 = vunpack.c.h.b16 %v6706
    %v6834 = vunpack.c.l.b16 %v6707
    %v6835 = vunpack.c.h.b16 %v6707
    %v6836 = vunpack.c.l.b16 %v6708
    %v6837 = vunpack.c.h.b16 %v6708
    %v6838 = vunpack.c.l.b16 %v6709
    %v6839 = vunpack.c.h.b16 %v6709
    %v6840 = vunpack.c.l.b16 %v6710
    %v6841 = vunpack.c.h.b16 %v6710
    %v6842 = vunpack.c.l.b16 %v6711
    %v6843 = vunpack.c.h.b16 %v6711
    %v6844 = vunpack.c.l.b16 %v6712
    %v6845 = vunpack.c.h.b16 %v6712
    %v6846 = vunpack.c.l.b16 %v6713
    %v6847 = vunpack.c.h.b16 %v6713
    %v6848 = vunpack.c.l.b16 %v6714
    %v6849 = vunpack.c.h.b16 %v6714
    %v6850 = vunpack.c.l.b16 %v6715
    %v6851 = vunpack.c.h.b16 %v6715
    %v6852 = vunpack.c.l.b16 %v6716
    %v6853 = vunpack.c.h.b16 %v6716
    %v6854 = vunpack.c.l.b16 %v6717
    %v6855 = vunpack.c.h.b16 %v6717
    %v6856 = vunpack.c.l.b16 %v6718
    %v6857 = vunpack.c.h.b16 %v6718
    %v6858 = vunpack.c.l.b16 %v6719
    %v6859 = vunpack.c.h.b16 %v6719
    %v6860 = vunpack.c.l.b16 %v6720
    %v6861 = vunpack.c.h.b16 %v6720
    %v6862 = vunpack.c.l.b16 %v6721
    %v6863 = vunpack.c.h.b16 %v6721
    %v6864 = vunpack.c.l.b16 %v6722
    %v6865 = vunpack.c.h.b16 %v6722
    %v6866 = vunpack.c.l.b16 %v6723
    %v6867 = vunpack.c.h.b16 %v6723
    %v6868 = vunpack.c.l.b16 %v6724
    %v6869 = vunpack.c.h.b16 %v6724
    %v6870 = vunpack.c.l.b16 %v6725
    %v6871 = vunpack.c.h.b16 %v6725
    %v6872 = vunpack.c.l.b16 %v6726
    %v6873 = vunpack.c.h.b16 %v6726
    %v6874 = vunpack.c.l.b16 %v6727
    %v6875 = vunpack.c.h.b16 %v6727
    %v6876 = vunpack.c.l.b16 %v6728
    %v6877 = vunpack.c.h.b16 %v6728
    %v6878 = vunpack.c.l.b16 %v6729
    %v6879 = vunpack.c.h.b16 %v6729
    %v6880 = vunpack.c.l.b16 %v6730
    %v6881 = vunpack.c.h.b16 %v6730
    %v6882 = vpack.c.b16 %v6810, %v6802
    %v6883 = vpack.c.b16 %v6811, %v6803
    %v6884 = vpack.c.b16 %v6812, %v6804
    %v6885 = vpack.c.b16 %v6813, %v6805
    %v6886 = vpack.c.b16 %v6814, %v6806
    %v6887 = vpack.c.b16 %v6815, %v6807
    %v6888 = vpack.c.b16 %v6816, %v6808
    %v6889 = vpack.c.b16 %v6817, %v6809
    %v6890 = vpack.c.b16 %v6826, %v6818
    %v6891 = vpack.c.b16 %v6827, %v6819
    %v6892 = vpack.c.b16 %v6828, %v6820
    %v6893 = vpack.c.b16 %v6829, %v6821
    %v6894 = vpack.c.b16 %v6830, %v6822
    %v6895 = vpack.c.b16 %v6831, %v6823
    %v6896 = vpack.c.b16 %v6832, %v6824
    %v6897 = vpack.c.b16 %v6833, %v6825
    %v6898 = vpack.c.b16 %v6842, %v6834
    %v6899 = vpack.c.b16 %v6843, %v6835
    %v6900 = vpack.c.b16 %v6844, %v6836
    %v6901 = vpack.c.b16 %v6845, %v6837
    %v6902 = vpack.c.b16 %v6846, %v6838
    %v6903 = vpack.c.b16 %v6847, %v6839
    %v6904 = vpack.c.b16 %v6848, %v6840
    %v6905 = vpack.c.b16 %v6849, %v6841
    %v6906 = vpack.c.b16 %v6858, %v6850
    %v6907 = vpack.c.b16 %v6859, %v6851
    %v6908 = vpack.c.b16 %v6860, %v6852
    %v6909 = vpack.c.b16 %v6861, %v6853
    %v6910 = vpack.c.b16 %v6862, %v6854
    %v6911 = vpack.c.b16 %v6863, %v6855
    %v6912 = vpack.c.b16 %v6864, %v6856
    %v6913 = vpack.c.b16 %v6865, %v6857
    %v6914 = vpack.c.b16 %v6874, %v6866
    %v6915 = vpack.c.b16 %v6875, %v6867
    %v6916 = vpack.c.b16 %v6876, %v6868
    %v6917 = vpack.c.b16 %v6877, %v6869
    %v6918 = vpack.c.b16 %v6878, %v6870
    %v6919 = vpack.c.b16 %v6879, %v6871
    %v6920 = vpack.c.b16 %v6880, %v6872
    %v6921 = vpack.c.b16 %v6881, %v6873
    %v6963 = vsel %vm5245, %v6754, 0
    %6965 = vmatprep.subr.bf16.mxu0 %v6883
    %6966 = vmatpush1.bf16.msra.mxu0 %v6882
    %6967 = vmatprep.subr.bf16.mxu0 %v6891
    %6968 = vmatpush1.bf16.msra.mxu0 %v6890
    %6969 = vmatprep.subr.bf16.mxu0 %v6899
    %6970 = vmatpush1.bf16.msra.mxu0 %v6898
    %6971 = vmatprep.subr.bf16.mxu0 %v6907
    %6972 = vmatpush1.bf16.msra.mxu0 %v6906
    %6973 = vmatprep.subr.bf16.mxu0 %v6915
    %6974 = vmatpush1.bf16.msra.mxu0 %v6914
    %6975 = vmatprep.subr.bf16.mxu0 0
    %6976 = vmatpush1.bf16.msra.mxu0 0
    %6977 = vmatprep.subr.bf16.mxu0 0
    %6978 = vmatpush1.bf16.msra.mxu0 0
    %6979 = vmatprep.subr.bf16.mxu0 0
    %6980 = vmatpush1.bf16.msra.mxu0 0
    %6981 = vmatprep.subr.bf16.mxu0 0
    %6982 = vmatpush1.bf16.msra.mxu0 0
    %6983 = vmatprep.subr.bf16.mxu0 0
    %6984 = vmatpush1.bf16.msra.mxu0 0
    %6985 = vmatprep.subr.bf16.mxu0 0
    %6986 = vmatpush1.bf16.msra.mxu0 0
    %6987 = vmatprep.subr.bf16.mxu0 0
    %6988 = vmatpush1.bf16.msra.mxu0 0
    %6989 = vmatprep.subr.bf16.mxu0 0
    %6990 = vmatpush1.bf16.msra.mxu0 0
    %6991 = vmatprep.subr.bf16.mxu0 0
    %6992 = vmatpush1.bf16.msra.mxu0 0
    %6993 = vmatprep.subr.bf16.mxu0 0
    %6994 = vmatpush1.bf16.msra.mxu0 0
    %6995 = vmatprep.subr.bf16.mxu0 0
    %6996 = vmatpush1.bf16.msra.mxu0 0
    %6997 = vmatprep.mubr.bf16.mxu0 0
    %6998 = vmatmul.mubr.bf16.gmra.mrb[0].mxu0 %v6963
    %v6999 = vpop.f32.mrb[0].mxu0
    %v7000 = vadd.f32 0.0, %v6999
    %v7001 = vpop.f32.mrb[0].mxu0
    %v7002 = vadd.f32 0.0, %v7001
    %v7003 = vpop.f32.mrb[0].mxu0
    %v7004 = vpop.f32.mrb[0].mxu0
    %7005 = vdwg.mxu0
    %7006 = vmatprep.subr.bf16.mxu0 %v6885
    %7007 = vmatpush1.bf16.msra.mxu0 %v6884
    %7008 = vmatprep.subr.bf16.mxu0 %v6893
    %7009 = vmatpush1.bf16.msra.mxu0 %v6892
    %7010 = vmatprep.subr.bf16.mxu0 %v6901
    %7011 = vmatpush1.bf16.msra.mxu0 %v6900
    %7012 = vmatprep.subr.bf16.mxu0 %v6909
    %7013 = vmatpush1.bf16.msra.mxu0 %v6908
    %7014 = vmatprep.subr.bf16.mxu0 %v6917
    %7015 = vmatpush1.bf16.msra.mxu0 %v6916
    %7016 = vmatprep.subr.bf16.mxu0 0
    %7017 = vmatpush1.bf16.msra.mxu0 0
    %7018 = vmatprep.subr.bf16.mxu0 0
    %7019 = vmatpush1.bf16.msra.mxu0 0
    %7020 = vmatprep.subr.bf16.mxu0 0
    %7021 = vmatpush1.bf16.msra.mxu0 0
    %7022 = vmatprep.subr.bf16.mxu0 0
    %7023 = vmatpush1.bf16.msra.mxu0 0
    %7024 = vmatprep.subr.bf16.mxu0 0
    %7025 = vmatpush1.bf16.msra.mxu0 0
    %7026 = vmatprep.subr.bf16.mxu0 0
    %7027 = vmatpush1.bf16.msra.mxu0 0
    %7028 = vmatprep.subr.bf16.mxu0 0
    %7029 = vmatpush1.bf16.msra.mxu0 0
    %7030 = vmatprep.subr.bf16.mxu0 0
    %7031 = vmatpush1.bf16.msra.mxu0 0
    %7032 = vmatprep.subr.bf16.mxu0 0
    %7033 = vmatpush1.bf16.msra.mxu0 0
    %7034 = vmatprep.subr.bf16.mxu0 0
    %7035 = vmatpush1.bf16.msra.mxu0 0
    %7036 = vmatprep.subr.bf16.mxu0 0
    %7037 = vmatpush1.bf16.msra.mxu0 0
    %7038 = vmatprep.mubr.bf16.mxu0 0
    %7039 = vmatmul.mubr.bf16.gmra.mrb[0].mxu0 %v6963
    %v7040 = vpop.f32.mrb[0].mxu0
    %v7041 = vadd.f32 0.0, %v7040
    %v7042 = vpop.f32.mrb[0].mxu0
    %v7043 = vadd.f32 0.0, %v7042
    %v7044 = vpop.f32.mrb[0].mxu0
    %v7045 = vpop.f32.mrb[0].mxu0
    %7046 = vdwg.mxu0
    %7047 = vmatprep.subr.bf16.mxu0 %v6887
    %7048 = vmatpush1.bf16.msra.mxu0 %v6886
    %7049 = vmatprep.subr.bf16.mxu0 %v6895
    %7050 = vmatpush1.bf16.msra.mxu0 %v6894
    %7051 = vmatprep.subr.bf16.mxu0 %v6903
    %7052 = vmatpush1.bf16.msra.mxu0 %v6902
    %7053 = vmatprep.subr.bf16.mxu0 %v6911
    %7054 = vmatpush1.bf16.msra.mxu0 %v6910
    %7055 = vmatprep.subr.bf16.mxu0 %v6919
    %7056 = vmatpush1.bf16.msra.mxu0 %v6918
    %7057 = vmatprep.subr.bf16.mxu0 0
    %7058 = vmatpush1.bf16.msra.mxu0 0
    %7059 = vmatprep.subr.bf16.mxu0 0
    %7060 = vmatpush1.bf16.msra.mxu0 0
    %7061 = vmatprep.subr.bf16.mxu0 0
    %7062 = vmatpush1.bf16.msra.mxu0 0
    %7063 = vmatprep.subr.bf16.mxu0 0
    %7064 = vmatpush1.bf16.msra.mxu0 0
    %7065 = vmatprep.subr.bf16.mxu0 0
    %7066 = vmatpush1.bf16.msra.mxu0 0
    %7067 = vmatprep.subr.bf16.mxu0 0
    %7068 = vmatpush1.bf16.msra.mxu0 0
    %7069 = vmatprep.subr.bf16.mxu0 0
    %7070 = vmatpush1.bf16.msra.mxu0 0
    %7071 = vmatprep.subr.bf16.mxu0 0
    %7072 = vmatpush1.bf16.msra.mxu0 0
    %7073 = vmatprep.subr.bf16.mxu0 0
    %7074 = vmatpush1.bf16.msra.mxu0 0
    %7075 = vmatprep.subr.bf16.mxu0 0
    %7076 = vmatpush1.bf16.msra.mxu0 0
    %7077 = vmatprep.subr.bf16.mxu0 0
    %7078 = vmatpush1.bf16.msra.mxu0 0
    %7079 = vmatprep.mubr.bf16.mxu0 0
    %7080 = vmatmul.mubr.bf16.gmra.mrb[0].mxu0 %v6963
    %v7081 = vpop.f32.mrb[0].mxu0
    %v7082 = vadd.f32 0.0, %v7081
    %v7083 = vpop.f32.mrb[0].mxu0
    %v7084 = vadd.f32 0.0, %v7083
    %v7085 = vpop.f32.mrb[0].mxu0
    %v7086 = vpop.f32.mrb[0].mxu0
    %7087 = vdwg.mxu0
    %7088 = vmatprep.subr.bf16.mxu0 %v6889
    %7089 = vmatpush1.bf16.msra.mxu0 %v6888
    %7090 = vmatprep.subr.bf16.mxu0 %v6897
    %7091 = vmatpush1.bf16.msra.mxu0 %v6896
    %7092 = vmatprep.subr.bf16.mxu0 %v6905
    %7093 = vmatpush1.bf16.msra.mxu0 %v6904
    %7094 = vmatprep.subr.bf16.mxu0 %v6913
    %7095 = vmatpush1.bf16.msra.mxu0 %v6912
    %7096 = vmatprep.subr.bf16.mxu0 %v6921
    %7097 = vmatpush1.bf16.msra.mxu0 %v6920
    %7098 = vmatprep.subr.bf16.mxu0 0
    %7099 = vmatpush1.bf16.msra.mxu0 0
    %7100 = vmatprep.subr.bf16.mxu0 0
    %7101 = vmatpush1.bf16.msra.mxu0 0
    %7102 = vmatprep.subr.bf16.mxu0 0
    %7103 = vmatpush1.bf16.msra.mxu0 0
    %7104 = vmatprep.subr.bf16.mxu0 0
    %7105 = vmatpush1.bf16.msra.mxu0 0
    %7106 = vmatprep.subr.bf16.mxu0 0
    %7107 = vmatpush1.bf16.msra.mxu0 0
    %7108 = vmatprep.subr.bf16.mxu0 0
    %7109 = vmatpush1.bf16.msra.mxu0 0
    %7110 = vmatprep.subr.bf16.mxu0 0
    %7111 = vmatpush1.bf16.msra.mxu0 0
    %7112 = vmatprep.subr.bf16.mxu0 0
    %7113 = vmatpush1.bf16.msra.mxu0 0
    %7114 = vmatprep.subr.bf16.mxu0 0
    %7115 = vmatpush1.bf16.msra.mxu0 0
    %7116 = vmatprep.subr.bf16.mxu0 0
    %7117 = vmatpush1.bf16.msra.mxu0 0
    %7118 = vmatprep.subr.bf16.mxu0 0
    %7119 = vmatpush1.bf16.msra.mxu0 0
    %7120 = vmatprep.mubr.bf16.mxu0 0
    %7121 = vmatmul.mubr.bf16.gmra.mrb[0].mxu0 %v6963
    %v7122 = vpop.f32.mrb[0].mxu0
    %v7123 = vadd.f32 0.0, %v7122
    %v7124 = vpop.f32.mrb[0].mxu0
    %v7125 = vadd.f32 0.0, %v7124
    %v7126 = vpop.f32.mrb[0].mxu0
    %v7127 = vpop.f32.mrb[0].mxu0
    %7128 = vdwg.mxu0
    %v7129 = vadd.f32 %v6682, %v7000
    %v7130 = vadd.f32 %v6683, %v7002
    %v7131 = vadd.f32 %v6684, %v7041
    %v7132 = vadd.f32 %v6685, %v7043
    %v7133 = vadd.f32 %v6686, %v7082
    %v7134 = vadd.f32 %v6687, %v7084
    %v7135 = vadd.f32 %v6688, %v7123
    %v7136 = vadd.f32 %v6689, %v7125
    %v7137 = vld [vmem:[%s11] sm:$0xff]
    %v7139 = vlaneseq
    %v7140 = vshrl.u32 %v7139, 7
    %v7141 = vsub.s32 0, %v7140
    %v7142 = vrot.slane %v7137, %v7141
    %v7143 = vlaneseq
    %v7144 = vshrl.u32 %v7143, 7
    %v7145 = vsub.s32 1, %v7144
    %v7146 = vrot.slane %v7137, %v7145
    %v7147 = vlaneseq
    %v7148 = vshrl.u32 %v7147, 7
    %v7149 = vsub.s32 2, %v7148
    %v7150 = vrot.slane %v7137, %v7149
    %v7151 = vlaneseq
    %v7152 = vshrl.u32 %v7151, 7
    %v7153 = vsub.s32 3, %v7152
    %v7154 = vrot.slane %v7137, %v7153
    %v7155 = vlaneseq
    %v7156 = vshrl.u32 %v7155, 7
    %v7157 = vsub.s32 4, %v7156
    %v7158 = vrot.slane %v7137, %v7157
    %v7159 = vlaneseq
    %v7160 = vshrl.u32 %v7159, 7
    %v7161 = vsub.s32 5, %v7160
    %v7162 = vrot.slane %v7137, %v7161
    %v7163 = vlaneseq
    %v7164 = vshrl.u32 %v7163, 7
    %v7165 = vsub.s32 6, %v7164
    %v7166 = vrot.slane %v7137, %v7165
    %v7167 = vlaneseq
    %v7168 = vshrl.u32 %v7167, 7
    %v7169 = vsub.s32 7, %v7168
    %v7170 = vrot.slane %v7137, %v7169
    %v7179 = vadd.f32 %v7129, %v7142
    %v7180 = vadd.f32 %v7130, %v7146
    %v7181 = vadd.f32 %v7131, %v7150
    %v7182 = vadd.f32 %v7132, %v7154
    %v7183 = vadd.f32 %v7133, %v7158
    %v7184 = vadd.f32 %v7134, %v7162
    %v7185 = vadd.f32 %v7135, %v7166
    %v7186 = vadd.f32 %v7136, %v7170
    %vm7187 = vcmp.ge.f32.partialorder %v7179, 0.0
    %vm7188 = vcmp.ge.f32.partialorder %v7180, 0.0
    %vm7189 = vcmp.ge.f32.partialorder %v7181, 0.0
    %vm7190 = vcmp.ge.f32.partialorder %v7182, 0.0
    %vm7191 = vcmp.ge.f32.partialorder %v7183, 0.0
    %vm7192 = vcmp.ge.f32.partialorder %v7184, 0.0
    %vm7193 = vcmp.ge.f32.partialorder %v7185, 0.0
    %vm7194 = vcmp.ge.f32.partialorder %v7186, 0.0
    %v7195 = vmul.f32 %v1848, %v7179
    %v7196 = vmul.f32 %v1848, %v7180
    %v7197 = vmul.f32 %v1848, %v7181
    %v7198 = vmul.f32 %v1848, %v7182
    %v7199 = vmul.f32 %v1848, %v7183
    %v7200 = vmul.f32 %v1848, %v7184
    %v7201 = vmul.f32 %v1848, %v7185
    %v7202 = vmul.f32 %v1848, %v7186
    %v7203 = vsel %vm7187, %v7179, %v7195
    %v7204 = vsel %vm7188, %v7180, %v7196
    %v7205 = vsel %vm7189, %v7181, %v7197
    %v7206 = vsel %vm7190, %v7182, %v7198
    %v7207 = vsel %vm7191, %v7183, %v7199
    %v7208 = vsel %vm7192, %v7184, %v7200
    %v7209 = vsel %vm7193, %v7185, %v7201
    %v7210 = vsel %vm7194, %v7186, %v7202
    %7211 = vst [vmem:[#allocation11] sm:$0xff] %v7203
    %7212 = vst [vmem:[#allocation11 + $0x8] sm:$0xff] %v7204
    %7213 = vst [vmem:[#allocation11 + $0x10] sm:$0xff] %v7205
    %7214 = vst [vmem:[#allocation11 + $0x18] sm:$0xff] %v7206
    %7215 = vst [vmem:[#allocation11 + $0x20] sm:$0xff] %v7207
    %7216 = vst [vmem:[#allocation11 + $0x28] sm:$0xff] %v7208
    %7217 = vst [vmem:[#allocation11 + $0x30] sm:$0xff] %v7209
    %7218 = vst [vmem:[#allocation11 + $0x38] sm:$0xff] %v7210
    // Predicated region
    $region70: #{tpu_custom_call.1} parent=1 // pred_check
      _
    $region71: #{tpu_custom_call.1} parent=1 // pred_check_branch
      %7220 = sbr.rel (0) target = $region73
    $region72: #{tpu_custom_call.1} parent=1 // pred_region
      %s7222 = ssub.s32 1024, 1024
      %7223 = vsyncadd [#allocation5], %s7222
      %s7225 = sshll.u32 [#allocation11], 4
      %s7226 = int_to_ptr.vmem [resolvable:$true] %s7225
      %7228 = dma.vmem_to_hbm [thread:$0]  %s7226, 1024, %s13, [#allocation5]
    $region73: #{tpu_custom_call.1} parent=1 // pred_fallthru
      _
    // Predicated region
    $region74: #{tpu_custom_call.1} parent=1 // pred_check
      _
    $region75: #{tpu_custom_call.1} parent=1 // pred_check_branch
      %7230 = sbr.rel (0) target = $region77
    $region76: #{tpu_custom_call.1} parent=1 // pred_region
      %7231 = dma.done [#allocation5], 1024
    $region77: #{tpu_custom_call.1} parent=1 // pred_fallthru
      _
    %7232 = vsyncpa [#allocation4], 1
    %7233 = vsyncpa [#allocation7], 1
    %7234 = vsyncpa [#allocation10], 1
    %7235 = vsyncpa [#allocation5], 1

</llo_original>
